<compile_context>
chip_gen: v5e
topology: v5e:2x2
jax: 0.10.0
libtpu: 0.0.40
codegen_flags: <defaults>
</compile_context>

<pallas_src>
import numpy as np
import jax
import jax.numpy as jnp
from jax.experimental import pallas as pl
from jax.experimental.pallas import tpu as pltpu

# ----------------------------- configuration -------------------------------
N_CLASSES = 8
LATENT_DIM = 32
IMG_SHAPE = (1, 8, 8)            # (C, H, W)
OUT_DIM = int(np.prod(IMG_SHAPE))
OUT_PAD = 128                    # pad final layer to a full lane width
HID = (128, 256, 512, 1024)
BN_EPS = 0.8                     # nn.BatchNorm1d(out_feat, 0.8) -> eps = 0.8
NEG_SLOPE = 0.2


def _leaky(x):
    # LeakyReLU(0.2): max(x, 0.2*x) is identical to where(x>0, x, 0.2x) for slope<1.
    return jnp.maximum(x, NEG_SLOPE * x)


# ------------------------------- kernel ------------------------------------
def generator_kernel(x_ref, w1_ref, b1_ref,
                     w2_ref, g2_ref, be2_ref,
                     w3_ref, g3_ref, be3_ref,
                     w4_hbm, g4_ref, be4_ref,
                     w5_hbm, b5_ref,
                     out_ref,
                     w4_buf, w5_buf, dma_sems):
    # Prefetch the two largest weights straight from HBM so their DMA hides
    # under the layer 1-3 compute.
    w4_cp = pltpu.make_async_copy(w4_hbm, w4_buf, dma_sems.at[0])
    w5_cp = pltpu.make_async_copy(w5_hbm, w5_buf, dma_sems.at[1])
    w4_cp.start()
    w5_cp.start()

    # Layer 1 (no norm). Embedding folded into w1 (wrapper), single dot.
    h = jnp.dot(x_ref[...], w1_ref[...],
                preferred_element_type=jnp.float32) + b1_ref[...]
    h = _leaky(h).astype(jnp.bfloat16)

    def bn_block(h, w, g, be):
        # Linear bias omitted: batch-stat BatchNorm cancels it exactly.
        y = jnp.dot(h, w, preferred_element_type=jnp.float32)        # (B, D) f32
        mean = jnp.mean(y, axis=0, keepdims=True)                     # (1, D)
        msq = jnp.mean(y * y, axis=0, keepdims=True)                  # (1, D)
        var = msq - mean * mean                                       # biased, one pass
        scale = jax.lax.rsqrt(var + BN_EPS) * g                       # (1, D)
        shift = be - mean * scale                                     # (1, D)
        return _leaky(y * scale + shift).astype(jnp.bfloat16)

    h = bn_block(h, w2_ref[...], g2_ref[...], be2_ref[...])   # -> 256
    h = bn_block(h, w3_ref[...], g3_ref[...], be3_ref[...])   # -> 512

    w4_cp.wait()
    h = bn_block(h, w4_buf[...], g4_ref[...], be4_ref[...])   # -> 1024

    w5_cp.wait()
    y = jnp.dot(h, w5_buf[...], preferred_element_type=jnp.float32) + b5_ref[...]
    out_ref[...] = jnp.tanh(y).astype(out_ref.dtype)           # (B, 128) lane-dense bf16 store


# --------------------------- one-time weight prep ----------------------------
def prepare_generator_params(params):
    """Fold / cast / pad weights once per weight update (hoisted out of the
    per-call path). Returns the exact arrays the kernel consumes."""
    f32, bf16 = jnp.float32, jnp.bfloat16
    nc = N_CLASSES

    emb = params["emb"].astype(f32)
    w1 = params["w1"].astype(f32)
    # emb[labels] @ W1[:nc] + z @ W1[nc:]  ==  [onehot, z] @ [[emb@W1[:nc]]; [W1[nc:]]]
    w1s = jnp.concatenate([emb @ w1[:nc, :], w1[nc:, :]], axis=0).astype(bf16)

    # Pad the final layer to 128 output lanes (zero weight/bias columns) so the
    # kernel's output store is lane-dense; padding is sliced off in the wrapper.
    w5p = jnp.zeros((HID[3], OUT_PAD), f32).at[:, :OUT_DIM].set(params["w5"]).astype(bf16)
    b5p = jnp.zeros((1, OUT_PAD), f32).at[:, :OUT_DIM].set(params["b5"])

    return dict(
        w1=w1s, b1=params["b1"].astype(f32),
        w2=params["w2"].astype(bf16), g2=params["g2"].astype(f32), be2=params["be2"].astype(f32),
        w3=params["w3"].astype(bf16), g3=params["g3"].astype(f32), be3=params["be3"].astype(f32),
        w4=params["w4"].astype(bf16), g4=params["g4"].astype(f32), be4=params["be4"].astype(f32),
        w5=w5p, b5=b5p,
    )


# ------------------------------- wrapper ------------------------------------
def generator_forward(z, labels, prep):
    B = z.shape[0]
    bf16 = jnp.bfloat16

    onehot = (labels[:, None] ==
              jnp.arange(N_CLASSES, dtype=labels.dtype)[None, :]).astype(bf16)
    x = jnp.concatenate([onehot, z.astype(bf16)], axis=-1)     # (B, nc+latent)

    args = (
        x,
        prep["w1"], prep["b1"],
        prep["w2"], prep["g2"], prep["be2"],
        prep["w3"], prep["g3"], prep["be3"],
        prep["w4"], prep["g4"], prep["be4"],
        prep["w5"], prep["b5"],
    )
    vmem = pl.BlockSpec(memory_space=pltpu.MemorySpace.VMEM)
    hbm = pl.BlockSpec(memory_space=pl.ANY)
    in_specs = [vmem] * len(args)
    in_specs[9] = hbm    # w4 stays in HBM, prefetched inside the kernel
    in_specs[12] = hbm   # w5 (padded) stays in HBM, prefetched inside the kernel

    flat = pl.pallas_call(
        generator_kernel,
        out_shape=jax.ShapeDtypeStruct((B, OUT_PAD), jnp.bfloat16),
        in_specs=in_specs,
        out_specs=pl.BlockSpec(memory_space=pltpu.MemorySpace.VMEM),
        scratch_shapes=[
            pltpu.VMEM((HID[2], HID[3]), jnp.bfloat16),    # w4 prefetch buffer
            pltpu.VMEM((HID[3], OUT_PAD), jnp.bfloat16),   # w5 prefetch buffer
            pltpu.SemaphoreType.DMA((2,)),
        ],
        # Actual footprint ~6-8 MiB; 16 MiB leaves headroom for Mosaic
        # temporaries while no longer reserving half of v7x's 64 MiB VMEM.
        compiler_params=pltpu.CompilerParams(vmem_limit_bytes=16 << 20),
    )(*args)
    return flat[:, :OUT_DIM].reshape(B, *IMG_SHAPE)


# -------------------------- pure-JAX reference ------------------------------
def generator_reference(z, labels, params):
    emb = params["emb"][labels]                           # (B, n_classes)
    h = jnp.concatenate([emb, z], axis=-1)
    h = _leaky(h @ params["w1"] + params["b1"])

    def bn_block(h, w, b, g, be):
        y = h @ w + b
        mean = jnp.mean(y, axis=0, keepdims=True)
        var = jnp.mean((y - mean) ** 2, axis=0, keepdims=True)
        y = (y - mean) / jnp.sqrt(var + BN_EPS) * g + be
        return _leaky(y)

    h = bn_block(h, params["w2"], params["b2"], params["g2"], params["be2"])
    h = bn_block(h, params["w3"], params["b3"], params["g3"], params["be3"])
    h = bn_block(h, params["w4"], params["b4"], params["g4"], params["be4"])
    y = jnp.tanh(h @ params["w5"] + params["b5"])
    return y.reshape(z.shape[0], *IMG_SHAPE)


# ------------------------------ param init ----------------------------------
def init_params(key):
    ks = jax.random.split(key, 6)
    ni = LATENT_DIM + N_CLASSES
    dims = [ni, HID[0], HID[1], HID[2], HID[3], OUT_DIM]

    def lin(k, din, dout):
        kw, kb = jax.random.split(k)
        w = jax.random.normal(kw, (din, dout), jnp.float32) * (1.0 / np.sqrt(din))
        b = jax.random.normal(kb, (1, dout), jnp.float32) * 0.01
        return w, b

    p = {}
    p["emb"] = jax.random.normal(ks[0], (N_CLASSES, N_CLASSES), jnp.float32)
    p["w1"], p["b1"] = lin(ks[1], dims[0], dims[1])
    p["w2"], p["b2"] = lin(ks[2], dims[1], dims[2])
    p["w3"], p["b3"] = lin(ks[3], dims[2], dims[3])
    p["w4"], p["b4"] = lin(ks[4], dims[3], dims[4])
    p["w5"], p["b5"] = lin(ks[5], dims[4], dims[5])
    # BatchNorm affine params: PyTorch init (weight=1, bias=0), kept as (1, D).
    for name, d in (("2", dims[2]), ("3", dims[3]), ("4", dims[4])):
        p["g" + name] = jnp.ones((1, d), jnp.float32)
        p["be" + name] = jnp.zeros((1, d), jnp.float32)
    return p


# --------------------------------- main --------------------------------------
if __name__ == "__main__":
    key = jax.random.PRNGKey(0)
    kp, kz, kl = jax.random.split(key, 3)

    # Batch large enough to amortize the weight stream / fill MXU rows; the
    # model itself is tiny so this is still small data.
    B = 256
    params = init_params(kp)
    z = jax.random.normal(kz, (B, LATENT_DIM), jnp.float32)
    labels = jax.random.randint(kl, (B,), 0, N_CLASSES, jnp.int32)

    # One-time weight prep (per weight update), outside the per-call path.
    prep = jax.tree_util.tree_map(jax.block_until_ready,
                                  prepare_generator_params(params))

    img = generator_forward(z, labels, prep)
    img = jax.block_until_ready(img)

    ref = generator_reference(z, labels, params)
    # bf16 weights/activations/output (f32 accumulation & BN stats) vs f32
    # reference -> loosened tolerance.
    np.testing.assert_allclose(np.asarray(img, dtype=np.float32),
                               np.asarray(ref, dtype=np.float32),
                               rtol=5e-2, atol=5e-2)
    assert img.shape == (B, *IMG_SHAPE)
    print("KERNEL_OK")
</pallas_src>

<mosaic_0001>
module attributes {stable_mosaic.version = 11 : i64} {
  func.func @generator_kernel(%arg0: memref<256x40xbf16, #tpu.memory_space<vmem>>, %arg1: memref<40x128xbf16, #tpu.memory_space<vmem>>, %arg2: memref<1x128xf32, #tpu.memory_space<vmem>>, %arg3: memref<128x256xbf16, #tpu.memory_space<vmem>>, %arg4: memref<1x256xf32, #tpu.memory_space<vmem>>, %arg5: memref<1x256xf32, #tpu.memory_space<vmem>>, %arg6: memref<256x512xbf16, #tpu.memory_space<vmem>>, %arg7: memref<1x512xf32, #tpu.memory_space<vmem>>, %arg8: memref<1x512xf32, #tpu.memory_space<vmem>>, %arg9: memref<512x1024xbf16, #tpu.memory_space<any>>, %arg10: memref<1x1024xf32, #tpu.memory_space<vmem>>, %arg11: memref<1x1024xf32, #tpu.memory_space<vmem>>, %arg12: memref<1024x128xbf16, #tpu.memory_space<any>>, %arg13: memref<1x128xf32, #tpu.memory_space<vmem>>, %arg14: memref<256x128xbf16, #tpu.memory_space<vmem>>, %arg15: memref<512x1024xbf16, #tpu.memory_space<vmem>>, %arg16: memref<1024x128xbf16, #tpu.memory_space<vmem>>, %arg17: memref<2x!tpu.dma_semaphore, #tpu.memory_space<semaphore_mem>>) attributes {dimension_semantics = [], scalar_prefetch = 0 : i64, scratch_operands = 3 : i64, tpu.core_type = #tpu.core_type<tc>} {
    %c0_i32 = arith.constant 0 : i32
    %0 = tpu.memref_slice %arg17[%c0_i32] : memref<2x!tpu.dma_semaphore, #tpu.memory_space<semaphore_mem>> -> memref<1x!tpu.dma_semaphore, #tpu.memory_space<semaphore_mem>>
    %1 = tpu.memref_squeeze %0 : memref<1x!tpu.dma_semaphore, #tpu.memory_space<semaphore_mem>> -> memref<!tpu.dma_semaphore, #tpu.memory_space<semaphore_mem>>
    tpu.enqueue_dma source(%arg9 : memref<512x1024xbf16, #tpu.memory_space<any>>) target(%arg15 : memref<512x1024xbf16, #tpu.memory_space<vmem>>) target_semaphore(%1 : memref<!tpu.dma_semaphore, #tpu.memory_space<semaphore_mem>>)
    %c1_i32 = arith.constant 1 : i32
    %2 = tpu.memref_slice %arg17[%c1_i32] : memref<2x!tpu.dma_semaphore, #tpu.memory_space<semaphore_mem>> -> memref<1x!tpu.dma_semaphore, #tpu.memory_space<semaphore_mem>>
    %3 = tpu.memref_squeeze %2 : memref<1x!tpu.dma_semaphore, #tpu.memory_space<semaphore_mem>> -> memref<!tpu.dma_semaphore, #tpu.memory_space<semaphore_mem>>
    tpu.enqueue_dma source(%arg12 : memref<1024x128xbf16, #tpu.memory_space<any>>) target(%arg16 : memref<1024x128xbf16, #tpu.memory_space<vmem>>) target_semaphore(%3 : memref<!tpu.dma_semaphore, #tpu.memory_space<semaphore_mem>>)
    %c0 = arith.constant 0 : index
    %c0_0 = arith.constant 0 : index
    %4 = vector.load %arg0[%c0, %c0_0] : memref<256x40xbf16, #tpu.memory_space<vmem>>, vector<256x40xbf16>
    %c0_1 = arith.constant 0 : index
    %c0_2 = arith.constant 0 : index
    %5 = vector.load %arg1[%c0_1, %c0_2] : memref<40x128xbf16, #tpu.memory_space<vmem>>, vector<40x128xbf16>
    %cst = arith.constant dense<0.000000e+00> : vector<256x128xf32>
    %6 = tpu.matmul %4, %5, %cst {dimension_numbers = #tpu.dot_dimension_numbers<[1], [0], [0], [1], [0, 0, 1, 1], [], []>} : vector<256x40xbf16>, vector<40x128xbf16>, vector<256x128xf32> -> vector<256x128xf32>
    %c0_3 = arith.constant 0 : index
    %c0_4 = arith.constant 0 : index
    %7 = vector.load %arg2[%c0_3, %c0_4] : memref<1x128xf32, #tpu.memory_space<vmem>>, vector<1x128xf32>
    %8 = vector.broadcast %7 : vector<1x128xf32> to vector<256x128xf32>
    %9 = arith.addf %6, %8 : vector<256x128xf32>
    %cst_5 = arith.constant 2.000000e-01 : f32
    %10 = vector.broadcast %cst_5 : f32 to vector<256x128xf32>
    %11 = arith.mulf %10, %9 : vector<256x128xf32>
    %12 = arith.maximumf %9, %11 : vector<256x128xf32>
    %13 = arith.truncf %12 : vector<256x128xf32> to vector<256x128xbf16>
    %c0_6 = arith.constant 0 : index
    %c0_7 = arith.constant 0 : index
    %14 = vector.load %arg3[%c0_6, %c0_7] : memref<128x256xbf16, #tpu.memory_space<vmem>>, vector<128x256xbf16>
    %c0_8 = arith.constant 0 : index
    %c0_9 = arith.constant 0 : index
    %15 = vector.load %arg4[%c0_8, %c0_9] : memref<1x256xf32, #tpu.memory_space<vmem>>, vector<1x256xf32>
    %c0_10 = arith.constant 0 : index
    %c0_11 = arith.constant 0 : index
    %16 = vector.load %arg5[%c0_10, %c0_11] : memref<1x256xf32, #tpu.memory_space<vmem>>, vector<1x256xf32>
    %cst_12 = arith.constant dense<0.000000e+00> : vector<256x256xf32>
    %17 = tpu.matmul %13, %14, %cst_12 {dimension_numbers = #tpu.dot_dimension_numbers<[1], [0], [0], [1], [0, 0, 1, 1], [], []>} : vector<256x128xbf16>, vector<128x256xbf16>, vector<256x256xf32> -> vector<256x256xf32>
    %cst_13 = arith.constant dense<0.000000e+00> : vector<256xf32>
    %18 = vector.multi_reduction <add>, %17, %cst_13 [0] : vector<256x256xf32> to vector<256xf32>
    %19 = vector.shape_cast %18 : vector<256xf32> to vector<1x256xf32>
    %cst_14 = arith.constant 2.560000e+02 : f32
    %20 = vector.broadcast %cst_14 : f32 to vector<1x256xf32>
    %21 = arith.divf %19, %20 : vector<1x256xf32>
    %22 = arith.mulf %17, %17 : vector<256x256xf32>
    %cst_15 = arith.constant dense<0.000000e+00> : vector<256xf32>
    %23 = vector.multi_reduction <add>, %22, %cst_15 [0] : vector<256x256xf32> to vector<256xf32>
    %24 = vector.shape_cast %23 : vector<256xf32> to vector<1x256xf32>
    %cst_16 = arith.constant 2.560000e+02 : f32
    %25 = vector.broadcast %cst_16 : f32 to vector<1x256xf32>
    %26 = arith.divf %24, %25 : vector<1x256xf32>
    %27 = arith.mulf %21, %21 : vector<1x256xf32>
    %28 = arith.subf %26, %27 : vector<1x256xf32>
    %cst_17 = arith.constant 8.000000e-01 : f32
    %29 = vector.broadcast %cst_17 : f32 to vector<1x256xf32>
    %30 = arith.addf %28, %29 : vector<1x256xf32>
    %31 = math.rsqrt %30 : vector<1x256xf32>
    %32 = arith.mulf %31, %15 : vector<1x256xf32>
    %33 = arith.mulf %21, %32 : vector<1x256xf32>
    %34 = arith.subf %16, %33 : vector<1x256xf32>
    %35 = vector.broadcast %32 : vector<1x256xf32> to vector<256x256xf32>
    %36 = arith.mulf %17, %35 : vector<256x256xf32>
    %37 = vector.broadcast %34 : vector<1x256xf32> to vector<256x256xf32>
    %38 = arith.addf %36, %37 : vector<256x256xf32>
    %cst_18 = arith.constant 2.000000e-01 : f32
    %39 = vector.broadcast %cst_18 : f32 to vector<256x256xf32>
    %40 = arith.mulf %39, %38 : vector<256x256xf32>
    %41 = arith.maximumf %38, %40 : vector<256x256xf32>
    %42 = arith.truncf %41 : vector<256x256xf32> to vector<256x256xbf16>
    %c0_19 = arith.constant 0 : index
    %c0_20 = arith.constant 0 : index
    %43 = vector.load %arg6[%c0_19, %c0_20] : memref<256x512xbf16, #tpu.memory_space<vmem>>, vector<256x512xbf16>
    %c0_21 = arith.constant 0 : index
    %c0_22 = arith.constant 0 : index
    %44 = vector.load %arg7[%c0_21, %c0_22] : memref<1x512xf32, #tpu.memory_space<vmem>>, vector<1x512xf32>
    %c0_23 = arith.constant 0 : index
    %c0_24 = arith.constant 0 : index
    %45 = vector.load %arg8[%c0_23, %c0_24] : memref<1x512xf32, #tpu.memory_space<vmem>>, vector<1x512xf32>
    %cst_25 = arith.constant dense<0.000000e+00> : vector<256x512xf32>
    %46 = tpu.matmul %42, %43, %cst_25 {dimension_numbers = #tpu.dot_dimension_numbers<[1], [0], [0], [1], [0, 0, 1, 1], [], []>} : vector<256x256xbf16>, vector<256x512xbf16>, vector<256x512xf32> -> vector<256x512xf32>
    %cst_26 = arith.constant dense<0.000000e+00> : vector<512xf32>
    %47 = vector.multi_reduction <add>, %46, %cst_26 [0] : vector<256x512xf32> to vector<512xf32>
    %48 = vector.shape_cast %47 : vector<512xf32> to vector<1x512xf32>
    %cst_27 = arith.constant 2.560000e+02 : f32
    %49 = vector.broadcast %cst_27 : f32 to vector<1x512xf32>
    %50 = arith.divf %48, %49 : vector<1x512xf32>
    %51 = arith.mulf %46, %46 : vector<256x512xf32>
    %cst_28 = arith.constant dense<0.000000e+00> : vector<512xf32>
    %52 = vector.multi_reduction <add>, %51, %cst_28 [0] : vector<256x512xf32> to vector<512xf32>
    %53 = vector.shape_cast %52 : vector<512xf32> to vector<1x512xf32>
    %cst_29 = arith.constant 2.560000e+02 : f32
    %54 = vector.broadcast %cst_29 : f32 to vector<1x512xf32>
    %55 = arith.divf %53, %54 : vector<1x512xf32>
    %56 = arith.mulf %50, %50 : vector<1x512xf32>
    %57 = arith.subf %55, %56 : vector<1x512xf32>
    %cst_30 = arith.constant 8.000000e-01 : f32
    %58 = vector.broadcast %cst_30 : f32 to vector<1x512xf32>
    %59 = arith.addf %57, %58 : vector<1x512xf32>
    %60 = math.rsqrt %59 : vector<1x512xf32>
    %61 = arith.mulf %60, %44 : vector<1x512xf32>
    %62 = arith.mulf %50, %61 : vector<1x512xf32>
    %63 = arith.subf %45, %62 : vector<1x512xf32>
    %64 = vector.broadcast %61 : vector<1x512xf32> to vector<256x512xf32>
    %65 = arith.mulf %46, %64 : vector<256x512xf32>
    %66 = vector.broadcast %63 : vector<1x512xf32> to vector<256x512xf32>
    %67 = arith.addf %65, %66 : vector<256x512xf32>
    %cst_31 = arith.constant 2.000000e-01 : f32
    %68 = vector.broadcast %cst_31 : f32 to vector<256x512xf32>
    %69 = arith.mulf %68, %67 : vector<256x512xf32>
    %70 = arith.maximumf %67, %69 : vector<256x512xf32>
    %71 = arith.truncf %70 : vector<256x512xf32> to vector<256x512xbf16>
    %c0_i32_32 = arith.constant 0 : i32
    %72 = tpu.memref_slice %arg17[%c0_i32_32] : memref<2x!tpu.dma_semaphore, #tpu.memory_space<semaphore_mem>> -> memref<1x!tpu.dma_semaphore, #tpu.memory_space<semaphore_mem>>
    %73 = tpu.memref_squeeze %72 : memref<1x!tpu.dma_semaphore, #tpu.memory_space<semaphore_mem>> -> memref<!tpu.dma_semaphore, #tpu.memory_space<semaphore_mem>>
    tpu.wait_dma2 semaphore(%73 : memref<!tpu.dma_semaphore, #tpu.memory_space<semaphore_mem>>) src(%arg9 : memref<512x1024xbf16, #tpu.memory_space<any>>) dst(%arg15 : memref<512x1024xbf16, #tpu.memory_space<vmem>>)
    %c0_33 = arith.constant 0 : index
    %c0_34 = arith.constant 0 : index
    %74 = vector.load %arg15[%c0_33, %c0_34] : memref<512x1024xbf16, #tpu.memory_space<vmem>>, vector<512x1024xbf16>
    %c0_35 = arith.constant 0 : index
    %c0_36 = arith.constant 0 : index
    %75 = vector.load %arg10[%c0_35, %c0_36] : memref<1x1024xf32, #tpu.memory_space<vmem>>, vector<1x1024xf32>
    %c0_37 = arith.constant 0 : index
    %c0_38 = arith.constant 0 : index
    %76 = vector.load %arg11[%c0_37, %c0_38] : memref<1x1024xf32, #tpu.memory_space<vmem>>, vector<1x1024xf32>
    %cst_39 = arith.constant dense<0.000000e+00> : vector<256x1024xf32>
    %77 = tpu.matmul %71, %74, %cst_39 {dimension_numbers = #tpu.dot_dimension_numbers<[1], [0], [0], [1], [0, 0, 1, 1], [], []>} : vector<256x512xbf16>, vector<512x1024xbf16>, vector<256x1024xf32> -> vector<256x1024xf32>
    %cst_40 = arith.constant dense<0.000000e+00> : vector<1024xf32>
    %78 = vector.multi_reduction <add>, %77, %cst_40 [0] : vector<256x1024xf32> to vector<1024xf32>
    %79 = vector.shape_cast %78 : vector<1024xf32> to vector<1x1024xf32>
    %cst_41 = arith.constant 2.560000e+02 : f32
    %80 = vector.broadcast %cst_41 : f32 to vector<1x1024xf32>
    %81 = arith.divf %79, %80 : vector<1x1024xf32>
    %82 = arith.mulf %77, %77 : vector<256x1024xf32>
    %cst_42 = arith.constant dense<0.000000e+00> : vector<1024xf32>
    %83 = vector.multi_reduction <add>, %82, %cst_42 [0] : vector<256x1024xf32> to vector<1024xf32>
    %84 = vector.shape_cast %83 : vector<1024xf32> to vector<1x1024xf32>
    %cst_43 = arith.constant 2.560000e+02 : f32
    %85 = vector.broadcast %cst_43 : f32 to vector<1x1024xf32>
    %86 = arith.divf %84, %85 : vector<1x1024xf32>
    %87 = arith.mulf %81, %81 : vector<1x1024xf32>
    %88 = arith.subf %86, %87 : vector<1x1024xf32>
    %cst_44 = arith.constant 8.000000e-01 : f32
    %89 = vector.broadcast %cst_44 : f32 to vector<1x1024xf32>
    %90 = arith.addf %88, %89 : vector<1x1024xf32>
    %91 = math.rsqrt %90 : vector<1x1024xf32>
    %92 = arith.mulf %91, %75 : vector<1x1024xf32>
    %93 = arith.mulf %81, %92 : vector<1x1024xf32>
    %94 = arith.subf %76, %93 : vector<1x1024xf32>
    %95 = vector.broadcast %92 : vector<1x1024xf32> to vector<256x1024xf32>
    %96 = arith.mulf %77, %95 : vector<256x1024xf32>
    %97 = vector.broadcast %94 : vector<1x1024xf32> to vector<256x1024xf32>
    %98 = arith.addf %96, %97 : vector<256x1024xf32>
    %cst_45 = arith.constant 2.000000e-01 : f32
    %99 = vector.broadcast %cst_45 : f32 to vector<256x1024xf32>
    %100 = arith.mulf %99, %98 : vector<256x1024xf32>
    %101 = arith.maximumf %98, %100 : vector<256x1024xf32>
    %102 = arith.truncf %101 : vector<256x1024xf32> to vector<256x1024xbf16>
    %c1_i32_46 = arith.constant 1 : i32
    %103 = tpu.memref_slice %arg17[%c1_i32_46] : memref<2x!tpu.dma_semaphore, #tpu.memory_space<semaphore_mem>> -> memref<1x!tpu.dma_semaphore, #tpu.memory_space<semaphore_mem>>
    %104 = tpu.memref_squeeze %103 : memref<1x!tpu.dma_semaphore, #tpu.memory_space<semaphore_mem>> -> memref<!tpu.dma_semaphore, #tpu.memory_space<semaphore_mem>>
    tpu.wait_dma2 semaphore(%104 : memref<!tpu.dma_semaphore, #tpu.memory_space<semaphore_mem>>) src(%arg12 : memref<1024x128xbf16, #tpu.memory_space<any>>) dst(%arg16 : memref<1024x128xbf16, #tpu.memory_space<vmem>>)
    %c0_47 = arith.constant 0 : index
    %c0_48 = arith.constant 0 : index
    %105 = vector.load %arg16[%c0_47, %c0_48] : memref<1024x128xbf16, #tpu.memory_space<vmem>>, vector<1024x128xbf16>
    %cst_49 = arith.constant dense<0.000000e+00> : vector<256x128xf32>
    %106 = tpu.matmul %102, %105, %cst_49 {dimension_numbers = #tpu.dot_dimension_numbers<[1], [0], [0], [1], [0, 0, 1, 1], [], []>} : vector<256x1024xbf16>, vector<1024x128xbf16>, vector<256x128xf32> -> vector<256x128xf32>
    %c0_50 = arith.constant 0 : index
    %c0_51 = arith.constant 0 : index
    %107 = vector.load %arg13[%c0_50, %c0_51] : memref<1x128xf32, #tpu.memory_space<vmem>>, vector<1x128xf32>
    %108 = vector.broadcast %107 : vector<1x128xf32> to vector<256x128xf32>
    %109 = arith.addf %106, %108 : vector<256x128xf32>
    %110 = math.tanh %109 : vector<256x128xf32>
    %111 = arith.truncf %110 : vector<256x128xf32> to vector<256x128xbf16>
    %c0_52 = arith.constant 0 : index
    %c0_53 = arith.constant 0 : index
    %112 = vector.load %arg14[%c0_52, %c0_53] : memref<256x128xbf16, #tpu.memory_space<vmem>>, vector<256x128xbf16>
    tpu.vector_store %arg14[%c0_52, %c0_53], %111 {strides = array<i32>} : memref<256x128xbf16, #tpu.memory_space<vmem>>, vector<256x128xbf16>,
    return
  }
}

</mosaic_0001>

<llo_original>
// kernel: tpu_custom_call.1
$region0: #{tpu_custom_call.1}
  #allocation0 [shape = 'u32[]', space=smem, size = 0x4, offset = 0x4, fixed_abs, tag = 'smem constant byte address 0x4 - core index']
  #allocation1 [shape = 'u32[72,128]{1,0:T(1,128)}', space=vmem, size = 0x9000, scoped, tag = 'internal scratch']
  #allocation2 [shape = 'bf16[512,1024]{1,0:T(8,128)(2,1)}', space=vmem, size = 0x100000, scoped, tag = 'scratch operand']
  #allocation3 [shape = 'bf16[1024,128]{1,0:T(8,128)(2,1)}', space=vmem, size = 0x40000, scoped, tag = 'scratch operand']
  #allocation4 [shape = 's32[2]{0}', space=sflag, size = 0x8, scoped, tag = 'scratch operand']
  #allocation12 [shape = 's32[]', space=sflag, size = 0x4, offset = 0, fixed_abs, tag = 'sflag constant byte address 0x0 - dummy sync flag']
  #allocation13 [shape = 's32[]', space=sflag, size = 0x4, offset = 0, fixed_abs, tag = 'sflag constant byte address 0x0 - dummy sync flag']
  #allocation14 [shape = 'u32[]', space=smem, size = 0x4, offset = 0x44, fixed_abs, tag = 'smem constant byte address 0x44 - assertion arg 0']
  #allocation15 [shape = 'u32[]', space=smem, size = 0x4, offset = 0x48, fixed_abs, tag = 'smem constant byte address 0x48 - assertion arg 1']
  #allocation16 [shape = 's32[]', space=sflag, size = 0x4, offset = 0, fixed_abs, tag = 'sflag constant byte address 0x0 - dummy sync flag']
  #allocation17 [shape = 's32[]', space=sflag, size = 0x4, offset = 0, fixed_abs, tag = 'sflag constant byte address 0x0 - dummy sync flag']
  %s0 = inlined_call_operand.vmem [shape: bf16[256,40], index: 0, kind: input, shape index: {}]
  %s1 = inlined_call_operand.vmem [shape: bf16[40,128], index: 1, kind: input, shape index: {}]
  %s2 = inlined_call_operand.vmem [shape: f32[1,128], index: 2, kind: input, shape index: {}]
  %s3 = inlined_call_operand.vmem [shape: bf16[128,256], index: 3, kind: input, shape index: {}]
  %s4 = inlined_call_operand.hbm [shape: f32[1,256], index: 4, kind: input, shape index: {}]
  %s5 = inlined_call_operand.hbm [shape: f32[1,256], index: 5, kind: input, shape index: {}]
  %s6 = inlined_call_operand.hbm [shape: bf16[256,512], index: 6, kind: input, shape index: {}]
  %s7 = inlined_call_operand.vmem [shape: f32[1,512], index: 7, kind: input, shape index: {}]
  %s8 = inlined_call_operand.vmem [shape: f32[1,512], index: 8, kind: input, shape index: {}]
  %s9 = inlined_call_operand.hbm [shape: bf16[512,1024], index: 9, kind: input, shape index: {}]
  %s10 = inlined_call_operand.vmem [shape: f32[1,1024], index: 10, kind: input, shape index: {}]
  %s11 = inlined_call_operand.vmem [shape: f32[1,1024], index: 11, kind: input, shape index: {}]
  %s12 = inlined_call_operand.hbm [shape: bf16[1024,128], index: 12, kind: input, shape index: {}]
  %s13 = inlined_call_operand.vmem [shape: f32[1,128], index: 13, kind: input, shape index: {}]
  %s14 = inlined_call_operand.hbm [shape: bf16[256,128], index: 14, kind: output, shape index: {}]
  %s15 = sld [smem:[#allocation0]]
  $region78: #{tpu_custom_call.1} parent=0
    _
  %s17 = ssub.s32 1, %s15
  %s18 = scalar_select 0, %s17, %s15
  $region1: #{tpu_custom_call.1} parent=0
    #allocation5 [shape = 'u8[1024]{0}', space=vmem, size = 0x400, scoped, tag = 'input window, operand 4, single buffered']
    #allocation6 [shape = 's32[1]{0}', space=sflag, size = 0x4, scoped, tag = 'scoped memory for tpu_custom_call.1']
    #allocation7 [shape = 's32[1]{0}', space=sflag, size = 0x4, scoped, tag = 'scoped memory for tpu_custom_call.1']
    #allocation8 [shape = 'u8[1024]{0}', space=vmem, size = 0x400, scoped, tag = 'input window, operand 5, single buffered']
    #allocation9 [shape = 's32[1]{0}', space=sflag, size = 0x4, scoped, tag = 'scoped memory for tpu_custom_call.1']
    #allocation10 [shape = 'u8[262144]{0}', space=vmem, size = 0x40000, scoped, tag = 'input window, operand 6, single buffered']
    #allocation11 [shape = 'u8[65536]{0}', space=vmem, size = 0x10000, scoped, tag = 'output window, operand 0, single buffered']
    %19 = vsyncpa [#allocation6], 0
    %20 = vsyncpa [#allocation9], 0
    %21 = vsyncpa [#allocation7], 0
    // Predicated region
    $region2: #{tpu_custom_call.1} parent=1 // pred_check
      _
    $region3: #{tpu_custom_call.1} parent=1 // pred_check_branch
      %23 = sbr.rel (0) target = $region5
    $region4: #{tpu_custom_call.1} parent=1 // pred_region
      _
    $region5: #{tpu_custom_call.1} parent=1 // pred_fallthru
      _
    // Predicated region
    $region6: #{tpu_custom_call.1} parent=1 // pred_check
      _
    $region7: #{tpu_custom_call.1} parent=1 // pred_check_branch
      %25 = sbr.rel (0) target = $region9
    $region8: #{tpu_custom_call.1} parent=1 // pred_region
      _
    $region9: #{tpu_custom_call.1} parent=1 // pred_fallthru
      _
    // Predicated region
    $region10: #{tpu_custom_call.1} parent=1 // pred_check
      _
    $region11: #{tpu_custom_call.1} parent=1 // pred_check_branch
      %27 = sbr.rel (0) target = $region13
    $region12: #{tpu_custom_call.1} parent=1 // pred_region
      _
    $region13: #{tpu_custom_call.1} parent=1 // pred_fallthru
      _
    // Predicated region
    $region14: #{tpu_custom_call.1} parent=1 // pred_check
      _
    $region15: #{tpu_custom_call.1} parent=1 // pred_check_branch
      %29 = sbr.rel (0) target = $region17
    $region16: #{tpu_custom_call.1} parent=1 // pred_region
      _
    $region17: #{tpu_custom_call.1} parent=1 // pred_fallthru
      _
    // Predicated region
    $region18: #{tpu_custom_call.1} parent=1 // pred_check
      _
    $region19: #{tpu_custom_call.1} parent=1 // pred_check_branch
      %31 = sbr.rel (0) target = $region21
    $region20: #{tpu_custom_call.1} parent=1 // pred_region
      %33 = vsyncadd [#allocation6], 0
      %s35 = sshll.u32 %s4, 4
      %s36 = int_to_ptr.hbm [resolvable:$true] %s35
      %s37 = sshll.u32 [#allocation5], 4
      %s38 = int_to_ptr.vmem [resolvable:$true] %s37
      %40 = dma.hbm_to_vmem [thread:$0]  %s36, 32, %s38, [#allocation6]
    $region21: #{tpu_custom_call.1} parent=1 // pred_fallthru
      _
    // Predicated region
    $region22: #{tpu_custom_call.1} parent=1 // pred_check
      _
    $region23: #{tpu_custom_call.1} parent=1 // pred_check_branch
      %42 = sbr.rel (0) target = $region25
    $region24: #{tpu_custom_call.1} parent=1 // pred_region
      %44 = vsyncadd [#allocation9], 0
      %s46 = sshll.u32 %s5, 4
      %s47 = int_to_ptr.hbm [resolvable:$true] %s46
      %s48 = sshll.u32 [#allocation8], 4
      %s49 = int_to_ptr.vmem [resolvable:$true] %s48
      %51 = dma.hbm_to_vmem [thread:$0]  %s47, 32, %s49, [#allocation9]
    $region25: #{tpu_custom_call.1} parent=1 // pred_fallthru
      _
    // Predicated region
    $region26: #{tpu_custom_call.1} parent=1 // pred_check
      _
    $region27: #{tpu_custom_call.1} parent=1 // pred_check_branch
      %53 = sbr.rel (0) target = $region29
    $region28: #{tpu_custom_call.1} parent=1 // pred_region
      %55 = vsyncadd [#allocation9], 0
      %s56 = sshll.u32 %s6, 4
      %s57 = int_to_ptr.hbm [resolvable:$true] %s56
      %s58 = sshll.u32 [#allocation10], 4
      %s59 = int_to_ptr.vmem [resolvable:$true] %s58
      %64 = dma.hbm_to_vmem [thread:$0]  %s57, 8192, %s59, [#allocation9], 256, 256, 16
    $region29: #{tpu_custom_call.1} parent=1 // pred_fallthru
      _
    // Predicated region
    $region30: #{tpu_custom_call.1} parent=1 // pred_check
      _
    $region31: #{tpu_custom_call.1} parent=1 // pred_check_branch
      %66 = sbr.rel (0) target = $region33
    $region32: #{tpu_custom_call.1} parent=1 // pred_region
      _
    $region33: #{tpu_custom_call.1} parent=1 // pred_fallthru
      _
    // Predicated region
    $region34: #{tpu_custom_call.1} parent=1 // pred_check
      _
    $region35: #{tpu_custom_call.1} parent=1 // pred_check_branch
      %68 = sbr.rel (0) target = $region37
    $region36: #{tpu_custom_call.1} parent=1 // pred_region
      _
    $region37: #{tpu_custom_call.1} parent=1 // pred_fallthru
      _
    // Predicated region
    $region38: #{tpu_custom_call.1} parent=1 // pred_check
      _
    $region39: #{tpu_custom_call.1} parent=1 // pred_check_branch
      %70 = sbr.rel (0) target = $region41
    $region40: #{tpu_custom_call.1} parent=1 // pred_region
      _
    $region41: #{tpu_custom_call.1} parent=1 // pred_fallthru
      _
    // Predicated region
    $region42: #{tpu_custom_call.1} parent=1 // pred_check
      _
    $region43: #{tpu_custom_call.1} parent=1 // pred_check_branch
      %72 = sbr.rel (0) target = $region45
    $region44: #{tpu_custom_call.1} parent=1 // pred_region
      _
    $region45: #{tpu_custom_call.1} parent=1 // pred_fallthru
      _
    // Predicated region
    $region46: #{tpu_custom_call.1} parent=1 // pred_check
      _
    $region47: #{tpu_custom_call.1} parent=1 // pred_check_branch
      %74 = sbr.rel (0) target = $region49
    $region48: #{tpu_custom_call.1} parent=1 // pred_region
      _
    $region49: #{tpu_custom_call.1} parent=1 // pred_fallthru
      _
    // Predicated region
    $region50: #{tpu_custom_call.1} parent=1 // pred_check
      _
    $region51: #{tpu_custom_call.1} parent=1 // pred_check_branch
      %76 = sbr.rel (0) target = $region53
    $region52: #{tpu_custom_call.1} parent=1 // pred_region
      %78 = dma.done [#allocation6], 32
    $region53: #{tpu_custom_call.1} parent=1 // pred_fallthru
      _
    // Predicated region
    $region54: #{tpu_custom_call.1} parent=1 // pred_check
      _
    $region55: #{tpu_custom_call.1} parent=1 // pred_check_branch
      %80 = sbr.rel (0) target = $region57
    $region56: #{tpu_custom_call.1} parent=1 // pred_region
      %82 = dma.done [#allocation9], 32
    $region57: #{tpu_custom_call.1} parent=1 // pred_fallthru
      _
    // Predicated region
    $region58: #{tpu_custom_call.1} parent=1 // pred_check
      _
    $region59: #{tpu_custom_call.1} parent=1 // pred_check_branch
      %84 = sbr.rel (0) target = $region61
    $region60: #{tpu_custom_call.1} parent=1 // pred_region
      %86 = dma.done [#allocation9], 8192
    $region61: #{tpu_custom_call.1} parent=1 // pred_fallthru
      _
    // Predicated region
    $region62: #{tpu_custom_call.1} parent=1 // pred_check
      _
    $region63: #{tpu_custom_call.1} parent=1 // pred_check_branch
      %89 = sbr.rel target = $region65
    $region64: #{tpu_custom_call.1} parent=1 // pred_region
      %90 = sst [smem:[#allocation14]] [#allocation13]
      %91 = sst [smem:[#allocation15]] [#allocation12]
    $region65: #{tpu_custom_call.1} parent=1 // pred_fallthru
      _
    %93 = shalt.err (0)
    %s95 = sshll.u32 %s9, 4
    %s96 = int_to_ptr.hbm [resolvable:$true] %s95
    %s97 = sshll.u32 [#allocation2], 4
    %s98 = int_to_ptr.vmem [resolvable:$true] %s97
    %100 = dma.hbm_to_vmem [thread:$0]  %s96, 32768, %s98, [#allocation4]
    %s101 = scalar_lea.sflag [#allocation4], 1
    // Predicated region
    $region66: #{tpu_custom_call.1} parent=1 // pred_check
      _
    $region67: #{tpu_custom_call.1} parent=1 // pred_check_branch
      %103 = sbr.rel target = $region69
    $region68: #{tpu_custom_call.1} parent=1 // pred_region
      %104 = sst [smem:[#allocation14]] [#allocation17]
      %105 = sst [smem:[#allocation15]] [#allocation16]
    $region69: #{tpu_custom_call.1} parent=1 // pred_fallthru
      _
    %107 = shalt.err (0)
    %s109 = sshll.u32 %s12, 4
    %s110 = int_to_ptr.hbm [resolvable:$true] %s109
    %s111 = sshll.u32 [#allocation3], 4
    %s112 = int_to_ptr.vmem [resolvable:$true] %s111
    %114 = dma.hbm_to_vmem [thread:$0]  %s110, 8192, %s112, %s101
    %v115 = vld [vmem:[%s0] sm:$0xf]
    %v116 = vld [vmem:[%s0 + $0x4] sm:$0xf]
    %v117 = vld [vmem:[%s0 + $0x8] sm:$0xf]
    %v118 = vld [vmem:[%s0 + $0xc] sm:$0xf]
    %v119 = vld [vmem:[%s0 + $0x10] sm:$0xf]
    %v120 = vld [vmem:[%s0 + $0x14] sm:$0xf]
    %v121 = vld [vmem:[%s0 + $0x18] sm:$0xf]
    %v122 = vld [vmem:[%s0 + $0x1c] sm:$0xf]
    %v123 = vld [vmem:[%s0 + $0x20] sm:$0xf]
    %v124 = vld [vmem:[%s0 + $0x24] sm:$0xf]
    %v125 = vld [vmem:[%s0 + $0x28] sm:$0xf]
    %v126 = vld [vmem:[%s0 + $0x2c] sm:$0xf]
    %v127 = vld [vmem:[%s0 + $0x30] sm:$0xf]
    %v128 = vld [vmem:[%s0 + $0x34] sm:$0xf]
    %v129 = vld [vmem:[%s0 + $0x38] sm:$0xf]
    %v130 = vld [vmem:[%s0 + $0x3c] sm:$0xf]
    %v131 = vld [vmem:[%s0 + $0x40] sm:$0xf]
    %v132 = vld [vmem:[%s0 + $0x44] sm:$0xf]
    %v133 = vld [vmem:[%s0 + $0x48] sm:$0xf]
    %v134 = vld [vmem:[%s0 + $0x4c] sm:$0xf]
    %v135 = vld [vmem:[%s0 + $0x50] sm:$0xf]
    %v136 = vld [vmem:[%s0 + $0x54] sm:$0xf]
    %v137 = vld [vmem:[%s0 + $0x58] sm:$0xf]
    %v138 = vld [vmem:[%s0 + $0x5c] sm:$0xf]
    %v139 = vld [vmem:[%s0 + $0x60] sm:$0xf]
    %v140 = vld [vmem:[%s0 + $0x64] sm:$0xf]
    %v141 = vld [vmem:[%s0 + $0x68] sm:$0xf]
    %v142 = vld [vmem:[%s0 + $0x6c] sm:$0xf]
    %v143 = vld [vmem:[%s0 + $0x70] sm:$0xf]
    %v144 = vld [vmem:[%s0 + $0x74] sm:$0xf]
    %v145 = vld [vmem:[%s0 + $0x78] sm:$0xf]
    %v146 = vld [vmem:[%s0 + $0x7c] sm:$0xf]
    %v147 = vld [vmem:[%s1] sm:$0xf]
    %v148 = vld [vmem:[%s1 + $0x4] sm:$0xf]
    %v149 = vld [vmem:[%s1 + $0x8] sm:$0xf]
    %v150 = vld [vmem:[%s1 + $0xc] sm:$0xf]
    %v151 = vld [vmem:[%s1 + $0x10] sm:$0xf]
    %v152 = vld [vmem:[%s2] sm:$0x1]
    %v154 = vperm.slane %v152, 0
    %v188 = vunpack.c.l.b16 %v115
    %v189 = vunpack.c.l.b16 %v116
    %v190 = vunpack.c.l.b16 %v117
    %v191 = vunpack.c.l.b16 %v118
    %v192 = vunpack.c.l.b16 %v119
    %v193 = vunpack.c.l.b16 %v120
    %v194 = vunpack.c.l.b16 %v121
    %v195 = vunpack.c.l.b16 %v122
    %v196 = vunpack.c.l.b16 %v123
    %v197 = vunpack.c.l.b16 %v124
    %v198 = vunpack.c.l.b16 %v125
    %v199 = vunpack.c.l.b16 %v126
    %v200 = vunpack.c.l.b16 %v127
    %v201 = vunpack.c.l.b16 %v128
    %v202 = vunpack.c.l.b16 %v129
    %v203 = vunpack.c.l.b16 %v130
    %v204 = vunpack.c.l.b16 %v131
    %v205 = vunpack.c.l.b16 %v132
    %v206 = vunpack.c.l.b16 %v133
    %v207 = vunpack.c.l.b16 %v134
    %v208 = vunpack.c.l.b16 %v135
    %v209 = vunpack.c.l.b16 %v136
    %v210 = vunpack.c.l.b16 %v137
    %v211 = vunpack.c.l.b16 %v138
    %v212 = vunpack.c.l.b16 %v139
    %v213 = vunpack.c.l.b16 %v140
    %v214 = vunpack.c.l.b16 %v141
    %v215 = vunpack.c.l.b16 %v142
    %v216 = vunpack.c.l.b16 %v143
    %v217 = vunpack.c.l.b16 %v144
    %v218 = vunpack.c.l.b16 %v145
    %v219 = vunpack.c.l.b16 %v146
    %v220 = vpack.c.b16 %v189, %v188
    %v221 = vpack.c.b16 %v191, %v190
    %v222 = vpack.c.b16 %v193, %v192
    %v223 = vpack.c.b16 %v195, %v194
    %v224 = vpack.c.b16 %v197, %v196
    %v225 = vpack.c.b16 %v199, %v198
    %v226 = vpack.c.b16 %v201, %v200
    %v227 = vpack.c.b16 %v203, %v202
    %v228 = vpack.c.b16 %v205, %v204
    %v229 = vpack.c.b16 %v207, %v206
    %v230 = vpack.c.b16 %v209, %v208
    %v231 = vpack.c.b16 %v211, %v210
    %v232 = vpack.c.b16 %v213, %v212
    %v233 = vpack.c.b16 %v215, %v214
    %v234 = vpack.c.b16 %v217, %v216
    %v235 = vpack.c.b16 %v219, %v218
    %v241 = vunpack.c.l.b16 %v147
    %v242 = vunpack.c.l.b16 %v148
    %v243 = vunpack.c.l.b16 %v149
    %v244 = vunpack.c.l.b16 %v150
    %v245 = vunpack.c.l.b16 %v151
    %v246 = vpack.c.b16 %v242, %v241
    %v247 = vpack.c.b16 %v244, %v243
    %v248 = vpack.c.b16 %v245, %v245
    %vm251 = vcmask 326656
    %v253 = vsel %vm251, %v220, 0
    %v256 = vsel %vm251, %v221, 0
    %v259 = vsel %vm251, %v222, 0
    %v262 = vsel %vm251, %v223, 0
    %v265 = vsel %vm251, %v224, 0
    %v268 = vsel %vm251, %v225, 0
    %v271 = vsel %vm251, %v226, 0
    %v274 = vsel %vm251, %v227, 0
    %v277 = vsel %vm251, %v228, 0
    %v280 = vsel %vm251, %v229, 0
    %v283 = vsel %vm251, %v230, 0
    %v286 = vsel %vm251, %v231, 0
    %v289 = vsel %vm251, %v232, 0
    %v292 = vsel %vm251, %v233, 0
    %v295 = vsel %vm251, %v234, 0
    %v298 = vsel %vm251, %v235, 0
    %vm300 = vcmask 1043456
    %v302 = vsel %vm300, %v248, 0
    %304 = vmatpush.bf16.msra.mxu0 0
    %305 = vmatpush.bf16.msra.mxu0 0
    %306 = vmatpush.bf16.msra.mxu0 0
    %307 = vmatpush.bf16.msra.mxu0 0
    %308 = vmatpush.bf16.msra.mxu0 0
    %309 = vmatpush.bf16.msra.mxu0 %v302
    %310 = vmatpush.bf16.msra.mxu0 %v247
    %311 = vmatpush.bf16.msra.mxu0 %v246
    %312 = vmatmul.bf16.gmra.mxu0 %v253
    %v313 = vpop.f32.mrf.mxu0
    %v314 = vadd.f32 %v154, %v313
    %v315 = vpop.f32.mrf.mxu0
    %v316 = vadd.f32 %v154, %v315
    %317 = vmatmul.bf16.gmra.mxu0 %v256
    %v318 = vpop.f32.mrf.mxu0
    %v319 = vadd.f32 %v154, %v318
    %v320 = vpop.f32.mrf.mxu0
    %v321 = vadd.f32 %v154, %v320
    %322 = vmatmul.bf16.gmra.mxu0 %v259
    %v323 = vpop.f32.mrf.mxu0
    %v324 = vadd.f32 %v154, %v323
    %v325 = vpop.f32.mrf.mxu0
    %v326 = vadd.f32 %v154, %v325
    %327 = vmatmul.bf16.gmra.mxu0 %v262
    %v328 = vpop.f32.mrf.mxu0
    %v329 = vadd.f32 %v154, %v328
    %v330 = vpop.f32.mrf.mxu0
    %v331 = vadd.f32 %v154, %v330
    %332 = vmatmul.bf16.gmra.mxu0 %v265
    %v333 = vpop.f32.mrf.mxu0
    %v334 = vadd.f32 %v154, %v333
    %v335 = vpop.f32.mrf.mxu0
    %v336 = vadd.f32 %v154, %v335
    %337 = vmatmul.bf16.gmra.mxu0 %v268
    %v338 = vpop.f32.mrf.mxu0
    %v339 = vadd.f32 %v154, %v338
    %v340 = vpop.f32.mrf.mxu0
    %v341 = vadd.f32 %v154, %v340
    %342 = vmatmul.bf16.gmra.mxu0 %v271
    %v343 = vpop.f32.mrf.mxu0
    %v344 = vadd.f32 %v154, %v343
    %v345 = vpop.f32.mrf.mxu0
    %v346 = vadd.f32 %v154, %v345
    %347 = vmatmul.bf16.gmra.mxu0 %v274
    %v348 = vpop.f32.mrf.mxu0
    %v349 = vadd.f32 %v154, %v348
    %v350 = vpop.f32.mrf.mxu0
    %v351 = vadd.f32 %v154, %v350
    %352 = vmatmul.bf16.gmra.mxu0 %v277
    %v353 = vpop.f32.mrf.mxu0
    %v354 = vadd.f32 %v154, %v353
    %v355 = vpop.f32.mrf.mxu0
    %v356 = vadd.f32 %v154, %v355
    %357 = vmatmul.bf16.gmra.mxu0 %v280
    %v358 = vpop.f32.mrf.mxu0
    %v359 = vadd.f32 %v154, %v358
    %v360 = vpop.f32.mrf.mxu0
    %v361 = vadd.f32 %v154, %v360
    %362 = vmatmul.bf16.gmra.mxu0 %v283
    %v363 = vpop.f32.mrf.mxu0
    %v364 = vadd.f32 %v154, %v363
    %v365 = vpop.f32.mrf.mxu0
    %v366 = vadd.f32 %v154, %v365
    %367 = vmatmul.bf16.gmra.mxu0 %v286
    %v368 = vpop.f32.mrf.mxu0
    %v369 = vadd.f32 %v154, %v368
    %v370 = vpop.f32.mrf.mxu0
    %v371 = vadd.f32 %v154, %v370
    %372 = vmatmul.bf16.gmra.mxu0 %v289
    %v373 = vpop.f32.mrf.mxu0
    %v374 = vadd.f32 %v154, %v373
    %v375 = vpop.f32.mrf.mxu0
    %v376 = vadd.f32 %v154, %v375
    %377 = vmatmul.bf16.gmra.mxu0 %v292
    %v378 = vpop.f32.mrf.mxu0
    %v379 = vadd.f32 %v154, %v378
    %v380 = vpop.f32.mrf.mxu0
    %v381 = vadd.f32 %v154, %v380
    %382 = vmatmul.bf16.gmra.mxu0 %v295
    %v383 = vpop.f32.mrf.mxu0
    %v384 = vadd.f32 %v154, %v383
    %v385 = vpop.f32.mrf.mxu0
    %v386 = vadd.f32 %v154, %v385
    %387 = vmatmul.bf16.gmra.mxu0 %v298
    %v388 = vpop.f32.mrf.mxu0
    %v389 = vadd.f32 %v154, %v388
    %v390 = vpop.f32.mrf.mxu0
    %v391 = vadd.f32 %v154, %v390
    %392 = vdwg.mxu0
    %v393 = vmul.f32 %v314, 0.2
    %v394 = vmul.f32 %v316, 0.2
    %v395 = vmul.f32 %v319, 0.2
    %v396 = vmul.f32 %v321, 0.2
    %v397 = vmul.f32 %v324, 0.2
    %v398 = vmul.f32 %v326, 0.2
    %v399 = vmul.f32 %v329, 0.2
    %v400 = vmul.f32 %v331, 0.2
    %v401 = vmul.f32 %v334, 0.2
    %v402 = vmul.f32 %v336, 0.2
    %v403 = vmul.f32 %v339, 0.2
    %v404 = vmul.f32 %v341, 0.2
    %v405 = vmul.f32 %v344, 0.2
    %v406 = vmul.f32 %v346, 0.2
    %v407 = vmul.f32 %v349, 0.2
    %v408 = vmul.f32 %v351, 0.2
    %v409 = vmul.f32 %v354, 0.2
    %v410 = vmul.f32 %v356, 0.2
    %v411 = vmul.f32 %v359, 0.2
    %v412 = vmul.f32 %v361, 0.2
    %v413 = vmul.f32 %v364, 0.2
    %v414 = vmul.f32 %v366, 0.2
    %v415 = vmul.f32 %v369, 0.2
    %v416 = vmul.f32 %v371, 0.2
    %v417 = vmul.f32 %v374, 0.2
    %v418 = vmul.f32 %v376, 0.2
    %v419 = vmul.f32 %v379, 0.2
    %v420 = vmul.f32 %v381, 0.2
    %v421 = vmul.f32 %v384, 0.2
    %v422 = vmul.f32 %v386, 0.2
    %v423 = vmul.f32 %v389, 0.2
    %v424 = vmul.f32 %v391, 0.2
    %v425 = vmax.f32 %v314, %v393
    %v426 = vmax.f32 %v316, %v394
    %v427 = vmax.f32 %v319, %v395
    %v428 = vmax.f32 %v321, %v396
    %v429 = vmax.f32 %v324, %v397
    %v430 = vmax.f32 %v326, %v398
    %v431 = vmax.f32 %v329, %v399
    %v432 = vmax.f32 %v331, %v400
    %v433 = vmax.f32 %v334, %v401
    %v434 = vmax.f32 %v336, %v402
    %v435 = vmax.f32 %v339, %v403
    %v436 = vmax.f32 %v341, %v404
    %v437 = vmax.f32 %v344, %v405
    %v438 = vmax.f32 %v346, %v406
    %v439 = vmax.f32 %v349, %v407
    %v440 = vmax.f32 %v351, %v408
    %v441 = vmax.f32 %v354, %v409
    %v442 = vmax.f32 %v356, %v410
    %v443 = vmax.f32 %v359, %v411
    %v444 = vmax.f32 %v361, %v412
    %v445 = vmax.f32 %v364, %v413
    %v446 = vmax.f32 %v366, %v414
    %v447 = vmax.f32 %v369, %v415
    %v448 = vmax.f32 %v371, %v416
    %v449 = vmax.f32 %v374, %v417
    %v450 = vmax.f32 %v376, %v418
    %v451 = vmax.f32 %v379, %v419
    %v452 = vmax.f32 %v381, %v420
    %v453 = vmax.f32 %v384, %v421
    %v454 = vmax.f32 %v386, %v422
    %v455 = vmax.f32 %v389, %v423
    %v456 = vmax.f32 %v391, %v424
    %v457 = vpack.c.bf16 %v426, %v425
    %v458 = vpack.c.bf16 %v428, %v427
    %v459 = vpack.c.bf16 %v430, %v429
    %v460 = vpack.c.bf16 %v432, %v431
    %v461 = vpack.c.bf16 %v434, %v433
    %v462 = vpack.c.bf16 %v436, %v435
    %v463 = vpack.c.bf16 %v438, %v437
    %v464 = vpack.c.bf16 %v440, %v439
    %v465 = vpack.c.bf16 %v442, %v441
    %v466 = vpack.c.bf16 %v444, %v443
    %v467 = vpack.c.bf16 %v446, %v445
    %v468 = vpack.c.bf16 %v448, %v447
    %v469 = vpack.c.bf16 %v450, %v449
    %v470 = vpack.c.bf16 %v452, %v451
    %v471 = vpack.c.bf16 %v454, %v453
    %v472 = vpack.c.bf16 %v456, %v455
    %v473 = vld [vmem:[%s3] sm:$0xff]
    %v474 = vld [vmem:[%s3 + $0x8] sm:$0xff]
    %v475 = vld [vmem:[%s3 + $0x10] sm:$0xff]
    %v476 = vld [vmem:[%s3 + $0x18] sm:$0xff]
    %v477 = vld [vmem:[%s3 + $0x20] sm:$0xff]
    %v478 = vld [vmem:[%s3 + $0x28] sm:$0xff]
    %v479 = vld [vmem:[%s3 + $0x30] sm:$0xff]
    %v480 = vld [vmem:[%s3 + $0x38] sm:$0xff]
    %v481 = vld [vmem:[%s3 + $0x40] sm:$0xff]
    %v482 = vld [vmem:[%s3 + $0x48] sm:$0xff]
    %v483 = vld [vmem:[%s3 + $0x50] sm:$0xff]
    %v484 = vld [vmem:[%s3 + $0x58] sm:$0xff]
    %v485 = vld [vmem:[%s3 + $0x60] sm:$0xff]
    %v486 = vld [vmem:[%s3 + $0x68] sm:$0xff]
    %v487 = vld [vmem:[%s3 + $0x70] sm:$0xff]
    %v488 = vld [vmem:[%s3 + $0x78] sm:$0xff]
    %v489 = vld [vmem:[#allocation5] sm:$0x3]
    %v490 = vld [vmem:[#allocation8] sm:$0x3]
    %v507 = vunpack.c.l.b16 %v473
    %v508 = vunpack.c.h.b16 %v473
    %v509 = vunpack.c.l.b16 %v474
    %v510 = vunpack.c.h.b16 %v474
    %v511 = vunpack.c.l.b16 %v475
    %v512 = vunpack.c.h.b16 %v475
    %v513 = vunpack.c.l.b16 %v476
    %v514 = vunpack.c.h.b16 %v476
    %v515 = vunpack.c.l.b16 %v477
    %v516 = vunpack.c.h.b16 %v477
    %v517 = vunpack.c.l.b16 %v478
    %v518 = vunpack.c.h.b16 %v478
    %v519 = vunpack.c.l.b16 %v479
    %v520 = vunpack.c.h.b16 %v479
    %v521 = vunpack.c.l.b16 %v480
    %v522 = vunpack.c.h.b16 %v480
    %v523 = vunpack.c.l.b16 %v481
    %v524 = vunpack.c.h.b16 %v481
    %v525 = vunpack.c.l.b16 %v482
    %v526 = vunpack.c.h.b16 %v482
    %v527 = vunpack.c.l.b16 %v483
    %v528 = vunpack.c.h.b16 %v483
    %v529 = vunpack.c.l.b16 %v484
    %v530 = vunpack.c.h.b16 %v484
    %v531 = vunpack.c.l.b16 %v485
    %v532 = vunpack.c.h.b16 %v485
    %v533 = vunpack.c.l.b16 %v486
    %v534 = vunpack.c.h.b16 %v486
    %v535 = vunpack.c.l.b16 %v487
    %v536 = vunpack.c.h.b16 %v487
    %v537 = vunpack.c.l.b16 %v488
    %v538 = vunpack.c.h.b16 %v488
    %v539 = vpack.c.b16 %v509, %v507
    %v540 = vpack.c.b16 %v510, %v508
    %v541 = vpack.c.b16 %v513, %v511
    %v542 = vpack.c.b16 %v514, %v512
    %v543 = vpack.c.b16 %v517, %v515
    %v544 = vpack.c.b16 %v518, %v516
    %v545 = vpack.c.b16 %v521, %v519
    %v546 = vpack.c.b16 %v522, %v520
    %v547 = vpack.c.b16 %v525, %v523
    %v548 = vpack.c.b16 %v526, %v524
    %v549 = vpack.c.b16 %v529, %v527
    %v550 = vpack.c.b16 %v530, %v528
    %v551 = vpack.c.b16 %v533, %v531
    %v552 = vpack.c.b16 %v534, %v532
    %v553 = vpack.c.b16 %v537, %v535
    %v554 = vpack.c.b16 %v538, %v536
    %571 = vmatpush.bf16.msra.mxu0 %v553
    %572 = vmatpush.bf16.msra.mxu0 %v551
    %573 = vmatpush.bf16.msra.mxu0 %v549
    %574 = vmatpush.bf16.msra.mxu0 %v547
    %575 = vmatpush.bf16.msra.mxu0 %v545
    %576 = vmatpush.bf16.msra.mxu0 %v543
    %577 = vmatpush.bf16.msra.mxu0 %v541
    %578 = vmatpush.bf16.msra.mxu0 %v539
    %579 = vmatmul.bf16.gmra.mxu0 %v457
    %v580 = vpop.f32.mrf.mxu0
    %v581 = vadd.f32 0.0, %v580
    %v582 = vpop.f32.mrf.mxu0
    %v583 = vadd.f32 0.0, %v582
    %584 = vmatmul.bf16.gmra.mxu0 %v458
    %v585 = vpop.f32.mrf.mxu0
    %v586 = vadd.f32 0.0, %v585
    %v587 = vpop.f32.mrf.mxu0
    %v588 = vadd.f32 0.0, %v587
    %589 = vmatmul.bf16.gmra.mxu0 %v459
    %v590 = vpop.f32.mrf.mxu0
    %v591 = vadd.f32 0.0, %v590
    %v592 = vpop.f32.mrf.mxu0
    %v593 = vadd.f32 0.0, %v592
    %594 = vmatmul.bf16.gmra.mxu0 %v460
    %v595 = vpop.f32.mrf.mxu0
    %v596 = vadd.f32 0.0, %v595
    %v597 = vpop.f32.mrf.mxu0
    %v598 = vadd.f32 0.0, %v597
    %599 = vmatmul.bf16.gmra.mxu0 %v461
    %v600 = vpop.f32.mrf.mxu0
    %v601 = vadd.f32 0.0, %v600
    %v602 = vpop.f32.mrf.mxu0
    %v603 = vadd.f32 0.0, %v602
    %604 = vmatmul.bf16.gmra.mxu0 %v462
    %v605 = vpop.f32.mrf.mxu0
    %v606 = vadd.f32 0.0, %v605
    %v607 = vpop.f32.mrf.mxu0
    %v608 = vadd.f32 0.0, %v607
    %609 = vmatmul.bf16.gmra.mxu0 %v463
    %v610 = vpop.f32.mrf.mxu0
    %v611 = vadd.f32 0.0, %v610
    %v612 = vpop.f32.mrf.mxu0
    %v613 = vadd.f32 0.0, %v612
    %614 = vmatmul.bf16.gmra.mxu0 %v464
    %v615 = vpop.f32.mrf.mxu0
    %v616 = vadd.f32 0.0, %v615
    %v617 = vpop.f32.mrf.mxu0
    %v618 = vadd.f32 0.0, %v617
    %619 = vmatmul.bf16.gmra.mxu0 %v465
    %v620 = vpop.f32.mrf.mxu0
    %v621 = vadd.f32 0.0, %v620
    %v622 = vpop.f32.mrf.mxu0
    %v623 = vadd.f32 0.0, %v622
    %624 = vmatmul.bf16.gmra.mxu0 %v466
    %v625 = vpop.f32.mrf.mxu0
    %v626 = vadd.f32 0.0, %v625
    %v627 = vpop.f32.mrf.mxu0
    %v628 = vadd.f32 0.0, %v627
    %629 = vmatmul.bf16.gmra.mxu0 %v467
    %v630 = vpop.f32.mrf.mxu0
    %v631 = vadd.f32 0.0, %v630
    %v632 = vpop.f32.mrf.mxu0
    %v633 = vadd.f32 0.0, %v632
    %634 = vmatmul.bf16.gmra.mxu0 %v468
    %v635 = vpop.f32.mrf.mxu0
    %v636 = vadd.f32 0.0, %v635
    %v637 = vpop.f32.mrf.mxu0
    %v638 = vadd.f32 0.0, %v637
    %639 = vmatmul.bf16.gmra.mxu0 %v469
    %v640 = vpop.f32.mrf.mxu0
    %v641 = vadd.f32 0.0, %v640
    %v642 = vpop.f32.mrf.mxu0
    %v643 = vadd.f32 0.0, %v642
    %644 = vmatmul.bf16.gmra.mxu0 %v470
    %v645 = vpop.f32.mrf.mxu0
    %v646 = vadd.f32 0.0, %v645
    %v647 = vpop.f32.mrf.mxu0
    %v648 = vadd.f32 0.0, %v647
    %649 = vmatmul.bf16.gmra.mxu0 %v471
    %v650 = vpop.f32.mrf.mxu0
    %v651 = vadd.f32 0.0, %v650
    %v652 = vpop.f32.mrf.mxu0
    %v653 = vadd.f32 0.0, %v652
    %654 = vmatmul.bf16.gmra.mxu0 %v472
    %v655 = vpop.f32.mrf.mxu0
    %v656 = vadd.f32 0.0, %v655
    %v657 = vpop.f32.mrf.mxu0
    %v658 = vadd.f32 0.0, %v657
    %659 = vdwg.mxu0
    %660 = vmatpush.bf16.msra.mxu0 %v554
    %661 = vmatpush.bf16.msra.mxu0 %v552
    %662 = vmatpush.bf16.msra.mxu0 %v550
    %663 = vmatpush.bf16.msra.mxu0 %v548
    %664 = vmatpush.bf16.msra.mxu0 %v546
    %665 = vmatpush.bf16.msra.mxu0 %v544
    %666 = vmatpush.bf16.msra.mxu0 %v542
    %667 = vmatpush.bf16.msra.mxu0 %v540
    %668 = vmatmul.bf16.gmra.mxu0 %v457
    %v669 = vpop.f32.mrf.mxu0
    %v670 = vadd.f32 0.0, %v669
    %v671 = vpop.f32.mrf.mxu0
    %v672 = vadd.f32 0.0, %v671
    %673 = vmatmul.bf16.gmra.mxu0 %v458
    %v674 = vpop.f32.mrf.mxu0
    %v675 = vadd.f32 0.0, %v674
    %v676 = vpop.f32.mrf.mxu0
    %v677 = vadd.f32 0.0, %v676
    %678 = vmatmul.bf16.gmra.mxu0 %v459
    %v679 = vpop.f32.mrf.mxu0
    %v680 = vadd.f32 0.0, %v679
    %v681 = vpop.f32.mrf.mxu0
    %v682 = vadd.f32 0.0, %v681
    %683 = vmatmul.bf16.gmra.mxu0 %v460
    %v684 = vpop.f32.mrf.mxu0
    %v685 = vadd.f32 0.0, %v684
    %v686 = vpop.f32.mrf.mxu0
    %v687 = vadd.f32 0.0, %v686
    %688 = vmatmul.bf16.gmra.mxu0 %v461
    %v689 = vpop.f32.mrf.mxu0
    %v690 = vadd.f32 0.0, %v689
    %v691 = vpop.f32.mrf.mxu0
    %v692 = vadd.f32 0.0, %v691
    %693 = vmatmul.bf16.gmra.mxu0 %v462
    %v694 = vpop.f32.mrf.mxu0
    %v695 = vadd.f32 0.0, %v694
    %v696 = vpop.f32.mrf.mxu0
    %v697 = vadd.f32 0.0, %v696
    %698 = vmatmul.bf16.gmra.mxu0 %v463
    %v699 = vpop.f32.mrf.mxu0
    %v700 = vadd.f32 0.0, %v699
    %v701 = vpop.f32.mrf.mxu0
    %v702 = vadd.f32 0.0, %v701
    %703 = vmatmul.bf16.gmra.mxu0 %v464
    %v704 = vpop.f32.mrf.mxu0
    %v705 = vadd.f32 0.0, %v704
    %v706 = vpop.f32.mrf.mxu0
    %v707 = vadd.f32 0.0, %v706
    %708 = vmatmul.bf16.gmra.mxu0 %v465
    %v709 = vpop.f32.mrf.mxu0
    %v710 = vadd.f32 0.0, %v709
    %v711 = vpop.f32.mrf.mxu0
    %v712 = vadd.f32 0.0, %v711
    %713 = vmatmul.bf16.gmra.mxu0 %v466
    %v714 = vpop.f32.mrf.mxu0
    %v715 = vadd.f32 0.0, %v714
    %v716 = vpop.f32.mrf.mxu0
    %v717 = vadd.f32 0.0, %v716
    %718 = vmatmul.bf16.gmra.mxu0 %v467
    %v719 = vpop.f32.mrf.mxu0
    %v720 = vadd.f32 0.0, %v719
    %v721 = vpop.f32.mrf.mxu0
    %v722 = vadd.f32 0.0, %v721
    %723 = vmatmul.bf16.gmra.mxu0 %v468
    %v724 = vpop.f32.mrf.mxu0
    %v725 = vadd.f32 0.0, %v724
    %v726 = vpop.f32.mrf.mxu0
    %v727 = vadd.f32 0.0, %v726
    %728 = vmatmul.bf16.gmra.mxu0 %v469
    %v729 = vpop.f32.mrf.mxu0
    %v730 = vadd.f32 0.0, %v729
    %v731 = vpop.f32.mrf.mxu0
    %v732 = vadd.f32 0.0, %v731
    %733 = vmatmul.bf16.gmra.mxu0 %v470
    %v734 = vpop.f32.mrf.mxu0
    %v735 = vadd.f32 0.0, %v734
    %v736 = vpop.f32.mrf.mxu0
    %v737 = vadd.f32 0.0, %v736
    %738 = vmatmul.bf16.gmra.mxu0 %v471
    %v739 = vpop.f32.mrf.mxu0
    %v740 = vadd.f32 0.0, %v739
    %v741 = vpop.f32.mrf.mxu0
    %v742 = vadd.f32 0.0, %v741
    %743 = vmatmul.bf16.gmra.mxu0 %v472
    %v744 = vpop.f32.mrf.mxu0
    %v745 = vadd.f32 0.0, %v744
    %v746 = vpop.f32.mrf.mxu0
    %v747 = vadd.f32 0.0, %v746
    %748 = vdwg.mxu0
    %v749 = vadd.f32 %v581, %v583
    %v750 = vadd.f32 %v749, %v586
    %v751 = vadd.f32 %v750, %v588
    %v752 = vadd.f32 %v751, %v591
    %v753 = vadd.f32 %v752, %v593
    %v754 = vadd.f32 %v753, %v596
    %v755 = vadd.f32 %v754, %v598
    %v756 = vadd.f32 %v755, %v601
    %v757 = vadd.f32 %v756, %v603
    %v758 = vadd.f32 %v757, %v606
    %v759 = vadd.f32 %v758, %v608
    %v760 = vadd.f32 %v759, %v611
    %v761 = vadd.f32 %v760, %v613
    %v762 = vadd.f32 %v761, %v616
    %v763 = vadd.f32 %v762, %v618
    %v764 = vadd.f32 %v763, %v621
    %v765 = vadd.f32 %v764, %v623
    %v766 = vadd.f32 %v765, %v626
    %v767 = vadd.f32 %v766, %v628
    %v768 = vadd.f32 %v767, %v631
    %v769 = vadd.f32 %v768, %v633
    %v770 = vadd.f32 %v769, %v636
    %v771 = vadd.f32 %v770, %v638
    %v772 = vadd.f32 %v771, %v641
    %v773 = vadd.f32 %v772, %v643
    %v774 = vadd.f32 %v773, %v646
    %v775 = vadd.f32 %v774, %v648
    %v776 = vadd.f32 %v775, %v651
    %v777 = vadd.f32 %v776, %v653
    %v778 = vadd.f32 %v777, %v656
    %v779 = vadd.f32 %v778, %v658
    %v780 = vrot.slane %v779, 4
    %v781 = vadd.f32 %v779, %v780
    %v782 = vrot.slane %v781, 2
    %v783 = vadd.f32 %v781, %v782
    %v784 = vrot.slane %v783, 1
    %v785 = vadd.f32 %v783, %v784
    %v786 = vadd.f32 %v670, %v672
    %v787 = vadd.f32 %v786, %v675
    %v788 = vadd.f32 %v787, %v677
    %v789 = vadd.f32 %v788, %v680
    %v790 = vadd.f32 %v789, %v682
    %v791 = vadd.f32 %v790, %v685
    %v792 = vadd.f32 %v791, %v687
    %v793 = vadd.f32 %v792, %v690
    %v794 = vadd.f32 %v793, %v692
    %v795 = vadd.f32 %v794, %v695
    %v796 = vadd.f32 %v795, %v697
    %v797 = vadd.f32 %v796, %v700
    %v798 = vadd.f32 %v797, %v702
    %v799 = vadd.f32 %v798, %v705
    %v800 = vadd.f32 %v799, %v707
    %v801 = vadd.f32 %v800, %v710
    %v802 = vadd.f32 %v801, %v712
    %v803 = vadd.f32 %v802, %v715
    %v804 = vadd.f32 %v803, %v717
    %v805 = vadd.f32 %v804, %v720
    %v806 = vadd.f32 %v805, %v722
    %v807 = vadd.f32 %v806, %v725
    %v808 = vadd.f32 %v807, %v727
    %v809 = vadd.f32 %v808, %v730
    %v810 = vadd.f32 %v809, %v732
    %v811 = vadd.f32 %v810, %v735
    %v812 = vadd.f32 %v811, %v737
    %v813 = vadd.f32 %v812, %v740
    %v814 = vadd.f32 %v813, %v742
    %v815 = vadd.f32 %v814, %v745
    %v816 = vadd.f32 %v815, %v747
    %v817 = vrot.slane %v816, 4
    %v818 = vadd.f32 %v816, %v817
    %v819 = vrot.slane %v818, 2
    %v820 = vadd.f32 %v818, %v819
    %v821 = vrot.slane %v820, 1
    %v822 = vadd.f32 %v820, %v821
    %v823 = vrcp.pop 256.0
    %v824 = vmul.f32 256.0, %v823
    %v825 = vsub.f32 1.0, %v824
    %v826 = vmul.f32 %v823, %v825
    %v827 = vadd.f32 %v823, %v826
    %vm828 = vweird.f32 %v823
    %v829 = vsel %vm828, %v823, %v827
    %v830 = vmul.f32 %v785, %v829
    %v831 = vmul.f32 %v822, %v829
    %v832 = vmul.f32 %v581, %v581
    %v833 = vmul.f32 %v670, %v670
    %v834 = vmul.f32 %v583, %v583
    %v835 = vmul.f32 %v672, %v672
    %v836 = vmul.f32 %v586, %v586
    %v837 = vmul.f32 %v675, %v675
    %v838 = vmul.f32 %v588, %v588
    %v839 = vmul.f32 %v677, %v677
    %v840 = vmul.f32 %v591, %v591
    %v841 = vmul.f32 %v680, %v680
    %v842 = vmul.f32 %v593, %v593
    %v843 = vmul.f32 %v682, %v682
    %v844 = vmul.f32 %v596, %v596
    %v845 = vmul.f32 %v685, %v685
    %v846 = vmul.f32 %v598, %v598
    %v847 = vmul.f32 %v687, %v687
    %v848 = vmul.f32 %v601, %v601
    %v849 = vmul.f32 %v690, %v690
    %v850 = vmul.f32 %v603, %v603
    %v851 = vmul.f32 %v692, %v692
    %v852 = vmul.f32 %v606, %v606
    %v853 = vmul.f32 %v695, %v695
    %v854 = vmul.f32 %v608, %v608
    %v855 = vmul.f32 %v697, %v697
    %v856 = vmul.f32 %v611, %v611
    %v857 = vmul.f32 %v700, %v700
    %v858 = vmul.f32 %v613, %v613
    %v859 = vmul.f32 %v702, %v702
    %v860 = vmul.f32 %v616, %v616
    %v861 = vmul.f32 %v705, %v705
    %v862 = vmul.f32 %v618, %v618
    %v863 = vmul.f32 %v707, %v707
    %v864 = vmul.f32 %v621, %v621
    %v865 = vmul.f32 %v710, %v710
    %v866 = vmul.f32 %v623, %v623
    %v867 = vmul.f32 %v712, %v712
    %v868 = vmul.f32 %v626, %v626
    %v869 = vmul.f32 %v715, %v715
    %v870 = vmul.f32 %v628, %v628
    %v871 = vmul.f32 %v717, %v717
    %v872 = vmul.f32 %v631, %v631
    %v873 = vmul.f32 %v720, %v720
    %v874 = vmul.f32 %v633, %v633
    %v875 = vmul.f32 %v722, %v722
    %v876 = vmul.f32 %v636, %v636
    %v877 = vmul.f32 %v725, %v725
    %v878 = vmul.f32 %v638, %v638
    %v879 = vmul.f32 %v727, %v727
    %v880 = vmul.f32 %v641, %v641
    %v881 = vmul.f32 %v730, %v730
    %v882 = vmul.f32 %v643, %v643
    %v883 = vmul.f32 %v732, %v732
    %v884 = vmul.f32 %v646, %v646
    %v885 = vmul.f32 %v735, %v735
    %v886 = vmul.f32 %v648, %v648
    %v887 = vmul.f32 %v737, %v737
    %v888 = vmul.f32 %v651, %v651
    %v889 = vmul.f32 %v740, %v740
    %v890 = vmul.f32 %v653, %v653
    %v891 = vmul.f32 %v742, %v742
    %v892 = vmul.f32 %v656, %v656
    %v893 = vmul.f32 %v745, %v745
    %v894 = vmul.f32 %v658, %v658
    %v895 = vmul.f32 %v747, %v747
    %v896 = vadd.f32 %v832, %v834
    %v897 = vadd.f32 %v896, %v836
    %v898 = vadd.f32 %v897, %v838
    %v899 = vadd.f32 %v898, %v840
    %v900 = vadd.f32 %v899, %v842
    %v901 = vadd.f32 %v900, %v844
    %v902 = vadd.f32 %v901, %v846
    %v903 = vadd.f32 %v902, %v848
    %v904 = vadd.f32 %v903, %v850
    %v905 = vadd.f32 %v904, %v852
    %v906 = vadd.f32 %v905, %v854
    %v907 = vadd.f32 %v906, %v856
    %v908 = vadd.f32 %v907, %v858
    %v909 = vadd.f32 %v908, %v860
    %v910 = vadd.f32 %v909, %v862
    %v911 = vadd.f32 %v910, %v864
    %v912 = vadd.f32 %v911, %v866
    %v913 = vadd.f32 %v912, %v868
    %v914 = vadd.f32 %v913, %v870
    %v915 = vadd.f32 %v914, %v872
    %v916 = vadd.f32 %v915, %v874
    %v917 = vadd.f32 %v916, %v876
    %v918 = vadd.f32 %v917, %v878
    %v919 = vadd.f32 %v918, %v880
    %v920 = vadd.f32 %v919, %v882
    %v921 = vadd.f32 %v920, %v884
    %v922 = vadd.f32 %v921, %v886
    %v923 = vadd.f32 %v922, %v888
    %v924 = vadd.f32 %v923, %v890
    %v925 = vadd.f32 %v924, %v892
    %v926 = vadd.f32 %v925, %v894
    %v927 = vrot.slane %v926, 4
    %v928 = vadd.f32 %v926, %v927
    %v929 = vrot.slane %v928, 2
    %v930 = vadd.f32 %v928, %v929
    %v931 = vrot.slane %v930, 1
    %v932 = vadd.f32 %v930, %v931
    %v933 = vadd.f32 %v833, %v835
    %v934 = vadd.f32 %v933, %v837
    %v935 = vadd.f32 %v934, %v839
    %v936 = vadd.f32 %v935, %v841
    %v937 = vadd.f32 %v936, %v843
    %v938 = vadd.f32 %v937, %v845
    %v939 = vadd.f32 %v938, %v847
    %v940 = vadd.f32 %v939, %v849
    %v941 = vadd.f32 %v940, %v851
    %v942 = vadd.f32 %v941, %v853
    %v943 = vadd.f32 %v942, %v855
    %v944 = vadd.f32 %v943, %v857
    %v945 = vadd.f32 %v944, %v859
    %v946 = vadd.f32 %v945, %v861
    %v947 = vadd.f32 %v946, %v863
    %v948 = vadd.f32 %v947, %v865
    %v949 = vadd.f32 %v948, %v867
    %v950 = vadd.f32 %v949, %v869
    %v951 = vadd.f32 %v950, %v871
    %v952 = vadd.f32 %v951, %v873
    %v953 = vadd.f32 %v952, %v875
    %v954 = vadd.f32 %v953, %v877
    %v955 = vadd.f32 %v954, %v879
    %v956 = vadd.f32 %v955, %v881
    %v957 = vadd.f32 %v956, %v883
    %v958 = vadd.f32 %v957, %v885
    %v959 = vadd.f32 %v958, %v887
    %v960 = vadd.f32 %v959, %v889
    %v961 = vadd.f32 %v960, %v891
    %v962 = vadd.f32 %v961, %v893
    %v963 = vadd.f32 %v962, %v895
    %v964 = vrot.slane %v963, 4
    %v965 = vadd.f32 %v963, %v964
    %v966 = vrot.slane %v965, 2
    %v967 = vadd.f32 %v965, %v966
    %v968 = vrot.slane %v967, 1
    %v969 = vadd.f32 %v967, %v968
    %v970 = vmul.f32 %v932, %v829
    %v971 = vmul.f32 %v969, %v829
    %v972 = vmul.f32 %v830, %v830
    %v973 = vmul.f32 %v831, %v831
    %v974 = vsub.f32 %v970, %v972
    %v975 = vsub.f32 %v971, %v973
    %v976 = vadd.f32 %v974, 0.8
    %v977 = vadd.f32 %v975, 0.8
    %v978 = vrsqrt.pop %v976
    %v979 = vmul.f32 %v978, %v976
    %v980 = vmul.f32 %v979, %v978
    %v981 = vmul.f32 0.5, %v980
    %v982 = vsub.f32 1.5, %v981
    %v983 = vmul.f32 %v978, %v982
    %vm984 = vweird.f32 %v976
    %vm985 = vweird.f32 %v978
    %vm986 = vmor %vm984, %vm985
    %v987 = vsel %vm986, %v978, %v983
    %v988 = vrsqrt.pop %v977
    %v989 = vmul.f32 %v988, %v977
    %v990 = vmul.f32 %v989, %v988
    %v991 = vmul.f32 0.5, %v990
    %v992 = vsub.f32 1.5, %v991
    %v993 = vmul.f32 %v988, %v992
    %vm994 = vweird.f32 %v977
    %vm995 = vweird.f32 %v988
    %vm996 = vmor %vm994, %vm995
    %v997 = vsel %vm996, %v988, %v993
    %v999 = vperm.slane %v489, 0
    %v1000 = vperm.slane %v489, 1
    %v1003 = vmul.f32 %v987, %v999
    %v1004 = vmul.f32 %v997, %v1000
    %v1005 = vmul.f32 %v830, %v1003
    %v1006 = vmul.f32 %v831, %v1004
    %v1009 = vrot.slane %v1006, 7
    %vm1010 = vcmask 1040384
    %v1011 = vsel %vm1010, %v1005, %v1009
    %v1013 = vsub.f32 %v490, %v1011
    %v1014 = vperm.slane %v1003, 0
    %v1015 = vperm.slane %v1004, 0
    %v1016 = vmul.f32 %v581, %v1014
    %v1017 = vmul.f32 %v670, %v1015
    %v1018 = vmul.f32 %v583, %v1014
    %v1019 = vmul.f32 %v672, %v1015
    %v1020 = vmul.f32 %v586, %v1014
    %v1021 = vmul.f32 %v675, %v1015
    %v1022 = vmul.f32 %v588, %v1014
    %v1023 = vmul.f32 %v677, %v1015
    %v1024 = vmul.f32 %v591, %v1014
    %v1025 = vmul.f32 %v680, %v1015
    %v1026 = vmul.f32 %v593, %v1014
    %v1027 = vmul.f32 %v682, %v1015
    %v1028 = vmul.f32 %v596, %v1014
    %v1029 = vmul.f32 %v685, %v1015
    %v1030 = vmul.f32 %v598, %v1014
    %v1031 = vmul.f32 %v687, %v1015
    %v1032 = vmul.f32 %v601, %v1014
    %v1033 = vmul.f32 %v690, %v1015
    %v1034 = vmul.f32 %v603, %v1014
    %v1035 = vmul.f32 %v692, %v1015
    %v1036 = vmul.f32 %v606, %v1014
    %v1037 = vmul.f32 %v695, %v1015
    %v1038 = vmul.f32 %v608, %v1014
    %v1039 = vmul.f32 %v697, %v1015
    %v1040 = vmul.f32 %v611, %v1014
    %v1041 = vmul.f32 %v700, %v1015
    %v1042 = vmul.f32 %v613, %v1014
    %v1043 = vmul.f32 %v702, %v1015
    %v1044 = vmul.f32 %v616, %v1014
    %v1045 = vmul.f32 %v705, %v1015
    %v1046 = vmul.f32 %v618, %v1014
    %v1047 = vmul.f32 %v707, %v1015
    %v1048 = vmul.f32 %v621, %v1014
    %v1049 = vmul.f32 %v710, %v1015
    %v1050 = vmul.f32 %v623, %v1014
    %v1051 = vmul.f32 %v712, %v1015
    %v1052 = vmul.f32 %v626, %v1014
    %v1053 = vmul.f32 %v715, %v1015
    %v1054 = vmul.f32 %v628, %v1014
    %v1055 = vmul.f32 %v717, %v1015
    %v1056 = vmul.f32 %v631, %v1014
    %v1057 = vmul.f32 %v720, %v1015
    %v1058 = vmul.f32 %v633, %v1014
    %v1059 = vmul.f32 %v722, %v1015
    %v1060 = vmul.f32 %v636, %v1014
    %v1061 = vmul.f32 %v725, %v1015
    %v1062 = vmul.f32 %v638, %v1014
    %v1063 = vmul.f32 %v727, %v1015
    %v1064 = vmul.f32 %v641, %v1014
    %v1065 = vmul.f32 %v730, %v1015
    %v1066 = vmul.f32 %v643, %v1014
    %v1067 = vmul.f32 %v732, %v1015
    %v1068 = vmul.f32 %v646, %v1014
    %v1069 = vmul.f32 %v735, %v1015
    %v1070 = vmul.f32 %v648, %v1014
    %v1071 = vmul.f32 %v737, %v1015
    %v1072 = vmul.f32 %v651, %v1014
    %v1073 = vmul.f32 %v740, %v1015
    %v1074 = vmul.f32 %v653, %v1014
    %v1075 = vmul.f32 %v742, %v1015
    %v1076 = vmul.f32 %v656, %v1014
    %v1077 = vmul.f32 %v745, %v1015
    %v1078 = vmul.f32 %v658, %v1014
    %v1079 = vmul.f32 %v747, %v1015
    %v1081 = vperm.slane %v1013, 0
    %v1082 = vperm.slane %v1013, 1
    %v1085 = vadd.f32 %v1016, %v1081
    %v1086 = vadd.f32 %v1017, %v1082
    %v1087 = vadd.f32 %v1018, %v1081
    %v1088 = vadd.f32 %v1019, %v1082
    %v1089 = vadd.f32 %v1020, %v1081
    %v1090 = vadd.f32 %v1021, %v1082
    %v1091 = vadd.f32 %v1022, %v1081
    %v1092 = vadd.f32 %v1023, %v1082
    %v1093 = vadd.f32 %v1024, %v1081
    %v1094 = vadd.f32 %v1025, %v1082
    %v1095 = vadd.f32 %v1026, %v1081
    %v1096 = vadd.f32 %v1027, %v1082
    %v1097 = vadd.f32 %v1028, %v1081
    %v1098 = vadd.f32 %v1029, %v1082
    %v1099 = vadd.f32 %v1030, %v1081
    %v1100 = vadd.f32 %v1031, %v1082
    %v1101 = vadd.f32 %v1032, %v1081
    %v1102 = vadd.f32 %v1033, %v1082
    %v1103 = vadd.f32 %v1034, %v1081
    %v1104 = vadd.f32 %v1035, %v1082
    %v1105 = vadd.f32 %v1036, %v1081
    %v1106 = vadd.f32 %v1037, %v1082
    %v1107 = vadd.f32 %v1038, %v1081
    %v1108 = vadd.f32 %v1039, %v1082
    %v1109 = vadd.f32 %v1040, %v1081
    %v1110 = vadd.f32 %v1041, %v1082
    %v1111 = vadd.f32 %v1042, %v1081
    %v1112 = vadd.f32 %v1043, %v1082
    %v1113 = vadd.f32 %v1044, %v1081
    %v1114 = vadd.f32 %v1045, %v1082
    %v1115 = vadd.f32 %v1046, %v1081
    %v1116 = vadd.f32 %v1047, %v1082
    %v1117 = vadd.f32 %v1048, %v1081
    %v1118 = vadd.f32 %v1049, %v1082
    %v1119 = vadd.f32 %v1050, %v1081
    %v1120 = vadd.f32 %v1051, %v1082
    %v1121 = vadd.f32 %v1052, %v1081
    %v1122 = vadd.f32 %v1053, %v1082
    %v1123 = vadd.f32 %v1054, %v1081
    %v1124 = vadd.f32 %v1055, %v1082
    %v1125 = vadd.f32 %v1056, %v1081
    %v1126 = vadd.f32 %v1057, %v1082
    %v1127 = vadd.f32 %v1058, %v1081
    %v1128 = vadd.f32 %v1059, %v1082
    %v1129 = vadd.f32 %v1060, %v1081
    %v1130 = vadd.f32 %v1061, %v1082
    %v1131 = vadd.f32 %v1062, %v1081
    %v1132 = vadd.f32 %v1063, %v1082
    %v1133 = vadd.f32 %v1064, %v1081
    %v1134 = vadd.f32 %v1065, %v1082
    %v1135 = vadd.f32 %v1066, %v1081
    %v1136 = vadd.f32 %v1067, %v1082
    %v1137 = vadd.f32 %v1068, %v1081
    %v1138 = vadd.f32 %v1069, %v1082
    %v1139 = vadd.f32 %v1070, %v1081
    %v1140 = vadd.f32 %v1071, %v1082
    %v1141 = vadd.f32 %v1072, %v1081
    %v1142 = vadd.f32 %v1073, %v1082
    %v1143 = vadd.f32 %v1074, %v1081
    %v1144 = vadd.f32 %v1075, %v1082
    %v1145 = vadd.f32 %v1076, %v1081
    %v1146 = vadd.f32 %v1077, %v1082
    %v1147 = vadd.f32 %v1078, %v1081
    %v1148 = vadd.f32 %v1079, %v1082
    %v1149 = vmul.f32 %v1085, 0.2
    %v1150 = vmul.f32 %v1086, 0.2
    %v1151 = vmul.f32 %v1087, 0.2
    %v1152 = vmul.f32 %v1088, 0.2
    %v1153 = vmul.f32 %v1089, 0.2
    %v1154 = vmul.f32 %v1090, 0.2
    %v1155 = vmul.f32 %v1091, 0.2
    %v1156 = vmul.f32 %v1092, 0.2
    %v1157 = vmul.f32 %v1093, 0.2
    %v1158 = vmul.f32 %v1094, 0.2
    %v1159 = vmul.f32 %v1095, 0.2
    %v1160 = vmul.f32 %v1096, 0.2
    %v1161 = vmul.f32 %v1097, 0.2
    %v1162 = vmul.f32 %v1098, 0.2
    %v1163 = vmul.f32 %v1099, 0.2
    %v1164 = vmul.f32 %v1100, 0.2
    %v1165 = vmul.f32 %v1101, 0.2
    %v1166 = vmul.f32 %v1102, 0.2
    %v1167 = vmul.f32 %v1103, 0.2
    %v1168 = vmul.f32 %v1104, 0.2
    %v1169 = vmul.f32 %v1105, 0.2
    %v1170 = vmul.f32 %v1106, 0.2
    %v1171 = vmul.f32 %v1107, 0.2
    %v1172 = vmul.f32 %v1108, 0.2
    %v1173 = vmul.f32 %v1109, 0.2
    %v1174 = vmul.f32 %v1110, 0.2
    %v1175 = vmul.f32 %v1111, 0.2
    %v1176 = vmul.f32 %v1112, 0.2
    %v1177 = vmul.f32 %v1113, 0.2
    %v1178 = vmul.f32 %v1114, 0.2
    %v1179 = vmul.f32 %v1115, 0.2
    %v1180 = vmul.f32 %v1116, 0.2
    %v1181 = vmul.f32 %v1117, 0.2
    %v1182 = vmul.f32 %v1118, 0.2
    %v1183 = vmul.f32 %v1119, 0.2
    %v1184 = vmul.f32 %v1120, 0.2
    %v1185 = vmul.f32 %v1121, 0.2
    %v1186 = vmul.f32 %v1122, 0.2
    %v1187 = vmul.f32 %v1123, 0.2
    %v1188 = vmul.f32 %v1124, 0.2
    %v1189 = vmul.f32 %v1125, 0.2
    %v1190 = vmul.f32 %v1126, 0.2
    %v1191 = vmul.f32 %v1127, 0.2
    %v1192 = vmul.f32 %v1128, 0.2
    %v1193 = vmul.f32 %v1129, 0.2
    %v1194 = vmul.f32 %v1130, 0.2
    %v1195 = vmul.f32 %v1131, 0.2
    %v1196 = vmul.f32 %v1132, 0.2
    %v1197 = vmul.f32 %v1133, 0.2
    %v1198 = vmul.f32 %v1134, 0.2
    %v1199 = vmul.f32 %v1135, 0.2
    %v1200 = vmul.f32 %v1136, 0.2
    %v1201 = vmul.f32 %v1137, 0.2
    %v1202 = vmul.f32 %v1138, 0.2
    %v1203 = vmul.f32 %v1139, 0.2
    %v1204 = vmul.f32 %v1140, 0.2
    %v1205 = vmul.f32 %v1141, 0.2
    %v1206 = vmul.f32 %v1142, 0.2
    %v1207 = vmul.f32 %v1143, 0.2
    %v1208 = vmul.f32 %v1144, 0.2
    %v1209 = vmul.f32 %v1145, 0.2
    %v1210 = vmul.f32 %v1146, 0.2
    %v1211 = vmul.f32 %v1147, 0.2
    %v1212 = vmul.f32 %v1148, 0.2
    %v1213 = vmax.f32 %v1085, %v1149
    %v1214 = vmax.f32 %v1086, %v1150
    %v1215 = vmax.f32 %v1087, %v1151
    %v1216 = vmax.f32 %v1088, %v1152
    %v1217 = vmax.f32 %v1089, %v1153
    %v1218 = vmax.f32 %v1090, %v1154
    %v1219 = vmax.f32 %v1091, %v1155
    %v1220 = vmax.f32 %v1092, %v1156
    %v1221 = vmax.f32 %v1093, %v1157
    %v1222 = vmax.f32 %v1094, %v1158
    %v1223 = vmax.f32 %v1095, %v1159
    %v1224 = vmax.f32 %v1096, %v1160
    %v1225 = vmax.f32 %v1097, %v1161
    %v1226 = vmax.f32 %v1098, %v1162
    %v1227 = vmax.f32 %v1099, %v1163
    %v1228 = vmax.f32 %v1100, %v1164
    %v1229 = vmax.f32 %v1101, %v1165
    %v1230 = vmax.f32 %v1102, %v1166
    %v1231 = vmax.f32 %v1103, %v1167
    %v1232 = vmax.f32 %v1104, %v1168
    %v1233 = vmax.f32 %v1105, %v1169
    %v1234 = vmax.f32 %v1106, %v1170
    %v1235 = vmax.f32 %v1107, %v1171
    %v1236 = vmax.f32 %v1108, %v1172
    %v1237 = vmax.f32 %v1109, %v1173
    %v1238 = vmax.f32 %v1110, %v1174
    %v1239 = vmax.f32 %v1111, %v1175
    %v1240 = vmax.f32 %v1112, %v1176
    %v1241 = vmax.f32 %v1113, %v1177
    %v1242 = vmax.f32 %v1114, %v1178
    %v1243 = vmax.f32 %v1115, %v1179
    %v1244 = vmax.f32 %v1116, %v1180
    %v1245 = vmax.f32 %v1117, %v1181
    %v1246 = vmax.f32 %v1118, %v1182
    %v1247 = vmax.f32 %v1119, %v1183
    %v1248 = vmax.f32 %v1120, %v1184
    %v1249 = vmax.f32 %v1121, %v1185
    %v1250 = vmax.f32 %v1122, %v1186
    %v1251 = vmax.f32 %v1123, %v1187
    %v1252 = vmax.f32 %v1124, %v1188
    %v1253 = vmax.f32 %v1125, %v1189
    %v1254 = vmax.f32 %v1126, %v1190
    %v1255 = vmax.f32 %v1127, %v1191
    %v1256 = vmax.f32 %v1128, %v1192
    %v1257 = vmax.f32 %v1129, %v1193
    %v1258 = vmax.f32 %v1130, %v1194
    %v1259 = vmax.f32 %v1131, %v1195
    %v1260 = vmax.f32 %v1132, %v1196
    %v1261 = vmax.f32 %v1133, %v1197
    %v1262 = vmax.f32 %v1134, %v1198
    %v1263 = vmax.f32 %v1135, %v1199
    %v1264 = vmax.f32 %v1136, %v1200
    %v1265 = vmax.f32 %v1137, %v1201
    %v1266 = vmax.f32 %v1138, %v1202
    %v1267 = vmax.f32 %v1139, %v1203
    %v1268 = vmax.f32 %v1140, %v1204
    %v1269 = vmax.f32 %v1141, %v1205
    %v1270 = vmax.f32 %v1142, %v1206
    %v1271 = vmax.f32 %v1143, %v1207
    %v1272 = vmax.f32 %v1144, %v1208
    %v1273 = vmax.f32 %v1145, %v1209
    %v1274 = vmax.f32 %v1146, %v1210
    %v1275 = vmax.f32 %v1147, %v1211
    %v1276 = vmax.f32 %v1148, %v1212
    %v1277 = vpack.c.bf16 %v1215, %v1213
    %v1278 = vpack.c.bf16 %v1216, %v1214
    %v1279 = vpack.c.bf16 %v1219, %v1217
    %v1280 = vpack.c.bf16 %v1220, %v1218
    %v1281 = vpack.c.bf16 %v1223, %v1221
    %v1282 = vpack.c.bf16 %v1224, %v1222
    %v1283 = vpack.c.bf16 %v1227, %v1225
    %v1284 = vpack.c.bf16 %v1228, %v1226
    %v1285 = vpack.c.bf16 %v1231, %v1229
    %v1286 = vpack.c.bf16 %v1232, %v1230
    %v1287 = vpack.c.bf16 %v1235, %v1233
    %v1288 = vpack.c.bf16 %v1236, %v1234
    %v1289 = vpack.c.bf16 %v1239, %v1237
    %v1290 = vpack.c.bf16 %v1240, %v1238
    %v1291 = vpack.c.bf16 %v1243, %v1241
    %v1292 = vpack.c.bf16 %v1244, %v1242
    %v1293 = vpack.c.bf16 %v1247, %v1245
    %v1294 = vpack.c.bf16 %v1248, %v1246
    %v1295 = vpack.c.bf16 %v1251, %v1249
    %v1296 = vpack.c.bf16 %v1252, %v1250
    %v1297 = vpack.c.bf16 %v1255, %v1253
    %v1298 = vpack.c.bf16 %v1256, %v1254
    %v1299 = vpack.c.bf16 %v1259, %v1257
    %v1300 = vpack.c.bf16 %v1260, %v1258
    %v1301 = vpack.c.bf16 %v1263, %v1261
    %v1302 = vpack.c.bf16 %v1264, %v1262
    %v1303 = vpack.c.bf16 %v1267, %v1265
    %v1304 = vpack.c.bf16 %v1268, %v1266
    %v1305 = vpack.c.bf16 %v1271, %v1269
    %v1306 = vpack.c.bf16 %v1272, %v1270
    %v1307 = vpack.c.bf16 %v1275, %v1273
    %v1308 = vpack.c.bf16 %v1276, %v1274
    %v1309 = vld [vmem:[#allocation10] sm:$0xff]
    %v1310 = vld [vmem:[#allocation10 + $0x8] sm:$0xff]
    %v1311 = vld [vmem:[#allocation10 + $0x10] sm:$0xff]
    %v1312 = vld [vmem:[#allocation10 + $0x18] sm:$0xff]
    %v1313 = vld [vmem:[#allocation10 + $0x20] sm:$0xff]
    %v1314 = vld [vmem:[#allocation10 + $0x28] sm:$0xff]
    %v1315 = vld [vmem:[#allocation10 + $0x30] sm:$0xff]
    %v1316 = vld [vmem:[#allocation10 + $0x38] sm:$0xff]
    %v1317 = vld [vmem:[#allocation10 + $0x40] sm:$0xff]
    %v1318 = vld [vmem:[#allocation10 + $0x48] sm:$0xff]
    %v1319 = vld [vmem:[#allocation10 + $0x50] sm:$0xff]
    %v1320 = vld [vmem:[#allocation10 + $0x58] sm:$0xff]
    %v1321 = vld [vmem:[#allocation10 + $0x60] sm:$0xff]
    %v1322 = vld [vmem:[#allocation10 + $0x68] sm:$0xff]
    %v1323 = vld [vmem:[#allocation10 + $0x70] sm:$0xff]
    %v1324 = vld [vmem:[#allocation10 + $0x78] sm:$0xff]
    %v1325 = vld [vmem:[#allocation10 + $0x80] sm:$0xff]
    %v1326 = vld [vmem:[#allocation10 + $0x88] sm:$0xff]
    %v1327 = vld [vmem:[#allocation10 + $0x90] sm:$0xff]
    %v1328 = vld [vmem:[#allocation10 + $0x98] sm:$0xff]
    %v1329 = vld [vmem:[#allocation10 + $0xa0] sm:$0xff]
    %v1330 = vld [vmem:[#allocation10 + $0xa8] sm:$0xff]
    %v1331 = vld [vmem:[#allocation10 + $0xb0] sm:$0xff]
    %v1332 = vld [vmem:[#allocation10 + $0xb8] sm:$0xff]
    %v1333 = vld [vmem:[#allocation10 + $0xc0] sm:$0xff]
    %v1334 = vld [vmem:[#allocation10 + $0xc8] sm:$0xff]
    %v1335 = vld [vmem:[#allocation10 + $0xd0] sm:$0xff]
    %v1336 = vld [vmem:[#allocation10 + $0xd8] sm:$0xff]
    %v1337 = vld [vmem:[#allocation10 + $0xe0] sm:$0xff]
    %v1338 = vld [vmem:[#allocation10 + $0xe8] sm:$0xff]
    %v1339 = vld [vmem:[#allocation10 + $0xf0] sm:$0xff]
    %v1340 = vld [vmem:[#allocation10 + $0xf8] sm:$0xff]
    %v1341 = vld [vmem:[#allocation10 + $0x100] sm:$0xff]
    %v1342 = vld [vmem:[#allocation10 + $0x108] sm:$0xff]
    %v1343 = vld [vmem:[#allocation10 + $0x110] sm:$0xff]
    %v1344 = vld [vmem:[#allocation10 + $0x118] sm:$0xff]
    %v1345 = vld [vmem:[#allocation10 + $0x120] sm:$0xff]
    %v1346 = vld [vmem:[#allocation10 + $0x128] sm:$0xff]
    %v1347 = vld [vmem:[#allocation10 + $0x130] sm:$0xff]
    %v1348 = vld [vmem:[#allocation10 + $0x138] sm:$0xff]
    %v1349 = vld [vmem:[#allocation10 + $0x140] sm:$0xff]
    %v1350 = vld [vmem:[#allocation10 + $0x148] sm:$0xff]
    %v1351 = vld [vmem:[#allocation10 + $0x150] sm:$0xff]
    %v1352 = vld [vmem:[#allocation10 + $0x158] sm:$0xff]
    %v1353 = vld [vmem:[#allocation10 + $0x160] sm:$0xff]
    %v1354 = vld [vmem:[#allocation10 + $0x168] sm:$0xff]
    %v1355 = vld [vmem:[#allocation10 + $0x170] sm:$0xff]
    %v1356 = vld [vmem:[#allocation10 + $0x178] sm:$0xff]
    %v1357 = vld [vmem:[#allocation10 + $0x180] sm:$0xff]
    %v1358 = vld [vmem:[#allocation10 + $0x188] sm:$0xff]
    %v1359 = vld [vmem:[#allocation10 + $0x190] sm:$0xff]
    %v1360 = vld [vmem:[#allocation10 + $0x198] sm:$0xff]
    %v1361 = vld [vmem:[#allocation10 + $0x1a0] sm:$0xff]
    %v1362 = vld [vmem:[#allocation10 + $0x1a8] sm:$0xff]
    %v1363 = vld [vmem:[#allocation10 + $0x1b0] sm:$0xff]
    %v1364 = vld [vmem:[#allocation10 + $0x1b8] sm:$0xff]
    %v1365 = vld [vmem:[#allocation10 + $0x1c0] sm:$0xff]
    %v1366 = vld [vmem:[#allocation10 + $0x1c8] sm:$0xff]
    %v1367 = vld [vmem:[#allocation10 + $0x1d0] sm:$0xff]
    %v1368 = vld [vmem:[#allocation10 + $0x1d8] sm:$0xff]
    %v1369 = vld [vmem:[#allocation10 + $0x1e0] sm:$0xff]
    %v1370 = vld [vmem:[#allocation10 + $0x1e8] sm:$0xff]
    %v1371 = vld [vmem:[#allocation10 + $0x1f0] sm:$0xff]
    %v1372 = vld [vmem:[#allocation10 + $0x1f8] sm:$0xff]
    %v1373 = vld [vmem:[%s7] sm:$0xf]
    %v1374 = vld [vmem:[%s8] sm:$0xf]
    %v1439 = vunpack.c.l.b16 %v1309
    %v1440 = vunpack.c.h.b16 %v1309
    %v1441 = vunpack.c.l.b16 %v1310
    %v1442 = vunpack.c.h.b16 %v1310
    %v1443 = vunpack.c.l.b16 %v1311
    %v1444 = vunpack.c.h.b16 %v1311
    %v1445 = vunpack.c.l.b16 %v1312
    %v1446 = vunpack.c.h.b16 %v1312
    %v1447 = vunpack.c.l.b16 %v1313
    %v1448 = vunpack.c.h.b16 %v1313
    %v1449 = vunpack.c.l.b16 %v1314
    %v1450 = vunpack.c.h.b16 %v1314
    %v1451 = vunpack.c.l.b16 %v1315
    %v1452 = vunpack.c.h.b16 %v1315
    %v1453 = vunpack.c.l.b16 %v1316
    %v1454 = vunpack.c.h.b16 %v1316
    %v1455 = vunpack.c.l.b16 %v1317
    %v1456 = vunpack.c.h.b16 %v1317
    %v1457 = vunpack.c.l.b16 %v1318
    %v1458 = vunpack.c.h.b16 %v1318
    %v1459 = vunpack.c.l.b16 %v1319
    %v1460 = vunpack.c.h.b16 %v1319
    %v1461 = vunpack.c.l.b16 %v1320
    %v1462 = vunpack.c.h.b16 %v1320
    %v1463 = vunpack.c.l.b16 %v1321
    %v1464 = vunpack.c.h.b16 %v1321
    %v1465 = vunpack.c.l.b16 %v1322
    %v1466 = vunpack.c.h.b16 %v1322
    %v1467 = vunpack.c.l.b16 %v1323
    %v1468 = vunpack.c.h.b16 %v1323
    %v1469 = vunpack.c.l.b16 %v1324
    %v1470 = vunpack.c.h.b16 %v1324
    %v1471 = vunpack.c.l.b16 %v1325
    %v1472 = vunpack.c.h.b16 %v1325
    %v1473 = vunpack.c.l.b16 %v1326
    %v1474 = vunpack.c.h.b16 %v1326
    %v1475 = vunpack.c.l.b16 %v1327
    %v1476 = vunpack.c.h.b16 %v1327
    %v1477 = vunpack.c.l.b16 %v1328
    %v1478 = vunpack.c.h.b16 %v1328
    %v1479 = vunpack.c.l.b16 %v1329
    %v1480 = vunpack.c.h.b16 %v1329
    %v1481 = vunpack.c.l.b16 %v1330
    %v1482 = vunpack.c.h.b16 %v1330
    %v1483 = vunpack.c.l.b16 %v1331
    %v1484 = vunpack.c.h.b16 %v1331
    %v1485 = vunpack.c.l.b16 %v1332
    %v1486 = vunpack.c.h.b16 %v1332
    %v1487 = vunpack.c.l.b16 %v1333
    %v1488 = vunpack.c.h.b16 %v1333
    %v1489 = vunpack.c.l.b16 %v1334
    %v1490 = vunpack.c.h.b16 %v1334
    %v1491 = vunpack.c.l.b16 %v1335
    %v1492 = vunpack.c.h.b16 %v1335
    %v1493 = vunpack.c.l.b16 %v1336
    %v1494 = vunpack.c.h.b16 %v1336
    %v1495 = vunpack.c.l.b16 %v1337
    %v1496 = vunpack.c.h.b16 %v1337
    %v1497 = vunpack.c.l.b16 %v1338
    %v1498 = vunpack.c.h.b16 %v1338
    %v1499 = vunpack.c.l.b16 %v1339
    %v1500 = vunpack.c.h.b16 %v1339
    %v1501 = vunpack.c.l.b16 %v1340
    %v1502 = vunpack.c.h.b16 %v1340
    %v1503 = vunpack.c.l.b16 %v1341
    %v1504 = vunpack.c.h.b16 %v1341
    %v1505 = vunpack.c.l.b16 %v1342
    %v1506 = vunpack.c.h.b16 %v1342
    %v1507 = vunpack.c.l.b16 %v1343
    %v1508 = vunpack.c.h.b16 %v1343
    %v1509 = vunpack.c.l.b16 %v1344
    %v1510 = vunpack.c.h.b16 %v1344
    %v1511 = vunpack.c.l.b16 %v1345
    %v1512 = vunpack.c.h.b16 %v1345
    %v1513 = vunpack.c.l.b16 %v1346
    %v1514 = vunpack.c.h.b16 %v1346
    %v1515 = vunpack.c.l.b16 %v1347
    %v1516 = vunpack.c.h.b16 %v1347
    %v1517 = vunpack.c.l.b16 %v1348
    %v1518 = vunpack.c.h.b16 %v1348
    %v1519 = vunpack.c.l.b16 %v1349
    %v1520 = vunpack.c.h.b16 %v1349
    %v1521 = vunpack.c.l.b16 %v1350
    %v1522 = vunpack.c.h.b16 %v1350
    %v1523 = vunpack.c.l.b16 %v1351
    %v1524 = vunpack.c.h.b16 %v1351
    %v1525 = vunpack.c.l.b16 %v1352
    %v1526 = vunpack.c.h.b16 %v1352
    %v1527 = vunpack.c.l.b16 %v1353
    %v1528 = vunpack.c.h.b16 %v1353
    %v1529 = vunpack.c.l.b16 %v1354
    %v1530 = vunpack.c.h.b16 %v1354
    %v1531 = vunpack.c.l.b16 %v1355
    %v1532 = vunpack.c.h.b16 %v1355
    %v1533 = vunpack.c.l.b16 %v1356
    %v1534 = vunpack.c.h.b16 %v1356
    %v1535 = vunpack.c.l.b16 %v1357
    %v1536 = vunpack.c.h.b16 %v1357
    %v1537 = vunpack.c.l.b16 %v1358
    %v1538 = vunpack.c.h.b16 %v1358
    %v1539 = vunpack.c.l.b16 %v1359
    %v1540 = vunpack.c.h.b16 %v1359
    %v1541 = vunpack.c.l.b16 %v1360
    %v1542 = vunpack.c.h.b16 %v1360
    %v1543 = vunpack.c.l.b16 %v1361
    %v1544 = vunpack.c.h.b16 %v1361
    %v1545 = vunpack.c.l.b16 %v1362
    %v1546 = vunpack.c.h.b16 %v1362
    %v1547 = vunpack.c.l.b16 %v1363
    %v1548 = vunpack.c.h.b16 %v1363
    %v1549 = vunpack.c.l.b16 %v1364
    %v1550 = vunpack.c.h.b16 %v1364
    %v1551 = vunpack.c.l.b16 %v1365
    %v1552 = vunpack.c.h.b16 %v1365
    %v1553 = vunpack.c.l.b16 %v1366
    %v1554 = vunpack.c.h.b16 %v1366
    %v1555 = vunpack.c.l.b16 %v1367
    %v1556 = vunpack.c.h.b16 %v1367
    %v1557 = vunpack.c.l.b16 %v1368
    %v1558 = vunpack.c.h.b16 %v1368
    %v1559 = vunpack.c.l.b16 %v1369
    %v1560 = vunpack.c.h.b16 %v1369
    %v1561 = vunpack.c.l.b16 %v1370
    %v1562 = vunpack.c.h.b16 %v1370
    %v1563 = vunpack.c.l.b16 %v1371
    %v1564 = vunpack.c.h.b16 %v1371
    %v1565 = vunpack.c.l.b16 %v1372
    %v1566 = vunpack.c.h.b16 %v1372
    %v1567 = vpack.c.b16 %v1443, %v1439
    %v1568 = vpack.c.b16 %v1444, %v1440
    %v1569 = vpack.c.b16 %v1445, %v1441
    %v1570 = vpack.c.b16 %v1446, %v1442
    %v1571 = vpack.c.b16 %v1451, %v1447
    %v1572 = vpack.c.b16 %v1452, %v1448
    %v1573 = vpack.c.b16 %v1453, %v1449
    %v1574 = vpack.c.b16 %v1454, %v1450
    %v1575 = vpack.c.b16 %v1459, %v1455
    %v1576 = vpack.c.b16 %v1460, %v1456
    %v1577 = vpack.c.b16 %v1461, %v1457
    %v1578 = vpack.c.b16 %v1462, %v1458
    %v1579 = vpack.c.b16 %v1467, %v1463
    %v1580 = vpack.c.b16 %v1468, %v1464
    %v1581 = vpack.c.b16 %v1469, %v1465
    %v1582 = vpack.c.b16 %v1470, %v1466
    %v1583 = vpack.c.b16 %v1475, %v1471
    %v1584 = vpack.c.b16 %v1476, %v1472
    %v1585 = vpack.c.b16 %v1477, %v1473
    %v1586 = vpack.c.b16 %v1478, %v1474
    %v1587 = vpack.c.b16 %v1483, %v1479
    %v1588 = vpack.c.b16 %v1484, %v1480
    %v1589 = vpack.c.b16 %v1485, %v1481
    %v1590 = vpack.c.b16 %v1486, %v1482
    %v1591 = vpack.c.b16 %v1491, %v1487
    %v1592 = vpack.c.b16 %v1492, %v1488
    %v1593 = vpack.c.b16 %v1493, %v1489
    %v1594 = vpack.c.b16 %v1494, %v1490
    %v1595 = vpack.c.b16 %v1499, %v1495
    %v1596 = vpack.c.b16 %v1500, %v1496
    %v1597 = vpack.c.b16 %v1501, %v1497
    %v1598 = vpack.c.b16 %v1502, %v1498
    %v1599 = vpack.c.b16 %v1507, %v1503
    %v1600 = vpack.c.b16 %v1508, %v1504
    %v1601 = vpack.c.b16 %v1509, %v1505
    %v1602 = vpack.c.b16 %v1510, %v1506
    %v1603 = vpack.c.b16 %v1515, %v1511
    %v1604 = vpack.c.b16 %v1516, %v1512
    %v1605 = vpack.c.b16 %v1517, %v1513
    %v1606 = vpack.c.b16 %v1518, %v1514
    %v1607 = vpack.c.b16 %v1523, %v1519
    %v1608 = vpack.c.b16 %v1524, %v1520
    %v1609 = vpack.c.b16 %v1525, %v1521
    %v1610 = vpack.c.b16 %v1526, %v1522
    %v1611 = vpack.c.b16 %v1531, %v1527
    %v1612 = vpack.c.b16 %v1532, %v1528
    %v1613 = vpack.c.b16 %v1533, %v1529
    %v1614 = vpack.c.b16 %v1534, %v1530
    %v1615 = vpack.c.b16 %v1539, %v1535
    %v1616 = vpack.c.b16 %v1540, %v1536
    %v1617 = vpack.c.b16 %v1541, %v1537
    %v1618 = vpack.c.b16 %v1542, %v1538
    %v1619 = vpack.c.b16 %v1547, %v1543
    %v1620 = vpack.c.b16 %v1548, %v1544
    %v1621 = vpack.c.b16 %v1549, %v1545
    %v1622 = vpack.c.b16 %v1550, %v1546
    %v1623 = vpack.c.b16 %v1555, %v1551
    %v1624 = vpack.c.b16 %v1556, %v1552
    %v1625 = vpack.c.b16 %v1557, %v1553
    %v1626 = vpack.c.b16 %v1558, %v1554
    %v1627 = vpack.c.b16 %v1563, %v1559
    %v1628 = vpack.c.b16 %v1564, %v1560
    %v1629 = vpack.c.b16 %v1565, %v1561
    %v1630 = vpack.c.b16 %v1566, %v1562
    %1695 = vmatpush.bf16.msra.mxu0 %v1595
    %1696 = vmatpush.bf16.msra.mxu0 %v1591
    %1697 = vmatpush.bf16.msra.mxu0 %v1587
    %1698 = vmatpush.bf16.msra.mxu0 %v1583
    %1699 = vmatpush.bf16.msra.mxu0 %v1579
    %1700 = vmatpush.bf16.msra.mxu0 %v1575
    %1701 = vmatpush.bf16.msra.mxu0 %v1571
    %1702 = vmatpush.bf16.msra.mxu0 %v1567
    %1703 = vmatmul.bf16.gmra.mxu0 %v1277
    %v1704 = vpop.f32.mrf.mxu0
    %v1705 = vadd.f32 0.0, %v1704
    %v1706 = vpop.f32.mrf.mxu0
    %v1707 = vadd.f32 0.0, %v1706
    %1708 = vmatmul.bf16.gmra.mxu0 %v1279
    %v1709 = vpop.f32.mrf.mxu0
    %v1710 = vadd.f32 0.0, %v1709
    %v1711 = vpop.f32.mrf.mxu0
    %v1712 = vadd.f32 0.0, %v1711
    %1713 = vmatmul.bf16.gmra.mxu0 %v1281
    %v1714 = vpop.f32.mrf.mxu0
    %v1715 = vadd.f32 0.0, %v1714
    %v1716 = vpop.f32.mrf.mxu0
    %v1717 = vadd.f32 0.0, %v1716
    %1718 = vmatmul.bf16.gmra.mxu0 %v1283
    %v1719 = vpop.f32.mrf.mxu0
    %v1720 = vadd.f32 0.0, %v1719
    %v1721 = vpop.f32.mrf.mxu0
    %v1722 = vadd.f32 0.0, %v1721
    %1723 = vmatmul.bf16.gmra.mxu0 %v1285
    %v1724 = vpop.f32.mrf.mxu0
    %v1725 = vadd.f32 0.0, %v1724
    %v1726 = vpop.f32.mrf.mxu0
    %v1727 = vadd.f32 0.0, %v1726
    %1728 = vmatmul.bf16.gmra.mxu0 %v1287
    %v1729 = vpop.f32.mrf.mxu0
    %v1730 = vadd.f32 0.0, %v1729
    %v1731 = vpop.f32.mrf.mxu0
    %v1732 = vadd.f32 0.0, %v1731
    %1733 = vmatmul.bf16.gmra.mxu0 %v1289
    %v1734 = vpop.f32.mrf.mxu0
    %v1735 = vadd.f32 0.0, %v1734
    %v1736 = vpop.f32.mrf.mxu0
    %v1737 = vadd.f32 0.0, %v1736
    %1738 = vmatmul.bf16.gmra.mxu0 %v1291
    %v1739 = vpop.f32.mrf.mxu0
    %v1740 = vadd.f32 0.0, %v1739
    %v1741 = vpop.f32.mrf.mxu0
    %v1742 = vadd.f32 0.0, %v1741
    %1743 = vmatmul.bf16.gmra.mxu0 %v1293
    %v1744 = vpop.f32.mrf.mxu0
    %v1745 = vadd.f32 0.0, %v1744
    %v1746 = vpop.f32.mrf.mxu0
    %v1747 = vadd.f32 0.0, %v1746
    %1748 = vmatmul.bf16.gmra.mxu0 %v1295
    %v1749 = vpop.f32.mrf.mxu0
    %v1750 = vadd.f32 0.0, %v1749
    %v1751 = vpop.f32.mrf.mxu0
    %v1752 = vadd.f32 0.0, %v1751
    %1753 = vmatmul.bf16.gmra.mxu0 %v1297
    %v1754 = vpop.f32.mrf.mxu0
    %v1755 = vadd.f32 0.0, %v1754
    %v1756 = vpop.f32.mrf.mxu0
    %v1757 = vadd.f32 0.0, %v1756
    %1758 = vmatmul.bf16.gmra.mxu0 %v1299
    %v1759 = vpop.f32.mrf.mxu0
    %v1760 = vadd.f32 0.0, %v1759
    %v1761 = vpop.f32.mrf.mxu0
    %v1762 = vadd.f32 0.0, %v1761
    %1763 = vmatmul.bf16.gmra.mxu0 %v1301
    %v1764 = vpop.f32.mrf.mxu0
    %v1765 = vadd.f32 0.0, %v1764
    %v1766 = vpop.f32.mrf.mxu0
    %v1767 = vadd.f32 0.0, %v1766
    %1768 = vmatmul.bf16.gmra.mxu0 %v1303
    %v1769 = vpop.f32.mrf.mxu0
    %v1770 = vadd.f32 0.0, %v1769
    %v1771 = vpop.f32.mrf.mxu0
    %v1772 = vadd.f32 0.0, %v1771
    %1773 = vmatmul.bf16.gmra.mxu0 %v1305
    %v1774 = vpop.f32.mrf.mxu0
    %v1775 = vadd.f32 0.0, %v1774
    %v1776 = vpop.f32.mrf.mxu0
    %v1777 = vadd.f32 0.0, %v1776
    %1778 = vmatmul.bf16.gmra.mxu0 %v1307
    %v1779 = vpop.f32.mrf.mxu0
    %v1780 = vadd.f32 0.0, %v1779
    %v1781 = vpop.f32.mrf.mxu0
    %v1782 = vadd.f32 0.0, %v1781
    %1783 = vdwg.mxu0
    %1784 = vmatpush.bf16.msra.mxu0 %v1627
    %1785 = vmatpush.bf16.msra.mxu0 %v1623
    %1786 = vmatpush.bf16.msra.mxu0 %v1619
    %1787 = vmatpush.bf16.msra.mxu0 %v1615
    %1788 = vmatpush.bf16.msra.mxu0 %v1611
    %1789 = vmatpush.bf16.msra.mxu0 %v1607
    %1790 = vmatpush.bf16.msra.mxu0 %v1603
    %1791 = vmatpush.bf16.msra.mxu0 %v1599
    %1792 = vmatmul.bf16.gmra.mxu0 %v1278
    %v1793 = vpop.f32.mrf.mxu0
    %v1794 = vadd.f32 %v1705, %v1793
    %v1795 = vpop.f32.mrf.mxu0
    %v1796 = vadd.f32 %v1707, %v1795
    %1797 = vmatmul.bf16.gmra.mxu0 %v1280
    %v1798 = vpop.f32.mrf.mxu0
    %v1799 = vadd.f32 %v1710, %v1798
    %v1800 = vpop.f32.mrf.mxu0
    %v1801 = vadd.f32 %v1712, %v1800
    %1802 = vmatmul.bf16.gmra.mxu0 %v1282
    %v1803 = vpop.f32.mrf.mxu0
    %v1804 = vadd.f32 %v1715, %v1803
    %v1805 = vpop.f32.mrf.mxu0
    %v1806 = vadd.f32 %v1717, %v1805
    %1807 = vmatmul.bf16.gmra.mxu0 %v1284
    %v1808 = vpop.f32.mrf.mxu0
    %v1809 = vadd.f32 %v1720, %v1808
    %v1810 = vpop.f32.mrf.mxu0
    %v1811 = vadd.f32 %v1722, %v1810
    %1812 = vmatmul.bf16.gmra.mxu0 %v1286
    %v1813 = vpop.f32.mrf.mxu0
    %v1814 = vadd.f32 %v1725, %v1813
    %v1815 = vpop.f32.mrf.mxu0
    %v1816 = vadd.f32 %v1727, %v1815
    %1817 = vmatmul.bf16.gmra.mxu0 %v1288
    %v1818 = vpop.f32.mrf.mxu0
    %v1819 = vadd.f32 %v1730, %v1818
    %v1820 = vpop.f32.mrf.mxu0
    %v1821 = vadd.f32 %v1732, %v1820
    %1822 = vmatmul.bf16.gmra.mxu0 %v1290
    %v1823 = vpop.f32.mrf.mxu0
    %v1824 = vadd.f32 %v1735, %v1823
    %v1825 = vpop.f32.mrf.mxu0
    %v1826 = vadd.f32 %v1737, %v1825
    %1827 = vmatmul.bf16.gmra.mxu0 %v1292
    %v1828 = vpop.f32.mrf.mxu0
    %v1829 = vadd.f32 %v1740, %v1828
    %v1830 = vpop.f32.mrf.mxu0
    %v1831 = vadd.f32 %v1742, %v1830
    %1832 = vmatmul.bf16.gmra.mxu0 %v1294
    %v1833 = vpop.f32.mrf.mxu0
    %v1834 = vadd.f32 %v1745, %v1833
    %v1835 = vpop.f32.mrf.mxu0
    %v1836 = vadd.f32 %v1747, %v1835
    %1837 = vmatmul.bf16.gmra.mxu0 %v1296
    %v1838 = vpop.f32.mrf.mxu0
    %v1839 = vadd.f32 %v1750, %v1838
    %v1840 = vpop.f32.mrf.mxu0
    %v1841 = vadd.f32 %v1752, %v1840
    %1842 = vmatmul.bf16.gmra.mxu0 %v1298
    %v1843 = vpop.f32.mrf.mxu0
    %v1844 = vadd.f32 %v1755, %v1843
    %v1845 = vpop.f32.mrf.mxu0
    %v1846 = vadd.f32 %v1757, %v1845
    %1847 = vmatmul.bf16.gmra.mxu0 %v1300
    %v1848 = vpop.f32.mrf.mxu0
    %v1849 = vadd.f32 %v1760, %v1848
    %v1850 = vpop.f32.mrf.mxu0
    %v1851 = vadd.f32 %v1762, %v1850
    %1852 = vmatmul.bf16.gmra.mxu0 %v1302
    %v1853 = vpop.f32.mrf.mxu0
    %v1854 = vadd.f32 %v1765, %v1853
    %v1855 = vpop.f32.mrf.mxu0
    %v1856 = vadd.f32 %v1767, %v1855
    %1857 = vmatmul.bf16.gmra.mxu0 %v1304
    %v1858 = vpop.f32.mrf.mxu0
    %v1859 = vadd.f32 %v1770, %v1858
    %v1860 = vpop.f32.mrf.mxu0
    %v1861 = vadd.f32 %v1772, %v1860
    %1862 = vmatmul.bf16.gmra.mxu0 %v1306
    %v1863 = vpop.f32.mrf.mxu0
    %v1864 = vadd.f32 %v1775, %v1863
    %v1865 = vpop.f32.mrf.mxu0
    %v1866 = vadd.f32 %v1777, %v1865
    %1867 = vmatmul.bf16.gmra.mxu0 %v1308
    %v1868 = vpop.f32.mrf.mxu0
    %v1869 = vadd.f32 %v1780, %v1868
    %v1870 = vpop.f32.mrf.mxu0
    %v1871 = vadd.f32 %v1782, %v1870
    %1872 = vdwg.mxu0
    %1873 = vmatpush.bf16.msra.mxu0 %v1596
    %1874 = vmatpush.bf16.msra.mxu0 %v1592
    %1875 = vmatpush.bf16.msra.mxu0 %v1588
    %1876 = vmatpush.bf16.msra.mxu0 %v1584
    %1877 = vmatpush.bf16.msra.mxu0 %v1580
    %1878 = vmatpush.bf16.msra.mxu0 %v1576
    %1879 = vmatpush.bf16.msra.mxu0 %v1572
    %1880 = vmatpush.bf16.msra.mxu0 %v1568
    %1881 = vmatmul.bf16.gmra.mxu0 %v1277
    %v1882 = vpop.f32.mrf.mxu0
    %v1883 = vadd.f32 0.0, %v1882
    %v1884 = vpop.f32.mrf.mxu0
    %v1885 = vadd.f32 0.0, %v1884
    %1886 = vmatmul.bf16.gmra.mxu0 %v1279
    %v1887 = vpop.f32.mrf.mxu0
    %v1888 = vadd.f32 0.0, %v1887
    %v1889 = vpop.f32.mrf.mxu0
    %v1890 = vadd.f32 0.0, %v1889
    %1891 = vmatmul.bf16.gmra.mxu0 %v1281
    %v1892 = vpop.f32.mrf.mxu0
    %v1893 = vadd.f32 0.0, %v1892
    %v1894 = vpop.f32.mrf.mxu0
    %v1895 = vadd.f32 0.0, %v1894
    %1896 = vmatmul.bf16.gmra.mxu0 %v1283
    %v1897 = vpop.f32.mrf.mxu0
    %v1898 = vadd.f32 0.0, %v1897
    %v1899 = vpop.f32.mrf.mxu0
    %v1900 = vadd.f32 0.0, %v1899
    %1901 = vmatmul.bf16.gmra.mxu0 %v1285
    %v1902 = vpop.f32.mrf.mxu0
    %v1903 = vadd.f32 0.0, %v1902
    %v1904 = vpop.f32.mrf.mxu0
    %v1905 = vadd.f32 0.0, %v1904
    %1906 = vmatmul.bf16.gmra.mxu0 %v1287
    %v1907 = vpop.f32.mrf.mxu0
    %v1908 = vadd.f32 0.0, %v1907
    %v1909 = vpop.f32.mrf.mxu0
    %v1910 = vadd.f32 0.0, %v1909
    %1911 = vmatmul.bf16.gmra.mxu0 %v1289
    %v1912 = vpop.f32.mrf.mxu0
    %v1913 = vadd.f32 0.0, %v1912
    %v1914 = vpop.f32.mrf.mxu0
    %v1915 = vadd.f32 0.0, %v1914
    %1916 = vmatmul.bf16.gmra.mxu0 %v1291
    %v1917 = vpop.f32.mrf.mxu0
    %v1918 = vadd.f32 0.0, %v1917
    %v1919 = vpop.f32.mrf.mxu0
    %v1920 = vadd.f32 0.0, %v1919
    %1921 = vmatmul.bf16.gmra.mxu0 %v1293
    %v1922 = vpop.f32.mrf.mxu0
    %v1923 = vadd.f32 0.0, %v1922
    %v1924 = vpop.f32.mrf.mxu0
    %v1925 = vadd.f32 0.0, %v1924
    %1926 = vmatmul.bf16.gmra.mxu0 %v1295
    %v1927 = vpop.f32.mrf.mxu0
    %v1928 = vadd.f32 0.0, %v1927
    %v1929 = vpop.f32.mrf.mxu0
    %v1930 = vadd.f32 0.0, %v1929
    %1931 = vmatmul.bf16.gmra.mxu0 %v1297
    %v1932 = vpop.f32.mrf.mxu0
    %v1933 = vadd.f32 0.0, %v1932
    %v1934 = vpop.f32.mrf.mxu0
    %v1935 = vadd.f32 0.0, %v1934
    %1936 = vmatmul.bf16.gmra.mxu0 %v1299
    %v1937 = vpop.f32.mrf.mxu0
    %v1938 = vadd.f32 0.0, %v1937
    %v1939 = vpop.f32.mrf.mxu0
    %v1940 = vadd.f32 0.0, %v1939
    %1941 = vmatmul.bf16.gmra.mxu0 %v1301
    %v1942 = vpop.f32.mrf.mxu0
    %v1943 = vadd.f32 0.0, %v1942
    %v1944 = vpop.f32.mrf.mxu0
    %v1945 = vadd.f32 0.0, %v1944
    %1946 = vmatmul.bf16.gmra.mxu0 %v1303
    %v1947 = vpop.f32.mrf.mxu0
    %v1948 = vadd.f32 0.0, %v1947
    %v1949 = vpop.f32.mrf.mxu0
    %v1950 = vadd.f32 0.0, %v1949
    %1951 = vmatmul.bf16.gmra.mxu0 %v1305
    %v1952 = vpop.f32.mrf.mxu0
    %v1953 = vadd.f32 0.0, %v1952
    %v1954 = vpop.f32.mrf.mxu0
    %v1955 = vadd.f32 0.0, %v1954
    %1956 = vmatmul.bf16.gmra.mxu0 %v1307
    %v1957 = vpop.f32.mrf.mxu0
    %v1958 = vadd.f32 0.0, %v1957
    %v1959 = vpop.f32.mrf.mxu0
    %v1960 = vadd.f32 0.0, %v1959
    %1961 = vdwg.mxu0
    %1962 = vmatpush.bf16.msra.mxu0 %v1628
    %1963 = vmatpush.bf16.msra.mxu0 %v1624
    %1964 = vmatpush.bf16.msra.mxu0 %v1620
    %1965 = vmatpush.bf16.msra.mxu0 %v1616
    %1966 = vmatpush.bf16.msra.mxu0 %v1612
    %1967 = vmatpush.bf16.msra.mxu0 %v1608
    %1968 = vmatpush.bf16.msra.mxu0 %v1604
    %1969 = vmatpush.bf16.msra.mxu0 %v1600
    %1970 = vmatmul.bf16.gmra.mxu0 %v1278
    %v1971 = vpop.f32.mrf.mxu0
    %v1972 = vadd.f32 %v1883, %v1971
    %v1973 = vpop.f32.mrf.mxu0
    %v1974 = vadd.f32 %v1885, %v1973
    %1975 = vmatmul.bf16.gmra.mxu0 %v1280
    %v1976 = vpop.f32.mrf.mxu0
    %v1977 = vadd.f32 %v1888, %v1976
    %v1978 = vpop.f32.mrf.mxu0
    %v1979 = vadd.f32 %v1890, %v1978
    %1980 = vmatmul.bf16.gmra.mxu0 %v1282
    %v1981 = vpop.f32.mrf.mxu0
    %v1982 = vadd.f32 %v1893, %v1981
    %v1983 = vpop.f32.mrf.mxu0
    %v1984 = vadd.f32 %v1895, %v1983
    %1985 = vmatmul.bf16.gmra.mxu0 %v1284
    %v1986 = vpop.f32.mrf.mxu0
    %v1987 = vadd.f32 %v1898, %v1986
    %v1988 = vpop.f32.mrf.mxu0
    %v1989 = vadd.f32 %v1900, %v1988
    %1990 = vmatmul.bf16.gmra.mxu0 %v1286
    %v1991 = vpop.f32.mrf.mxu0
    %v1992 = vadd.f32 %v1903, %v1991
    %v1993 = vpop.f32.mrf.mxu0
    %v1994 = vadd.f32 %v1905, %v1993
    %1995 = vmatmul.bf16.gmra.mxu0 %v1288
    %v1996 = vpop.f32.mrf.mxu0
    %v1997 = vadd.f32 %v1908, %v1996
    %v1998 = vpop.f32.mrf.mxu0
    %v1999 = vadd.f32 %v1910, %v1998
    %2000 = vmatmul.bf16.gmra.mxu0 %v1290
    %v2001 = vpop.f32.mrf.mxu0
    %v2002 = vadd.f32 %v1913, %v2001
    %v2003 = vpop.f32.mrf.mxu0
    %v2004 = vadd.f32 %v1915, %v2003
    %2005 = vmatmul.bf16.gmra.mxu0 %v1292
    %v2006 = vpop.f32.mrf.mxu0
    %v2007 = vadd.f32 %v1918, %v2006
    %v2008 = vpop.f32.mrf.mxu0
    %v2009 = vadd.f32 %v1920, %v2008
    %2010 = vmatmul.bf16.gmra.mxu0 %v1294
    %v2011 = vpop.f32.mrf.mxu0
    %v2012 = vadd.f32 %v1923, %v2011
    %v2013 = vpop.f32.mrf.mxu0
    %v2014 = vadd.f32 %v1925, %v2013
    %2015 = vmatmul.bf16.gmra.mxu0 %v1296
    %v2016 = vpop.f32.mrf.mxu0
    %v2017 = vadd.f32 %v1928, %v2016
    %v2018 = vpop.f32.mrf.mxu0
    %v2019 = vadd.f32 %v1930, %v2018
    %2020 = vmatmul.bf16.gmra.mxu0 %v1298
    %v2021 = vpop.f32.mrf.mxu0
    %v2022 = vadd.f32 %v1933, %v2021
    %v2023 = vpop.f32.mrf.mxu0
    %v2024 = vadd.f32 %v1935, %v2023
    %2025 = vmatmul.bf16.gmra.mxu0 %v1300
    %v2026 = vpop.f32.mrf.mxu0
    %v2027 = vadd.f32 %v1938, %v2026
    %v2028 = vpop.f32.mrf.mxu0
    %v2029 = vadd.f32 %v1940, %v2028
    %2030 = vmatmul.bf16.gmra.mxu0 %v1302
    %v2031 = vpop.f32.mrf.mxu0
    %v2032 = vadd.f32 %v1943, %v2031
    %v2033 = vpop.f32.mrf.mxu0
    %v2034 = vadd.f32 %v1945, %v2033
    %2035 = vmatmul.bf16.gmra.mxu0 %v1304
    %v2036 = vpop.f32.mrf.mxu0
    %v2037 = vadd.f32 %v1948, %v2036
    %v2038 = vpop.f32.mrf.mxu0
    %v2039 = vadd.f32 %v1950, %v2038
    %2040 = vmatmul.bf16.gmra.mxu0 %v1306
    %v2041 = vpop.f32.mrf.mxu0
    %v2042 = vadd.f32 %v1953, %v2041
    %v2043 = vpop.f32.mrf.mxu0
    %v2044 = vadd.f32 %v1955, %v2043
    %2045 = vmatmul.bf16.gmra.mxu0 %v1308
    %v2046 = vpop.f32.mrf.mxu0
    %v2047 = vadd.f32 %v1958, %v2046
    %v2048 = vpop.f32.mrf.mxu0
    %v2049 = vadd.f32 %v1960, %v2048
    %2050 = vdwg.mxu0
    %2051 = vmatpush.bf16.msra.mxu0 %v1597
    %2052 = vmatpush.bf16.msra.mxu0 %v1593
    %2053 = vmatpush.bf16.msra.mxu0 %v1589
    %2054 = vmatpush.bf16.msra.mxu0 %v1585
    %2055 = vmatpush.bf16.msra.mxu0 %v1581
    %2056 = vmatpush.bf16.msra.mxu0 %v1577
    %2057 = vmatpush.bf16.msra.mxu0 %v1573
    %2058 = vmatpush.bf16.msra.mxu0 %v1569
    %2059 = vmatmul.bf16.gmra.mxu0 %v1277
    %v2060 = vpop.f32.mrf.mxu0
    %v2061 = vadd.f32 0.0, %v2060
    %v2062 = vpop.f32.mrf.mxu0
    %v2063 = vadd.f32 0.0, %v2062
    %2064 = vmatmul.bf16.gmra.mxu0 %v1279
    %v2065 = vpop.f32.mrf.mxu0
    %v2066 = vadd.f32 0.0, %v2065
    %v2067 = vpop.f32.mrf.mxu0
    %v2068 = vadd.f32 0.0, %v2067
    %2069 = vmatmul.bf16.gmra.mxu0 %v1281
    %v2070 = vpop.f32.mrf.mxu0
    %v2071 = vadd.f32 0.0, %v2070
    %v2072 = vpop.f32.mrf.mxu0
    %v2073 = vadd.f32 0.0, %v2072
    %2074 = vmatmul.bf16.gmra.mxu0 %v1283
    %v2075 = vpop.f32.mrf.mxu0
    %v2076 = vadd.f32 0.0, %v2075
    %v2077 = vpop.f32.mrf.mxu0
    %v2078 = vadd.f32 0.0, %v2077
    %2079 = vmatmul.bf16.gmra.mxu0 %v1285
    %v2080 = vpop.f32.mrf.mxu0
    %v2081 = vadd.f32 0.0, %v2080
    %v2082 = vpop.f32.mrf.mxu0
    %v2083 = vadd.f32 0.0, %v2082
    %2084 = vmatmul.bf16.gmra.mxu0 %v1287
    %v2085 = vpop.f32.mrf.mxu0
    %v2086 = vadd.f32 0.0, %v2085
    %v2087 = vpop.f32.mrf.mxu0
    %v2088 = vadd.f32 0.0, %v2087
    %2089 = vmatmul.bf16.gmra.mxu0 %v1289
    %v2090 = vpop.f32.mrf.mxu0
    %v2091 = vadd.f32 0.0, %v2090
    %v2092 = vpop.f32.mrf.mxu0
    %v2093 = vadd.f32 0.0, %v2092
    %2094 = vmatmul.bf16.gmra.mxu0 %v1291
    %v2095 = vpop.f32.mrf.mxu0
    %v2096 = vadd.f32 0.0, %v2095
    %v2097 = vpop.f32.mrf.mxu0
    %v2098 = vadd.f32 0.0, %v2097
    %2099 = vmatmul.bf16.gmra.mxu0 %v1293
    %v2100 = vpop.f32.mrf.mxu0
    %v2101 = vadd.f32 0.0, %v2100
    %v2102 = vpop.f32.mrf.mxu0
    %v2103 = vadd.f32 0.0, %v2102
    %2104 = vmatmul.bf16.gmra.mxu0 %v1295
    %v2105 = vpop.f32.mrf.mxu0
    %v2106 = vadd.f32 0.0, %v2105
    %v2107 = vpop.f32.mrf.mxu0
    %v2108 = vadd.f32 0.0, %v2107
    %2109 = vmatmul.bf16.gmra.mxu0 %v1297
    %v2110 = vpop.f32.mrf.mxu0
    %v2111 = vadd.f32 0.0, %v2110
    %v2112 = vpop.f32.mrf.mxu0
    %v2113 = vadd.f32 0.0, %v2112
    %2114 = vmatmul.bf16.gmra.mxu0 %v1299
    %v2115 = vpop.f32.mrf.mxu0
    %v2116 = vadd.f32 0.0, %v2115
    %v2117 = vpop.f32.mrf.mxu0
    %v2118 = vadd.f32 0.0, %v2117
    %2119 = vmatmul.bf16.gmra.mxu0 %v1301
    %v2120 = vpop.f32.mrf.mxu0
    %v2121 = vadd.f32 0.0, %v2120
    %v2122 = vpop.f32.mrf.mxu0
    %v2123 = vadd.f32 0.0, %v2122
    %2124 = vmatmul.bf16.gmra.mxu0 %v1303
    %v2125 = vpop.f32.mrf.mxu0
    %v2126 = vadd.f32 0.0, %v2125
    %v2127 = vpop.f32.mrf.mxu0
    %v2128 = vadd.f32 0.0, %v2127
    %2129 = vmatmul.bf16.gmra.mxu0 %v1305
    %v2130 = vpop.f32.mrf.mxu0
    %v2131 = vadd.f32 0.0, %v2130
    %v2132 = vpop.f32.mrf.mxu0
    %v2133 = vadd.f32 0.0, %v2132
    %2134 = vmatmul.bf16.gmra.mxu0 %v1307
    %v2135 = vpop.f32.mrf.mxu0
    %v2136 = vadd.f32 0.0, %v2135
    %v2137 = vpop.f32.mrf.mxu0
    %v2138 = vadd.f32 0.0, %v2137
    %2139 = vdwg.mxu0
    %2140 = vmatpush.bf16.msra.mxu0 %v1629
    %2141 = vmatpush.bf16.msra.mxu0 %v1625
    %2142 = vmatpush.bf16.msra.mxu0 %v1621
    %2143 = vmatpush.bf16.msra.mxu0 %v1617
    %2144 = vmatpush.bf16.msra.mxu0 %v1613
    %2145 = vmatpush.bf16.msra.mxu0 %v1609
    %2146 = vmatpush.bf16.msra.mxu0 %v1605
    %2147 = vmatpush.bf16.msra.mxu0 %v1601
    %2148 = vmatmul.bf16.gmra.mxu0 %v1278
    %v2149 = vpop.f32.mrf.mxu0
    %v2150 = vadd.f32 %v2061, %v2149
    %v2151 = vpop.f32.mrf.mxu0
    %v2152 = vadd.f32 %v2063, %v2151
    %2153 = vmatmul.bf16.gmra.mxu0 %v1280
    %v2154 = vpop.f32.mrf.mxu0
    %v2155 = vadd.f32 %v2066, %v2154
    %v2156 = vpop.f32.mrf.mxu0
    %v2157 = vadd.f32 %v2068, %v2156
    %2158 = vmatmul.bf16.gmra.mxu0 %v1282
    %v2159 = vpop.f32.mrf.mxu0
    %v2160 = vadd.f32 %v2071, %v2159
    %v2161 = vpop.f32.mrf.mxu0
    %v2162 = vadd.f32 %v2073, %v2161
    %2163 = vmatmul.bf16.gmra.mxu0 %v1284
    %v2164 = vpop.f32.mrf.mxu0
    %v2165 = vadd.f32 %v2076, %v2164
    %v2166 = vpop.f32.mrf.mxu0
    %v2167 = vadd.f32 %v2078, %v2166
    %2168 = vmatmul.bf16.gmra.mxu0 %v1286
    %v2169 = vpop.f32.mrf.mxu0
    %v2170 = vadd.f32 %v2081, %v2169
    %v2171 = vpop.f32.mrf.mxu0
    %v2172 = vadd.f32 %v2083, %v2171
    %2173 = vmatmul.bf16.gmra.mxu0 %v1288
    %v2174 = vpop.f32.mrf.mxu0
    %v2175 = vadd.f32 %v2086, %v2174
    %v2176 = vpop.f32.mrf.mxu0
    %v2177 = vadd.f32 %v2088, %v2176
    %2178 = vmatmul.bf16.gmra.mxu0 %v1290
    %v2179 = vpop.f32.mrf.mxu0
    %v2180 = vadd.f32 %v2091, %v2179
    %v2181 = vpop.f32.mrf.mxu0
    %v2182 = vadd.f32 %v2093, %v2181
    %2183 = vmatmul.bf16.gmra.mxu0 %v1292
    %v2184 = vpop.f32.mrf.mxu0
    %v2185 = vadd.f32 %v2096, %v2184
    %v2186 = vpop.f32.mrf.mxu0
    %v2187 = vadd.f32 %v2098, %v2186
    %2188 = vmatmul.bf16.gmra.mxu0 %v1294
    %v2189 = vpop.f32.mrf.mxu0
    %v2190 = vadd.f32 %v2101, %v2189
    %v2191 = vpop.f32.mrf.mxu0
    %v2192 = vadd.f32 %v2103, %v2191
    %2193 = vmatmul.bf16.gmra.mxu0 %v1296
    %v2194 = vpop.f32.mrf.mxu0
    %v2195 = vadd.f32 %v2106, %v2194
    %v2196 = vpop.f32.mrf.mxu0
    %v2197 = vadd.f32 %v2108, %v2196
    %2198 = vmatmul.bf16.gmra.mxu0 %v1298
    %v2199 = vpop.f32.mrf.mxu0
    %v2200 = vadd.f32 %v2111, %v2199
    %v2201 = vpop.f32.mrf.mxu0
    %v2202 = vadd.f32 %v2113, %v2201
    %2203 = vmatmul.bf16.gmra.mxu0 %v1300
    %v2204 = vpop.f32.mrf.mxu0
    %v2205 = vadd.f32 %v2116, %v2204
    %v2206 = vpop.f32.mrf.mxu0
    %v2207 = vadd.f32 %v2118, %v2206
    %2208 = vmatmul.bf16.gmra.mxu0 %v1302
    %v2209 = vpop.f32.mrf.mxu0
    %v2210 = vadd.f32 %v2121, %v2209
    %v2211 = vpop.f32.mrf.mxu0
    %v2212 = vadd.f32 %v2123, %v2211
    %2213 = vmatmul.bf16.gmra.mxu0 %v1304
    %v2214 = vpop.f32.mrf.mxu0
    %v2215 = vadd.f32 %v2126, %v2214
    %v2216 = vpop.f32.mrf.mxu0
    %v2217 = vadd.f32 %v2128, %v2216
    %2218 = vmatmul.bf16.gmra.mxu0 %v1306
    %v2219 = vpop.f32.mrf.mxu0
    %v2220 = vadd.f32 %v2131, %v2219
    %v2221 = vpop.f32.mrf.mxu0
    %v2222 = vadd.f32 %v2133, %v2221
    %2223 = vmatmul.bf16.gmra.mxu0 %v1308
    %v2224 = vpop.f32.mrf.mxu0
    %v2225 = vadd.f32 %v2136, %v2224
    %v2226 = vpop.f32.mrf.mxu0
    %v2227 = vadd.f32 %v2138, %v2226
    %2228 = vdwg.mxu0
    %2229 = vmatpush.bf16.msra.mxu0 %v1598
    %2230 = vmatpush.bf16.msra.mxu0 %v1594
    %2231 = vmatpush.bf16.msra.mxu0 %v1590
    %2232 = vmatpush.bf16.msra.mxu0 %v1586
    %2233 = vmatpush.bf16.msra.mxu0 %v1582
    %2234 = vmatpush.bf16.msra.mxu0 %v1578
    %2235 = vmatpush.bf16.msra.mxu0 %v1574
    %2236 = vmatpush.bf16.msra.mxu0 %v1570
    %2237 = vmatmul.bf16.gmra.mxu0 %v1277
    %v2238 = vpop.f32.mrf.mxu0
    %v2239 = vadd.f32 0.0, %v2238
    %v2240 = vpop.f32.mrf.mxu0
    %v2241 = vadd.f32 0.0, %v2240
    %2242 = vmatmul.bf16.gmra.mxu0 %v1279
    %v2243 = vpop.f32.mrf.mxu0
    %v2244 = vadd.f32 0.0, %v2243
    %v2245 = vpop.f32.mrf.mxu0
    %v2246 = vadd.f32 0.0, %v2245
    %2247 = vmatmul.bf16.gmra.mxu0 %v1281
    %v2248 = vpop.f32.mrf.mxu0
    %v2249 = vadd.f32 0.0, %v2248
    %v2250 = vpop.f32.mrf.mxu0
    %v2251 = vadd.f32 0.0, %v2250
    %2252 = vmatmul.bf16.gmra.mxu0 %v1283
    %v2253 = vpop.f32.mrf.mxu0
    %v2254 = vadd.f32 0.0, %v2253
    %v2255 = vpop.f32.mrf.mxu0
    %v2256 = vadd.f32 0.0, %v2255
    %2257 = vmatmul.bf16.gmra.mxu0 %v1285
    %v2258 = vpop.f32.mrf.mxu0
    %v2259 = vadd.f32 0.0, %v2258
    %v2260 = vpop.f32.mrf.mxu0
    %v2261 = vadd.f32 0.0, %v2260
    %2262 = vmatmul.bf16.gmra.mxu0 %v1287
    %v2263 = vpop.f32.mrf.mxu0
    %v2264 = vadd.f32 0.0, %v2263
    %v2265 = vpop.f32.mrf.mxu0
    %v2266 = vadd.f32 0.0, %v2265
    %2267 = vmatmul.bf16.gmra.mxu0 %v1289
    %v2268 = vpop.f32.mrf.mxu0
    %v2269 = vadd.f32 0.0, %v2268
    %v2270 = vpop.f32.mrf.mxu0
    %v2271 = vadd.f32 0.0, %v2270
    %2272 = vmatmul.bf16.gmra.mxu0 %v1291
    %v2273 = vpop.f32.mrf.mxu0
    %v2274 = vadd.f32 0.0, %v2273
    %v2275 = vpop.f32.mrf.mxu0
    %v2276 = vadd.f32 0.0, %v2275
    %2277 = vmatmul.bf16.gmra.mxu0 %v1293
    %v2278 = vpop.f32.mrf.mxu0
    %v2279 = vadd.f32 0.0, %v2278
    %v2280 = vpop.f32.mrf.mxu0
    %v2281 = vadd.f32 0.0, %v2280
    %2282 = vmatmul.bf16.gmra.mxu0 %v1295
    %v2283 = vpop.f32.mrf.mxu0
    %v2284 = vadd.f32 0.0, %v2283
    %v2285 = vpop.f32.mrf.mxu0
    %v2286 = vadd.f32 0.0, %v2285
    %2287 = vmatmul.bf16.gmra.mxu0 %v1297
    %v2288 = vpop.f32.mrf.mxu0
    %v2289 = vadd.f32 0.0, %v2288
    %v2290 = vpop.f32.mrf.mxu0
    %v2291 = vadd.f32 0.0, %v2290
    %2292 = vmatmul.bf16.gmra.mxu0 %v1299
    %v2293 = vpop.f32.mrf.mxu0
    %v2294 = vadd.f32 0.0, %v2293
    %v2295 = vpop.f32.mrf.mxu0
    %v2296 = vadd.f32 0.0, %v2295
    %2297 = vmatmul.bf16.gmra.mxu0 %v1301
    %v2298 = vpop.f32.mrf.mxu0
    %v2299 = vadd.f32 0.0, %v2298
    %v2300 = vpop.f32.mrf.mxu0
    %v2301 = vadd.f32 0.0, %v2300
    %2302 = vmatmul.bf16.gmra.mxu0 %v1303
    %v2303 = vpop.f32.mrf.mxu0
    %v2304 = vadd.f32 0.0, %v2303
    %v2305 = vpop.f32.mrf.mxu0
    %v2306 = vadd.f32 0.0, %v2305
    %2307 = vmatmul.bf16.gmra.mxu0 %v1305
    %v2308 = vpop.f32.mrf.mxu0
    %v2309 = vadd.f32 0.0, %v2308
    %v2310 = vpop.f32.mrf.mxu0
    %v2311 = vadd.f32 0.0, %v2310
    %2312 = vmatmul.bf16.gmra.mxu0 %v1307
    %v2313 = vpop.f32.mrf.mxu0
    %v2314 = vadd.f32 0.0, %v2313
    %v2315 = vpop.f32.mrf.mxu0
    %v2316 = vadd.f32 0.0, %v2315
    %2317 = vdwg.mxu0
    %2318 = vmatpush.bf16.msra.mxu0 %v1630
    %2319 = vmatpush.bf16.msra.mxu0 %v1626
    %2320 = vmatpush.bf16.msra.mxu0 %v1622
    %2321 = vmatpush.bf16.msra.mxu0 %v1618
    %2322 = vmatpush.bf16.msra.mxu0 %v1614
    %2323 = vmatpush.bf16.msra.mxu0 %v1610
    %2324 = vmatpush.bf16.msra.mxu0 %v1606
    %2325 = vmatpush.bf16.msra.mxu0 %v1602
    %2326 = vmatmul.bf16.gmra.mxu0 %v1278
    %v2327 = vpop.f32.mrf.mxu0
    %v2328 = vadd.f32 %v2239, %v2327
    %v2329 = vpop.f32.mrf.mxu0
    %v2330 = vadd.f32 %v2241, %v2329
    %2331 = vmatmul.bf16.gmra.mxu0 %v1280
    %v2332 = vpop.f32.mrf.mxu0
    %v2333 = vadd.f32 %v2244, %v2332
    %v2334 = vpop.f32.mrf.mxu0
    %v2335 = vadd.f32 %v2246, %v2334
    %2336 = vmatmul.bf16.gmra.mxu0 %v1282
    %v2337 = vpop.f32.mrf.mxu0
    %v2338 = vadd.f32 %v2249, %v2337
    %v2339 = vpop.f32.mrf.mxu0
    %v2340 = vadd.f32 %v2251, %v2339
    %2341 = vmatmul.bf16.gmra.mxu0 %v1284
    %v2342 = vpop.f32.mrf.mxu0
    %v2343 = vadd.f32 %v2254, %v2342
    %v2344 = vpop.f32.mrf.mxu0
    %v2345 = vadd.f32 %v2256, %v2344
    %2346 = vmatmul.bf16.gmra.mxu0 %v1286
    %v2347 = vpop.f32.mrf.mxu0
    %v2348 = vadd.f32 %v2259, %v2347
    %v2349 = vpop.f32.mrf.mxu0
    %v2350 = vadd.f32 %v2261, %v2349
    %2351 = vmatmul.bf16.gmra.mxu0 %v1288
    %v2352 = vpop.f32.mrf.mxu0
    %v2353 = vadd.f32 %v2264, %v2352
    %v2354 = vpop.f32.mrf.mxu0
    %v2355 = vadd.f32 %v2266, %v2354
    %2356 = vmatmul.bf16.gmra.mxu0 %v1290
    %v2357 = vpop.f32.mrf.mxu0
    %v2358 = vadd.f32 %v2269, %v2357
    %v2359 = vpop.f32.mrf.mxu0
    %v2360 = vadd.f32 %v2271, %v2359
    %2361 = vmatmul.bf16.gmra.mxu0 %v1292
    %v2362 = vpop.f32.mrf.mxu0
    %v2363 = vadd.f32 %v2274, %v2362
    %v2364 = vpop.f32.mrf.mxu0
    %v2365 = vadd.f32 %v2276, %v2364
    %2366 = vmatmul.bf16.gmra.mxu0 %v1294
    %v2367 = vpop.f32.mrf.mxu0
    %v2368 = vadd.f32 %v2279, %v2367
    %v2369 = vpop.f32.mrf.mxu0
    %v2370 = vadd.f32 %v2281, %v2369
    %2371 = vmatmul.bf16.gmra.mxu0 %v1296
    %v2372 = vpop.f32.mrf.mxu0
    %v2373 = vadd.f32 %v2284, %v2372
    %v2374 = vpop.f32.mrf.mxu0
    %v2375 = vadd.f32 %v2286, %v2374
    %2376 = vmatmul.bf16.gmra.mxu0 %v1298
    %v2377 = vpop.f32.mrf.mxu0
    %v2378 = vadd.f32 %v2289, %v2377
    %v2379 = vpop.f32.mrf.mxu0
    %v2380 = vadd.f32 %v2291, %v2379
    %2381 = vmatmul.bf16.gmra.mxu0 %v1300
    %v2382 = vpop.f32.mrf.mxu0
    %v2383 = vadd.f32 %v2294, %v2382
    %v2384 = vpop.f32.mrf.mxu0
    %v2385 = vadd.f32 %v2296, %v2384
    %2386 = vmatmul.bf16.gmra.mxu0 %v1302
    %v2387 = vpop.f32.mrf.mxu0
    %v2388 = vadd.f32 %v2299, %v2387
    %v2389 = vpop.f32.mrf.mxu0
    %v2390 = vadd.f32 %v2301, %v2389
    %2391 = vmatmul.bf16.gmra.mxu0 %v1304
    %v2392 = vpop.f32.mrf.mxu0
    %v2393 = vadd.f32 %v2304, %v2392
    %v2394 = vpop.f32.mrf.mxu0
    %v2395 = vadd.f32 %v2306, %v2394
    %2396 = vmatmul.bf16.gmra.mxu0 %v1306
    %v2397 = vpop.f32.mrf.mxu0
    %v2398 = vadd.f32 %v2309, %v2397
    %v2399 = vpop.f32.mrf.mxu0
    %v2400 = vadd.f32 %v2311, %v2399
    %2401 = vmatmul.bf16.gmra.mxu0 %v1308
    %v2402 = vpop.f32.mrf.mxu0
    %v2403 = vadd.f32 %v2314, %v2402
    %v2404 = vpop.f32.mrf.mxu0
    %v2405 = vadd.f32 %v2316, %v2404
    %2406 = vdwg.mxu0
    %v2407 = vadd.f32 %v1794, %v1796
    %v2408 = vadd.f32 %v2407, %v1799
    %v2409 = vadd.f32 %v2408, %v1801
    %v2410 = vadd.f32 %v2409, %v1804
    %v2411 = vadd.f32 %v2410, %v1806
    %v2412 = vadd.f32 %v2411, %v1809
    %v2413 = vadd.f32 %v2412, %v1811
    %v2414 = vadd.f32 %v2413, %v1814
    %v2415 = vadd.f32 %v2414, %v1816
    %v2416 = vadd.f32 %v2415, %v1819
    %v2417 = vadd.f32 %v2416, %v1821
    %v2418 = vadd.f32 %v2417, %v1824
    %v2419 = vadd.f32 %v2418, %v1826
    %v2420 = vadd.f32 %v2419, %v1829
    %v2421 = vadd.f32 %v2420, %v1831
    %v2422 = vadd.f32 %v2421, %v1834
    %v2423 = vadd.f32 %v2422, %v1836
    %v2424 = vadd.f32 %v2423, %v1839
    %v2425 = vadd.f32 %v2424, %v1841
    %v2426 = vadd.f32 %v2425, %v1844
    %v2427 = vadd.f32 %v2426, %v1846
    %v2428 = vadd.f32 %v2427, %v1849
    %v2429 = vadd.f32 %v2428, %v1851
    %v2430 = vadd.f32 %v2429, %v1854
    %v2431 = vadd.f32 %v2430, %v1856
    %v2432 = vadd.f32 %v2431, %v1859
    %v2433 = vadd.f32 %v2432, %v1861
    %v2434 = vadd.f32 %v2433, %v1864
    %v2435 = vadd.f32 %v2434, %v1866
    %v2436 = vadd.f32 %v2435, %v1869
    %v2437 = vadd.f32 %v2436, %v1871
    %v2438 = vrot.slane %v2437, 4
    %v2439 = vadd.f32 %v2437, %v2438
    %v2440 = vrot.slane %v2439, 2
    %v2441 = vadd.f32 %v2439, %v2440
    %v2442 = vrot.slane %v2441, 1
    %v2443 = vadd.f32 %v2441, %v2442
    %v2444 = vadd.f32 %v1972, %v1974
    %v2445 = vadd.f32 %v2444, %v1977
    %v2446 = vadd.f32 %v2445, %v1979
    %v2447 = vadd.f32 %v2446, %v1982
    %v2448 = vadd.f32 %v2447, %v1984
    %v2449 = vadd.f32 %v2448, %v1987
    %v2450 = vadd.f32 %v2449, %v1989
    %v2451 = vadd.f32 %v2450, %v1992
    %v2452 = vadd.f32 %v2451, %v1994
    %v2453 = vadd.f32 %v2452, %v1997
    %v2454 = vadd.f32 %v2453, %v1999
    %v2455 = vadd.f32 %v2454, %v2002
    %v2456 = vadd.f32 %v2455, %v2004
    %v2457 = vadd.f32 %v2456, %v2007
    %v2458 = vadd.f32 %v2457, %v2009
    %v2459 = vadd.f32 %v2458, %v2012
    %v2460 = vadd.f32 %v2459, %v2014
    %v2461 = vadd.f32 %v2460, %v2017
    %v2462 = vadd.f32 %v2461, %v2019
    %v2463 = vadd.f32 %v2462, %v2022
    %v2464 = vadd.f32 %v2463, %v2024
    %v2465 = vadd.f32 %v2464, %v2027
    %v2466 = vadd.f32 %v2465, %v2029
    %v2467 = vadd.f32 %v2466, %v2032
    %v2468 = vadd.f32 %v2467, %v2034
    %v2469 = vadd.f32 %v2468, %v2037
    %v2470 = vadd.f32 %v2469, %v2039
    %v2471 = vadd.f32 %v2470, %v2042
    %v2472 = vadd.f32 %v2471, %v2044
    %v2473 = vadd.f32 %v2472, %v2047
    %v2474 = vadd.f32 %v2473, %v2049
    %v2475 = vrot.slane %v2474, 4
    %v2476 = vadd.f32 %v2474, %v2475
    %v2477 = vrot.slane %v2476, 2
    %v2478 = vadd.f32 %v2476, %v2477
    %v2479 = vrot.slane %v2478, 1
    %v2480 = vadd.f32 %v2478, %v2479
    %v2481 = vadd.f32 %v2150, %v2152
    %v2482 = vadd.f32 %v2481, %v2155
    %v2483 = vadd.f32 %v2482, %v2157
    %v2484 = vadd.f32 %v2483, %v2160
    %v2485 = vadd.f32 %v2484, %v2162
    %v2486 = vadd.f32 %v2485, %v2165
    %v2487 = vadd.f32 %v2486, %v2167
    %v2488 = vadd.f32 %v2487, %v2170
    %v2489 = vadd.f32 %v2488, %v2172
    %v2490 = vadd.f32 %v2489, %v2175
    %v2491 = vadd.f32 %v2490, %v2177
    %v2492 = vadd.f32 %v2491, %v2180
    %v2493 = vadd.f32 %v2492, %v2182
    %v2494 = vadd.f32 %v2493, %v2185
    %v2495 = vadd.f32 %v2494, %v2187
    %v2496 = vadd.f32 %v2495, %v2190
    %v2497 = vadd.f32 %v2496, %v2192
    %v2498 = vadd.f32 %v2497, %v2195
    %v2499 = vadd.f32 %v2498, %v2197
    %v2500 = vadd.f32 %v2499, %v2200
    %v2501 = vadd.f32 %v2500, %v2202
    %v2502 = vadd.f32 %v2501, %v2205
    %v2503 = vadd.f32 %v2502, %v2207
    %v2504 = vadd.f32 %v2503, %v2210
    %v2505 = vadd.f32 %v2504, %v2212
    %v2506 = vadd.f32 %v2505, %v2215
    %v2507 = vadd.f32 %v2506, %v2217
    %v2508 = vadd.f32 %v2507, %v2220
    %v2509 = vadd.f32 %v2508, %v2222
    %v2510 = vadd.f32 %v2509, %v2225
    %v2511 = vadd.f32 %v2510, %v2227
    %v2512 = vrot.slane %v2511, 4
    %v2513 = vadd.f32 %v2511, %v2512
    %v2514 = vrot.slane %v2513, 2
    %v2515 = vadd.f32 %v2513, %v2514
    %v2516 = vrot.slane %v2515, 1
    %v2517 = vadd.f32 %v2515, %v2516
    %v2518 = vadd.f32 %v2328, %v2330
    %v2519 = vadd.f32 %v2518, %v2333
    %v2520 = vadd.f32 %v2519, %v2335
    %v2521 = vadd.f32 %v2520, %v2338
    %v2522 = vadd.f32 %v2521, %v2340
    %v2523 = vadd.f32 %v2522, %v2343
    %v2524 = vadd.f32 %v2523, %v2345
    %v2525 = vadd.f32 %v2524, %v2348
    %v2526 = vadd.f32 %v2525, %v2350
    %v2527 = vadd.f32 %v2526, %v2353
    %v2528 = vadd.f32 %v2527, %v2355
    %v2529 = vadd.f32 %v2528, %v2358
    %v2530 = vadd.f32 %v2529, %v2360
    %v2531 = vadd.f32 %v2530, %v2363
    %v2532 = vadd.f32 %v2531, %v2365
    %v2533 = vadd.f32 %v2532, %v2368
    %v2534 = vadd.f32 %v2533, %v2370
    %v2535 = vadd.f32 %v2534, %v2373
    %v2536 = vadd.f32 %v2535, %v2375
    %v2537 = vadd.f32 %v2536, %v2378
    %v2538 = vadd.f32 %v2537, %v2380
    %v2539 = vadd.f32 %v2538, %v2383
    %v2540 = vadd.f32 %v2539, %v2385
    %v2541 = vadd.f32 %v2540, %v2388
    %v2542 = vadd.f32 %v2541, %v2390
    %v2543 = vadd.f32 %v2542, %v2393
    %v2544 = vadd.f32 %v2543, %v2395
    %v2545 = vadd.f32 %v2544, %v2398
    %v2546 = vadd.f32 %v2545, %v2400
    %v2547 = vadd.f32 %v2546, %v2403
    %v2548 = vadd.f32 %v2547, %v2405
    %v2549 = vrot.slane %v2548, 4
    %v2550 = vadd.f32 %v2548, %v2549
    %v2551 = vrot.slane %v2550, 2
    %v2552 = vadd.f32 %v2550, %v2551
    %v2553 = vrot.slane %v2552, 1
    %v2554 = vadd.f32 %v2552, %v2553
    %v2555 = vmul.f32 %v2443, %v829
    %v2556 = vmul.f32 %v2480, %v829
    %v2557 = vmul.f32 %v2517, %v829
    %v2558 = vmul.f32 %v2554, %v829
    %v2559 = vmul.f32 %v1794, %v1794
    %v2560 = vmul.f32 %v1972, %v1972
    %v2561 = vmul.f32 %v2150, %v2150
    %v2562 = vmul.f32 %v2328, %v2328
    %v2563 = vmul.f32 %v1796, %v1796
    %v2564 = vmul.f32 %v1974, %v1974
    %v2565 = vmul.f32 %v2152, %v2152
    %v2566 = vmul.f32 %v2330, %v2330
    %v2567 = vmul.f32 %v1799, %v1799
    %v2568 = vmul.f32 %v1977, %v1977
    %v2569 = vmul.f32 %v2155, %v2155
    %v2570 = vmul.f32 %v2333, %v2333
    %v2571 = vmul.f32 %v1801, %v1801
    %v2572 = vmul.f32 %v1979, %v1979
    %v2573 = vmul.f32 %v2157, %v2157
    %v2574 = vmul.f32 %v2335, %v2335
    %v2575 = vmul.f32 %v1804, %v1804
    %v2576 = vmul.f32 %v1982, %v1982
    %v2577 = vmul.f32 %v2160, %v2160
    %v2578 = vmul.f32 %v2338, %v2338
    %v2579 = vmul.f32 %v1806, %v1806
    %v2580 = vmul.f32 %v1984, %v1984
    %v2581 = vmul.f32 %v2162, %v2162
    %v2582 = vmul.f32 %v2340, %v2340
    %v2583 = vmul.f32 %v1809, %v1809
    %v2584 = vmul.f32 %v1987, %v1987
    %v2585 = vmul.f32 %v2165, %v2165
    %v2586 = vmul.f32 %v2343, %v2343
    %v2587 = vmul.f32 %v1811, %v1811
    %v2588 = vmul.f32 %v1989, %v1989
    %v2589 = vmul.f32 %v2167, %v2167
    %v2590 = vmul.f32 %v2345, %v2345
    %v2591 = vmul.f32 %v1814, %v1814
    %v2592 = vmul.f32 %v1992, %v1992
    %v2593 = vmul.f32 %v2170, %v2170
    %v2594 = vmul.f32 %v2348, %v2348
    %v2595 = vmul.f32 %v1816, %v1816
    %v2596 = vmul.f32 %v1994, %v1994
    %v2597 = vmul.f32 %v2172, %v2172
    %v2598 = vmul.f32 %v2350, %v2350
    %v2599 = vmul.f32 %v1819, %v1819
    %v2600 = vmul.f32 %v1997, %v1997
    %v2601 = vmul.f32 %v2175, %v2175
    %v2602 = vmul.f32 %v2353, %v2353
    %v2603 = vmul.f32 %v1821, %v1821
    %v2604 = vmul.f32 %v1999, %v1999
    %v2605 = vmul.f32 %v2177, %v2177
    %v2606 = vmul.f32 %v2355, %v2355
    %v2607 = vmul.f32 %v1824, %v1824
    %v2608 = vmul.f32 %v2002, %v2002
    %v2609 = vmul.f32 %v2180, %v2180
    %v2610 = vmul.f32 %v2358, %v2358
    %v2611 = vmul.f32 %v1826, %v1826
    %v2612 = vmul.f32 %v2004, %v2004
    %v2613 = vmul.f32 %v2182, %v2182
    %v2614 = vmul.f32 %v2360, %v2360
    %v2615 = vmul.f32 %v1829, %v1829
    %v2616 = vmul.f32 %v2007, %v2007
    %v2617 = vmul.f32 %v2185, %v2185
    %v2618 = vmul.f32 %v2363, %v2363
    %v2619 = vmul.f32 %v1831, %v1831
    %v2620 = vmul.f32 %v2009, %v2009
    %v2621 = vmul.f32 %v2187, %v2187
    %v2622 = vmul.f32 %v2365, %v2365
    %v2623 = vmul.f32 %v1834, %v1834
    %v2624 = vmul.f32 %v2012, %v2012
    %v2625 = vmul.f32 %v2190, %v2190
    %v2626 = vmul.f32 %v2368, %v2368
    %v2627 = vmul.f32 %v1836, %v1836
    %v2628 = vmul.f32 %v2014, %v2014
    %v2629 = vmul.f32 %v2192, %v2192
    %v2630 = vmul.f32 %v2370, %v2370
    %v2631 = vmul.f32 %v1839, %v1839
    %v2632 = vmul.f32 %v2017, %v2017
    %v2633 = vmul.f32 %v2195, %v2195
    %v2634 = vmul.f32 %v2373, %v2373
    %v2635 = vmul.f32 %v1841, %v1841
    %v2636 = vmul.f32 %v2019, %v2019
    %v2637 = vmul.f32 %v2197, %v2197
    %v2638 = vmul.f32 %v2375, %v2375
    %v2639 = vmul.f32 %v1844, %v1844
    %v2640 = vmul.f32 %v2022, %v2022
    %v2641 = vmul.f32 %v2200, %v2200
    %v2642 = vmul.f32 %v2378, %v2378
    %v2643 = vmul.f32 %v1846, %v1846
    %v2644 = vmul.f32 %v2024, %v2024
    %v2645 = vmul.f32 %v2202, %v2202
    %v2646 = vmul.f32 %v2380, %v2380
    %v2647 = vmul.f32 %v1849, %v1849
    %v2648 = vmul.f32 %v2027, %v2027
    %v2649 = vmul.f32 %v2205, %v2205
    %v2650 = vmul.f32 %v2383, %v2383
    %v2651 = vmul.f32 %v1851, %v1851
    %v2652 = vmul.f32 %v2029, %v2029
    %v2653 = vmul.f32 %v2207, %v2207
    %v2654 = vmul.f32 %v2385, %v2385
    %v2655 = vmul.f32 %v1854, %v1854
    %v2656 = vmul.f32 %v2032, %v2032
    %v2657 = vmul.f32 %v2210, %v2210
    %v2658 = vmul.f32 %v2388, %v2388
    %v2659 = vmul.f32 %v1856, %v1856
    %v2660 = vmul.f32 %v2034, %v2034
    %v2661 = vmul.f32 %v2212, %v2212
    %v2662 = vmul.f32 %v2390, %v2390
    %v2663 = vmul.f32 %v1859, %v1859
    %v2664 = vmul.f32 %v2037, %v2037
    %v2665 = vmul.f32 %v2215, %v2215
    %v2666 = vmul.f32 %v2393, %v2393
    %v2667 = vmul.f32 %v1861, %v1861
    %v2668 = vmul.f32 %v2039, %v2039
    %v2669 = vmul.f32 %v2217, %v2217
    %v2670 = vmul.f32 %v2395, %v2395
    %v2671 = vmul.f32 %v1864, %v1864
    %v2672 = vmul.f32 %v2042, %v2042
    %v2673 = vmul.f32 %v2220, %v2220
    %v2674 = vmul.f32 %v2398, %v2398
    %v2675 = vmul.f32 %v1866, %v1866
    %v2676 = vmul.f32 %v2044, %v2044
    %v2677 = vmul.f32 %v2222, %v2222
    %v2678 = vmul.f32 %v2400, %v2400
    %v2679 = vmul.f32 %v1869, %v1869
    %v2680 = vmul.f32 %v2047, %v2047
    %v2681 = vmul.f32 %v2225, %v2225
    %v2682 = vmul.f32 %v2403, %v2403
    %v2683 = vmul.f32 %v1871, %v1871
    %v2684 = vmul.f32 %v2049, %v2049
    %v2685 = vmul.f32 %v2227, %v2227
    %v2686 = vmul.f32 %v2405, %v2405
    %v2687 = vadd.f32 %v2559, %v2563
    %v2688 = vadd.f32 %v2687, %v2567
    %v2689 = vadd.f32 %v2688, %v2571
    %v2690 = vadd.f32 %v2689, %v2575
    %v2691 = vadd.f32 %v2690, %v2579
    %v2692 = vadd.f32 %v2691, %v2583
    %v2693 = vadd.f32 %v2692, %v2587
    %v2694 = vadd.f32 %v2693, %v2591
    %v2695 = vadd.f32 %v2694, %v2595
    %v2696 = vadd.f32 %v2695, %v2599
    %v2697 = vadd.f32 %v2696, %v2603
    %v2698 = vadd.f32 %v2697, %v2607
    %v2699 = vadd.f32 %v2698, %v2611
    %v2700 = vadd.f32 %v2699, %v2615
    %v2701 = vadd.f32 %v2700, %v2619
    %v2702 = vadd.f32 %v2701, %v2623
    %v2703 = vadd.f32 %v2702, %v2627
    %v2704 = vadd.f32 %v2703, %v2631
    %v2705 = vadd.f32 %v2704, %v2635
    %v2706 = vadd.f32 %v2705, %v2639
    %v2707 = vadd.f32 %v2706, %v2643
    %v2708 = vadd.f32 %v2707, %v2647
    %v2709 = vadd.f32 %v2708, %v2651
    %v2710 = vadd.f32 %v2709, %v2655
    %v2711 = vadd.f32 %v2710, %v2659
    %v2712 = vadd.f32 %v2711, %v2663
    %v2713 = vadd.f32 %v2712, %v2667
    %v2714 = vadd.f32 %v2713, %v2671
    %v2715 = vadd.f32 %v2714, %v2675
    %v2716 = vadd.f32 %v2715, %v2679
    %v2717 = vadd.f32 %v2716, %v2683
    %v2718 = vrot.slane %v2717, 4
    %v2719 = vadd.f32 %v2717, %v2718
    %v2720 = vrot.slane %v2719, 2
    %v2721 = vadd.f32 %v2719, %v2720
    %v2722 = vrot.slane %v2721, 1
    %v2723 = vadd.f32 %v2721, %v2722
    %v2724 = vadd.f32 %v2560, %v2564
    %v2725 = vadd.f32 %v2724, %v2568
    %v2726 = vadd.f32 %v2725, %v2572
    %v2727 = vadd.f32 %v2726, %v2576
    %v2728 = vadd.f32 %v2727, %v2580
    %v2729 = vadd.f32 %v2728, %v2584
    %v2730 = vadd.f32 %v2729, %v2588
    %v2731 = vadd.f32 %v2730, %v2592
    %v2732 = vadd.f32 %v2731, %v2596
    %v2733 = vadd.f32 %v2732, %v2600
    %v2734 = vadd.f32 %v2733, %v2604
    %v2735 = vadd.f32 %v2734, %v2608
    %v2736 = vadd.f32 %v2735, %v2612
    %v2737 = vadd.f32 %v2736, %v2616
    %v2738 = vadd.f32 %v2737, %v2620
    %v2739 = vadd.f32 %v2738, %v2624
    %v2740 = vadd.f32 %v2739, %v2628
    %v2741 = vadd.f32 %v2740, %v2632
    %v2742 = vadd.f32 %v2741, %v2636
    %v2743 = vadd.f32 %v2742, %v2640
    %v2744 = vadd.f32 %v2743, %v2644
    %v2745 = vadd.f32 %v2744, %v2648
    %v2746 = vadd.f32 %v2745, %v2652
    %v2747 = vadd.f32 %v2746, %v2656
    %v2748 = vadd.f32 %v2747, %v2660
    %v2749 = vadd.f32 %v2748, %v2664
    %v2750 = vadd.f32 %v2749, %v2668
    %v2751 = vadd.f32 %v2750, %v2672
    %v2752 = vadd.f32 %v2751, %v2676
    %v2753 = vadd.f32 %v2752, %v2680
    %v2754 = vadd.f32 %v2753, %v2684
    %v2755 = vrot.slane %v2754, 4
    %v2756 = vadd.f32 %v2754, %v2755
    %v2757 = vrot.slane %v2756, 2
    %v2758 = vadd.f32 %v2756, %v2757
    %v2759 = vrot.slane %v2758, 1
    %v2760 = vadd.f32 %v2758, %v2759
    %v2761 = vadd.f32 %v2561, %v2565
    %v2762 = vadd.f32 %v2761, %v2569
    %v2763 = vadd.f32 %v2762, %v2573
    %v2764 = vadd.f32 %v2763, %v2577
    %v2765 = vadd.f32 %v2764, %v2581
    %v2766 = vadd.f32 %v2765, %v2585
    %v2767 = vadd.f32 %v2766, %v2589
    %v2768 = vadd.f32 %v2767, %v2593
    %v2769 = vadd.f32 %v2768, %v2597
    %v2770 = vadd.f32 %v2769, %v2601
    %v2771 = vadd.f32 %v2770, %v2605
    %v2772 = vadd.f32 %v2771, %v2609
    %v2773 = vadd.f32 %v2772, %v2613
    %v2774 = vadd.f32 %v2773, %v2617
    %v2775 = vadd.f32 %v2774, %v2621
    %v2776 = vadd.f32 %v2775, %v2625
    %v2777 = vadd.f32 %v2776, %v2629
    %v2778 = vadd.f32 %v2777, %v2633
    %v2779 = vadd.f32 %v2778, %v2637
    %v2780 = vadd.f32 %v2779, %v2641
    %v2781 = vadd.f32 %v2780, %v2645
    %v2782 = vadd.f32 %v2781, %v2649
    %v2783 = vadd.f32 %v2782, %v2653
    %v2784 = vadd.f32 %v2783, %v2657
    %v2785 = vadd.f32 %v2784, %v2661
    %v2786 = vadd.f32 %v2785, %v2665
    %v2787 = vadd.f32 %v2786, %v2669
    %v2788 = vadd.f32 %v2787, %v2673
    %v2789 = vadd.f32 %v2788, %v2677
    %v2790 = vadd.f32 %v2789, %v2681
    %v2791 = vadd.f32 %v2790, %v2685
    %v2792 = vrot.slane %v2791, 4
    %v2793 = vadd.f32 %v2791, %v2792
    %v2794 = vrot.slane %v2793, 2
    %v2795 = vadd.f32 %v2793, %v2794
    %v2796 = vrot.slane %v2795, 1
    %v2797 = vadd.f32 %v2795, %v2796
    %v2798 = vadd.f32 %v2562, %v2566
    %v2799 = vadd.f32 %v2798, %v2570
    %v2800 = vadd.f32 %v2799, %v2574
    %v2801 = vadd.f32 %v2800, %v2578
    %v2802 = vadd.f32 %v2801, %v2582
    %v2803 = vadd.f32 %v2802, %v2586
    %v2804 = vadd.f32 %v2803, %v2590
    %v2805 = vadd.f32 %v2804, %v2594
    %v2806 = vadd.f32 %v2805, %v2598
    %v2807 = vadd.f32 %v2806, %v2602
    %v2808 = vadd.f32 %v2807, %v2606
    %v2809 = vadd.f32 %v2808, %v2610
    %v2810 = vadd.f32 %v2809, %v2614
    %v2811 = vadd.f32 %v2810, %v2618
    %v2812 = vadd.f32 %v2811, %v2622
    %v2813 = vadd.f32 %v2812, %v2626
    %v2814 = vadd.f32 %v2813, %v2630
    %v2815 = vadd.f32 %v2814, %v2634
    %v2816 = vadd.f32 %v2815, %v2638
    %v2817 = vadd.f32 %v2816, %v2642
    %v2818 = vadd.f32 %v2817, %v2646
    %v2819 = vadd.f32 %v2818, %v2650
    %v2820 = vadd.f32 %v2819, %v2654
    %v2821 = vadd.f32 %v2820, %v2658
    %v2822 = vadd.f32 %v2821, %v2662
    %v2823 = vadd.f32 %v2822, %v2666
    %v2824 = vadd.f32 %v2823, %v2670
    %v2825 = vadd.f32 %v2824, %v2674
    %v2826 = vadd.f32 %v2825, %v2678
    %v2827 = vadd.f32 %v2826, %v2682
    %v2828 = vadd.f32 %v2827, %v2686
    %v2829 = vrot.slane %v2828, 4
    %v2830 = vadd.f32 %v2828, %v2829
    %v2831 = vrot.slane %v2830, 2
    %v2832 = vadd.f32 %v2830, %v2831
    %v2833 = vrot.slane %v2832, 1
    %v2834 = vadd.f32 %v2832, %v2833
    %v2835 = vmul.f32 %v2723, %v829
    %v2836 = vmul.f32 %v2760, %v829
    %v2837 = vmul.f32 %v2797, %v829
    %v2838 = vmul.f32 %v2834, %v829
    %v2839 = vmul.f32 %v2555, %v2555
    %v2840 = vmul.f32 %v2556, %v2556
    %v2841 = vmul.f32 %v2557, %v2557
    %v2842 = vmul.f32 %v2558, %v2558
    %v2843 = vsub.f32 %v2835, %v2839
    %v2844 = vsub.f32 %v2836, %v2840
    %v2845 = vsub.f32 %v2837, %v2841
    %v2846 = vsub.f32 %v2838, %v2842
    %v2847 = vadd.f32 %v2843, 0.8
    %v2848 = vadd.f32 %v2844, 0.8
    %v2849 = vadd.f32 %v2845, 0.8
    %v2850 = vadd.f32 %v2846, 0.8
    %v2851 = vrsqrt.pop %v2847
    %v2852 = vmul.f32 %v2851, %v2847
    %v2853 = vmul.f32 %v2852, %v2851
    %v2854 = vmul.f32 0.5, %v2853
    %v2855 = vsub.f32 1.5, %v2854
    %v2856 = vmul.f32 %v2851, %v2855
    %vm2857 = vweird.f32 %v2847
    %vm2858 = vweird.f32 %v2851
    %vm2859 = vmor %vm2857, %vm2858
    %v2860 = vsel %vm2859, %v2851, %v2856
    %v2861 = vrsqrt.pop %v2848
    %v2862 = vmul.f32 %v2861, %v2848
    %v2863 = vmul.f32 %v2862, %v2861
    %v2864 = vmul.f32 0.5, %v2863
    %v2865 = vsub.f32 1.5, %v2864
    %v2866 = vmul.f32 %v2861, %v2865
    %vm2867 = vweird.f32 %v2848
    %vm2868 = vweird.f32 %v2861
    %vm2869 = vmor %vm2867, %vm2868
    %v2870 = vsel %vm2869, %v2861, %v2866
    %v2871 = vrsqrt.pop %v2849
    %v2872 = vmul.f32 %v2871, %v2849
    %v2873 = vmul.f32 %v2872, %v2871
    %v2874 = vmul.f32 0.5, %v2873
    %v2875 = vsub.f32 1.5, %v2874
    %v2876 = vmul.f32 %v2871, %v2875
    %vm2877 = vweird.f32 %v2849
    %vm2878 = vweird.f32 %v2871
    %vm2879 = vmor %vm2877, %vm2878
    %v2880 = vsel %vm2879, %v2871, %v2876
    %v2881 = vrsqrt.pop %v2850
    %v2882 = vmul.f32 %v2881, %v2850
    %v2883 = vmul.f32 %v2882, %v2881
    %v2884 = vmul.f32 0.5, %v2883
    %v2885 = vsub.f32 1.5, %v2884
    %v2886 = vmul.f32 %v2881, %v2885
    %vm2887 = vweird.f32 %v2850
    %vm2888 = vweird.f32 %v2881
    %vm2889 = vmor %vm2887, %vm2888
    %v2890 = vsel %vm2889, %v2881, %v2886
    %v2892 = vperm.slane %v1373, 0
    %v2893 = vperm.slane %v1373, 1
    %v2894 = vperm.slane %v1373, 2
    %v2895 = vperm.slane %v1373, 3
    %v2900 = vmul.f32 %v2860, %v2892
    %v2901 = vmul.f32 %v2870, %v2893
    %v2902 = vmul.f32 %v2880, %v2894
    %v2903 = vmul.f32 %v2890, %v2895
    %v2904 = vmul.f32 %v2555, %v2900
    %v2905 = vmul.f32 %v2556, %v2901
    %v2906 = vmul.f32 %v2557, %v2902
    %v2907 = vmul.f32 %v2558, %v2903
    %v2912 = vrot.slane %v2905, 7
    %v2913 = vrot.slane %v2906, 6
    %v2914 = vrot.slane %v2907, 5
    %v2915 = vsel %vm1010, %v2904, %v2912
    %vm2916 = vcmask 1042434
    %v2917 = vsel %vm2916, %v2913, %v2914
    %vm2918 = vcmask 1041408
    %v2919 = vsel %vm2918, %v2915, %v2917
    %v2921 = vsub.f32 %v1374, %v2919
    %v2922 = vperm.slane %v2900, 0
    %v2923 = vperm.slane %v2901, 0
    %v2924 = vperm.slane %v2902, 0
    %v2925 = vperm.slane %v2903, 0
    %v2926 = vmul.f32 %v1794, %v2922
    %v2927 = vmul.f32 %v1972, %v2923
    %v2928 = vmul.f32 %v2150, %v2924
    %v2929 = vmul.f32 %v2328, %v2925
    %v2930 = vmul.f32 %v1796, %v2922
    %v2931 = vmul.f32 %v1974, %v2923
    %v2932 = vmul.f32 %v2152, %v2924
    %v2933 = vmul.f32 %v2330, %v2925
    %v2934 = vmul.f32 %v1799, %v2922
    %v2935 = vmul.f32 %v1977, %v2923
    %v2936 = vmul.f32 %v2155, %v2924
    %v2937 = vmul.f32 %v2333, %v2925
    %v2938 = vmul.f32 %v1801, %v2922
    %v2939 = vmul.f32 %v1979, %v2923
    %v2940 = vmul.f32 %v2157, %v2924
    %v2941 = vmul.f32 %v2335, %v2925
    %v2942 = vmul.f32 %v1804, %v2922
    %v2943 = vmul.f32 %v1982, %v2923
    %v2944 = vmul.f32 %v2160, %v2924
    %v2945 = vmul.f32 %v2338, %v2925
    %v2946 = vmul.f32 %v1806, %v2922
    %v2947 = vmul.f32 %v1984, %v2923
    %v2948 = vmul.f32 %v2162, %v2924
    %v2949 = vmul.f32 %v2340, %v2925
    %v2950 = vmul.f32 %v1809, %v2922
    %v2951 = vmul.f32 %v1987, %v2923
    %v2952 = vmul.f32 %v2165, %v2924
    %v2953 = vmul.f32 %v2343, %v2925
    %v2954 = vmul.f32 %v1811, %v2922
    %v2955 = vmul.f32 %v1989, %v2923
    %v2956 = vmul.f32 %v2167, %v2924
    %v2957 = vmul.f32 %v2345, %v2925
    %v2958 = vmul.f32 %v1814, %v2922
    %v2959 = vmul.f32 %v1992, %v2923
    %v2960 = vmul.f32 %v2170, %v2924
    %v2961 = vmul.f32 %v2348, %v2925
    %v2962 = vmul.f32 %v1816, %v2922
    %v2963 = vmul.f32 %v1994, %v2923
    %v2964 = vmul.f32 %v2172, %v2924
    %v2965 = vmul.f32 %v2350, %v2925
    %v2966 = vmul.f32 %v1819, %v2922
    %v2967 = vmul.f32 %v1997, %v2923
    %v2968 = vmul.f32 %v2175, %v2924
    %v2969 = vmul.f32 %v2353, %v2925
    %v2970 = vmul.f32 %v1821, %v2922
    %v2971 = vmul.f32 %v1999, %v2923
    %v2972 = vmul.f32 %v2177, %v2924
    %v2973 = vmul.f32 %v2355, %v2925
    %v2974 = vmul.f32 %v1824, %v2922
    %v2975 = vmul.f32 %v2002, %v2923
    %v2976 = vmul.f32 %v2180, %v2924
    %v2977 = vmul.f32 %v2358, %v2925
    %v2978 = vmul.f32 %v1826, %v2922
    %v2979 = vmul.f32 %v2004, %v2923
    %v2980 = vmul.f32 %v2182, %v2924
    %v2981 = vmul.f32 %v2360, %v2925
    %v2982 = vmul.f32 %v1829, %v2922
    %v2983 = vmul.f32 %v2007, %v2923
    %v2984 = vmul.f32 %v2185, %v2924
    %v2985 = vmul.f32 %v2363, %v2925
    %v2986 = vmul.f32 %v1831, %v2922
    %v2987 = vmul.f32 %v2009, %v2923
    %v2988 = vmul.f32 %v2187, %v2924
    %v2989 = vmul.f32 %v2365, %v2925
    %v2990 = vmul.f32 %v1834, %v2922
    %v2991 = vmul.f32 %v2012, %v2923
    %v2992 = vmul.f32 %v2190, %v2924
    %v2993 = vmul.f32 %v2368, %v2925
    %v2994 = vmul.f32 %v1836, %v2922
    %v2995 = vmul.f32 %v2014, %v2923
    %v2996 = vmul.f32 %v2192, %v2924
    %v2997 = vmul.f32 %v2370, %v2925
    %v2998 = vmul.f32 %v1839, %v2922
    %v2999 = vmul.f32 %v2017, %v2923
    %v3000 = vmul.f32 %v2195, %v2924
    %v3001 = vmul.f32 %v2373, %v2925
    %v3002 = vmul.f32 %v1841, %v2922
    %v3003 = vmul.f32 %v2019, %v2923
    %v3004 = vmul.f32 %v2197, %v2924
    %v3005 = vmul.f32 %v2375, %v2925
    %v3006 = vmul.f32 %v1844, %v2922
    %v3007 = vmul.f32 %v2022, %v2923
    %v3008 = vmul.f32 %v2200, %v2924
    %v3009 = vmul.f32 %v2378, %v2925
    %v3010 = vmul.f32 %v1846, %v2922
    %v3011 = vmul.f32 %v2024, %v2923
    %v3012 = vmul.f32 %v2202, %v2924
    %v3013 = vmul.f32 %v2380, %v2925
    %v3014 = vmul.f32 %v1849, %v2922
    %v3015 = vmul.f32 %v2027, %v2923
    %v3016 = vmul.f32 %v2205, %v2924
    %v3017 = vmul.f32 %v2383, %v2925
    %v3018 = vmul.f32 %v1851, %v2922
    %v3019 = vmul.f32 %v2029, %v2923
    %v3020 = vmul.f32 %v2207, %v2924
    %v3021 = vmul.f32 %v2385, %v2925
    %v3022 = vmul.f32 %v1854, %v2922
    %v3023 = vmul.f32 %v2032, %v2923
    %v3024 = vmul.f32 %v2210, %v2924
    %v3025 = vmul.f32 %v2388, %v2925
    %v3026 = vmul.f32 %v1856, %v2922
    %v3027 = vmul.f32 %v2034, %v2923
    %v3028 = vmul.f32 %v2212, %v2924
    %v3029 = vmul.f32 %v2390, %v2925
    %v3030 = vmul.f32 %v1859, %v2922
    %v3031 = vmul.f32 %v2037, %v2923
    %v3032 = vmul.f32 %v2215, %v2924
    %v3033 = vmul.f32 %v2393, %v2925
    %v3034 = vmul.f32 %v1861, %v2922
    %v3035 = vmul.f32 %v2039, %v2923
    %v3036 = vmul.f32 %v2217, %v2924
    %v3037 = vmul.f32 %v2395, %v2925
    %v3038 = vmul.f32 %v1864, %v2922
    %v3039 = vmul.f32 %v2042, %v2923
    %v3040 = vmul.f32 %v2220, %v2924
    %v3041 = vmul.f32 %v2398, %v2925
    %v3042 = vmul.f32 %v1866, %v2922
    %v3043 = vmul.f32 %v2044, %v2923
    %v3044 = vmul.f32 %v2222, %v2924
    %v3045 = vmul.f32 %v2400, %v2925
    %v3046 = vmul.f32 %v1869, %v2922
    %v3047 = vmul.f32 %v2047, %v2923
    %v3048 = vmul.f32 %v2225, %v2924
    %v3049 = vmul.f32 %v2403, %v2925
    %v3050 = vmul.f32 %v1871, %v2922
    %v3051 = vmul.f32 %v2049, %v2923
    %v3052 = vmul.f32 %v2227, %v2924
    %v3053 = vmul.f32 %v2405, %v2925
    %v3055 = vperm.slane %v2921, 0
    %v3056 = vperm.slane %v2921, 1
    %v3057 = vperm.slane %v2921, 2
    %v3058 = vperm.slane %v2921, 3
    %v3063 = vadd.f32 %v2926, %v3055
    %v3064 = vadd.f32 %v2927, %v3056
    %v3065 = vadd.f32 %v2928, %v3057
    %v3066 = vadd.f32 %v2929, %v3058
    %v3067 = vadd.f32 %v2930, %v3055
    %v3068 = vadd.f32 %v2931, %v3056
    %v3069 = vadd.f32 %v2932, %v3057
    %v3070 = vadd.f32 %v2933, %v3058
    %v3071 = vadd.f32 %v2934, %v3055
    %v3072 = vadd.f32 %v2935, %v3056
    %v3073 = vadd.f32 %v2936, %v3057
    %v3074 = vadd.f32 %v2937, %v3058
    %v3075 = vadd.f32 %v2938, %v3055
    %v3076 = vadd.f32 %v2939, %v3056
    %v3077 = vadd.f32 %v2940, %v3057
    %v3078 = vadd.f32 %v2941, %v3058
    %v3079 = vadd.f32 %v2942, %v3055
    %v3080 = vadd.f32 %v2943, %v3056
    %v3081 = vadd.f32 %v2944, %v3057
    %v3082 = vadd.f32 %v2945, %v3058
    %v3083 = vadd.f32 %v2946, %v3055
    %v3084 = vadd.f32 %v2947, %v3056
    %v3085 = vadd.f32 %v2948, %v3057
    %v3086 = vadd.f32 %v2949, %v3058
    %v3087 = vadd.f32 %v2950, %v3055
    %v3088 = vadd.f32 %v2951, %v3056
    %v3089 = vadd.f32 %v2952, %v3057
    %v3090 = vadd.f32 %v2953, %v3058
    %v3091 = vadd.f32 %v2954, %v3055
    %v3092 = vadd.f32 %v2955, %v3056
    %v3093 = vadd.f32 %v2956, %v3057
    %v3094 = vadd.f32 %v2957, %v3058
    %v3095 = vadd.f32 %v2958, %v3055
    %v3096 = vadd.f32 %v2959, %v3056
    %v3097 = vadd.f32 %v2960, %v3057
    %v3098 = vadd.f32 %v2961, %v3058
    %v3099 = vadd.f32 %v2962, %v3055
    %v3100 = vadd.f32 %v2963, %v3056
    %v3101 = vadd.f32 %v2964, %v3057
    %v3102 = vadd.f32 %v2965, %v3058
    %v3103 = vadd.f32 %v2966, %v3055
    %v3104 = vadd.f32 %v2967, %v3056
    %v3105 = vadd.f32 %v2968, %v3057
    %v3106 = vadd.f32 %v2969, %v3058
    %v3107 = vadd.f32 %v2970, %v3055
    %v3108 = vadd.f32 %v2971, %v3056
    %v3109 = vadd.f32 %v2972, %v3057
    %v3110 = vadd.f32 %v2973, %v3058
    %v3111 = vadd.f32 %v2974, %v3055
    %v3112 = vadd.f32 %v2975, %v3056
    %v3113 = vadd.f32 %v2976, %v3057
    %v3114 = vadd.f32 %v2977, %v3058
    %v3115 = vadd.f32 %v2978, %v3055
    %v3116 = vadd.f32 %v2979, %v3056
    %v3117 = vadd.f32 %v2980, %v3057
    %v3118 = vadd.f32 %v2981, %v3058
    %v3119 = vadd.f32 %v2982, %v3055
    %v3120 = vadd.f32 %v2983, %v3056
    %v3121 = vadd.f32 %v2984, %v3057
    %v3122 = vadd.f32 %v2985, %v3058
    %v3123 = vadd.f32 %v2986, %v3055
    %v3124 = vadd.f32 %v2987, %v3056
    %v3125 = vadd.f32 %v2988, %v3057
    %v3126 = vadd.f32 %v2989, %v3058
    %v3127 = vadd.f32 %v2990, %v3055
    %v3128 = vadd.f32 %v2991, %v3056
    %v3129 = vadd.f32 %v2992, %v3057
    %v3130 = vadd.f32 %v2993, %v3058
    %v3131 = vadd.f32 %v2994, %v3055
    %v3132 = vadd.f32 %v2995, %v3056
    %v3133 = vadd.f32 %v2996, %v3057
    %v3134 = vadd.f32 %v2997, %v3058
    %v3135 = vadd.f32 %v2998, %v3055
    %v3136 = vadd.f32 %v2999, %v3056
    %v3137 = vadd.f32 %v3000, %v3057
    %v3138 = vadd.f32 %v3001, %v3058
    %v3139 = vadd.f32 %v3002, %v3055
    %v3140 = vadd.f32 %v3003, %v3056
    %v3141 = vadd.f32 %v3004, %v3057
    %v3142 = vadd.f32 %v3005, %v3058
    %v3143 = vadd.f32 %v3006, %v3055
    %v3144 = vadd.f32 %v3007, %v3056
    %v3145 = vadd.f32 %v3008, %v3057
    %v3146 = vadd.f32 %v3009, %v3058
    %v3147 = vadd.f32 %v3010, %v3055
    %v3148 = vadd.f32 %v3011, %v3056
    %v3149 = vadd.f32 %v3012, %v3057
    %v3150 = vadd.f32 %v3013, %v3058
    %v3151 = vadd.f32 %v3014, %v3055
    %v3152 = vadd.f32 %v3015, %v3056
    %v3153 = vadd.f32 %v3016, %v3057
    %v3154 = vadd.f32 %v3017, %v3058
    %v3155 = vadd.f32 %v3018, %v3055
    %v3156 = vadd.f32 %v3019, %v3056
    %v3157 = vadd.f32 %v3020, %v3057
    %v3158 = vadd.f32 %v3021, %v3058
    %v3159 = vadd.f32 %v3022, %v3055
    %v3160 = vadd.f32 %v3023, %v3056
    %v3161 = vadd.f32 %v3024, %v3057
    %v3162 = vadd.f32 %v3025, %v3058
    %v3163 = vadd.f32 %v3026, %v3055
    %v3164 = vadd.f32 %v3027, %v3056
    %v3165 = vadd.f32 %v3028, %v3057
    %v3166 = vadd.f32 %v3029, %v3058
    %v3167 = vadd.f32 %v3030, %v3055
    %v3168 = vadd.f32 %v3031, %v3056
    %v3169 = vadd.f32 %v3032, %v3057
    %v3170 = vadd.f32 %v3033, %v3058
    %v3171 = vadd.f32 %v3034, %v3055
    %v3172 = vadd.f32 %v3035, %v3056
    %v3173 = vadd.f32 %v3036, %v3057
    %v3174 = vadd.f32 %v3037, %v3058
    %v3175 = vadd.f32 %v3038, %v3055
    %v3176 = vadd.f32 %v3039, %v3056
    %v3177 = vadd.f32 %v3040, %v3057
    %v3178 = vadd.f32 %v3041, %v3058
    %v3179 = vadd.f32 %v3042, %v3055
    %v3180 = vadd.f32 %v3043, %v3056
    %v3181 = vadd.f32 %v3044, %v3057
    %v3182 = vadd.f32 %v3045, %v3058
    %v3183 = vadd.f32 %v3046, %v3055
    %v3184 = vadd.f32 %v3047, %v3056
    %v3185 = vadd.f32 %v3048, %v3057
    %v3186 = vadd.f32 %v3049, %v3058
    %v3187 = vadd.f32 %v3050, %v3055
    %v3188 = vadd.f32 %v3051, %v3056
    %v3189 = vadd.f32 %v3052, %v3057
    %v3190 = vadd.f32 %v3053, %v3058
    %v3191 = vmul.f32 %v3063, 0.2
    %v3192 = vmul.f32 %v3064, 0.2
    %v3193 = vmul.f32 %v3065, 0.2
    %v3194 = vmul.f32 %v3066, 0.2
    %v3195 = vmul.f32 %v3067, 0.2
    %v3196 = vmul.f32 %v3068, 0.2
    %v3197 = vmul.f32 %v3069, 0.2
    %v3198 = vmul.f32 %v3070, 0.2
    %v3199 = vmul.f32 %v3071, 0.2
    %v3200 = vmul.f32 %v3072, 0.2
    %v3201 = vmul.f32 %v3073, 0.2
    %v3202 = vmul.f32 %v3074, 0.2
    %v3203 = vmul.f32 %v3075, 0.2
    %v3204 = vmul.f32 %v3076, 0.2
    %v3205 = vmul.f32 %v3077, 0.2
    %v3206 = vmul.f32 %v3078, 0.2
    %v3207 = vmul.f32 %v3079, 0.2
    %v3208 = vmul.f32 %v3080, 0.2
    %v3209 = vmul.f32 %v3081, 0.2
    %v3210 = vmul.f32 %v3082, 0.2
    %v3211 = vmul.f32 %v3083, 0.2
    %v3212 = vmul.f32 %v3084, 0.2
    %v3213 = vmul.f32 %v3085, 0.2
    %v3214 = vmul.f32 %v3086, 0.2
    %v3215 = vmul.f32 %v3087, 0.2
    %v3216 = vmul.f32 %v3088, 0.2
    %v3217 = vmul.f32 %v3089, 0.2
    %v3218 = vmul.f32 %v3090, 0.2
    %v3219 = vmul.f32 %v3091, 0.2
    %v3220 = vmul.f32 %v3092, 0.2
    %v3221 = vmul.f32 %v3093, 0.2
    %v3222 = vmul.f32 %v3094, 0.2
    %v3223 = vmul.f32 %v3095, 0.2
    %v3224 = vmul.f32 %v3096, 0.2
    %v3225 = vmul.f32 %v3097, 0.2
    %v3226 = vmul.f32 %v3098, 0.2
    %v3227 = vmul.f32 %v3099, 0.2
    %v3228 = vmul.f32 %v3100, 0.2
    %v3229 = vmul.f32 %v3101, 0.2
    %v3230 = vmul.f32 %v3102, 0.2
    %v3231 = vmul.f32 %v3103, 0.2
    %v3232 = vmul.f32 %v3104, 0.2
    %v3233 = vmul.f32 %v3105, 0.2
    %v3234 = vmul.f32 %v3106, 0.2
    %v3235 = vmul.f32 %v3107, 0.2
    %v3236 = vmul.f32 %v3108, 0.2
    %v3237 = vmul.f32 %v3109, 0.2
    %v3238 = vmul.f32 %v3110, 0.2
    %v3239 = vmul.f32 %v3111, 0.2
    %v3240 = vmul.f32 %v3112, 0.2
    %v3241 = vmul.f32 %v3113, 0.2
    %v3242 = vmul.f32 %v3114, 0.2
    %v3243 = vmul.f32 %v3115, 0.2
    %v3244 = vmul.f32 %v3116, 0.2
    %v3245 = vmul.f32 %v3117, 0.2
    %v3246 = vmul.f32 %v3118, 0.2
    %v3247 = vmul.f32 %v3119, 0.2
    %v3248 = vmul.f32 %v3120, 0.2
    %v3249 = vmul.f32 %v3121, 0.2
    %v3250 = vmul.f32 %v3122, 0.2
    %v3251 = vmul.f32 %v3123, 0.2
    %v3252 = vmul.f32 %v3124, 0.2
    %v3253 = vmul.f32 %v3125, 0.2
    %v3254 = vmul.f32 %v3126, 0.2
    %v3255 = vmul.f32 %v3127, 0.2
    %v3256 = vmul.f32 %v3128, 0.2
    %v3257 = vmul.f32 %v3129, 0.2
    %v3258 = vmul.f32 %v3130, 0.2
    %v3259 = vmul.f32 %v3131, 0.2
    %v3260 = vmul.f32 %v3132, 0.2
    %v3261 = vmul.f32 %v3133, 0.2
    %v3262 = vmul.f32 %v3134, 0.2
    %v3263 = vmul.f32 %v3135, 0.2
    %v3264 = vmul.f32 %v3136, 0.2
    %v3265 = vmul.f32 %v3137, 0.2
    %v3266 = vmul.f32 %v3138, 0.2
    %v3267 = vmul.f32 %v3139, 0.2
    %v3268 = vmul.f32 %v3140, 0.2
    %v3269 = vmul.f32 %v3141, 0.2
    %v3270 = vmul.f32 %v3142, 0.2
    %v3271 = vmul.f32 %v3143, 0.2
    %v3272 = vmul.f32 %v3144, 0.2
    %v3273 = vmul.f32 %v3145, 0.2
    %v3274 = vmul.f32 %v3146, 0.2
    %v3275 = vmul.f32 %v3147, 0.2
    %v3276 = vmul.f32 %v3148, 0.2
    %v3277 = vmul.f32 %v3149, 0.2
    %v3278 = vmul.f32 %v3150, 0.2
    %v3279 = vmul.f32 %v3151, 0.2
    %v3280 = vmul.f32 %v3152, 0.2
    %v3281 = vmul.f32 %v3153, 0.2
    %v3282 = vmul.f32 %v3154, 0.2
    %v3283 = vmul.f32 %v3155, 0.2
    %v3284 = vmul.f32 %v3156, 0.2
    %v3285 = vmul.f32 %v3157, 0.2
    %v3286 = vmul.f32 %v3158, 0.2
    %v3287 = vmul.f32 %v3159, 0.2
    %v3288 = vmul.f32 %v3160, 0.2
    %v3289 = vmul.f32 %v3161, 0.2
    %v3290 = vmul.f32 %v3162, 0.2
    %v3291 = vmul.f32 %v3163, 0.2
    %v3292 = vmul.f32 %v3164, 0.2
    %v3293 = vmul.f32 %v3165, 0.2
    %v3294 = vmul.f32 %v3166, 0.2
    %v3295 = vmul.f32 %v3167, 0.2
    %v3296 = vmul.f32 %v3168, 0.2
    %v3297 = vmul.f32 %v3169, 0.2
    %v3298 = vmul.f32 %v3170, 0.2
    %v3299 = vmul.f32 %v3171, 0.2
    %v3300 = vmul.f32 %v3172, 0.2
    %v3301 = vmul.f32 %v3173, 0.2
    %v3302 = vmul.f32 %v3174, 0.2
    %v3303 = vmul.f32 %v3175, 0.2
    %v3304 = vmul.f32 %v3176, 0.2
    %v3305 = vmul.f32 %v3177, 0.2
    %v3306 = vmul.f32 %v3178, 0.2
    %v3307 = vmul.f32 %v3179, 0.2
    %v3308 = vmul.f32 %v3180, 0.2
    %v3309 = vmul.f32 %v3181, 0.2
    %v3310 = vmul.f32 %v3182, 0.2
    %v3311 = vmul.f32 %v3183, 0.2
    %v3312 = vmul.f32 %v3184, 0.2
    %v3313 = vmul.f32 %v3185, 0.2
    %v3314 = vmul.f32 %v3186, 0.2
    %v3315 = vmul.f32 %v3187, 0.2
    %v3316 = vmul.f32 %v3188, 0.2
    %v3317 = vmul.f32 %v3189, 0.2
    %v3318 = vmul.f32 %v3190, 0.2
    %v3319 = vmax.f32 %v3063, %v3191
    %v3320 = vmax.f32 %v3064, %v3192
    %v3321 = vmax.f32 %v3065, %v3193
    %v3322 = vmax.f32 %v3066, %v3194
    %v3323 = vmax.f32 %v3067, %v3195
    %v3324 = vmax.f32 %v3068, %v3196
    %v3325 = vmax.f32 %v3069, %v3197
    %v3326 = vmax.f32 %v3070, %v3198
    %v3327 = vmax.f32 %v3071, %v3199
    %v3328 = vmax.f32 %v3072, %v3200
    %v3329 = vmax.f32 %v3073, %v3201
    %v3330 = vmax.f32 %v3074, %v3202
    %v3331 = vmax.f32 %v3075, %v3203
    %v3332 = vmax.f32 %v3076, %v3204
    %v3333 = vmax.f32 %v3077, %v3205
    %v3334 = vmax.f32 %v3078, %v3206
    %v3335 = vmax.f32 %v3079, %v3207
    %v3336 = vmax.f32 %v3080, %v3208
    %v3337 = vmax.f32 %v3081, %v3209
    %v3338 = vmax.f32 %v3082, %v3210
    %v3339 = vmax.f32 %v3083, %v3211
    %v3340 = vmax.f32 %v3084, %v3212
    %v3341 = vmax.f32 %v3085, %v3213
    %v3342 = vmax.f32 %v3086, %v3214
    %v3343 = vmax.f32 %v3087, %v3215
    %v3344 = vmax.f32 %v3088, %v3216
    %v3345 = vmax.f32 %v3089, %v3217
    %v3346 = vmax.f32 %v3090, %v3218
    %v3347 = vmax.f32 %v3091, %v3219
    %v3348 = vmax.f32 %v3092, %v3220
    %v3349 = vmax.f32 %v3093, %v3221
    %v3350 = vmax.f32 %v3094, %v3222
    %v3351 = vmax.f32 %v3095, %v3223
    %v3352 = vmax.f32 %v3096, %v3224
    %v3353 = vmax.f32 %v3097, %v3225
    %v3354 = vmax.f32 %v3098, %v3226
    %v3355 = vmax.f32 %v3099, %v3227
    %v3356 = vmax.f32 %v3100, %v3228
    %v3357 = vmax.f32 %v3101, %v3229
    %v3358 = vmax.f32 %v3102, %v3230
    %v3359 = vmax.f32 %v3103, %v3231
    %v3360 = vmax.f32 %v3104, %v3232
    %v3361 = vmax.f32 %v3105, %v3233
    %v3362 = vmax.f32 %v3106, %v3234
    %v3363 = vmax.f32 %v3107, %v3235
    %v3364 = vmax.f32 %v3108, %v3236
    %v3365 = vmax.f32 %v3109, %v3237
    %v3366 = vmax.f32 %v3110, %v3238
    %v3367 = vmax.f32 %v3111, %v3239
    %v3368 = vmax.f32 %v3112, %v3240
    %v3369 = vmax.f32 %v3113, %v3241
    %v3370 = vmax.f32 %v3114, %v3242
    %v3371 = vmax.f32 %v3115, %v3243
    %v3372 = vmax.f32 %v3116, %v3244
    %v3373 = vmax.f32 %v3117, %v3245
    %v3374 = vmax.f32 %v3118, %v3246
    %v3375 = vmax.f32 %v3119, %v3247
    %v3376 = vmax.f32 %v3120, %v3248
    %v3377 = vmax.f32 %v3121, %v3249
    %v3378 = vmax.f32 %v3122, %v3250
    %v3379 = vmax.f32 %v3123, %v3251
    %v3380 = vmax.f32 %v3124, %v3252
    %v3381 = vmax.f32 %v3125, %v3253
    %v3382 = vmax.f32 %v3126, %v3254
    %v3383 = vmax.f32 %v3127, %v3255
    %v3384 = vmax.f32 %v3128, %v3256
    %v3385 = vmax.f32 %v3129, %v3257
    %v3386 = vmax.f32 %v3130, %v3258
    %v3387 = vmax.f32 %v3131, %v3259
    %v3388 = vmax.f32 %v3132, %v3260
    %v3389 = vmax.f32 %v3133, %v3261
    %v3390 = vmax.f32 %v3134, %v3262
    %v3391 = vmax.f32 %v3135, %v3263
    %v3392 = vmax.f32 %v3136, %v3264
    %v3393 = vmax.f32 %v3137, %v3265
    %v3394 = vmax.f32 %v3138, %v3266
    %v3395 = vmax.f32 %v3139, %v3267
    %v3396 = vmax.f32 %v3140, %v3268
    %v3397 = vmax.f32 %v3141, %v3269
    %v3398 = vmax.f32 %v3142, %v3270
    %v3399 = vmax.f32 %v3143, %v3271
    %v3400 = vmax.f32 %v3144, %v3272
    %v3401 = vmax.f32 %v3145, %v3273
    %v3402 = vmax.f32 %v3146, %v3274
    %v3403 = vmax.f32 %v3147, %v3275
    %v3404 = vmax.f32 %v3148, %v3276
    %v3405 = vmax.f32 %v3149, %v3277
    %v3406 = vmax.f32 %v3150, %v3278
    %v3407 = vmax.f32 %v3151, %v3279
    %v3408 = vmax.f32 %v3152, %v3280
    %v3409 = vmax.f32 %v3153, %v3281
    %v3410 = vmax.f32 %v3154, %v3282
    %v3411 = vmax.f32 %v3155, %v3283
    %v3412 = vmax.f32 %v3156, %v3284
    %v3413 = vmax.f32 %v3157, %v3285
    %v3414 = vmax.f32 %v3158, %v3286
    %v3415 = vmax.f32 %v3159, %v3287
    %v3416 = vmax.f32 %v3160, %v3288
    %v3417 = vmax.f32 %v3161, %v3289
    %v3418 = vmax.f32 %v3162, %v3290
    %v3419 = vmax.f32 %v3163, %v3291
    %v3420 = vmax.f32 %v3164, %v3292
    %v3421 = vmax.f32 %v3165, %v3293
    %v3422 = vmax.f32 %v3166, %v3294
    %v3423 = vmax.f32 %v3167, %v3295
    %v3424 = vmax.f32 %v3168, %v3296
    %v3425 = vmax.f32 %v3169, %v3297
    %v3426 = vmax.f32 %v3170, %v3298
    %v3427 = vmax.f32 %v3171, %v3299
    %v3428 = vmax.f32 %v3172, %v3300
    %v3429 = vmax.f32 %v3173, %v3301
    %v3430 = vmax.f32 %v3174, %v3302
    %v3431 = vmax.f32 %v3175, %v3303
    %v3432 = vmax.f32 %v3176, %v3304
    %v3433 = vmax.f32 %v3177, %v3305
    %v3434 = vmax.f32 %v3178, %v3306
    %v3435 = vmax.f32 %v3179, %v3307
    %v3436 = vmax.f32 %v3180, %v3308
    %v3437 = vmax.f32 %v3181, %v3309
    %v3438 = vmax.f32 %v3182, %v3310
    %v3439 = vmax.f32 %v3183, %v3311
    %v3440 = vmax.f32 %v3184, %v3312
    %v3441 = vmax.f32 %v3185, %v3313
    %v3442 = vmax.f32 %v3186, %v3314
    %v3443 = vmax.f32 %v3187, %v3315
    %v3444 = vmax.f32 %v3188, %v3316
    %v3445 = vmax.f32 %v3189, %v3317
    %v3446 = vmax.f32 %v3190, %v3318
    %v3447 = vpack.c.bf16 %v3323, %v3319
    %v3448 = vpack.c.bf16 %v3324, %v3320
    %v3449 = vpack.c.bf16 %v3325, %v3321
    %v3450 = vpack.c.bf16 %v3326, %v3322
    %v3451 = vpack.c.bf16 %v3331, %v3327
    %v3452 = vpack.c.bf16 %v3332, %v3328
    %v3453 = vpack.c.bf16 %v3333, %v3329
    %v3454 = vpack.c.bf16 %v3334, %v3330
    %v3455 = vpack.c.bf16 %v3339, %v3335
    %v3456 = vpack.c.bf16 %v3340, %v3336
    %v3457 = vpack.c.bf16 %v3341, %v3337
    %v3458 = vpack.c.bf16 %v3342, %v3338
    %v3459 = vpack.c.bf16 %v3347, %v3343
    %v3460 = vpack.c.bf16 %v3348, %v3344
    %v3461 = vpack.c.bf16 %v3349, %v3345
    %v3462 = vpack.c.bf16 %v3350, %v3346
    %v3463 = vpack.c.bf16 %v3355, %v3351
    %v3464 = vpack.c.bf16 %v3356, %v3352
    %v3465 = vpack.c.bf16 %v3357, %v3353
    %v3466 = vpack.c.bf16 %v3358, %v3354
    %v3467 = vpack.c.bf16 %v3363, %v3359
    %v3468 = vpack.c.bf16 %v3364, %v3360
    %v3469 = vpack.c.bf16 %v3365, %v3361
    %v3470 = vpack.c.bf16 %v3366, %v3362
    %v3471 = vpack.c.bf16 %v3371, %v3367
    %v3472 = vpack.c.bf16 %v3372, %v3368
    %v3473 = vpack.c.bf16 %v3373, %v3369
    %v3474 = vpack.c.bf16 %v3374, %v3370
    %v3475 = vpack.c.bf16 %v3379, %v3375
    %v3476 = vpack.c.bf16 %v3380, %v3376
    %v3477 = vpack.c.bf16 %v3381, %v3377
    %v3478 = vpack.c.bf16 %v3382, %v3378
    %v3479 = vpack.c.bf16 %v3387, %v3383
    %v3480 = vpack.c.bf16 %v3388, %v3384
    %v3481 = vpack.c.bf16 %v3389, %v3385
    %v3482 = vpack.c.bf16 %v3390, %v3386
    %v3483 = vpack.c.bf16 %v3395, %v3391
    %v3484 = vpack.c.bf16 %v3396, %v3392
    %v3485 = vpack.c.bf16 %v3397, %v3393
    %v3486 = vpack.c.bf16 %v3398, %v3394
    %v3487 = vpack.c.bf16 %v3403, %v3399
    %v3488 = vpack.c.bf16 %v3404, %v3400
    %v3489 = vpack.c.bf16 %v3405, %v3401
    %v3490 = vpack.c.bf16 %v3406, %v3402
    %v3491 = vpack.c.bf16 %v3411, %v3407
    %v3492 = vpack.c.bf16 %v3412, %v3408
    %v3493 = vpack.c.bf16 %v3413, %v3409
    %v3494 = vpack.c.bf16 %v3414, %v3410
    %v3495 = vpack.c.bf16 %v3419, %v3415
    %v3496 = vpack.c.bf16 %v3420, %v3416
    %v3497 = vpack.c.bf16 %v3421, %v3417
    %v3498 = vpack.c.bf16 %v3422, %v3418
    %v3499 = vpack.c.bf16 %v3427, %v3423
    %v3500 = vpack.c.bf16 %v3428, %v3424
    %v3501 = vpack.c.bf16 %v3429, %v3425
    %v3502 = vpack.c.bf16 %v3430, %v3426
    %v3503 = vpack.c.bf16 %v3435, %v3431
    %v3504 = vpack.c.bf16 %v3436, %v3432
    %v3505 = vpack.c.bf16 %v3437, %v3433
    %v3506 = vpack.c.bf16 %v3438, %v3434
    %v3507 = vpack.c.bf16 %v3443, %v3439
    %v3508 = vpack.c.bf16 %v3444, %v3440
    %v3509 = vpack.c.bf16 %v3445, %v3441
    %v3510 = vpack.c.bf16 %v3446, %v3442
    %s3511 = smul.u32 4, 64
    %s3512 = smul.u32 %s3511, 8
    %s3513 = sshll.u32 %s3512, 4
    %3514 = dma.done [#allocation4], %s3513
    %v3515 = vld [vmem:[#allocation2] sm:$0xff]
    %v3516 = vld [vmem:[#allocation2 + $0x8] sm:$0xff]
    %v3517 = vld [vmem:[#allocation2 + $0x10] sm:$0xff]
    %v3518 = vld [vmem:[#allocation2 + $0x18] sm:$0xff]
    %v3519 = vld [vmem:[#allocation2 + $0x20] sm:$0xff]
    %v3520 = vld [vmem:[#allocation2 + $0x28] sm:$0xff]
    %v3521 = vld [vmem:[#allocation2 + $0x30] sm:$0xff]
    %v3522 = vld [vmem:[#allocation2 + $0x38] sm:$0xff]
    %v3523 = vld [vmem:[#allocation2 + $0x40] sm:$0xff]
    %v3524 = vld [vmem:[#allocation2 + $0x48] sm:$0xff]
    %v3525 = vld [vmem:[#allocation2 + $0x50] sm:$0xff]
    %v3526 = vld [vmem:[#allocation2 + $0x58] sm:$0xff]
    %v3527 = vld [vmem:[#allocation2 + $0x60] sm:$0xff]
    %v3528 = vld [vmem:[#allocation2 + $0x68] sm:$0xff]
    %v3529 = vld [vmem:[#allocation2 + $0x70] sm:$0xff]
    %v3530 = vld [vmem:[#allocation2 + $0x78] sm:$0xff]
    %v3531 = vld [vmem:[#allocation2 + $0x80] sm:$0xff]
    %v3532 = vld [vmem:[#allocation2 + $0x88] sm:$0xff]
    %v3533 = vld [vmem:[#allocation2 + $0x90] sm:$0xff]
    %v3534 = vld [vmem:[#allocation2 + $0x98] sm:$0xff]
    %v3535 = vld [vmem:[#allocation2 + $0xa0] sm:$0xff]
    %v3536 = vld [vmem:[#allocation2 + $0xa8] sm:$0xff]
    %v3537 = vld [vmem:[#allocation2 + $0xb0] sm:$0xff]
    %v3538 = vld [vmem:[#allocation2 + $0xb8] sm:$0xff]
    %v3539 = vld [vmem:[#allocation2 + $0xc0] sm:$0xff]
    %v3540 = vld [vmem:[#allocation2 + $0xc8] sm:$0xff]
    %v3541 = vld [vmem:[#allocation2 + $0xd0] sm:$0xff]
    %v3542 = vld [vmem:[#allocation2 + $0xd8] sm:$0xff]
    %v3543 = vld [vmem:[#allocation2 + $0xe0] sm:$0xff]
    %v3544 = vld [vmem:[#allocation2 + $0xe8] sm:$0xff]
    %v3545 = vld [vmem:[#allocation2 + $0xf0] sm:$0xff]
    %v3546 = vld [vmem:[#allocation2 + $0xf8] sm:$0xff]
    %v3547 = vld [vmem:[#allocation2 + $0x100] sm:$0xff]
    %v3548 = vld [vmem:[#allocation2 + $0x108] sm:$0xff]
    %v3549 = vld [vmem:[#allocation2 + $0x110] sm:$0xff]
    %v3550 = vld [vmem:[#allocation2 + $0x118] sm:$0xff]
    %v3551 = vld [vmem:[#allocation2 + $0x120] sm:$0xff]
    %v3552 = vld [vmem:[#allocation2 + $0x128] sm:$0xff]
    %v3553 = vld [vmem:[#allocation2 + $0x130] sm:$0xff]
    %v3554 = vld [vmem:[#allocation2 + $0x138] sm:$0xff]
    %v3555 = vld [vmem:[#allocation2 + $0x140] sm:$0xff]
    %v3556 = vld [vmem:[#allocation2 + $0x148] sm:$0xff]
    %v3557 = vld [vmem:[#allocation2 + $0x150] sm:$0xff]
    %v3558 = vld [vmem:[#allocation2 + $0x158] sm:$0xff]
    %v3559 = vld [vmem:[#allocation2 + $0x160] sm:$0xff]
    %v3560 = vld [vmem:[#allocation2 + $0x168] sm:$0xff]
    %v3561 = vld [vmem:[#allocation2 + $0x170] sm:$0xff]
    %v3562 = vld [vmem:[#allocation2 + $0x178] sm:$0xff]
    %v3563 = vld [vmem:[#allocation2 + $0x180] sm:$0xff]
    %v3564 = vld [vmem:[#allocation2 + $0x188] sm:$0xff]
    %v3565 = vld [vmem:[#allocation2 + $0x190] sm:$0xff]
    %v3566 = vld [vmem:[#allocation2 + $0x198] sm:$0xff]
    %v3567 = vld [vmem:[#allocation2 + $0x1a0] sm:$0xff]
    %v3568 = vld [vmem:[#allocation2 + $0x1a8] sm:$0xff]
    %v3569 = vld [vmem:[#allocation2 + $0x1b0] sm:$0xff]
    %v3570 = vld [vmem:[#allocation2 + $0x1b8] sm:$0xff]
    %v3571 = vld [vmem:[#allocation2 + $0x1c0] sm:$0xff]
    %v3572 = vld [vmem:[#allocation2 + $0x1c8] sm:$0xff]
    %v3573 = vld [vmem:[#allocation2 + $0x1d0] sm:$0xff]
    %v3574 = vld [vmem:[#allocation2 + $0x1d8] sm:$0xff]
    %v3575 = vld [vmem:[#allocation2 + $0x1e0] sm:$0xff]
    %v3576 = vld [vmem:[#allocation2 + $0x1e8] sm:$0xff]
    %v3577 = vld [vmem:[#allocation2 + $0x1f0] sm:$0xff]
    %v3578 = vld [vmem:[#allocation2 + $0x1f8] sm:$0xff]
    %v3579 = vld [vmem:[#allocation2 + $0x200] sm:$0xff]
    %v3580 = vld [vmem:[#allocation2 + $0x208] sm:$0xff]
    %v3581 = vld [vmem:[#allocation2 + $0x210] sm:$0xff]
    %v3582 = vld [vmem:[#allocation2 + $0x218] sm:$0xff]
    %v3583 = vld [vmem:[#allocation2 + $0x220] sm:$0xff]
    %v3584 = vld [vmem:[#allocation2 + $0x228] sm:$0xff]
    %v3585 = vld [vmem:[#allocation2 + $0x230] sm:$0xff]
    %v3586 = vld [vmem:[#allocation2 + $0x238] sm:$0xff]
    %v3587 = vld [vmem:[#allocation2 + $0x240] sm:$0xff]
    %v3588 = vld [vmem:[#allocation2 + $0x248] sm:$0xff]
    %v3589 = vld [vmem:[#allocation2 + $0x250] sm:$0xff]
    %v3590 = vld [vmem:[#allocation2 + $0x258] sm:$0xff]
    %v3591 = vld [vmem:[#allocation2 + $0x260] sm:$0xff]
    %v3592 = vld [vmem:[#allocation2 + $0x268] sm:$0xff]
    %v3593 = vld [vmem:[#allocation2 + $0x270] sm:$0xff]
    %v3594 = vld [vmem:[#allocation2 + $0x278] sm:$0xff]
    %v3595 = vld [vmem:[#allocation2 + $0x280] sm:$0xff]
    %v3596 = vld [vmem:[#allocation2 + $0x288] sm:$0xff]
    %v3597 = vld [vmem:[#allocation2 + $0x290] sm:$0xff]
    %v3598 = vld [vmem:[#allocation2 + $0x298] sm:$0xff]
    %v3599 = vld [vmem:[#allocation2 + $0x2a0] sm:$0xff]
    %v3600 = vld [vmem:[#allocation2 + $0x2a8] sm:$0xff]
    %v3601 = vld [vmem:[#allocation2 + $0x2b0] sm:$0xff]
    %v3602 = vld [vmem:[#allocation2 + $0x2b8] sm:$0xff]
    %v3603 = vld [vmem:[#allocation2 + $0x2c0] sm:$0xff]
    %v3604 = vld [vmem:[#allocation2 + $0x2c8] sm:$0xff]
    %v3605 = vld [vmem:[#allocation2 + $0x2d0] sm:$0xff]
    %v3606 = vld [vmem:[#allocation2 + $0x2d8] sm:$0xff]
    %v3607 = vld [vmem:[#allocation2 + $0x2e0] sm:$0xff]
    %v3608 = vld [vmem:[#allocation2 + $0x2e8] sm:$0xff]
    %v3609 = vld [vmem:[#allocation2 + $0x2f0] sm:$0xff]
    %v3610 = vld [vmem:[#allocation2 + $0x2f8] sm:$0xff]
    %v3611 = vld [vmem:[#allocation2 + $0x300] sm:$0xff]
    %v3612 = vld [vmem:[#allocation2 + $0x308] sm:$0xff]
    %v3613 = vld [vmem:[#allocation2 + $0x310] sm:$0xff]
    %v3614 = vld [vmem:[#allocation2 + $0x318] sm:$0xff]
    %v3615 = vld [vmem:[#allocation2 + $0x320] sm:$0xff]
    %v3616 = vld [vmem:[#allocation2 + $0x328] sm:$0xff]
    %v3617 = vld [vmem:[#allocation2 + $0x330] sm:$0xff]
    %v3618 = vld [vmem:[#allocation2 + $0x338] sm:$0xff]
    %v3619 = vld [vmem:[#allocation2 + $0x340] sm:$0xff]
    %v3620 = vld [vmem:[#allocation2 + $0x348] sm:$0xff]
    %v3621 = vld [vmem:[#allocation2 + $0x350] sm:$0xff]
    %v3622 = vld [vmem:[#allocation2 + $0x358] sm:$0xff]
    %v3623 = vld [vmem:[#allocation2 + $0x360] sm:$0xff]
    %v3624 = vld [vmem:[#allocation2 + $0x368] sm:$0xff]
    %v3625 = vld [vmem:[#allocation2 + $0x370] sm:$0xff]
    %v3626 = vld [vmem:[#allocation2 + $0x378] sm:$0xff]
    %v3627 = vld [vmem:[#allocation2 + $0x380] sm:$0xff]
    %v3628 = vld [vmem:[#allocation2 + $0x388] sm:$0xff]
    %v3629 = vld [vmem:[#allocation2 + $0x390] sm:$0xff]
    %v3630 = vld [vmem:[#allocation2 + $0x398] sm:$0xff]
    %v3631 = vld [vmem:[#allocation2 + $0x3a0] sm:$0xff]
    %v3632 = vld [vmem:[#allocation2 + $0x3a8] sm:$0xff]
    %v3633 = vld [vmem:[#allocation2 + $0x3b0] sm:$0xff]
    %v3634 = vld [vmem:[#allocation2 + $0x3b8] sm:$0xff]
    %v3635 = vld [vmem:[#allocation2 + $0x3c0] sm:$0xff]
    %v3636 = vld [vmem:[#allocation2 + $0x3c8] sm:$0xff]
    %v3637 = vld [vmem:[#allocation2 + $0x3d0] sm:$0xff]
    %v3638 = vld [vmem:[#allocation2 + $0x3d8] sm:$0xff]
    %v3639 = vld [vmem:[#allocation2 + $0x3e0] sm:$0xff]
    %v3640 = vld [vmem:[#allocation2 + $0x3e8] sm:$0xff]
    %v3641 = vld [vmem:[#allocation2 + $0x3f0] sm:$0xff]
    %v3642 = vld [vmem:[#allocation2 + $0x3f8] sm:$0xff]
    %v3643 = vld [vmem:[#allocation2 + $0x400] sm:$0xff]
    %v3644 = vld [vmem:[#allocation2 + $0x408] sm:$0xff]
    %v3645 = vld [vmem:[#allocation2 + $0x410] sm:$0xff]
    %v3646 = vld [vmem:[#allocation2 + $0x418] sm:$0xff]
    %v3647 = vld [vmem:[#allocation2 + $0x420] sm:$0xff]
    %v3648 = vld [vmem:[#allocation2 + $0x428] sm:$0xff]
    %v3649 = vld [vmem:[#allocation2 + $0x430] sm:$0xff]
    %v3650 = vld [vmem:[#allocation2 + $0x438] sm:$0xff]
    %v3651 = vld [vmem:[#allocation2 + $0x440] sm:$0xff]
    %v3652 = vld [vmem:[#allocation2 + $0x448] sm:$0xff]
    %v3653 = vld [vmem:[#allocation2 + $0x450] sm:$0xff]
    %v3654 = vld [vmem:[#allocation2 + $0x458] sm:$0xff]
    %v3655 = vld [vmem:[#allocation2 + $0x460] sm:$0xff]
    %v3656 = vld [vmem:[#allocation2 + $0x468] sm:$0xff]
    %v3657 = vld [vmem:[#allocation2 + $0x470] sm:$0xff]
    %v3658 = vld [vmem:[#allocation2 + $0x478] sm:$0xff]
    %v3659 = vld [vmem:[#allocation2 + $0x480] sm:$0xff]
    %v3660 = vld [vmem:[#allocation2 + $0x488] sm:$0xff]
    %v3661 = vld [vmem:[#allocation2 + $0x490] sm:$0xff]
    %v3662 = vld [vmem:[#allocation2 + $0x498] sm:$0xff]
    %v3663 = vld [vmem:[#allocation2 + $0x4a0] sm:$0xff]
    %v3664 = vld [vmem:[#allocation2 + $0x4a8] sm:$0xff]
    %v3665 = vld [vmem:[#allocation2 + $0x4b0] sm:$0xff]
    %v3666 = vld [vmem:[#allocation2 + $0x4b8] sm:$0xff]
    %v3667 = vld [vmem:[#allocation2 + $0x4c0] sm:$0xff]
    %v3668 = vld [vmem:[#allocation2 + $0x4c8] sm:$0xff]
    %v3669 = vld [vmem:[#allocation2 + $0x4d0] sm:$0xff]
    %v3670 = vld [vmem:[#allocation2 + $0x4d8] sm:$0xff]
    %v3671 = vld [vmem:[#allocation2 + $0x4e0] sm:$0xff]
    %v3672 = vld [vmem:[#allocation2 + $0x4e8] sm:$0xff]
    %v3673 = vld [vmem:[#allocation2 + $0x4f0] sm:$0xff]
    %v3674 = vld [vmem:[#allocation2 + $0x4f8] sm:$0xff]
    %v3675 = vld [vmem:[#allocation2 + $0x500] sm:$0xff]
    %v3676 = vld [vmem:[#allocation2 + $0x508] sm:$0xff]
    %v3677 = vld [vmem:[#allocation2 + $0x510] sm:$0xff]
    %v3678 = vld [vmem:[#allocation2 + $0x518] sm:$0xff]
    %v3679 = vld [vmem:[#allocation2 + $0x520] sm:$0xff]
    %v3680 = vld [vmem:[#allocation2 + $0x528] sm:$0xff]
    %v3681 = vld [vmem:[#allocation2 + $0x530] sm:$0xff]
    %v3682 = vld [vmem:[#allocation2 + $0x538] sm:$0xff]
    %v3683 = vld [vmem:[#allocation2 + $0x540] sm:$0xff]
    %v3684 = vld [vmem:[#allocation2 + $0x548] sm:$0xff]
    %v3685 = vld [vmem:[#allocation2 + $0x550] sm:$0xff]
    %v3686 = vld [vmem:[#allocation2 + $0x558] sm:$0xff]
    %v3687 = vld [vmem:[#allocation2 + $0x560] sm:$0xff]
    %v3688 = vld [vmem:[#allocation2 + $0x568] sm:$0xff]
    %v3689 = vld [vmem:[#allocation2 + $0x570] sm:$0xff]
    %v3690 = vld [vmem:[#allocation2 + $0x578] sm:$0xff]
    %v3691 = vld [vmem:[#allocation2 + $0x580] sm:$0xff]
    %v3692 = vld [vmem:[#allocation2 + $0x588] sm:$0xff]
    %v3693 = vld [vmem:[#allocation2 + $0x590] sm:$0xff]
    %v3694 = vld [vmem:[#allocation2 + $0x598] sm:$0xff]
    %v3695 = vld [vmem:[#allocation2 + $0x5a0] sm:$0xff]
    %v3696 = vld [vmem:[#allocation2 + $0x5a8] sm:$0xff]
    %v3697 = vld [vmem:[#allocation2 + $0x5b0] sm:$0xff]
    %v3698 = vld [vmem:[#allocation2 + $0x5b8] sm:$0xff]
    %v3699 = vld [vmem:[#allocation2 + $0x5c0] sm:$0xff]
    %v3700 = vld [vmem:[#allocation2 + $0x5c8] sm:$0xff]
    %v3701 = vld [vmem:[#allocation2 + $0x5d0] sm:$0xff]
    %v3702 = vld [vmem:[#allocation2 + $0x5d8] sm:$0xff]
    %v3703 = vld [vmem:[#allocation2 + $0x5e0] sm:$0xff]
    %v3704 = vld [vmem:[#allocation2 + $0x5e8] sm:$0xff]
    %v3705 = vld [vmem:[#allocation2 + $0x5f0] sm:$0xff]
    %v3706 = vld [vmem:[#allocation2 + $0x5f8] sm:$0xff]
    %v3707 = vld [vmem:[#allocation2 + $0x600] sm:$0xff]
    %v3708 = vld [vmem:[#allocation2 + $0x608] sm:$0xff]
    %v3709 = vld [vmem:[#allocation2 + $0x610] sm:$0xff]
    %v3710 = vld [vmem:[#allocation2 + $0x618] sm:$0xff]
    %v3711 = vld [vmem:[#allocation2 + $0x620] sm:$0xff]
    %v3712 = vld [vmem:[#allocation2 + $0x628] sm:$0xff]
    %v3713 = vld [vmem:[#allocation2 + $0x630] sm:$0xff]
    %v3714 = vld [vmem:[#allocation2 + $0x638] sm:$0xff]
    %v3715 = vld [vmem:[#allocation2 + $0x640] sm:$0xff]
    %v3716 = vld [vmem:[#allocation2 + $0x648] sm:$0xff]
    %v3717 = vld [vmem:[#allocation2 + $0x650] sm:$0xff]
    %v3718 = vld [vmem:[#allocation2 + $0x658] sm:$0xff]
    %v3719 = vld [vmem:[#allocation2 + $0x660] sm:$0xff]
    %v3720 = vld [vmem:[#allocation2 + $0x668] sm:$0xff]
    %v3721 = vld [vmem:[#allocation2 + $0x670] sm:$0xff]
    %v3722 = vld [vmem:[#allocation2 + $0x678] sm:$0xff]
    %v3723 = vld [vmem:[#allocation2 + $0x680] sm:$0xff]
    %v3724 = vld [vmem:[#allocation2 + $0x688] sm:$0xff]
    %v3725 = vld [vmem:[#allocation2 + $0x690] sm:$0xff]
    %v3726 = vld [vmem:[#allocation2 + $0x698] sm:$0xff]
    %v3727 = vld [vmem:[#allocation2 + $0x6a0] sm:$0xff]
    %v3728 = vld [vmem:[#allocation2 + $0x6a8] sm:$0xff]
    %v3729 = vld [vmem:[#allocation2 + $0x6b0] sm:$0xff]
    %v3730 = vld [vmem:[#allocation2 + $0x6b8] sm:$0xff]
    %v3731 = vld [vmem:[#allocation2 + $0x6c0] sm:$0xff]
    %v3732 = vld [vmem:[#allocation2 + $0x6c8] sm:$0xff]
    %v3733 = vld [vmem:[#allocation2 + $0x6d0] sm:$0xff]
    %v3734 = vld [vmem:[#allocation2 + $0x6d8] sm:$0xff]
    %v3735 = vld [vmem:[#allocation2 + $0x6e0] sm:$0xff]
    %v3736 = vld [vmem:[#allocation2 + $0x6e8] sm:$0xff]
    %v3737 = vld [vmem:[#allocation2 + $0x6f0] sm:$0xff]
    %v3738 = vld [vmem:[#allocation2 + $0x6f8] sm:$0xff]
    %v3739 = vld [vmem:[#allocation2 + $0x700] sm:$0xff]
    %v3740 = vld [vmem:[#allocation2 + $0x708] sm:$0xff]
    %v3741 = vld [vmem:[#allocation2 + $0x710] sm:$0xff]
    %v3742 = vld [vmem:[#allocation2 + $0x718] sm:$0xff]
    %v3743 = vld [vmem:[#allocation2 + $0x720] sm:$0xff]
    %v3744 = vld [vmem:[#allocation2 + $0x728] sm:$0xff]
    %v3745 = vld [vmem:[#allocation2 + $0x730] sm:$0xff]
    %v3746 = vld [vmem:[#allocation2 + $0x738] sm:$0xff]
    %v3747 = vld [vmem:[#allocation2 + $0x740] sm:$0xff]
    %v3748 = vld [vmem:[#allocation2 + $0x748] sm:$0xff]
    %v3749 = vld [vmem:[#allocation2 + $0x750] sm:$0xff]
    %v3750 = vld [vmem:[#allocation2 + $0x758] sm:$0xff]
    %v3751 = vld [vmem:[#allocation2 + $0x760] sm:$0xff]
    %v3752 = vld [vmem:[#allocation2 + $0x768] sm:$0xff]
    %v3753 = vld [vmem:[#allocation2 + $0x770] sm:$0xff]
    %v3754 = vld [vmem:[#allocation2 + $0x778] sm:$0xff]
    %v3755 = vld [vmem:[#allocation2 + $0x780] sm:$0xff]
    %v3756 = vld [vmem:[#allocation2 + $0x788] sm:$0xff]
    %v3757 = vld [vmem:[#allocation2 + $0x790] sm:$0xff]
    %v3758 = vld [vmem:[#allocation2 + $0x798] sm:$0xff]
    %v3759 = vld [vmem:[#allocation2 + $0x7a0] sm:$0xff]
    %v3760 = vld [vmem:[#allocation2 + $0x7a8] sm:$0xff]
    %v3761 = vld [vmem:[#allocation2 + $0x7b0] sm:$0xff]
    %v3762 = vld [vmem:[#allocation2 + $0x7b8] sm:$0xff]
    %v3763 = vld [vmem:[#allocation2 + $0x7c0] sm:$0xff]
    %v3764 = vld [vmem:[#allocation2 + $0x7c8] sm:$0xff]
    %v3765 = vld [vmem:[#allocation2 + $0x7d0] sm:$0xff]
    %v3766 = vld [vmem:[#allocation2 + $0x7d8] sm:$0xff]
    %v3767 = vld [vmem:[#allocation2 + $0x7e0] sm:$0xff]
    %v3768 = vld [vmem:[#allocation2 + $0x7e8] sm:$0xff]
    %v3769 = vld [vmem:[#allocation2 + $0x7f0] sm:$0xff]
    %v3770 = vld [vmem:[#allocation2 + $0x7f8] sm:$0xff]
    %v3771 = vld [vmem:[%s10] sm:$0xff]
    %v3772 = vld [vmem:[%s11] sm:$0xff]
    %v4029 = vunpack.c.l.b16 %v3515
    %v4030 = vunpack.c.h.b16 %v3515
    %v4031 = vunpack.c.l.b16 %v3516
    %v4032 = vunpack.c.h.b16 %v3516
    %v4033 = vunpack.c.l.b16 %v3517
    %v4034 = vunpack.c.h.b16 %v3517
    %v4035 = vunpack.c.l.b16 %v3518
    %v4036 = vunpack.c.h.b16 %v3518
    %v4037 = vunpack.c.l.b16 %v3519
    %v4038 = vunpack.c.h.b16 %v3519
    %v4039 = vunpack.c.l.b16 %v3520
    %v4040 = vunpack.c.h.b16 %v3520
    %v4041 = vunpack.c.l.b16 %v3521
    %v4042 = vunpack.c.h.b16 %v3521
    %v4043 = vunpack.c.l.b16 %v3522
    %v4044 = vunpack.c.h.b16 %v3522
    %v4045 = vunpack.c.l.b16 %v3523
    %v4046 = vunpack.c.h.b16 %v3523
    %v4047 = vunpack.c.l.b16 %v3524
    %v4048 = vunpack.c.h.b16 %v3524
    %v4049 = vunpack.c.l.b16 %v3525
    %v4050 = vunpack.c.h.b16 %v3525
    %v4051 = vunpack.c.l.b16 %v3526
    %v4052 = vunpack.c.h.b16 %v3526
    %v4053 = vunpack.c.l.b16 %v3527
    %v4054 = vunpack.c.h.b16 %v3527
    %v4055 = vunpack.c.l.b16 %v3528
    %v4056 = vunpack.c.h.b16 %v3528
    %v4057 = vunpack.c.l.b16 %v3529
    %v4058 = vunpack.c.h.b16 %v3529
    %v4059 = vunpack.c.l.b16 %v3530
    %v4060 = vunpack.c.h.b16 %v3530
    %v4061 = vunpack.c.l.b16 %v3531
    %v4062 = vunpack.c.h.b16 %v3531
    %v4063 = vunpack.c.l.b16 %v3532
    %v4064 = vunpack.c.h.b16 %v3532
    %v4065 = vunpack.c.l.b16 %v3533
    %v4066 = vunpack.c.h.b16 %v3533
    %v4067 = vunpack.c.l.b16 %v3534
    %v4068 = vunpack.c.h.b16 %v3534
    %v4069 = vunpack.c.l.b16 %v3535
    %v4070 = vunpack.c.h.b16 %v3535
    %v4071 = vunpack.c.l.b16 %v3536
    %v4072 = vunpack.c.h.b16 %v3536
    %v4073 = vunpack.c.l.b16 %v3537
    %v4074 = vunpack.c.h.b16 %v3537
    %v4075 = vunpack.c.l.b16 %v3538
    %v4076 = vunpack.c.h.b16 %v3538
    %v4077 = vunpack.c.l.b16 %v3539
    %v4078 = vunpack.c.h.b16 %v3539
    %v4079 = vunpack.c.l.b16 %v3540
    %v4080 = vunpack.c.h.b16 %v3540
    %v4081 = vunpack.c.l.b16 %v3541
    %v4082 = vunpack.c.h.b16 %v3541
    %v4083 = vunpack.c.l.b16 %v3542
    %v4084 = vunpack.c.h.b16 %v3542
    %v4085 = vunpack.c.l.b16 %v3543
    %v4086 = vunpack.c.h.b16 %v3543
    %v4087 = vunpack.c.l.b16 %v3544
    %v4088 = vunpack.c.h.b16 %v3544
    %v4089 = vunpack.c.l.b16 %v3545
    %v4090 = vunpack.c.h.b16 %v3545
    %v4091 = vunpack.c.l.b16 %v3546
    %v4092 = vunpack.c.h.b16 %v3546
    %v4093 = vunpack.c.l.b16 %v3547
    %v4094 = vunpack.c.h.b16 %v3547
    %v4095 = vunpack.c.l.b16 %v3548
    %v4096 = vunpack.c.h.b16 %v3548
    %v4097 = vunpack.c.l.b16 %v3549
    %v4098 = vunpack.c.h.b16 %v3549
    %v4099 = vunpack.c.l.b16 %v3550
    %v4100 = vunpack.c.h.b16 %v3550
    %v4101 = vunpack.c.l.b16 %v3551
    %v4102 = vunpack.c.h.b16 %v3551
    %v4103 = vunpack.c.l.b16 %v3552
    %v4104 = vunpack.c.h.b16 %v3552
    %v4105 = vunpack.c.l.b16 %v3553
    %v4106 = vunpack.c.h.b16 %v3553
    %v4107 = vunpack.c.l.b16 %v3554
    %v4108 = vunpack.c.h.b16 %v3554
    %v4109 = vunpack.c.l.b16 %v3555
    %v4110 = vunpack.c.h.b16 %v3555
    %v4111 = vunpack.c.l.b16 %v3556
    %v4112 = vunpack.c.h.b16 %v3556
    %v4113 = vunpack.c.l.b16 %v3557
    %v4114 = vunpack.c.h.b16 %v3557
    %v4115 = vunpack.c.l.b16 %v3558
    %v4116 = vunpack.c.h.b16 %v3558
    %v4117 = vunpack.c.l.b16 %v3559
    %v4118 = vunpack.c.h.b16 %v3559
    %v4119 = vunpack.c.l.b16 %v3560
    %v4120 = vunpack.c.h.b16 %v3560
    %v4121 = vunpack.c.l.b16 %v3561
    %v4122 = vunpack.c.h.b16 %v3561
    %v4123 = vunpack.c.l.b16 %v3562
    %v4124 = vunpack.c.h.b16 %v3562
    %v4125 = vunpack.c.l.b16 %v3563
    %v4126 = vunpack.c.h.b16 %v3563
    %v4127 = vunpack.c.l.b16 %v3564
    %v4128 = vunpack.c.h.b16 %v3564
    %v4129 = vunpack.c.l.b16 %v3565
    %v4130 = vunpack.c.h.b16 %v3565
    %v4131 = vunpack.c.l.b16 %v3566
    %v4132 = vunpack.c.h.b16 %v3566
    %v4133 = vunpack.c.l.b16 %v3567
    %v4134 = vunpack.c.h.b16 %v3567
    %v4135 = vunpack.c.l.b16 %v3568
    %v4136 = vunpack.c.h.b16 %v3568
    %v4137 = vunpack.c.l.b16 %v3569
    %v4138 = vunpack.c.h.b16 %v3569
    %v4139 = vunpack.c.l.b16 %v3570
    %v4140 = vunpack.c.h.b16 %v3570
    %v4141 = vunpack.c.l.b16 %v3571
    %v4142 = vunpack.c.h.b16 %v3571
    %v4143 = vunpack.c.l.b16 %v3572
    %v4144 = vunpack.c.h.b16 %v3572
    %v4145 = vunpack.c.l.b16 %v3573
    %v4146 = vunpack.c.h.b16 %v3573
    %v4147 = vunpack.c.l.b16 %v3574
    %v4148 = vunpack.c.h.b16 %v3574
    %v4149 = vunpack.c.l.b16 %v3575
    %v4150 = vunpack.c.h.b16 %v3575
    %v4151 = vunpack.c.l.b16 %v3576
    %v4152 = vunpack.c.h.b16 %v3576
    %v4153 = vunpack.c.l.b16 %v3577
    %v4154 = vunpack.c.h.b16 %v3577
    %v4155 = vunpack.c.l.b16 %v3578
    %v4156 = vunpack.c.h.b16 %v3578
    %v4157 = vunpack.c.l.b16 %v3579
    %v4158 = vunpack.c.h.b16 %v3579
    %v4159 = vunpack.c.l.b16 %v3580
    %v4160 = vunpack.c.h.b16 %v3580
    %v4161 = vunpack.c.l.b16 %v3581
    %v4162 = vunpack.c.h.b16 %v3581
    %v4163 = vunpack.c.l.b16 %v3582
    %v4164 = vunpack.c.h.b16 %v3582
    %v4165 = vunpack.c.l.b16 %v3583
    %v4166 = vunpack.c.h.b16 %v3583
    %v4167 = vunpack.c.l.b16 %v3584
    %v4168 = vunpack.c.h.b16 %v3584
    %v4169 = vunpack.c.l.b16 %v3585
    %v4170 = vunpack.c.h.b16 %v3585
    %v4171 = vunpack.c.l.b16 %v3586
    %v4172 = vunpack.c.h.b16 %v3586
    %v4173 = vunpack.c.l.b16 %v3587
    %v4174 = vunpack.c.h.b16 %v3587
    %v4175 = vunpack.c.l.b16 %v3588
    %v4176 = vunpack.c.h.b16 %v3588
    %v4177 = vunpack.c.l.b16 %v3589
    %v4178 = vunpack.c.h.b16 %v3589
    %v4179 = vunpack.c.l.b16 %v3590
    %v4180 = vunpack.c.h.b16 %v3590
    %v4181 = vunpack.c.l.b16 %v3591
    %v4182 = vunpack.c.h.b16 %v3591
    %v4183 = vunpack.c.l.b16 %v3592
    %v4184 = vunpack.c.h.b16 %v3592
    %v4185 = vunpack.c.l.b16 %v3593
    %v4186 = vunpack.c.h.b16 %v3593
    %v4187 = vunpack.c.l.b16 %v3594
    %v4188 = vunpack.c.h.b16 %v3594
    %v4189 = vunpack.c.l.b16 %v3595
    %v4190 = vunpack.c.h.b16 %v3595
    %v4191 = vunpack.c.l.b16 %v3596
    %v4192 = vunpack.c.h.b16 %v3596
    %v4193 = vunpack.c.l.b16 %v3597
    %v4194 = vunpack.c.h.b16 %v3597
    %v4195 = vunpack.c.l.b16 %v3598
    %v4196 = vunpack.c.h.b16 %v3598
    %v4197 = vunpack.c.l.b16 %v3599
    %v4198 = vunpack.c.h.b16 %v3599
    %v4199 = vunpack.c.l.b16 %v3600
    %v4200 = vunpack.c.h.b16 %v3600
    %v4201 = vunpack.c.l.b16 %v3601
    %v4202 = vunpack.c.h.b16 %v3601
    %v4203 = vunpack.c.l.b16 %v3602
    %v4204 = vunpack.c.h.b16 %v3602
    %v4205 = vunpack.c.l.b16 %v3603
    %v4206 = vunpack.c.h.b16 %v3603
    %v4207 = vunpack.c.l.b16 %v3604
    %v4208 = vunpack.c.h.b16 %v3604
    %v4209 = vunpack.c.l.b16 %v3605
    %v4210 = vunpack.c.h.b16 %v3605
    %v4211 = vunpack.c.l.b16 %v3606
    %v4212 = vunpack.c.h.b16 %v3606
    %v4213 = vunpack.c.l.b16 %v3607
    %v4214 = vunpack.c.h.b16 %v3607
    %v4215 = vunpack.c.l.b16 %v3608
    %v4216 = vunpack.c.h.b16 %v3608
    %v4217 = vunpack.c.l.b16 %v3609
    %v4218 = vunpack.c.h.b16 %v3609
    %v4219 = vunpack.c.l.b16 %v3610
    %v4220 = vunpack.c.h.b16 %v3610
    %v4221 = vunpack.c.l.b16 %v3611
    %v4222 = vunpack.c.h.b16 %v3611
    %v4223 = vunpack.c.l.b16 %v3612
    %v4224 = vunpack.c.h.b16 %v3612
    %v4225 = vunpack.c.l.b16 %v3613
    %v4226 = vunpack.c.h.b16 %v3613
    %v4227 = vunpack.c.l.b16 %v3614
    %v4228 = vunpack.c.h.b16 %v3614
    %v4229 = vunpack.c.l.b16 %v3615
    %v4230 = vunpack.c.h.b16 %v3615
    %v4231 = vunpack.c.l.b16 %v3616
    %v4232 = vunpack.c.h.b16 %v3616
    %v4233 = vunpack.c.l.b16 %v3617
    %v4234 = vunpack.c.h.b16 %v3617
    %v4235 = vunpack.c.l.b16 %v3618
    %v4236 = vunpack.c.h.b16 %v3618
    %v4237 = vunpack.c.l.b16 %v3619
    %v4238 = vunpack.c.h.b16 %v3619
    %v4239 = vunpack.c.l.b16 %v3620
    %v4240 = vunpack.c.h.b16 %v3620
    %v4241 = vunpack.c.l.b16 %v3621
    %v4242 = vunpack.c.h.b16 %v3621
    %v4243 = vunpack.c.l.b16 %v3622
    %v4244 = vunpack.c.h.b16 %v3622
    %v4245 = vunpack.c.l.b16 %v3623
    %v4246 = vunpack.c.h.b16 %v3623
    %v4247 = vunpack.c.l.b16 %v3624
    %v4248 = vunpack.c.h.b16 %v3624
    %v4249 = vunpack.c.l.b16 %v3625
    %v4250 = vunpack.c.h.b16 %v3625
    %v4251 = vunpack.c.l.b16 %v3626
    %v4252 = vunpack.c.h.b16 %v3626
    %v4253 = vunpack.c.l.b16 %v3627
    %v4254 = vunpack.c.h.b16 %v3627
    %v4255 = vunpack.c.l.b16 %v3628
    %v4256 = vunpack.c.h.b16 %v3628
    %v4257 = vunpack.c.l.b16 %v3629
    %v4258 = vunpack.c.h.b16 %v3629
    %v4259 = vunpack.c.l.b16 %v3630
    %v4260 = vunpack.c.h.b16 %v3630
    %v4261 = vunpack.c.l.b16 %v3631
    %v4262 = vunpack.c.h.b16 %v3631
    %v4263 = vunpack.c.l.b16 %v3632
    %v4264 = vunpack.c.h.b16 %v3632
    %v4265 = vunpack.c.l.b16 %v3633
    %v4266 = vunpack.c.h.b16 %v3633
    %v4267 = vunpack.c.l.b16 %v3634
    %v4268 = vunpack.c.h.b16 %v3634
    %v4269 = vunpack.c.l.b16 %v3635
    %v4270 = vunpack.c.h.b16 %v3635
    %v4271 = vunpack.c.l.b16 %v3636
    %v4272 = vunpack.c.h.b16 %v3636
    %v4273 = vunpack.c.l.b16 %v3637
    %v4274 = vunpack.c.h.b16 %v3637
    %v4275 = vunpack.c.l.b16 %v3638
    %v4276 = vunpack.c.h.b16 %v3638
    %v4277 = vunpack.c.l.b16 %v3639
    %v4278 = vunpack.c.h.b16 %v3639
    %v4279 = vunpack.c.l.b16 %v3640
    %v4280 = vunpack.c.h.b16 %v3640
    %v4281 = vunpack.c.l.b16 %v3641
    %v4282 = vunpack.c.h.b16 %v3641
    %v4283 = vunpack.c.l.b16 %v3642
    %v4284 = vunpack.c.h.b16 %v3642
    %v4285 = vunpack.c.l.b16 %v3643
    %v4286 = vunpack.c.h.b16 %v3643
    %v4287 = vunpack.c.l.b16 %v3644
    %v4288 = vunpack.c.h.b16 %v3644
    %v4289 = vunpack.c.l.b16 %v3645
    %v4290 = vunpack.c.h.b16 %v3645
    %v4291 = vunpack.c.l.b16 %v3646
    %v4292 = vunpack.c.h.b16 %v3646
    %v4293 = vunpack.c.l.b16 %v3647
    %v4294 = vunpack.c.h.b16 %v3647
    %v4295 = vunpack.c.l.b16 %v3648
    %v4296 = vunpack.c.h.b16 %v3648
    %v4297 = vunpack.c.l.b16 %v3649
    %v4298 = vunpack.c.h.b16 %v3649
    %v4299 = vunpack.c.l.b16 %v3650
    %v4300 = vunpack.c.h.b16 %v3650
    %v4301 = vunpack.c.l.b16 %v3651
    %v4302 = vunpack.c.h.b16 %v3651
    %v4303 = vunpack.c.l.b16 %v3652
    %v4304 = vunpack.c.h.b16 %v3652
    %v4305 = vunpack.c.l.b16 %v3653
    %v4306 = vunpack.c.h.b16 %v3653
    %v4307 = vunpack.c.l.b16 %v3654
    %v4308 = vunpack.c.h.b16 %v3654
    %v4309 = vunpack.c.l.b16 %v3655
    %v4310 = vunpack.c.h.b16 %v3655
    %v4311 = vunpack.c.l.b16 %v3656
    %v4312 = vunpack.c.h.b16 %v3656
    %v4313 = vunpack.c.l.b16 %v3657
    %v4314 = vunpack.c.h.b16 %v3657
    %v4315 = vunpack.c.l.b16 %v3658
    %v4316 = vunpack.c.h.b16 %v3658
    %v4317 = vunpack.c.l.b16 %v3659
    %v4318 = vunpack.c.h.b16 %v3659
    %v4319 = vunpack.c.l.b16 %v3660
    %v4320 = vunpack.c.h.b16 %v3660
    %v4321 = vunpack.c.l.b16 %v3661
    %v4322 = vunpack.c.h.b16 %v3661
    %v4323 = vunpack.c.l.b16 %v3662
    %v4324 = vunpack.c.h.b16 %v3662
    %v4325 = vunpack.c.l.b16 %v3663
    %v4326 = vunpack.c.h.b16 %v3663
    %v4327 = vunpack.c.l.b16 %v3664
    %v4328 = vunpack.c.h.b16 %v3664
    %v4329 = vunpack.c.l.b16 %v3665
    %v4330 = vunpack.c.h.b16 %v3665
    %v4331 = vunpack.c.l.b16 %v3666
    %v4332 = vunpack.c.h.b16 %v3666
    %v4333 = vunpack.c.l.b16 %v3667
    %v4334 = vunpack.c.h.b16 %v3667
    %v4335 = vunpack.c.l.b16 %v3668
    %v4336 = vunpack.c.h.b16 %v3668
    %v4337 = vunpack.c.l.b16 %v3669
    %v4338 = vunpack.c.h.b16 %v3669
    %v4339 = vunpack.c.l.b16 %v3670
    %v4340 = vunpack.c.h.b16 %v3670
    %v4341 = vunpack.c.l.b16 %v3671
    %v4342 = vunpack.c.h.b16 %v3671
    %v4343 = vunpack.c.l.b16 %v3672
    %v4344 = vunpack.c.h.b16 %v3672
    %v4345 = vunpack.c.l.b16 %v3673
    %v4346 = vunpack.c.h.b16 %v3673
    %v4347 = vunpack.c.l.b16 %v3674
    %v4348 = vunpack.c.h.b16 %v3674
    %v4349 = vunpack.c.l.b16 %v3675
    %v4350 = vunpack.c.h.b16 %v3675
    %v4351 = vunpack.c.l.b16 %v3676
    %v4352 = vunpack.c.h.b16 %v3676
    %v4353 = vunpack.c.l.b16 %v3677
    %v4354 = vunpack.c.h.b16 %v3677
    %v4355 = vunpack.c.l.b16 %v3678
    %v4356 = vunpack.c.h.b16 %v3678
    %v4357 = vunpack.c.l.b16 %v3679
    %v4358 = vunpack.c.h.b16 %v3679
    %v4359 = vunpack.c.l.b16 %v3680
    %v4360 = vunpack.c.h.b16 %v3680
    %v4361 = vunpack.c.l.b16 %v3681
    %v4362 = vunpack.c.h.b16 %v3681
    %v4363 = vunpack.c.l.b16 %v3682
    %v4364 = vunpack.c.h.b16 %v3682
    %v4365 = vunpack.c.l.b16 %v3683
    %v4366 = vunpack.c.h.b16 %v3683
    %v4367 = vunpack.c.l.b16 %v3684
    %v4368 = vunpack.c.h.b16 %v3684
    %v4369 = vunpack.c.l.b16 %v3685
    %v4370 = vunpack.c.h.b16 %v3685
    %v4371 = vunpack.c.l.b16 %v3686
    %v4372 = vunpack.c.h.b16 %v3686
    %v4373 = vunpack.c.l.b16 %v3687
    %v4374 = vunpack.c.h.b16 %v3687
    %v4375 = vunpack.c.l.b16 %v3688
    %v4376 = vunpack.c.h.b16 %v3688
    %v4377 = vunpack.c.l.b16 %v3689
    %v4378 = vunpack.c.h.b16 %v3689
    %v4379 = vunpack.c.l.b16 %v3690
    %v4380 = vunpack.c.h.b16 %v3690
    %v4381 = vunpack.c.l.b16 %v3691
    %v4382 = vunpack.c.h.b16 %v3691
    %v4383 = vunpack.c.l.b16 %v3692
    %v4384 = vunpack.c.h.b16 %v3692
    %v4385 = vunpack.c.l.b16 %v3693
    %v4386 = vunpack.c.h.b16 %v3693
    %v4387 = vunpack.c.l.b16 %v3694
    %v4388 = vunpack.c.h.b16 %v3694
    %v4389 = vunpack.c.l.b16 %v3695
    %v4390 = vunpack.c.h.b16 %v3695
    %v4391 = vunpack.c.l.b16 %v3696
    %v4392 = vunpack.c.h.b16 %v3696
    %v4393 = vunpack.c.l.b16 %v3697
    %v4394 = vunpack.c.h.b16 %v3697
    %v4395 = vunpack.c.l.b16 %v3698
    %v4396 = vunpack.c.h.b16 %v3698
    %v4397 = vunpack.c.l.b16 %v3699
    %v4398 = vunpack.c.h.b16 %v3699
    %v4399 = vunpack.c.l.b16 %v3700
    %v4400 = vunpack.c.h.b16 %v3700
    %v4401 = vunpack.c.l.b16 %v3701
    %v4402 = vunpack.c.h.b16 %v3701
    %v4403 = vunpack.c.l.b16 %v3702
    %v4404 = vunpack.c.h.b16 %v3702
    %v4405 = vunpack.c.l.b16 %v3703
    %v4406 = vunpack.c.h.b16 %v3703
    %v4407 = vunpack.c.l.b16 %v3704
    %v4408 = vunpack.c.h.b16 %v3704
    %v4409 = vunpack.c.l.b16 %v3705
    %v4410 = vunpack.c.h.b16 %v3705
    %v4411 = vunpack.c.l.b16 %v3706
    %v4412 = vunpack.c.h.b16 %v3706
    %v4413 = vunpack.c.l.b16 %v3707
    %v4414 = vunpack.c.h.b16 %v3707
    %v4415 = vunpack.c.l.b16 %v3708
    %v4416 = vunpack.c.h.b16 %v3708
    %v4417 = vunpack.c.l.b16 %v3709
    %v4418 = vunpack.c.h.b16 %v3709
    %v4419 = vunpack.c.l.b16 %v3710
    %v4420 = vunpack.c.h.b16 %v3710
    %v4421 = vunpack.c.l.b16 %v3711
    %v4422 = vunpack.c.h.b16 %v3711
    %v4423 = vunpack.c.l.b16 %v3712
    %v4424 = vunpack.c.h.b16 %v3712
    %v4425 = vunpack.c.l.b16 %v3713
    %v4426 = vunpack.c.h.b16 %v3713
    %v4427 = vunpack.c.l.b16 %v3714
    %v4428 = vunpack.c.h.b16 %v3714
    %v4429 = vunpack.c.l.b16 %v3715
    %v4430 = vunpack.c.h.b16 %v3715
    %v4431 = vunpack.c.l.b16 %v3716
    %v4432 = vunpack.c.h.b16 %v3716
    %v4433 = vunpack.c.l.b16 %v3717
    %v4434 = vunpack.c.h.b16 %v3717
    %v4435 = vunpack.c.l.b16 %v3718
    %v4436 = vunpack.c.h.b16 %v3718
    %v4437 = vunpack.c.l.b16 %v3719
    %v4438 = vunpack.c.h.b16 %v3719
    %v4439 = vunpack.c.l.b16 %v3720
    %v4440 = vunpack.c.h.b16 %v3720
    %v4441 = vunpack.c.l.b16 %v3721
    %v4442 = vunpack.c.h.b16 %v3721
    %v4443 = vunpack.c.l.b16 %v3722
    %v4444 = vunpack.c.h.b16 %v3722
    %v4445 = vunpack.c.l.b16 %v3723
    %v4446 = vunpack.c.h.b16 %v3723
    %v4447 = vunpack.c.l.b16 %v3724
    %v4448 = vunpack.c.h.b16 %v3724
    %v4449 = vunpack.c.l.b16 %v3725
    %v4450 = vunpack.c.h.b16 %v3725
    %v4451 = vunpack.c.l.b16 %v3726
    %v4452 = vunpack.c.h.b16 %v3726
    %v4453 = vunpack.c.l.b16 %v3727
    %v4454 = vunpack.c.h.b16 %v3727
    %v4455 = vunpack.c.l.b16 %v3728
    %v4456 = vunpack.c.h.b16 %v3728
    %v4457 = vunpack.c.l.b16 %v3729
    %v4458 = vunpack.c.h.b16 %v3729
    %v4459 = vunpack.c.l.b16 %v3730
    %v4460 = vunpack.c.h.b16 %v3730
    %v4461 = vunpack.c.l.b16 %v3731
    %v4462 = vunpack.c.h.b16 %v3731
    %v4463 = vunpack.c.l.b16 %v3732
    %v4464 = vunpack.c.h.b16 %v3732
    %v4465 = vunpack.c.l.b16 %v3733
    %v4466 = vunpack.c.h.b16 %v3733
    %v4467 = vunpack.c.l.b16 %v3734
    %v4468 = vunpack.c.h.b16 %v3734
    %v4469 = vunpack.c.l.b16 %v3735
    %v4470 = vunpack.c.h.b16 %v3735
    %v4471 = vunpack.c.l.b16 %v3736
    %v4472 = vunpack.c.h.b16 %v3736
    %v4473 = vunpack.c.l.b16 %v3737
    %v4474 = vunpack.c.h.b16 %v3737
    %v4475 = vunpack.c.l.b16 %v3738
    %v4476 = vunpack.c.h.b16 %v3738
    %v4477 = vunpack.c.l.b16 %v3739
    %v4478 = vunpack.c.h.b16 %v3739
    %v4479 = vunpack.c.l.b16 %v3740
    %v4480 = vunpack.c.h.b16 %v3740
    %v4481 = vunpack.c.l.b16 %v3741
    %v4482 = vunpack.c.h.b16 %v3741
    %v4483 = vunpack.c.l.b16 %v3742
    %v4484 = vunpack.c.h.b16 %v3742
    %v4485 = vunpack.c.l.b16 %v3743
    %v4486 = vunpack.c.h.b16 %v3743
    %v4487 = vunpack.c.l.b16 %v3744
    %v4488 = vunpack.c.h.b16 %v3744
    %v4489 = vunpack.c.l.b16 %v3745
    %v4490 = vunpack.c.h.b16 %v3745
    %v4491 = vunpack.c.l.b16 %v3746
    %v4492 = vunpack.c.h.b16 %v3746
    %v4493 = vunpack.c.l.b16 %v3747
    %v4494 = vunpack.c.h.b16 %v3747
    %v4495 = vunpack.c.l.b16 %v3748
    %v4496 = vunpack.c.h.b16 %v3748
    %v4497 = vunpack.c.l.b16 %v3749
    %v4498 = vunpack.c.h.b16 %v3749
    %v4499 = vunpack.c.l.b16 %v3750
    %v4500 = vunpack.c.h.b16 %v3750
    %v4501 = vunpack.c.l.b16 %v3751
    %v4502 = vunpack.c.h.b16 %v3751
    %v4503 = vunpack.c.l.b16 %v3752
    %v4504 = vunpack.c.h.b16 %v3752
    %v4505 = vunpack.c.l.b16 %v3753
    %v4506 = vunpack.c.h.b16 %v3753
    %v4507 = vunpack.c.l.b16 %v3754
    %v4508 = vunpack.c.h.b16 %v3754
    %v4509 = vunpack.c.l.b16 %v3755
    %v4510 = vunpack.c.h.b16 %v3755
    %v4511 = vunpack.c.l.b16 %v3756
    %v4512 = vunpack.c.h.b16 %v3756
    %v4513 = vunpack.c.l.b16 %v3757
    %v4514 = vunpack.c.h.b16 %v3757
    %v4515 = vunpack.c.l.b16 %v3758
    %v4516 = vunpack.c.h.b16 %v3758
    %v4517 = vunpack.c.l.b16 %v3759
    %v4518 = vunpack.c.h.b16 %v3759
    %v4519 = vunpack.c.l.b16 %v3760
    %v4520 = vunpack.c.h.b16 %v3760
    %v4521 = vunpack.c.l.b16 %v3761
    %v4522 = vunpack.c.h.b16 %v3761
    %v4523 = vunpack.c.l.b16 %v3762
    %v4524 = vunpack.c.h.b16 %v3762
    %v4525 = vunpack.c.l.b16 %v3763
    %v4526 = vunpack.c.h.b16 %v3763
    %v4527 = vunpack.c.l.b16 %v3764
    %v4528 = vunpack.c.h.b16 %v3764
    %v4529 = vunpack.c.l.b16 %v3765
    %v4530 = vunpack.c.h.b16 %v3765
    %v4531 = vunpack.c.l.b16 %v3766
    %v4532 = vunpack.c.h.b16 %v3766
    %v4533 = vunpack.c.l.b16 %v3767
    %v4534 = vunpack.c.h.b16 %v3767
    %v4535 = vunpack.c.l.b16 %v3768
    %v4536 = vunpack.c.h.b16 %v3768
    %v4537 = vunpack.c.l.b16 %v3769
    %v4538 = vunpack.c.h.b16 %v3769
    %v4539 = vunpack.c.l.b16 %v3770
    %v4540 = vunpack.c.h.b16 %v3770
    %v4541 = vpack.c.b16 %v4037, %v4029
    %v4542 = vpack.c.b16 %v4038, %v4030
    %v4543 = vpack.c.b16 %v4039, %v4031
    %v4544 = vpack.c.b16 %v4040, %v4032
    %v4545 = vpack.c.b16 %v4041, %v4033
    %v4546 = vpack.c.b16 %v4042, %v4034
    %v4547 = vpack.c.b16 %v4043, %v4035
    %v4548 = vpack.c.b16 %v4044, %v4036
    %v4549 = vpack.c.b16 %v4053, %v4045
    %v4550 = vpack.c.b16 %v4054, %v4046
    %v4551 = vpack.c.b16 %v4055, %v4047
    %v4552 = vpack.c.b16 %v4056, %v4048
    %v4553 = vpack.c.b16 %v4057, %v4049
    %v4554 = vpack.c.b16 %v4058, %v4050
    %v4555 = vpack.c.b16 %v4059, %v4051
    %v4556 = vpack.c.b16 %v4060, %v4052
    %v4557 = vpack.c.b16 %v4069, %v4061
    %v4558 = vpack.c.b16 %v4070, %v4062
    %v4559 = vpack.c.b16 %v4071, %v4063
    %v4560 = vpack.c.b16 %v4072, %v4064
    %v4561 = vpack.c.b16 %v4073, %v4065
    %v4562 = vpack.c.b16 %v4074, %v4066
    %v4563 = vpack.c.b16 %v4075, %v4067
    %v4564 = vpack.c.b16 %v4076, %v4068
    %v4565 = vpack.c.b16 %v4085, %v4077
    %v4566 = vpack.c.b16 %v4086, %v4078
    %v4567 = vpack.c.b16 %v4087, %v4079
    %v4568 = vpack.c.b16 %v4088, %v4080
    %v4569 = vpack.c.b16 %v4089, %v4081
    %v4570 = vpack.c.b16 %v4090, %v4082
    %v4571 = vpack.c.b16 %v4091, %v4083
    %v4572 = vpack.c.b16 %v4092, %v4084
    %v4573 = vpack.c.b16 %v4101, %v4093
    %v4574 = vpack.c.b16 %v4102, %v4094
    %v4575 = vpack.c.b16 %v4103, %v4095
    %v4576 = vpack.c.b16 %v4104, %v4096
    %v4577 = vpack.c.b16 %v4105, %v4097
    %v4578 = vpack.c.b16 %v4106, %v4098
    %v4579 = vpack.c.b16 %v4107, %v4099
    %v4580 = vpack.c.b16 %v4108, %v4100
    %v4581 = vpack.c.b16 %v4117, %v4109
    %v4582 = vpack.c.b16 %v4118, %v4110
    %v4583 = vpack.c.b16 %v4119, %v4111
    %v4584 = vpack.c.b16 %v4120, %v4112
    %v4585 = vpack.c.b16 %v4121, %v4113
    %v4586 = vpack.c.b16 %v4122, %v4114
    %v4587 = vpack.c.b16 %v4123, %v4115
    %v4588 = vpack.c.b16 %v4124, %v4116
    %v4589 = vpack.c.b16 %v4133, %v4125
    %v4590 = vpack.c.b16 %v4134, %v4126
    %v4591 = vpack.c.b16 %v4135, %v4127
    %v4592 = vpack.c.b16 %v4136, %v4128
    %v4593 = vpack.c.b16 %v4137, %v4129
    %v4594 = vpack.c.b16 %v4138, %v4130
    %v4595 = vpack.c.b16 %v4139, %v4131
    %v4596 = vpack.c.b16 %v4140, %v4132
    %v4597 = vpack.c.b16 %v4149, %v4141
    %v4598 = vpack.c.b16 %v4150, %v4142
    %v4599 = vpack.c.b16 %v4151, %v4143
    %v4600 = vpack.c.b16 %v4152, %v4144
    %v4601 = vpack.c.b16 %v4153, %v4145
    %v4602 = vpack.c.b16 %v4154, %v4146
    %v4603 = vpack.c.b16 %v4155, %v4147
    %v4604 = vpack.c.b16 %v4156, %v4148
    %v4605 = vpack.c.b16 %v4165, %v4157
    %v4606 = vpack.c.b16 %v4166, %v4158
    %v4607 = vpack.c.b16 %v4167, %v4159
    %v4608 = vpack.c.b16 %v4168, %v4160
    %v4609 = vpack.c.b16 %v4169, %v4161
    %v4610 = vpack.c.b16 %v4170, %v4162
    %v4611 = vpack.c.b16 %v4171, %v4163
    %v4612 = vpack.c.b16 %v4172, %v4164
    %v4613 = vpack.c.b16 %v4181, %v4173
    %v4614 = vpack.c.b16 %v4182, %v4174
    %v4615 = vpack.c.b16 %v4183, %v4175
    %v4616 = vpack.c.b16 %v4184, %v4176
    %v4617 = vpack.c.b16 %v4185, %v4177
    %v4618 = vpack.c.b16 %v4186, %v4178
    %v4619 = vpack.c.b16 %v4187, %v4179
    %v4620 = vpack.c.b16 %v4188, %v4180
    %v4621 = vpack.c.b16 %v4197, %v4189
    %v4622 = vpack.c.b16 %v4198, %v4190
    %v4623 = vpack.c.b16 %v4199, %v4191
    %v4624 = vpack.c.b16 %v4200, %v4192
    %v4625 = vpack.c.b16 %v4201, %v4193
    %v4626 = vpack.c.b16 %v4202, %v4194
    %v4627 = vpack.c.b16 %v4203, %v4195
    %v4628 = vpack.c.b16 %v4204, %v4196
    %v4629 = vpack.c.b16 %v4213, %v4205
    %v4630 = vpack.c.b16 %v4214, %v4206
    %v4631 = vpack.c.b16 %v4215, %v4207
    %v4632 = vpack.c.b16 %v4216, %v4208
    %v4633 = vpack.c.b16 %v4217, %v4209
    %v4634 = vpack.c.b16 %v4218, %v4210
    %v4635 = vpack.c.b16 %v4219, %v4211
    %v4636 = vpack.c.b16 %v4220, %v4212
    %v4637 = vpack.c.b16 %v4229, %v4221
    %v4638 = vpack.c.b16 %v4230, %v4222
    %v4639 = vpack.c.b16 %v4231, %v4223
    %v4640 = vpack.c.b16 %v4232, %v4224
    %v4641 = vpack.c.b16 %v4233, %v4225
    %v4642 = vpack.c.b16 %v4234, %v4226
    %v4643 = vpack.c.b16 %v4235, %v4227
    %v4644 = vpack.c.b16 %v4236, %v4228
    %v4645 = vpack.c.b16 %v4245, %v4237
    %v4646 = vpack.c.b16 %v4246, %v4238
    %v4647 = vpack.c.b16 %v4247, %v4239
    %v4648 = vpack.c.b16 %v4248, %v4240
    %v4649 = vpack.c.b16 %v4249, %v4241
    %v4650 = vpack.c.b16 %v4250, %v4242
    %v4651 = vpack.c.b16 %v4251, %v4243
    %v4652 = vpack.c.b16 %v4252, %v4244
    %v4653 = vpack.c.b16 %v4261, %v4253
    %v4654 = vpack.c.b16 %v4262, %v4254
    %v4655 = vpack.c.b16 %v4263, %v4255
    %v4656 = vpack.c.b16 %v4264, %v4256
    %v4657 = vpack.c.b16 %v4265, %v4257
    %v4658 = vpack.c.b16 %v4266, %v4258
    %v4659 = vpack.c.b16 %v4267, %v4259
    %v4660 = vpack.c.b16 %v4268, %v4260
    %v4661 = vpack.c.b16 %v4277, %v4269
    %v4662 = vpack.c.b16 %v4278, %v4270
    %v4663 = vpack.c.b16 %v4279, %v4271
    %v4664 = vpack.c.b16 %v4280, %v4272
    %v4665 = vpack.c.b16 %v4281, %v4273
    %v4666 = vpack.c.b16 %v4282, %v4274
    %v4667 = vpack.c.b16 %v4283, %v4275
    %v4668 = vpack.c.b16 %v4284, %v4276
    %v4669 = vpack.c.b16 %v4293, %v4285
    %v4670 = vpack.c.b16 %v4294, %v4286
    %v4671 = vpack.c.b16 %v4295, %v4287
    %v4672 = vpack.c.b16 %v4296, %v4288
    %v4673 = vpack.c.b16 %v4297, %v4289
    %v4674 = vpack.c.b16 %v4298, %v4290
    %v4675 = vpack.c.b16 %v4299, %v4291
    %v4676 = vpack.c.b16 %v4300, %v4292
    %v4677 = vpack.c.b16 %v4309, %v4301
    %v4678 = vpack.c.b16 %v4310, %v4302
    %v4679 = vpack.c.b16 %v4311, %v4303
    %v4680 = vpack.c.b16 %v4312, %v4304
    %v4681 = vpack.c.b16 %v4313, %v4305
    %v4682 = vpack.c.b16 %v4314, %v4306
    %v4683 = vpack.c.b16 %v4315, %v4307
    %v4684 = vpack.c.b16 %v4316, %v4308
    %v4685 = vpack.c.b16 %v4325, %v4317
    %v4686 = vpack.c.b16 %v4326, %v4318
    %v4687 = vpack.c.b16 %v4327, %v4319
    %v4688 = vpack.c.b16 %v4328, %v4320
    %v4689 = vpack.c.b16 %v4329, %v4321
    %v4690 = vpack.c.b16 %v4330, %v4322
    %v4691 = vpack.c.b16 %v4331, %v4323
    %v4692 = vpack.c.b16 %v4332, %v4324
    %v4693 = vpack.c.b16 %v4341, %v4333
    %v4694 = vpack.c.b16 %v4342, %v4334
    %v4695 = vpack.c.b16 %v4343, %v4335
    %v4696 = vpack.c.b16 %v4344, %v4336
    %v4697 = vpack.c.b16 %v4345, %v4337
    %v4698 = vpack.c.b16 %v4346, %v4338
    %v4699 = vpack.c.b16 %v4347, %v4339
    %v4700 = vpack.c.b16 %v4348, %v4340
    %v4701 = vpack.c.b16 %v4357, %v4349
    %v4702 = vpack.c.b16 %v4358, %v4350
    %v4703 = vpack.c.b16 %v4359, %v4351
    %v4704 = vpack.c.b16 %v4360, %v4352
    %v4705 = vpack.c.b16 %v4361, %v4353
    %v4706 = vpack.c.b16 %v4362, %v4354
    %v4707 = vpack.c.b16 %v4363, %v4355
    %v4708 = vpack.c.b16 %v4364, %v4356
    %v4709 = vpack.c.b16 %v4373, %v4365
    %v4710 = vpack.c.b16 %v4374, %v4366
    %v4711 = vpack.c.b16 %v4375, %v4367
    %v4712 = vpack.c.b16 %v4376, %v4368
    %v4713 = vpack.c.b16 %v4377, %v4369
    %v4714 = vpack.c.b16 %v4378, %v4370
    %v4715 = vpack.c.b16 %v4379, %v4371
    %v4716 = vpack.c.b16 %v4380, %v4372
    %v4717 = vpack.c.b16 %v4389, %v4381
    %v4718 = vpack.c.b16 %v4390, %v4382
    %v4719 = vpack.c.b16 %v4391, %v4383
    %v4720 = vpack.c.b16 %v4392, %v4384
    %v4721 = vpack.c.b16 %v4393, %v4385
    %v4722 = vpack.c.b16 %v4394, %v4386
    %v4723 = vpack.c.b16 %v4395, %v4387
    %v4724 = vpack.c.b16 %v4396, %v4388
    %v4725 = vpack.c.b16 %v4405, %v4397
    %v4726 = vpack.c.b16 %v4406, %v4398
    %v4727 = vpack.c.b16 %v4407, %v4399
    %v4728 = vpack.c.b16 %v4408, %v4400
    %v4729 = vpack.c.b16 %v4409, %v4401
    %v4730 = vpack.c.b16 %v4410, %v4402
    %v4731 = vpack.c.b16 %v4411, %v4403
    %v4732 = vpack.c.b16 %v4412, %v4404
    %v4733 = vpack.c.b16 %v4421, %v4413
    %v4734 = vpack.c.b16 %v4422, %v4414
    %v4735 = vpack.c.b16 %v4423, %v4415
    %v4736 = vpack.c.b16 %v4424, %v4416
    %v4737 = vpack.c.b16 %v4425, %v4417
    %v4738 = vpack.c.b16 %v4426, %v4418
    %v4739 = vpack.c.b16 %v4427, %v4419
    %v4740 = vpack.c.b16 %v4428, %v4420
    %v4741 = vpack.c.b16 %v4437, %v4429
    %v4742 = vpack.c.b16 %v4438, %v4430
    %v4743 = vpack.c.b16 %v4439, %v4431
    %v4744 = vpack.c.b16 %v4440, %v4432
    %v4745 = vpack.c.b16 %v4441, %v4433
    %v4746 = vpack.c.b16 %v4442, %v4434
    %v4747 = vpack.c.b16 %v4443, %v4435
    %v4748 = vpack.c.b16 %v4444, %v4436
    %v4749 = vpack.c.b16 %v4453, %v4445
    %v4750 = vpack.c.b16 %v4454, %v4446
    %v4751 = vpack.c.b16 %v4455, %v4447
    %v4752 = vpack.c.b16 %v4456, %v4448
    %v4753 = vpack.c.b16 %v4457, %v4449
    %v4754 = vpack.c.b16 %v4458, %v4450
    %v4755 = vpack.c.b16 %v4459, %v4451
    %v4756 = vpack.c.b16 %v4460, %v4452
    %v4757 = vpack.c.b16 %v4469, %v4461
    %v4758 = vpack.c.b16 %v4470, %v4462
    %v4759 = vpack.c.b16 %v4471, %v4463
    %v4760 = vpack.c.b16 %v4472, %v4464
    %v4761 = vpack.c.b16 %v4473, %v4465
    %v4762 = vpack.c.b16 %v4474, %v4466
    %v4763 = vpack.c.b16 %v4475, %v4467
    %v4764 = vpack.c.b16 %v4476, %v4468
    %v4765 = vpack.c.b16 %v4485, %v4477
    %v4766 = vpack.c.b16 %v4486, %v4478
    %v4767 = vpack.c.b16 %v4487, %v4479
    %v4768 = vpack.c.b16 %v4488, %v4480
    %v4769 = vpack.c.b16 %v4489, %v4481
    %v4770 = vpack.c.b16 %v4490, %v4482
    %v4771 = vpack.c.b16 %v4491, %v4483
    %v4772 = vpack.c.b16 %v4492, %v4484
    %v4773 = vpack.c.b16 %v4501, %v4493
    %v4774 = vpack.c.b16 %v4502, %v4494
    %v4775 = vpack.c.b16 %v4503, %v4495
    %v4776 = vpack.c.b16 %v4504, %v4496
    %v4777 = vpack.c.b16 %v4505, %v4497
    %v4778 = vpack.c.b16 %v4506, %v4498
    %v4779 = vpack.c.b16 %v4507, %v4499
    %v4780 = vpack.c.b16 %v4508, %v4500
    %v4781 = vpack.c.b16 %v4517, %v4509
    %v4782 = vpack.c.b16 %v4518, %v4510
    %v4783 = vpack.c.b16 %v4519, %v4511
    %v4784 = vpack.c.b16 %v4520, %v4512
    %v4785 = vpack.c.b16 %v4521, %v4513
    %v4786 = vpack.c.b16 %v4522, %v4514
    %v4787 = vpack.c.b16 %v4523, %v4515
    %v4788 = vpack.c.b16 %v4524, %v4516
    %v4789 = vpack.c.b16 %v4533, %v4525
    %v4790 = vpack.c.b16 %v4534, %v4526
    %v4791 = vpack.c.b16 %v4535, %v4527
    %v4792 = vpack.c.b16 %v4536, %v4528
    %v4793 = vpack.c.b16 %v4537, %v4529
    %v4794 = vpack.c.b16 %v4538, %v4530
    %v4795 = vpack.c.b16 %v4539, %v4531
    %v4796 = vpack.c.b16 %v4540, %v4532
    %5053 = vmatpush.bf16.msra.mxu0 %v4597
    %5054 = vmatpush.bf16.msra.mxu0 %v4589
    %5055 = vmatpush.bf16.msra.mxu0 %v4581
    %5056 = vmatpush.bf16.msra.mxu0 %v4573
    %5057 = vmatpush.bf16.msra.mxu0 %v4565
    %5058 = vmatpush.bf16.msra.mxu0 %v4557
    %5059 = vmatpush.bf16.msra.mxu0 %v4549
    %5060 = vmatpush.bf16.msra.mxu0 %v4541
    %5061 = vmatmul.bf16.gmra.mxu0 %v3447
    %v5062 = vpop.f32.mrf.mxu0
    %v5063 = vadd.f32 0.0, %v5062
    %v5064 = vpop.f32.mrf.mxu0
    %v5065 = vadd.f32 0.0, %v5064
    %5066 = vmatmul.bf16.gmra.mxu0 %v3451
    %v5067 = vpop.f32.mrf.mxu0
    %v5068 = vadd.f32 0.0, %v5067
    %v5069 = vpop.f32.mrf.mxu0
    %v5070 = vadd.f32 0.0, %v5069
    %5071 = vmatmul.bf16.gmra.mxu0 %v3455
    %v5072 = vpop.f32.mrf.mxu0
    %v5073 = vadd.f32 0.0, %v5072
    %v5074 = vpop.f32.mrf.mxu0
    %v5075 = vadd.f32 0.0, %v5074
    %5076 = vmatmul.bf16.gmra.mxu0 %v3459
    %v5077 = vpop.f32.mrf.mxu0
    %v5078 = vadd.f32 0.0, %v5077
    %v5079 = vpop.f32.mrf.mxu0
    %v5080 = vadd.f32 0.0, %v5079
    %5081 = vmatmul.bf16.gmra.mxu0 %v3463
    %v5082 = vpop.f32.mrf.mxu0
    %v5083 = vadd.f32 0.0, %v5082
    %v5084 = vpop.f32.mrf.mxu0
    %v5085 = vadd.f32 0.0, %v5084
    %5086 = vmatmul.bf16.gmra.mxu0 %v3467
    %v5087 = vpop.f32.mrf.mxu0
    %v5088 = vadd.f32 0.0, %v5087
    %v5089 = vpop.f32.mrf.mxu0
    %v5090 = vadd.f32 0.0, %v5089
    %5091 = vmatmul.bf16.gmra.mxu0 %v3471
    %v5092 = vpop.f32.mrf.mxu0
    %v5093 = vadd.f32 0.0, %v5092
    %v5094 = vpop.f32.mrf.mxu0
    %v5095 = vadd.f32 0.0, %v5094
    %5096 = vmatmul.bf16.gmra.mxu0 %v3475
    %v5097 = vpop.f32.mrf.mxu0
    %v5098 = vadd.f32 0.0, %v5097
    %v5099 = vpop.f32.mrf.mxu0
    %v5100 = vadd.f32 0.0, %v5099
    %5101 = vmatmul.bf16.gmra.mxu0 %v3479
    %v5102 = vpop.f32.mrf.mxu0
    %v5103 = vadd.f32 0.0, %v5102
    %v5104 = vpop.f32.mrf.mxu0
    %v5105 = vadd.f32 0.0, %v5104
    %5106 = vmatmul.bf16.gmra.mxu0 %v3483
    %v5107 = vpop.f32.mrf.mxu0
    %v5108 = vadd.f32 0.0, %v5107
    %v5109 = vpop.f32.mrf.mxu0
    %v5110 = vadd.f32 0.0, %v5109
    %5111 = vmatmul.bf16.gmra.mxu0 %v3487
    %v5112 = vpop.f32.mrf.mxu0
    %v5113 = vadd.f32 0.0, %v5112
    %v5114 = vpop.f32.mrf.mxu0
    %v5115 = vadd.f32 0.0, %v5114
    %5116 = vmatmul.bf16.gmra.mxu0 %v3491
    %v5117 = vpop.f32.mrf.mxu0
    %v5118 = vadd.f32 0.0, %v5117
    %v5119 = vpop.f32.mrf.mxu0
    %v5120 = vadd.f32 0.0, %v5119
    %5121 = vmatmul.bf16.gmra.mxu0 %v3495
    %v5122 = vpop.f32.mrf.mxu0
    %v5123 = vadd.f32 0.0, %v5122
    %v5124 = vpop.f32.mrf.mxu0
    %v5125 = vadd.f32 0.0, %v5124
    %5126 = vmatmul.bf16.gmra.mxu0 %v3499
    %v5127 = vpop.f32.mrf.mxu0
    %v5128 = vadd.f32 0.0, %v5127
    %v5129 = vpop.f32.mrf.mxu0
    %v5130 = vadd.f32 0.0, %v5129
    %5131 = vmatmul.bf16.gmra.mxu0 %v3503
    %v5132 = vpop.f32.mrf.mxu0
    %v5133 = vadd.f32 0.0, %v5132
    %v5134 = vpop.f32.mrf.mxu0
    %v5135 = vadd.f32 0.0, %v5134
    %5136 = vmatmul.bf16.gmra.mxu0 %v3507
    %v5137 = vpop.f32.mrf.mxu0
    %v5138 = vadd.f32 0.0, %v5137
    %v5139 = vpop.f32.mrf.mxu0
    %v5140 = vadd.f32 0.0, %v5139
    %5141 = vdwg.mxu0
    %5142 = vmatpush.bf16.msra.mxu0 %v4661
    %5143 = vmatpush.bf16.msra.mxu0 %v4653
    %5144 = vmatpush.bf16.msra.mxu0 %v4645
    %5145 = vmatpush.bf16.msra.mxu0 %v4637
    %5146 = vmatpush.bf16.msra.mxu0 %v4629
    %5147 = vmatpush.bf16.msra.mxu0 %v4621
    %5148 = vmatpush.bf16.msra.mxu0 %v4613
    %5149 = vmatpush.bf16.msra.mxu0 %v4605
    %5150 = vmatmul.bf16.gmra.mxu0 %v3448
    %v5151 = vpop.f32.mrf.mxu0
    %v5152 = vadd.f32 %v5063, %v5151
    %v5153 = vpop.f32.mrf.mxu0
    %v5154 = vadd.f32 %v5065, %v5153
    %5155 = vmatmul.bf16.gmra.mxu0 %v3452
    %v5156 = vpop.f32.mrf.mxu0
    %v5157 = vadd.f32 %v5068, %v5156
    %v5158 = vpop.f32.mrf.mxu0
    %v5159 = vadd.f32 %v5070, %v5158
    %5160 = vmatmul.bf16.gmra.mxu0 %v3456
    %v5161 = vpop.f32.mrf.mxu0
    %v5162 = vadd.f32 %v5073, %v5161
    %v5163 = vpop.f32.mrf.mxu0
    %v5164 = vadd.f32 %v5075, %v5163
    %5165 = vmatmul.bf16.gmra.mxu0 %v3460
    %v5166 = vpop.f32.mrf.mxu0
    %v5167 = vadd.f32 %v5078, %v5166
    %v5168 = vpop.f32.mrf.mxu0
    %v5169 = vadd.f32 %v5080, %v5168
    %5170 = vmatmul.bf16.gmra.mxu0 %v3464
    %v5171 = vpop.f32.mrf.mxu0
    %v5172 = vadd.f32 %v5083, %v5171
    %v5173 = vpop.f32.mrf.mxu0
    %v5174 = vadd.f32 %v5085, %v5173
    %5175 = vmatmul.bf16.gmra.mxu0 %v3468
    %v5176 = vpop.f32.mrf.mxu0
    %v5177 = vadd.f32 %v5088, %v5176
    %v5178 = vpop.f32.mrf.mxu0
    %v5179 = vadd.f32 %v5090, %v5178
    %5180 = vmatmul.bf16.gmra.mxu0 %v3472
    %v5181 = vpop.f32.mrf.mxu0
    %v5182 = vadd.f32 %v5093, %v5181
    %v5183 = vpop.f32.mrf.mxu0
    %v5184 = vadd.f32 %v5095, %v5183
    %5185 = vmatmul.bf16.gmra.mxu0 %v3476
    %v5186 = vpop.f32.mrf.mxu0
    %v5187 = vadd.f32 %v5098, %v5186
    %v5188 = vpop.f32.mrf.mxu0
    %v5189 = vadd.f32 %v5100, %v5188
    %5190 = vmatmul.bf16.gmra.mxu0 %v3480
    %v5191 = vpop.f32.mrf.mxu0
    %v5192 = vadd.f32 %v5103, %v5191
    %v5193 = vpop.f32.mrf.mxu0
    %v5194 = vadd.f32 %v5105, %v5193
    %5195 = vmatmul.bf16.gmra.mxu0 %v3484
    %v5196 = vpop.f32.mrf.mxu0
    %v5197 = vadd.f32 %v5108, %v5196
    %v5198 = vpop.f32.mrf.mxu0
    %v5199 = vadd.f32 %v5110, %v5198
    %5200 = vmatmul.bf16.gmra.mxu0 %v3488
    %v5201 = vpop.f32.mrf.mxu0
    %v5202 = vadd.f32 %v5113, %v5201
    %v5203 = vpop.f32.mrf.mxu0
    %v5204 = vadd.f32 %v5115, %v5203
    %5205 = vmatmul.bf16.gmra.mxu0 %v3492
    %v5206 = vpop.f32.mrf.mxu0
    %v5207 = vadd.f32 %v5118, %v5206
    %v5208 = vpop.f32.mrf.mxu0
    %v5209 = vadd.f32 %v5120, %v5208
    %5210 = vmatmul.bf16.gmra.mxu0 %v3496
    %v5211 = vpop.f32.mrf.mxu0
    %v5212 = vadd.f32 %v5123, %v5211
    %v5213 = vpop.f32.mrf.mxu0
    %v5214 = vadd.f32 %v5125, %v5213
    %5215 = vmatmul.bf16.gmra.mxu0 %v3500
    %v5216 = vpop.f32.mrf.mxu0
    %v5217 = vadd.f32 %v5128, %v5216
    %v5218 = vpop.f32.mrf.mxu0
    %v5219 = vadd.f32 %v5130, %v5218
    %5220 = vmatmul.bf16.gmra.mxu0 %v3504
    %v5221 = vpop.f32.mrf.mxu0
    %v5222 = vadd.f32 %v5133, %v5221
    %v5223 = vpop.f32.mrf.mxu0
    %v5224 = vadd.f32 %v5135, %v5223
    %5225 = vmatmul.bf16.gmra.mxu0 %v3508
    %v5226 = vpop.f32.mrf.mxu0
    %v5227 = vadd.f32 %v5138, %v5226
    %v5228 = vpop.f32.mrf.mxu0
    %v5229 = vadd.f32 %v5140, %v5228
    %5230 = vdwg.mxu0
    %5231 = vmatpush.bf16.msra.mxu0 %v4725
    %5232 = vmatpush.bf16.msra.mxu0 %v4717
    %5233 = vmatpush.bf16.msra.mxu0 %v4709
    %5234 = vmatpush.bf16.msra.mxu0 %v4701
    %5235 = vmatpush.bf16.msra.mxu0 %v4693
    %5236 = vmatpush.bf16.msra.mxu0 %v4685
    %5237 = vmatpush.bf16.msra.mxu0 %v4677
    %5238 = vmatpush.bf16.msra.mxu0 %v4669
    %5239 = vmatmul.bf16.gmra.mxu0 %v3449
    %v5240 = vpop.f32.mrf.mxu0
    %v5241 = vadd.f32 %v5152, %v5240
    %v5242 = vpop.f32.mrf.mxu0
    %v5243 = vadd.f32 %v5154, %v5242
    %5244 = vmatmul.bf16.gmra.mxu0 %v3453
    %v5245 = vpop.f32.mrf.mxu0
    %v5246 = vadd.f32 %v5157, %v5245
    %v5247 = vpop.f32.mrf.mxu0
    %v5248 = vadd.f32 %v5159, %v5247
    %5249 = vmatmul.bf16.gmra.mxu0 %v3457
    %v5250 = vpop.f32.mrf.mxu0
    %v5251 = vadd.f32 %v5162, %v5250
    %v5252 = vpop.f32.mrf.mxu0
    %v5253 = vadd.f32 %v5164, %v5252
    %5254 = vmatmul.bf16.gmra.mxu0 %v3461
    %v5255 = vpop.f32.mrf.mxu0
    %v5256 = vadd.f32 %v5167, %v5255
    %v5257 = vpop.f32.mrf.mxu0
    %v5258 = vadd.f32 %v5169, %v5257
    %5259 = vmatmul.bf16.gmra.mxu0 %v3465
    %v5260 = vpop.f32.mrf.mxu0
    %v5261 = vadd.f32 %v5172, %v5260
    %v5262 = vpop.f32.mrf.mxu0
    %v5263 = vadd.f32 %v5174, %v5262
    %5264 = vmatmul.bf16.gmra.mxu0 %v3469
    %v5265 = vpop.f32.mrf.mxu0
    %v5266 = vadd.f32 %v5177, %v5265
    %v5267 = vpop.f32.mrf.mxu0
    %v5268 = vadd.f32 %v5179, %v5267
    %5269 = vmatmul.bf16.gmra.mxu0 %v3473
    %v5270 = vpop.f32.mrf.mxu0
    %v5271 = vadd.f32 %v5182, %v5270
    %v5272 = vpop.f32.mrf.mxu0
    %v5273 = vadd.f32 %v5184, %v5272
    %5274 = vmatmul.bf16.gmra.mxu0 %v3477
    %v5275 = vpop.f32.mrf.mxu0
    %v5276 = vadd.f32 %v5187, %v5275
    %v5277 = vpop.f32.mrf.mxu0
    %v5278 = vadd.f32 %v5189, %v5277
    %5279 = vmatmul.bf16.gmra.mxu0 %v3481
    %v5280 = vpop.f32.mrf.mxu0
    %v5281 = vadd.f32 %v5192, %v5280
    %v5282 = vpop.f32.mrf.mxu0
    %v5283 = vadd.f32 %v5194, %v5282
    %5284 = vmatmul.bf16.gmra.mxu0 %v3485
    %v5285 = vpop.f32.mrf.mxu0
    %v5286 = vadd.f32 %v5197, %v5285
    %v5287 = vpop.f32.mrf.mxu0
    %v5288 = vadd.f32 %v5199, %v5287
    %5289 = vmatmul.bf16.gmra.mxu0 %v3489
    %v5290 = vpop.f32.mrf.mxu0
    %v5291 = vadd.f32 %v5202, %v5290
    %v5292 = vpop.f32.mrf.mxu0
    %v5293 = vadd.f32 %v5204, %v5292
    %5294 = vmatmul.bf16.gmra.mxu0 %v3493
    %v5295 = vpop.f32.mrf.mxu0
    %v5296 = vadd.f32 %v5207, %v5295
    %v5297 = vpop.f32.mrf.mxu0
    %v5298 = vadd.f32 %v5209, %v5297
    %5299 = vmatmul.bf16.gmra.mxu0 %v3497
    %v5300 = vpop.f32.mrf.mxu0
    %v5301 = vadd.f32 %v5212, %v5300
    %v5302 = vpop.f32.mrf.mxu0
    %v5303 = vadd.f32 %v5214, %v5302
    %5304 = vmatmul.bf16.gmra.mxu0 %v3501
    %v5305 = vpop.f32.mrf.mxu0
    %v5306 = vadd.f32 %v5217, %v5305
    %v5307 = vpop.f32.mrf.mxu0
    %v5308 = vadd.f32 %v5219, %v5307
    %5309 = vmatmul.bf16.gmra.mxu0 %v3505
    %v5310 = vpop.f32.mrf.mxu0
    %v5311 = vadd.f32 %v5222, %v5310
    %v5312 = vpop.f32.mrf.mxu0
    %v5313 = vadd.f32 %v5224, %v5312
    %5314 = vmatmul.bf16.gmra.mxu0 %v3509
    %v5315 = vpop.f32.mrf.mxu0
    %v5316 = vadd.f32 %v5227, %v5315
    %v5317 = vpop.f32.mrf.mxu0
    %v5318 = vadd.f32 %v5229, %v5317
    %5319 = vdwg.mxu0
    %5320 = vmatpush.bf16.msra.mxu0 %v4789
    %5321 = vmatpush.bf16.msra.mxu0 %v4781
    %5322 = vmatpush.bf16.msra.mxu0 %v4773
    %5323 = vmatpush.bf16.msra.mxu0 %v4765
    %5324 = vmatpush.bf16.msra.mxu0 %v4757
    %5325 = vmatpush.bf16.msra.mxu0 %v4749
    %5326 = vmatpush.bf16.msra.mxu0 %v4741
    %5327 = vmatpush.bf16.msra.mxu0 %v4733
    %5328 = vmatmul.bf16.gmra.mxu0 %v3450
    %v5329 = vpop.f32.mrf.mxu0
    %v5330 = vadd.f32 %v5241, %v5329
    %v5331 = vpop.f32.mrf.mxu0
    %v5332 = vadd.f32 %v5243, %v5331
    %5333 = vmatmul.bf16.gmra.mxu0 %v3454
    %v5334 = vpop.f32.mrf.mxu0
    %v5335 = vadd.f32 %v5246, %v5334
    %v5336 = vpop.f32.mrf.mxu0
    %v5337 = vadd.f32 %v5248, %v5336
    %5338 = vmatmul.bf16.gmra.mxu0 %v3458
    %v5339 = vpop.f32.mrf.mxu0
    %v5340 = vadd.f32 %v5251, %v5339
    %v5341 = vpop.f32.mrf.mxu0
    %v5342 = vadd.f32 %v5253, %v5341
    %5343 = vmatmul.bf16.gmra.mxu0 %v3462
    %v5344 = vpop.f32.mrf.mxu0
    %v5345 = vadd.f32 %v5256, %v5344
    %v5346 = vpop.f32.mrf.mxu0
    %v5347 = vadd.f32 %v5258, %v5346
    %5348 = vmatmul.bf16.gmra.mxu0 %v3466
    %v5349 = vpop.f32.mrf.mxu0
    %v5350 = vadd.f32 %v5261, %v5349
    %v5351 = vpop.f32.mrf.mxu0
    %v5352 = vadd.f32 %v5263, %v5351
    %5353 = vmatmul.bf16.gmra.mxu0 %v3470
    %v5354 = vpop.f32.mrf.mxu0
    %v5355 = vadd.f32 %v5266, %v5354
    %v5356 = vpop.f32.mrf.mxu0
    %v5357 = vadd.f32 %v5268, %v5356
    %5358 = vmatmul.bf16.gmra.mxu0 %v3474
    %v5359 = vpop.f32.mrf.mxu0
    %v5360 = vadd.f32 %v5271, %v5359
    %v5361 = vpop.f32.mrf.mxu0
    %v5362 = vadd.f32 %v5273, %v5361
    %5363 = vmatmul.bf16.gmra.mxu0 %v3478
    %v5364 = vpop.f32.mrf.mxu0
    %v5365 = vadd.f32 %v5276, %v5364
    %v5366 = vpop.f32.mrf.mxu0
    %v5367 = vadd.f32 %v5278, %v5366
    %5368 = vmatmul.bf16.gmra.mxu0 %v3482
    %v5369 = vpop.f32.mrf.mxu0
    %v5370 = vadd.f32 %v5281, %v5369
    %v5371 = vpop.f32.mrf.mxu0
    %v5372 = vadd.f32 %v5283, %v5371
    %5373 = vmatmul.bf16.gmra.mxu0 %v3486
    %v5374 = vpop.f32.mrf.mxu0
    %v5375 = vadd.f32 %v5286, %v5374
    %v5376 = vpop.f32.mrf.mxu0
    %v5377 = vadd.f32 %v5288, %v5376
    %5378 = vmatmul.bf16.gmra.mxu0 %v3490
    %v5379 = vpop.f32.mrf.mxu0
    %v5380 = vadd.f32 %v5291, %v5379
    %v5381 = vpop.f32.mrf.mxu0
    %v5382 = vadd.f32 %v5293, %v5381
    %5383 = vmatmul.bf16.gmra.mxu0 %v3494
    %v5384 = vpop.f32.mrf.mxu0
    %v5385 = vadd.f32 %v5296, %v5384
    %v5386 = vpop.f32.mrf.mxu0
    %v5387 = vadd.f32 %v5298, %v5386
    %5388 = vmatmul.bf16.gmra.mxu0 %v3498
    %v5389 = vpop.f32.mrf.mxu0
    %v5390 = vadd.f32 %v5301, %v5389
    %v5391 = vpop.f32.mrf.mxu0
    %v5392 = vadd.f32 %v5303, %v5391
    %5393 = vmatmul.bf16.gmra.mxu0 %v3502
    %v5394 = vpop.f32.mrf.mxu0
    %v5395 = vadd.f32 %v5306, %v5394
    %v5396 = vpop.f32.mrf.mxu0
    %v5397 = vadd.f32 %v5308, %v5396
    %5398 = vmatmul.bf16.gmra.mxu0 %v3506
    %v5399 = vpop.f32.mrf.mxu0
    %v5400 = vadd.f32 %v5311, %v5399
    %v5401 = vpop.f32.mrf.mxu0
    %v5402 = vadd.f32 %v5313, %v5401
    %5403 = vmatmul.bf16.gmra.mxu0 %v3510
    %v5404 = vpop.f32.mrf.mxu0
    %v5405 = vadd.f32 %v5316, %v5404
    %v5406 = vpop.f32.mrf.mxu0
    %v5407 = vadd.f32 %v5318, %v5406
    %5408 = vdwg.mxu0
    %5409 = vmatpush.bf16.msra.mxu0 %v4598
    %5410 = vmatpush.bf16.msra.mxu0 %v4590
    %5411 = vmatpush.bf16.msra.mxu0 %v4582
    %5412 = vmatpush.bf16.msra.mxu0 %v4574
    %5413 = vmatpush.bf16.msra.mxu0 %v4566
    %5414 = vmatpush.bf16.msra.mxu0 %v4558
    %5415 = vmatpush.bf16.msra.mxu0 %v4550
    %5416 = vmatpush.bf16.msra.mxu0 %v4542
    %5417 = vmatmul.bf16.gmra.mxu0 %v3447
    %v5418 = vpop.f32.mrf.mxu0
    %v5419 = vadd.f32 0.0, %v5418
    %v5420 = vpop.f32.mrf.mxu0
    %v5421 = vadd.f32 0.0, %v5420
    %5422 = vmatmul.bf16.gmra.mxu0 %v3451
    %v5423 = vpop.f32.mrf.mxu0
    %v5424 = vadd.f32 0.0, %v5423
    %v5425 = vpop.f32.mrf.mxu0
    %v5426 = vadd.f32 0.0, %v5425
    %5427 = vmatmul.bf16.gmra.mxu0 %v3455
    %v5428 = vpop.f32.mrf.mxu0
    %v5429 = vadd.f32 0.0, %v5428
    %v5430 = vpop.f32.mrf.mxu0
    %v5431 = vadd.f32 0.0, %v5430
    %5432 = vmatmul.bf16.gmra.mxu0 %v3459
    %v5433 = vpop.f32.mrf.mxu0
    %v5434 = vadd.f32 0.0, %v5433
    %v5435 = vpop.f32.mrf.mxu0
    %v5436 = vadd.f32 0.0, %v5435
    %5437 = vmatmul.bf16.gmra.mxu0 %v3463
    %v5438 = vpop.f32.mrf.mxu0
    %v5439 = vadd.f32 0.0, %v5438
    %v5440 = vpop.f32.mrf.mxu0
    %v5441 = vadd.f32 0.0, %v5440
    %5442 = vmatmul.bf16.gmra.mxu0 %v3467
    %v5443 = vpop.f32.mrf.mxu0
    %v5444 = vadd.f32 0.0, %v5443
    %v5445 = vpop.f32.mrf.mxu0
    %v5446 = vadd.f32 0.0, %v5445
    %5447 = vmatmul.bf16.gmra.mxu0 %v3471
    %v5448 = vpop.f32.mrf.mxu0
    %v5449 = vadd.f32 0.0, %v5448
    %v5450 = vpop.f32.mrf.mxu0
    %v5451 = vadd.f32 0.0, %v5450
    %5452 = vmatmul.bf16.gmra.mxu0 %v3475
    %v5453 = vpop.f32.mrf.mxu0
    %v5454 = vadd.f32 0.0, %v5453
    %v5455 = vpop.f32.mrf.mxu0
    %v5456 = vadd.f32 0.0, %v5455
    %5457 = vmatmul.bf16.gmra.mxu0 %v3479
    %v5458 = vpop.f32.mrf.mxu0
    %v5459 = vadd.f32 0.0, %v5458
    %v5460 = vpop.f32.mrf.mxu0
    %v5461 = vadd.f32 0.0, %v5460
    %5462 = vmatmul.bf16.gmra.mxu0 %v3483
    %v5463 = vpop.f32.mrf.mxu0
    %v5464 = vadd.f32 0.0, %v5463
    %v5465 = vpop.f32.mrf.mxu0
    %v5466 = vadd.f32 0.0, %v5465
    %5467 = vmatmul.bf16.gmra.mxu0 %v3487
    %v5468 = vpop.f32.mrf.mxu0
    %v5469 = vadd.f32 0.0, %v5468
    %v5470 = vpop.f32.mrf.mxu0
    %v5471 = vadd.f32 0.0, %v5470
    %5472 = vmatmul.bf16.gmra.mxu0 %v3491
    %v5473 = vpop.f32.mrf.mxu0
    %v5474 = vadd.f32 0.0, %v5473
    %v5475 = vpop.f32.mrf.mxu0
    %v5476 = vadd.f32 0.0, %v5475
    %5477 = vmatmul.bf16.gmra.mxu0 %v3495
    %v5478 = vpop.f32.mrf.mxu0
    %v5479 = vadd.f32 0.0, %v5478
    %v5480 = vpop.f32.mrf.mxu0
    %v5481 = vadd.f32 0.0, %v5480
    %5482 = vmatmul.bf16.gmra.mxu0 %v3499
    %v5483 = vpop.f32.mrf.mxu0
    %v5484 = vadd.f32 0.0, %v5483
    %v5485 = vpop.f32.mrf.mxu0
    %v5486 = vadd.f32 0.0, %v5485
    %5487 = vmatmul.bf16.gmra.mxu0 %v3503
    %v5488 = vpop.f32.mrf.mxu0
    %v5489 = vadd.f32 0.0, %v5488
    %v5490 = vpop.f32.mrf.mxu0
    %v5491 = vadd.f32 0.0, %v5490
    %5492 = vmatmul.bf16.gmra.mxu0 %v3507
    %v5493 = vpop.f32.mrf.mxu0
    %v5494 = vadd.f32 0.0, %v5493
    %v5495 = vpop.f32.mrf.mxu0
    %v5496 = vadd.f32 0.0, %v5495
    %5497 = vdwg.mxu0
    %5498 = vmatpush.bf16.msra.mxu0 %v4662
    %5499 = vmatpush.bf16.msra.mxu0 %v4654
    %5500 = vmatpush.bf16.msra.mxu0 %v4646
    %5501 = vmatpush.bf16.msra.mxu0 %v4638
    %5502 = vmatpush.bf16.msra.mxu0 %v4630
    %5503 = vmatpush.bf16.msra.mxu0 %v4622
    %5504 = vmatpush.bf16.msra.mxu0 %v4614
    %5505 = vmatpush.bf16.msra.mxu0 %v4606
    %5506 = vmatmul.bf16.gmra.mxu0 %v3448
    %v5507 = vpop.f32.mrf.mxu0
    %v5508 = vadd.f32 %v5419, %v5507
    %v5509 = vpop.f32.mrf.mxu0
    %v5510 = vadd.f32 %v5421, %v5509
    %5511 = vmatmul.bf16.gmra.mxu0 %v3452
    %v5512 = vpop.f32.mrf.mxu0
    %v5513 = vadd.f32 %v5424, %v5512
    %v5514 = vpop.f32.mrf.mxu0
    %v5515 = vadd.f32 %v5426, %v5514
    %5516 = vmatmul.bf16.gmra.mxu0 %v3456
    %v5517 = vpop.f32.mrf.mxu0
    %v5518 = vadd.f32 %v5429, %v5517
    %v5519 = vpop.f32.mrf.mxu0
    %v5520 = vadd.f32 %v5431, %v5519
    %5521 = vmatmul.bf16.gmra.mxu0 %v3460
    %v5522 = vpop.f32.mrf.mxu0
    %v5523 = vadd.f32 %v5434, %v5522
    %v5524 = vpop.f32.mrf.mxu0
    %v5525 = vadd.f32 %v5436, %v5524
    %5526 = vmatmul.bf16.gmra.mxu0 %v3464
    %v5527 = vpop.f32.mrf.mxu0
    %v5528 = vadd.f32 %v5439, %v5527
    %v5529 = vpop.f32.mrf.mxu0
    %v5530 = vadd.f32 %v5441, %v5529
    %5531 = vmatmul.bf16.gmra.mxu0 %v3468
    %v5532 = vpop.f32.mrf.mxu0
    %v5533 = vadd.f32 %v5444, %v5532
    %v5534 = vpop.f32.mrf.mxu0
    %v5535 = vadd.f32 %v5446, %v5534
    %5536 = vmatmul.bf16.gmra.mxu0 %v3472
    %v5537 = vpop.f32.mrf.mxu0
    %v5538 = vadd.f32 %v5449, %v5537
    %v5539 = vpop.f32.mrf.mxu0
    %v5540 = vadd.f32 %v5451, %v5539
    %5541 = vmatmul.bf16.gmra.mxu0 %v3476
    %v5542 = vpop.f32.mrf.mxu0
    %v5543 = vadd.f32 %v5454, %v5542
    %v5544 = vpop.f32.mrf.mxu0
    %v5545 = vadd.f32 %v5456, %v5544
    %5546 = vmatmul.bf16.gmra.mxu0 %v3480
    %v5547 = vpop.f32.mrf.mxu0
    %v5548 = vadd.f32 %v5459, %v5547
    %v5549 = vpop.f32.mrf.mxu0
    %v5550 = vadd.f32 %v5461, %v5549
    %5551 = vmatmul.bf16.gmra.mxu0 %v3484
    %v5552 = vpop.f32.mrf.mxu0
    %v5553 = vadd.f32 %v5464, %v5552
    %v5554 = vpop.f32.mrf.mxu0
    %v5555 = vadd.f32 %v5466, %v5554
    %5556 = vmatmul.bf16.gmra.mxu0 %v3488
    %v5557 = vpop.f32.mrf.mxu0
    %v5558 = vadd.f32 %v5469, %v5557
    %v5559 = vpop.f32.mrf.mxu0
    %v5560 = vadd.f32 %v5471, %v5559
    %5561 = vmatmul.bf16.gmra.mxu0 %v3492
    %v5562 = vpop.f32.mrf.mxu0
    %v5563 = vadd.f32 %v5474, %v5562
    %v5564 = vpop.f32.mrf.mxu0
    %v5565 = vadd.f32 %v5476, %v5564
    %5566 = vmatmul.bf16.gmra.mxu0 %v3496
    %v5567 = vpop.f32.mrf.mxu0
    %v5568 = vadd.f32 %v5479, %v5567
    %v5569 = vpop.f32.mrf.mxu0
    %v5570 = vadd.f32 %v5481, %v5569
    %5571 = vmatmul.bf16.gmra.mxu0 %v3500
    %v5572 = vpop.f32.mrf.mxu0
    %v5573 = vadd.f32 %v5484, %v5572
    %v5574 = vpop.f32.mrf.mxu0
    %v5575 = vadd.f32 %v5486, %v5574
    %5576 = vmatmul.bf16.gmra.mxu0 %v3504
    %v5577 = vpop.f32.mrf.mxu0
    %v5578 = vadd.f32 %v5489, %v5577
    %v5579 = vpop.f32.mrf.mxu0
    %v5580 = vadd.f32 %v5491, %v5579
    %5581 = vmatmul.bf16.gmra.mxu0 %v3508
    %v5582 = vpop.f32.mrf.mxu0
    %v5583 = vadd.f32 %v5494, %v5582
    %v5584 = vpop.f32.mrf.mxu0
    %v5585 = vadd.f32 %v5496, %v5584
    %5586 = vdwg.mxu0
    %5587 = vmatpush.bf16.msra.mxu0 %v4726
    %5588 = vmatpush.bf16.msra.mxu0 %v4718
    %5589 = vmatpush.bf16.msra.mxu0 %v4710
    %5590 = vmatpush.bf16.msra.mxu0 %v4702
    %5591 = vmatpush.bf16.msra.mxu0 %v4694
    %5592 = vmatpush.bf16.msra.mxu0 %v4686
    %5593 = vmatpush.bf16.msra.mxu0 %v4678
    %5594 = vmatpush.bf16.msra.mxu0 %v4670
    %5595 = vmatmul.bf16.gmra.mxu0 %v3449
    %v5596 = vpop.f32.mrf.mxu0
    %v5597 = vadd.f32 %v5508, %v5596
    %v5598 = vpop.f32.mrf.mxu0
    %v5599 = vadd.f32 %v5510, %v5598
    %5600 = vmatmul.bf16.gmra.mxu0 %v3453
    %v5601 = vpop.f32.mrf.mxu0
    %v5602 = vadd.f32 %v5513, %v5601
    %v5603 = vpop.f32.mrf.mxu0
    %v5604 = vadd.f32 %v5515, %v5603
    %5605 = vmatmul.bf16.gmra.mxu0 %v3457
    %v5606 = vpop.f32.mrf.mxu0
    %v5607 = vadd.f32 %v5518, %v5606
    %v5608 = vpop.f32.mrf.mxu0
    %v5609 = vadd.f32 %v5520, %v5608
    %5610 = vmatmul.bf16.gmra.mxu0 %v3461
    %v5611 = vpop.f32.mrf.mxu0
    %v5612 = vadd.f32 %v5523, %v5611
    %v5613 = vpop.f32.mrf.mxu0
    %v5614 = vadd.f32 %v5525, %v5613
    %5615 = vmatmul.bf16.gmra.mxu0 %v3465
    %v5616 = vpop.f32.mrf.mxu0
    %v5617 = vadd.f32 %v5528, %v5616
    %v5618 = vpop.f32.mrf.mxu0
    %v5619 = vadd.f32 %v5530, %v5618
    %5620 = vmatmul.bf16.gmra.mxu0 %v3469
    %v5621 = vpop.f32.mrf.mxu0
    %v5622 = vadd.f32 %v5533, %v5621
    %v5623 = vpop.f32.mrf.mxu0
    %v5624 = vadd.f32 %v5535, %v5623
    %5625 = vmatmul.bf16.gmra.mxu0 %v3473
    %v5626 = vpop.f32.mrf.mxu0
    %v5627 = vadd.f32 %v5538, %v5626
    %v5628 = vpop.f32.mrf.mxu0
    %v5629 = vadd.f32 %v5540, %v5628
    %5630 = vmatmul.bf16.gmra.mxu0 %v3477
    %v5631 = vpop.f32.mrf.mxu0
    %v5632 = vadd.f32 %v5543, %v5631
    %v5633 = vpop.f32.mrf.mxu0
    %v5634 = vadd.f32 %v5545, %v5633
    %5635 = vmatmul.bf16.gmra.mxu0 %v3481
    %v5636 = vpop.f32.mrf.mxu0
    %v5637 = vadd.f32 %v5548, %v5636
    %v5638 = vpop.f32.mrf.mxu0
    %v5639 = vadd.f32 %v5550, %v5638
    %5640 = vmatmul.bf16.gmra.mxu0 %v3485
    %v5641 = vpop.f32.mrf.mxu0
    %v5642 = vadd.f32 %v5553, %v5641
    %v5643 = vpop.f32.mrf.mxu0
    %v5644 = vadd.f32 %v5555, %v5643
    %5645 = vmatmul.bf16.gmra.mxu0 %v3489
    %v5646 = vpop.f32.mrf.mxu0
    %v5647 = vadd.f32 %v5558, %v5646
    %v5648 = vpop.f32.mrf.mxu0
    %v5649 = vadd.f32 %v5560, %v5648
    %5650 = vmatmul.bf16.gmra.mxu0 %v3493
    %v5651 = vpop.f32.mrf.mxu0
    %v5652 = vadd.f32 %v5563, %v5651
    %v5653 = vpop.f32.mrf.mxu0
    %v5654 = vadd.f32 %v5565, %v5653
    %5655 = vmatmul.bf16.gmra.mxu0 %v3497
    %v5656 = vpop.f32.mrf.mxu0
    %v5657 = vadd.f32 %v5568, %v5656
    %v5658 = vpop.f32.mrf.mxu0
    %v5659 = vadd.f32 %v5570, %v5658
    %5660 = vmatmul.bf16.gmra.mxu0 %v3501
    %v5661 = vpop.f32.mrf.mxu0
    %v5662 = vadd.f32 %v5573, %v5661
    %v5663 = vpop.f32.mrf.mxu0
    %v5664 = vadd.f32 %v5575, %v5663
    %5665 = vmatmul.bf16.gmra.mxu0 %v3505
    %v5666 = vpop.f32.mrf.mxu0
    %v5667 = vadd.f32 %v5578, %v5666
    %v5668 = vpop.f32.mrf.mxu0
    %v5669 = vadd.f32 %v5580, %v5668
    %5670 = vmatmul.bf16.gmra.mxu0 %v3509
    %v5671 = vpop.f32.mrf.mxu0
    %v5672 = vadd.f32 %v5583, %v5671
    %v5673 = vpop.f32.mrf.mxu0
    %v5674 = vadd.f32 %v5585, %v5673
    %5675 = vdwg.mxu0
    %5676 = vmatpush.bf16.msra.mxu0 %v4790
    %5677 = vmatpush.bf16.msra.mxu0 %v4782
    %5678 = vmatpush.bf16.msra.mxu0 %v4774
    %5679 = vmatpush.bf16.msra.mxu0 %v4766
    %5680 = vmatpush.bf16.msra.mxu0 %v4758
    %5681 = vmatpush.bf16.msra.mxu0 %v4750
    %5682 = vmatpush.bf16.msra.mxu0 %v4742
    %5683 = vmatpush.bf16.msra.mxu0 %v4734
    %5684 = vmatmul.bf16.gmra.mxu0 %v3450
    %v5685 = vpop.f32.mrf.mxu0
    %v5686 = vadd.f32 %v5597, %v5685
    %v5687 = vpop.f32.mrf.mxu0
    %v5688 = vadd.f32 %v5599, %v5687
    %5689 = vmatmul.bf16.gmra.mxu0 %v3454
    %v5690 = vpop.f32.mrf.mxu0
    %v5691 = vadd.f32 %v5602, %v5690
    %v5692 = vpop.f32.mrf.mxu0
    %v5693 = vadd.f32 %v5604, %v5692
    %5694 = vmatmul.bf16.gmra.mxu0 %v3458
    %v5695 = vpop.f32.mrf.mxu0
    %v5696 = vadd.f32 %v5607, %v5695
    %v5697 = vpop.f32.mrf.mxu0
    %v5698 = vadd.f32 %v5609, %v5697
    %5699 = vmatmul.bf16.gmra.mxu0 %v3462
    %v5700 = vpop.f32.mrf.mxu0
    %v5701 = vadd.f32 %v5612, %v5700
    %v5702 = vpop.f32.mrf.mxu0
    %v5703 = vadd.f32 %v5614, %v5702
    %5704 = vmatmul.bf16.gmra.mxu0 %v3466
    %v5705 = vpop.f32.mrf.mxu0
    %v5706 = vadd.f32 %v5617, %v5705
    %v5707 = vpop.f32.mrf.mxu0
    %v5708 = vadd.f32 %v5619, %v5707
    %5709 = vmatmul.bf16.gmra.mxu0 %v3470
    %v5710 = vpop.f32.mrf.mxu0
    %v5711 = vadd.f32 %v5622, %v5710
    %v5712 = vpop.f32.mrf.mxu0
    %v5713 = vadd.f32 %v5624, %v5712
    %5714 = vmatmul.bf16.gmra.mxu0 %v3474
    %v5715 = vpop.f32.mrf.mxu0
    %v5716 = vadd.f32 %v5627, %v5715
    %v5717 = vpop.f32.mrf.mxu0
    %v5718 = vadd.f32 %v5629, %v5717
    %5719 = vmatmul.bf16.gmra.mxu0 %v3478
    %v5720 = vpop.f32.mrf.mxu0
    %v5721 = vadd.f32 %v5632, %v5720
    %v5722 = vpop.f32.mrf.mxu0
    %v5723 = vadd.f32 %v5634, %v5722
    %5724 = vmatmul.bf16.gmra.mxu0 %v3482
    %v5725 = vpop.f32.mrf.mxu0
    %v5726 = vadd.f32 %v5637, %v5725
    %v5727 = vpop.f32.mrf.mxu0
    %v5728 = vadd.f32 %v5639, %v5727
    %5729 = vmatmul.bf16.gmra.mxu0 %v3486
    %v5730 = vpop.f32.mrf.mxu0
    %v5731 = vadd.f32 %v5642, %v5730
    %v5732 = vpop.f32.mrf.mxu0
    %v5733 = vadd.f32 %v5644, %v5732
    %5734 = vmatmul.bf16.gmra.mxu0 %v3490
    %v5735 = vpop.f32.mrf.mxu0
    %v5736 = vadd.f32 %v5647, %v5735
    %v5737 = vpop.f32.mrf.mxu0
    %v5738 = vadd.f32 %v5649, %v5737
    %5739 = vmatmul.bf16.gmra.mxu0 %v3494
    %v5740 = vpop.f32.mrf.mxu0
    %v5741 = vadd.f32 %v5652, %v5740
    %v5742 = vpop.f32.mrf.mxu0
    %v5743 = vadd.f32 %v5654, %v5742
    %5744 = vmatmul.bf16.gmra.mxu0 %v3498
    %v5745 = vpop.f32.mrf.mxu0
    %v5746 = vadd.f32 %v5657, %v5745
    %v5747 = vpop.f32.mrf.mxu0
    %v5748 = vadd.f32 %v5659, %v5747
    %5749 = vmatmul.bf16.gmra.mxu0 %v3502
    %v5750 = vpop.f32.mrf.mxu0
    %v5751 = vadd.f32 %v5662, %v5750
    %v5752 = vpop.f32.mrf.mxu0
    %v5753 = vadd.f32 %v5664, %v5752
    %5754 = vmatmul.bf16.gmra.mxu0 %v3506
    %v5755 = vpop.f32.mrf.mxu0
    %v5756 = vadd.f32 %v5667, %v5755
    %v5757 = vpop.f32.mrf.mxu0
    %v5758 = vadd.f32 %v5669, %v5757
    %5759 = vmatmul.bf16.gmra.mxu0 %v3510
    %v5760 = vpop.f32.mrf.mxu0
    %v5761 = vadd.f32 %v5672, %v5760
    %v5762 = vpop.f32.mrf.mxu0
    %v5763 = vadd.f32 %v5674, %v5762
    %5764 = vdwg.mxu0
    %5765 = vmatpush.bf16.msra.mxu0 %v4599
    %5766 = vmatpush.bf16.msra.mxu0 %v4591
    %5767 = vmatpush.bf16.msra.mxu0 %v4583
    %5768 = vmatpush.bf16.msra.mxu0 %v4575
    %5769 = vmatpush.bf16.msra.mxu0 %v4567
    %5770 = vmatpush.bf16.msra.mxu0 %v4559
    %5771 = vmatpush.bf16.msra.mxu0 %v4551
    %5772 = vmatpush.bf16.msra.mxu0 %v4543
    %5773 = vmatmul.bf16.gmra.mxu0 %v3447
    %v5774 = vpop.f32.mrf.mxu0
    %v5775 = vadd.f32 0.0, %v5774
    %v5776 = vpop.f32.mrf.mxu0
    %v5777 = vadd.f32 0.0, %v5776
    %5778 = vmatmul.bf16.gmra.mxu0 %v3451
    %v5779 = vpop.f32.mrf.mxu0
    %v5780 = vadd.f32 0.0, %v5779
    %v5781 = vpop.f32.mrf.mxu0
    %v5782 = vadd.f32 0.0, %v5781
    %5783 = vmatmul.bf16.gmra.mxu0 %v3455
    %v5784 = vpop.f32.mrf.mxu0
    %v5785 = vadd.f32 0.0, %v5784
    %v5786 = vpop.f32.mrf.mxu0
    %v5787 = vadd.f32 0.0, %v5786
    %5788 = vmatmul.bf16.gmra.mxu0 %v3459
    %v5789 = vpop.f32.mrf.mxu0
    %v5790 = vadd.f32 0.0, %v5789
    %v5791 = vpop.f32.mrf.mxu0
    %v5792 = vadd.f32 0.0, %v5791
    %5793 = vmatmul.bf16.gmra.mxu0 %v3463
    %v5794 = vpop.f32.mrf.mxu0
    %v5795 = vadd.f32 0.0, %v5794
    %v5796 = vpop.f32.mrf.mxu0
    %v5797 = vadd.f32 0.0, %v5796
    %5798 = vmatmul.bf16.gmra.mxu0 %v3467
    %v5799 = vpop.f32.mrf.mxu0
    %v5800 = vadd.f32 0.0, %v5799
    %v5801 = vpop.f32.mrf.mxu0
    %v5802 = vadd.f32 0.0, %v5801
    %5803 = vmatmul.bf16.gmra.mxu0 %v3471
    %v5804 = vpop.f32.mrf.mxu0
    %v5805 = vadd.f32 0.0, %v5804
    %v5806 = vpop.f32.mrf.mxu0
    %v5807 = vadd.f32 0.0, %v5806
    %5808 = vmatmul.bf16.gmra.mxu0 %v3475
    %v5809 = vpop.f32.mrf.mxu0
    %v5810 = vadd.f32 0.0, %v5809
    %v5811 = vpop.f32.mrf.mxu0
    %v5812 = vadd.f32 0.0, %v5811
    %5813 = vmatmul.bf16.gmra.mxu0 %v3479
    %v5814 = vpop.f32.mrf.mxu0
    %v5815 = vadd.f32 0.0, %v5814
    %v5816 = vpop.f32.mrf.mxu0
    %v5817 = vadd.f32 0.0, %v5816
    %5818 = vmatmul.bf16.gmra.mxu0 %v3483
    %v5819 = vpop.f32.mrf.mxu0
    %v5820 = vadd.f32 0.0, %v5819
    %v5821 = vpop.f32.mrf.mxu0
    %v5822 = vadd.f32 0.0, %v5821
    %5823 = vmatmul.bf16.gmra.mxu0 %v3487
    %v5824 = vpop.f32.mrf.mxu0
    %v5825 = vadd.f32 0.0, %v5824
    %v5826 = vpop.f32.mrf.mxu0
    %v5827 = vadd.f32 0.0, %v5826
    %5828 = vmatmul.bf16.gmra.mxu0 %v3491
    %v5829 = vpop.f32.mrf.mxu0
    %v5830 = vadd.f32 0.0, %v5829
    %v5831 = vpop.f32.mrf.mxu0
    %v5832 = vadd.f32 0.0, %v5831
    %5833 = vmatmul.bf16.gmra.mxu0 %v3495
    %v5834 = vpop.f32.mrf.mxu0
    %v5835 = vadd.f32 0.0, %v5834
    %v5836 = vpop.f32.mrf.mxu0
    %v5837 = vadd.f32 0.0, %v5836
    %5838 = vmatmul.bf16.gmra.mxu0 %v3499
    %v5839 = vpop.f32.mrf.mxu0
    %v5840 = vadd.f32 0.0, %v5839
    %v5841 = vpop.f32.mrf.mxu0
    %v5842 = vadd.f32 0.0, %v5841
    %5843 = vmatmul.bf16.gmra.mxu0 %v3503
    %v5844 = vpop.f32.mrf.mxu0
    %v5845 = vadd.f32 0.0, %v5844
    %v5846 = vpop.f32.mrf.mxu0
    %v5847 = vadd.f32 0.0, %v5846
    %5848 = vmatmul.bf16.gmra.mxu0 %v3507
    %v5849 = vpop.f32.mrf.mxu0
    %v5850 = vadd.f32 0.0, %v5849
    %v5851 = vpop.f32.mrf.mxu0
    %v5852 = vadd.f32 0.0, %v5851
    %5853 = vdwg.mxu0
    %5854 = vmatpush.bf16.msra.mxu0 %v4663
    %5855 = vmatpush.bf16.msra.mxu0 %v4655
    %5856 = vmatpush.bf16.msra.mxu0 %v4647
    %5857 = vmatpush.bf16.msra.mxu0 %v4639
    %5858 = vmatpush.bf16.msra.mxu0 %v4631
    %5859 = vmatpush.bf16.msra.mxu0 %v4623
    %5860 = vmatpush.bf16.msra.mxu0 %v4615
    %5861 = vmatpush.bf16.msra.mxu0 %v4607
    %5862 = vmatmul.bf16.gmra.mxu0 %v3448
    %v5863 = vpop.f32.mrf.mxu0
    %v5864 = vadd.f32 %v5775, %v5863
    %v5865 = vpop.f32.mrf.mxu0
    %v5866 = vadd.f32 %v5777, %v5865
    %5867 = vmatmul.bf16.gmra.mxu0 %v3452
    %v5868 = vpop.f32.mrf.mxu0
    %v5869 = vadd.f32 %v5780, %v5868
    %v5870 = vpop.f32.mrf.mxu0
    %v5871 = vadd.f32 %v5782, %v5870
    %5872 = vmatmul.bf16.gmra.mxu0 %v3456
    %v5873 = vpop.f32.mrf.mxu0
    %v5874 = vadd.f32 %v5785, %v5873
    %v5875 = vpop.f32.mrf.mxu0
    %v5876 = vadd.f32 %v5787, %v5875
    %5877 = vmatmul.bf16.gmra.mxu0 %v3460
    %v5878 = vpop.f32.mrf.mxu0
    %v5879 = vadd.f32 %v5790, %v5878
    %v5880 = vpop.f32.mrf.mxu0
    %v5881 = vadd.f32 %v5792, %v5880
    %5882 = vmatmul.bf16.gmra.mxu0 %v3464
    %v5883 = vpop.f32.mrf.mxu0
    %v5884 = vadd.f32 %v5795, %v5883
    %v5885 = vpop.f32.mrf.mxu0
    %v5886 = vadd.f32 %v5797, %v5885
    %5887 = vmatmul.bf16.gmra.mxu0 %v3468
    %v5888 = vpop.f32.mrf.mxu0
    %v5889 = vadd.f32 %v5800, %v5888
    %v5890 = vpop.f32.mrf.mxu0
    %v5891 = vadd.f32 %v5802, %v5890
    %5892 = vmatmul.bf16.gmra.mxu0 %v3472
    %v5893 = vpop.f32.mrf.mxu0
    %v5894 = vadd.f32 %v5805, %v5893
    %v5895 = vpop.f32.mrf.mxu0
    %v5896 = vadd.f32 %v5807, %v5895
    %5897 = vmatmul.bf16.gmra.mxu0 %v3476
    %v5898 = vpop.f32.mrf.mxu0
    %v5899 = vadd.f32 %v5810, %v5898
    %v5900 = vpop.f32.mrf.mxu0
    %v5901 = vadd.f32 %v5812, %v5900
    %5902 = vmatmul.bf16.gmra.mxu0 %v3480
    %v5903 = vpop.f32.mrf.mxu0
    %v5904 = vadd.f32 %v5815, %v5903
    %v5905 = vpop.f32.mrf.mxu0
    %v5906 = vadd.f32 %v5817, %v5905
    %5907 = vmatmul.bf16.gmra.mxu0 %v3484
    %v5908 = vpop.f32.mrf.mxu0
    %v5909 = vadd.f32 %v5820, %v5908
    %v5910 = vpop.f32.mrf.mxu0
    %v5911 = vadd.f32 %v5822, %v5910
    %5912 = vmatmul.bf16.gmra.mxu0 %v3488
    %v5913 = vpop.f32.mrf.mxu0
    %v5914 = vadd.f32 %v5825, %v5913
    %v5915 = vpop.f32.mrf.mxu0
    %v5916 = vadd.f32 %v5827, %v5915
    %5917 = vmatmul.bf16.gmra.mxu0 %v3492
    %v5918 = vpop.f32.mrf.mxu0
    %v5919 = vadd.f32 %v5830, %v5918
    %v5920 = vpop.f32.mrf.mxu0
    %v5921 = vadd.f32 %v5832, %v5920
    %5922 = vmatmul.bf16.gmra.mxu0 %v3496
    %v5923 = vpop.f32.mrf.mxu0
    %v5924 = vadd.f32 %v5835, %v5923
    %v5925 = vpop.f32.mrf.mxu0
    %v5926 = vadd.f32 %v5837, %v5925
    %5927 = vmatmul.bf16.gmra.mxu0 %v3500
    %v5928 = vpop.f32.mrf.mxu0
    %v5929 = vadd.f32 %v5840, %v5928
    %v5930 = vpop.f32.mrf.mxu0
    %v5931 = vadd.f32 %v5842, %v5930
    %5932 = vmatmul.bf16.gmra.mxu0 %v3504
    %v5933 = vpop.f32.mrf.mxu0
    %v5934 = vadd.f32 %v5845, %v5933
    %v5935 = vpop.f32.mrf.mxu0
    %v5936 = vadd.f32 %v5847, %v5935
    %5937 = vmatmul.bf16.gmra.mxu0 %v3508
    %v5938 = vpop.f32.mrf.mxu0
    %v5939 = vadd.f32 %v5850, %v5938
    %v5940 = vpop.f32.mrf.mxu0
    %v5941 = vadd.f32 %v5852, %v5940
    %5942 = vdwg.mxu0
    %5943 = vmatpush.bf16.msra.mxu0 %v4727
    %5944 = vmatpush.bf16.msra.mxu0 %v4719
    %5945 = vmatpush.bf16.msra.mxu0 %v4711
    %5946 = vmatpush.bf16.msra.mxu0 %v4703
    %5947 = vmatpush.bf16.msra.mxu0 %v4695
    %5948 = vmatpush.bf16.msra.mxu0 %v4687
    %5949 = vmatpush.bf16.msra.mxu0 %v4679
    %5950 = vmatpush.bf16.msra.mxu0 %v4671
    %5951 = vmatmul.bf16.gmra.mxu0 %v3449
    %v5952 = vpop.f32.mrf.mxu0
    %v5953 = vadd.f32 %v5864, %v5952
    %v5954 = vpop.f32.mrf.mxu0
    %v5955 = vadd.f32 %v5866, %v5954
    %5956 = vmatmul.bf16.gmra.mxu0 %v3453
    %v5957 = vpop.f32.mrf.mxu0
    %v5958 = vadd.f32 %v5869, %v5957
    %v5959 = vpop.f32.mrf.mxu0
    %v5960 = vadd.f32 %v5871, %v5959
    %5961 = vmatmul.bf16.gmra.mxu0 %v3457
    %v5962 = vpop.f32.mrf.mxu0
    %v5963 = vadd.f32 %v5874, %v5962
    %v5964 = vpop.f32.mrf.mxu0
    %v5965 = vadd.f32 %v5876, %v5964
    %5966 = vmatmul.bf16.gmra.mxu0 %v3461
    %v5967 = vpop.f32.mrf.mxu0
    %v5968 = vadd.f32 %v5879, %v5967
    %v5969 = vpop.f32.mrf.mxu0
    %v5970 = vadd.f32 %v5881, %v5969
    %5971 = vmatmul.bf16.gmra.mxu0 %v3465
    %v5972 = vpop.f32.mrf.mxu0
    %v5973 = vadd.f32 %v5884, %v5972
    %v5974 = vpop.f32.mrf.mxu0
    %v5975 = vadd.f32 %v5886, %v5974
    %5976 = vmatmul.bf16.gmra.mxu0 %v3469
    %v5977 = vpop.f32.mrf.mxu0
    %v5978 = vadd.f32 %v5889, %v5977
    %v5979 = vpop.f32.mrf.mxu0
    %v5980 = vadd.f32 %v5891, %v5979
    %5981 = vmatmul.bf16.gmra.mxu0 %v3473
    %v5982 = vpop.f32.mrf.mxu0
    %v5983 = vadd.f32 %v5894, %v5982
    %v5984 = vpop.f32.mrf.mxu0
    %v5985 = vadd.f32 %v5896, %v5984
    %5986 = vmatmul.bf16.gmra.mxu0 %v3477
    %v5987 = vpop.f32.mrf.mxu0
    %v5988 = vadd.f32 %v5899, %v5987
    %v5989 = vpop.f32.mrf.mxu0
    %v5990 = vadd.f32 %v5901, %v5989
    %5991 = vmatmul.bf16.gmra.mxu0 %v3481
    %v5992 = vpop.f32.mrf.mxu0
    %v5993 = vadd.f32 %v5904, %v5992
    %v5994 = vpop.f32.mrf.mxu0
    %v5995 = vadd.f32 %v5906, %v5994
    %5996 = vmatmul.bf16.gmra.mxu0 %v3485
    %v5997 = vpop.f32.mrf.mxu0
    %v5998 = vadd.f32 %v5909, %v5997
    %v5999 = vpop.f32.mrf.mxu0
    %v6000 = vadd.f32 %v5911, %v5999
    %6001 = vmatmul.bf16.gmra.mxu0 %v3489
    %v6002 = vpop.f32.mrf.mxu0
    %v6003 = vadd.f32 %v5914, %v6002
    %v6004 = vpop.f32.mrf.mxu0
    %v6005 = vadd.f32 %v5916, %v6004
    %6006 = vmatmul.bf16.gmra.mxu0 %v3493
    %v6007 = vpop.f32.mrf.mxu0
    %v6008 = vadd.f32 %v5919, %v6007
    %v6009 = vpop.f32.mrf.mxu0
    %v6010 = vadd.f32 %v5921, %v6009
    %6011 = vmatmul.bf16.gmra.mxu0 %v3497
    %v6012 = vpop.f32.mrf.mxu0
    %v6013 = vadd.f32 %v5924, %v6012
    %v6014 = vpop.f32.mrf.mxu0
    %v6015 = vadd.f32 %v5926, %v6014
    %6016 = vmatmul.bf16.gmra.mxu0 %v3501
    %v6017 = vpop.f32.mrf.mxu0
    %v6018 = vadd.f32 %v5929, %v6017
    %v6019 = vpop.f32.mrf.mxu0
    %v6020 = vadd.f32 %v5931, %v6019
    %6021 = vmatmul.bf16.gmra.mxu0 %v3505
    %v6022 = vpop.f32.mrf.mxu0
    %v6023 = vadd.f32 %v5934, %v6022
    %v6024 = vpop.f32.mrf.mxu0
    %v6025 = vadd.f32 %v5936, %v6024
    %6026 = vmatmul.bf16.gmra.mxu0 %v3509
    %v6027 = vpop.f32.mrf.mxu0
    %v6028 = vadd.f32 %v5939, %v6027
    %v6029 = vpop.f32.mrf.mxu0
    %v6030 = vadd.f32 %v5941, %v6029
    %6031 = vdwg.mxu0
    %6032 = vmatpush.bf16.msra.mxu0 %v4791
    %6033 = vmatpush.bf16.msra.mxu0 %v4783
    %6034 = vmatpush.bf16.msra.mxu0 %v4775
    %6035 = vmatpush.bf16.msra.mxu0 %v4767
    %6036 = vmatpush.bf16.msra.mxu0 %v4759
    %6037 = vmatpush.bf16.msra.mxu0 %v4751
    %6038 = vmatpush.bf16.msra.mxu0 %v4743
    %6039 = vmatpush.bf16.msra.mxu0 %v4735
    %6040 = vmatmul.bf16.gmra.mxu0 %v3450
    %v6041 = vpop.f32.mrf.mxu0
    %v6042 = vadd.f32 %v5953, %v6041
    %v6043 = vpop.f32.mrf.mxu0
    %v6044 = vadd.f32 %v5955, %v6043
    %6045 = vmatmul.bf16.gmra.mxu0 %v3454
    %v6046 = vpop.f32.mrf.mxu0
    %v6047 = vadd.f32 %v5958, %v6046
    %v6048 = vpop.f32.mrf.mxu0
    %v6049 = vadd.f32 %v5960, %v6048
    %6050 = vmatmul.bf16.gmra.mxu0 %v3458
    %v6051 = vpop.f32.mrf.mxu0
    %v6052 = vadd.f32 %v5963, %v6051
    %v6053 = vpop.f32.mrf.mxu0
    %v6054 = vadd.f32 %v5965, %v6053
    %6055 = vmatmul.bf16.gmra.mxu0 %v3462
    %v6056 = vpop.f32.mrf.mxu0
    %v6057 = vadd.f32 %v5968, %v6056
    %v6058 = vpop.f32.mrf.mxu0
    %v6059 = vadd.f32 %v5970, %v6058
    %6060 = vmatmul.bf16.gmra.mxu0 %v3466
    %v6061 = vpop.f32.mrf.mxu0
    %v6062 = vadd.f32 %v5973, %v6061
    %v6063 = vpop.f32.mrf.mxu0
    %v6064 = vadd.f32 %v5975, %v6063
    %6065 = vmatmul.bf16.gmra.mxu0 %v3470
    %v6066 = vpop.f32.mrf.mxu0
    %v6067 = vadd.f32 %v5978, %v6066
    %v6068 = vpop.f32.mrf.mxu0
    %v6069 = vadd.f32 %v5980, %v6068
    %6070 = vmatmul.bf16.gmra.mxu0 %v3474
    %v6071 = vpop.f32.mrf.mxu0
    %v6072 = vadd.f32 %v5983, %v6071
    %v6073 = vpop.f32.mrf.mxu0
    %v6074 = vadd.f32 %v5985, %v6073
    %6075 = vmatmul.bf16.gmra.mxu0 %v3478
    %v6076 = vpop.f32.mrf.mxu0
    %v6077 = vadd.f32 %v5988, %v6076
    %v6078 = vpop.f32.mrf.mxu0
    %v6079 = vadd.f32 %v5990, %v6078
    %6080 = vmatmul.bf16.gmra.mxu0 %v3482
    %v6081 = vpop.f32.mrf.mxu0
    %v6082 = vadd.f32 %v5993, %v6081
    %v6083 = vpop.f32.mrf.mxu0
    %v6084 = vadd.f32 %v5995, %v6083
    %6085 = vmatmul.bf16.gmra.mxu0 %v3486
    %v6086 = vpop.f32.mrf.mxu0
    %v6087 = vadd.f32 %v5998, %v6086
    %v6088 = vpop.f32.mrf.mxu0
    %v6089 = vadd.f32 %v6000, %v6088
    %6090 = vmatmul.bf16.gmra.mxu0 %v3490
    %v6091 = vpop.f32.mrf.mxu0
    %v6092 = vadd.f32 %v6003, %v6091
    %v6093 = vpop.f32.mrf.mxu0
    %v6094 = vadd.f32 %v6005, %v6093
    %6095 = vmatmul.bf16.gmra.mxu0 %v3494
    %v6096 = vpop.f32.mrf.mxu0
    %v6097 = vadd.f32 %v6008, %v6096
    %v6098 = vpop.f32.mrf.mxu0
    %v6099 = vadd.f32 %v6010, %v6098
    %6100 = vmatmul.bf16.gmra.mxu0 %v3498
    %v6101 = vpop.f32.mrf.mxu0
    %v6102 = vadd.f32 %v6013, %v6101
    %v6103 = vpop.f32.mrf.mxu0
    %v6104 = vadd.f32 %v6015, %v6103
    %6105 = vmatmul.bf16.gmra.mxu0 %v3502
    %v6106 = vpop.f32.mrf.mxu0
    %v6107 = vadd.f32 %v6018, %v6106
    %v6108 = vpop.f32.mrf.mxu0
    %v6109 = vadd.f32 %v6020, %v6108
    %6110 = vmatmul.bf16.gmra.mxu0 %v3506
    %v6111 = vpop.f32.mrf.mxu0
    %v6112 = vadd.f32 %v6023, %v6111
    %v6113 = vpop.f32.mrf.mxu0
    %v6114 = vadd.f32 %v6025, %v6113
    %6115 = vmatmul.bf16.gmra.mxu0 %v3510
    %v6116 = vpop.f32.mrf.mxu0
    %v6117 = vadd.f32 %v6028, %v6116
    %v6118 = vpop.f32.mrf.mxu0
    %v6119 = vadd.f32 %v6030, %v6118
    %6120 = vdwg.mxu0
    %6121 = vmatpush.bf16.msra.mxu0 %v4600
    %6122 = vmatpush.bf16.msra.mxu0 %v4592
    %6123 = vmatpush.bf16.msra.mxu0 %v4584
    %6124 = vmatpush.bf16.msra.mxu0 %v4576
    %6125 = vmatpush.bf16.msra.mxu0 %v4568
    %6126 = vmatpush.bf16.msra.mxu0 %v4560
    %6127 = vmatpush.bf16.msra.mxu0 %v4552
    %6128 = vmatpush.bf16.msra.mxu0 %v4544
    %6129 = vmatmul.bf16.gmra.mxu0 %v3447
    %v6130 = vpop.f32.mrf.mxu0
    %v6131 = vadd.f32 0.0, %v6130
    %v6132 = vpop.f32.mrf.mxu0
    %v6133 = vadd.f32 0.0, %v6132
    %6134 = vmatmul.bf16.gmra.mxu0 %v3451
    %v6135 = vpop.f32.mrf.mxu0
    %v6136 = vadd.f32 0.0, %v6135
    %v6137 = vpop.f32.mrf.mxu0
    %v6138 = vadd.f32 0.0, %v6137
    %6139 = vmatmul.bf16.gmra.mxu0 %v3455
    %v6140 = vpop.f32.mrf.mxu0
    %v6141 = vadd.f32 0.0, %v6140
    %v6142 = vpop.f32.mrf.mxu0
    %v6143 = vadd.f32 0.0, %v6142
    %6144 = vmatmul.bf16.gmra.mxu0 %v3459
    %v6145 = vpop.f32.mrf.mxu0
    %v6146 = vadd.f32 0.0, %v6145
    %v6147 = vpop.f32.mrf.mxu0
    %v6148 = vadd.f32 0.0, %v6147
    %6149 = vmatmul.bf16.gmra.mxu0 %v3463
    %v6150 = vpop.f32.mrf.mxu0
    %v6151 = vadd.f32 0.0, %v6150
    %v6152 = vpop.f32.mrf.mxu0
    %v6153 = vadd.f32 0.0, %v6152
    %6154 = vmatmul.bf16.gmra.mxu0 %v3467
    %v6155 = vpop.f32.mrf.mxu0
    %v6156 = vadd.f32 0.0, %v6155
    %v6157 = vpop.f32.mrf.mxu0
    %v6158 = vadd.f32 0.0, %v6157
    %6159 = vmatmul.bf16.gmra.mxu0 %v3471
    %v6160 = vpop.f32.mrf.mxu0
    %v6161 = vadd.f32 0.0, %v6160
    %v6162 = vpop.f32.mrf.mxu0
    %v6163 = vadd.f32 0.0, %v6162
    %6164 = vmatmul.bf16.gmra.mxu0 %v3475
    %v6165 = vpop.f32.mrf.mxu0
    %v6166 = vadd.f32 0.0, %v6165
    %v6167 = vpop.f32.mrf.mxu0
    %v6168 = vadd.f32 0.0, %v6167
    %6169 = vmatmul.bf16.gmra.mxu0 %v3479
    %v6170 = vpop.f32.mrf.mxu0
    %v6171 = vadd.f32 0.0, %v6170
    %v6172 = vpop.f32.mrf.mxu0
    %v6173 = vadd.f32 0.0, %v6172
    %6174 = vmatmul.bf16.gmra.mxu0 %v3483
    %v6175 = vpop.f32.mrf.mxu0
    %v6176 = vadd.f32 0.0, %v6175
    %v6177 = vpop.f32.mrf.mxu0
    %v6178 = vadd.f32 0.0, %v6177
    %6179 = vmatmul.bf16.gmra.mxu0 %v3487
    %v6180 = vpop.f32.mrf.mxu0
    %v6181 = vadd.f32 0.0, %v6180
    %v6182 = vpop.f32.mrf.mxu0
    %v6183 = vadd.f32 0.0, %v6182
    %6184 = vmatmul.bf16.gmra.mxu0 %v3491
    %v6185 = vpop.f32.mrf.mxu0
    %v6186 = vadd.f32 0.0, %v6185
    %v6187 = vpop.f32.mrf.mxu0
    %v6188 = vadd.f32 0.0, %v6187
    %6189 = vmatmul.bf16.gmra.mxu0 %v3495
    %v6190 = vpop.f32.mrf.mxu0
    %v6191 = vadd.f32 0.0, %v6190
    %v6192 = vpop.f32.mrf.mxu0
    %v6193 = vadd.f32 0.0, %v6192
    %6194 = vmatmul.bf16.gmra.mxu0 %v3499
    %v6195 = vpop.f32.mrf.mxu0
    %v6196 = vadd.f32 0.0, %v6195
    %v6197 = vpop.f32.mrf.mxu0
    %v6198 = vadd.f32 0.0, %v6197
    %6199 = vmatmul.bf16.gmra.mxu0 %v3503
    %v6200 = vpop.f32.mrf.mxu0
    %v6201 = vadd.f32 0.0, %v6200
    %v6202 = vpop.f32.mrf.mxu0
    %v6203 = vadd.f32 0.0, %v6202
    %6204 = vmatmul.bf16.gmra.mxu0 %v3507
    %v6205 = vpop.f32.mrf.mxu0
    %v6206 = vadd.f32 0.0, %v6205
    %v6207 = vpop.f32.mrf.mxu0
    %v6208 = vadd.f32 0.0, %v6207
    %6209 = vdwg.mxu0
    %6210 = vmatpush.bf16.msra.mxu0 %v4664
    %6211 = vmatpush.bf16.msra.mxu0 %v4656
    %6212 = vmatpush.bf16.msra.mxu0 %v4648
    %6213 = vmatpush.bf16.msra.mxu0 %v4640
    %6214 = vmatpush.bf16.msra.mxu0 %v4632
    %6215 = vmatpush.bf16.msra.mxu0 %v4624
    %6216 = vmatpush.bf16.msra.mxu0 %v4616
    %6217 = vmatpush.bf16.msra.mxu0 %v4608
    %6218 = vmatmul.bf16.gmra.mxu0 %v3448
    %v6219 = vpop.f32.mrf.mxu0
    %v6220 = vadd.f32 %v6131, %v6219
    %v6221 = vpop.f32.mrf.mxu0
    %v6222 = vadd.f32 %v6133, %v6221
    %6223 = vmatmul.bf16.gmra.mxu0 %v3452
    %v6224 = vpop.f32.mrf.mxu0
    %v6225 = vadd.f32 %v6136, %v6224
    %v6226 = vpop.f32.mrf.mxu0
    %v6227 = vadd.f32 %v6138, %v6226
    %6228 = vmatmul.bf16.gmra.mxu0 %v3456
    %v6229 = vpop.f32.mrf.mxu0
    %v6230 = vadd.f32 %v6141, %v6229
    %v6231 = vpop.f32.mrf.mxu0
    %v6232 = vadd.f32 %v6143, %v6231
    %6233 = vmatmul.bf16.gmra.mxu0 %v3460
    %v6234 = vpop.f32.mrf.mxu0
    %v6235 = vadd.f32 %v6146, %v6234
    %v6236 = vpop.f32.mrf.mxu0
    %v6237 = vadd.f32 %v6148, %v6236
    %6238 = vmatmul.bf16.gmra.mxu0 %v3464
    %v6239 = vpop.f32.mrf.mxu0
    %v6240 = vadd.f32 %v6151, %v6239
    %v6241 = vpop.f32.mrf.mxu0
    %v6242 = vadd.f32 %v6153, %v6241
    %6243 = vmatmul.bf16.gmra.mxu0 %v3468
    %v6244 = vpop.f32.mrf.mxu0
    %v6245 = vadd.f32 %v6156, %v6244
    %v6246 = vpop.f32.mrf.mxu0
    %v6247 = vadd.f32 %v6158, %v6246
    %6248 = vmatmul.bf16.gmra.mxu0 %v3472
    %v6249 = vpop.f32.mrf.mxu0
    %v6250 = vadd.f32 %v6161, %v6249
    %v6251 = vpop.f32.mrf.mxu0
    %v6252 = vadd.f32 %v6163, %v6251
    %6253 = vmatmul.bf16.gmra.mxu0 %v3476
    %v6254 = vpop.f32.mrf.mxu0
    %v6255 = vadd.f32 %v6166, %v6254
    %v6256 = vpop.f32.mrf.mxu0
    %v6257 = vadd.f32 %v6168, %v6256
    %6258 = vmatmul.bf16.gmra.mxu0 %v3480
    %v6259 = vpop.f32.mrf.mxu0
    %v6260 = vadd.f32 %v6171, %v6259
    %v6261 = vpop.f32.mrf.mxu0
    %v6262 = vadd.f32 %v6173, %v6261
    %6263 = vmatmul.bf16.gmra.mxu0 %v3484
    %v6264 = vpop.f32.mrf.mxu0
    %v6265 = vadd.f32 %v6176, %v6264
    %v6266 = vpop.f32.mrf.mxu0
    %v6267 = vadd.f32 %v6178, %v6266
    %6268 = vmatmul.bf16.gmra.mxu0 %v3488
    %v6269 = vpop.f32.mrf.mxu0
    %v6270 = vadd.f32 %v6181, %v6269
    %v6271 = vpop.f32.mrf.mxu0
    %v6272 = vadd.f32 %v6183, %v6271
    %6273 = vmatmul.bf16.gmra.mxu0 %v3492
    %v6274 = vpop.f32.mrf.mxu0
    %v6275 = vadd.f32 %v6186, %v6274
    %v6276 = vpop.f32.mrf.mxu0
    %v6277 = vadd.f32 %v6188, %v6276
    %6278 = vmatmul.bf16.gmra.mxu0 %v3496
    %v6279 = vpop.f32.mrf.mxu0
    %v6280 = vadd.f32 %v6191, %v6279
    %v6281 = vpop.f32.mrf.mxu0
    %v6282 = vadd.f32 %v6193, %v6281
    %6283 = vmatmul.bf16.gmra.mxu0 %v3500
    %v6284 = vpop.f32.mrf.mxu0
    %v6285 = vadd.f32 %v6196, %v6284
    %v6286 = vpop.f32.mrf.mxu0
    %v6287 = vadd.f32 %v6198, %v6286
    %6288 = vmatmul.bf16.gmra.mxu0 %v3504
    %v6289 = vpop.f32.mrf.mxu0
    %v6290 = vadd.f32 %v6201, %v6289
    %v6291 = vpop.f32.mrf.mxu0
    %v6292 = vadd.f32 %v6203, %v6291
    %6293 = vmatmul.bf16.gmra.mxu0 %v3508
    %v6294 = vpop.f32.mrf.mxu0
    %v6295 = vadd.f32 %v6206, %v6294
    %v6296 = vpop.f32.mrf.mxu0
    %v6297 = vadd.f32 %v6208, %v6296
    %6298 = vdwg.mxu0
    %6299 = vmatpush.bf16.msra.mxu0 %v4728
    %6300 = vmatpush.bf16.msra.mxu0 %v4720
    %6301 = vmatpush.bf16.msra.mxu0 %v4712
    %6302 = vmatpush.bf16.msra.mxu0 %v4704
    %6303 = vmatpush.bf16.msra.mxu0 %v4696
    %6304 = vmatpush.bf16.msra.mxu0 %v4688
    %6305 = vmatpush.bf16.msra.mxu0 %v4680
    %6306 = vmatpush.bf16.msra.mxu0 %v4672
    %6307 = vmatmul.bf16.gmra.mxu0 %v3449
    %v6308 = vpop.f32.mrf.mxu0
    %v6309 = vadd.f32 %v6220, %v6308
    %v6310 = vpop.f32.mrf.mxu0
    %v6311 = vadd.f32 %v6222, %v6310
    %6312 = vmatmul.bf16.gmra.mxu0 %v3453
    %v6313 = vpop.f32.mrf.mxu0
    %v6314 = vadd.f32 %v6225, %v6313
    %v6315 = vpop.f32.mrf.mxu0
    %v6316 = vadd.f32 %v6227, %v6315
    %6317 = vmatmul.bf16.gmra.mxu0 %v3457
    %v6318 = vpop.f32.mrf.mxu0
    %v6319 = vadd.f32 %v6230, %v6318
    %v6320 = vpop.f32.mrf.mxu0
    %v6321 = vadd.f32 %v6232, %v6320
    %6322 = vmatmul.bf16.gmra.mxu0 %v3461
    %v6323 = vpop.f32.mrf.mxu0
    %v6324 = vadd.f32 %v6235, %v6323
    %v6325 = vpop.f32.mrf.mxu0
    %v6326 = vadd.f32 %v6237, %v6325
    %6327 = vmatmul.bf16.gmra.mxu0 %v3465
    %v6328 = vpop.f32.mrf.mxu0
    %v6329 = vadd.f32 %v6240, %v6328
    %v6330 = vpop.f32.mrf.mxu0
    %v6331 = vadd.f32 %v6242, %v6330
    %6332 = vmatmul.bf16.gmra.mxu0 %v3469
    %v6333 = vpop.f32.mrf.mxu0
    %v6334 = vadd.f32 %v6245, %v6333
    %v6335 = vpop.f32.mrf.mxu0
    %v6336 = vadd.f32 %v6247, %v6335
    %6337 = vmatmul.bf16.gmra.mxu0 %v3473
    %v6338 = vpop.f32.mrf.mxu0
    %v6339 = vadd.f32 %v6250, %v6338
    %v6340 = vpop.f32.mrf.mxu0
    %v6341 = vadd.f32 %v6252, %v6340
    %6342 = vmatmul.bf16.gmra.mxu0 %v3477
    %v6343 = vpop.f32.mrf.mxu0
    %v6344 = vadd.f32 %v6255, %v6343
    %v6345 = vpop.f32.mrf.mxu0
    %v6346 = vadd.f32 %v6257, %v6345
    %6347 = vmatmul.bf16.gmra.mxu0 %v3481
    %v6348 = vpop.f32.mrf.mxu0
    %v6349 = vadd.f32 %v6260, %v6348
    %v6350 = vpop.f32.mrf.mxu0
    %v6351 = vadd.f32 %v6262, %v6350
    %6352 = vmatmul.bf16.gmra.mxu0 %v3485
    %v6353 = vpop.f32.mrf.mxu0
    %v6354 = vadd.f32 %v6265, %v6353
    %v6355 = vpop.f32.mrf.mxu0
    %v6356 = vadd.f32 %v6267, %v6355
    %6357 = vmatmul.bf16.gmra.mxu0 %v3489
    %v6358 = vpop.f32.mrf.mxu0
    %v6359 = vadd.f32 %v6270, %v6358
    %v6360 = vpop.f32.mrf.mxu0
    %v6361 = vadd.f32 %v6272, %v6360
    %6362 = vmatmul.bf16.gmra.mxu0 %v3493
    %v6363 = vpop.f32.mrf.mxu0
    %v6364 = vadd.f32 %v6275, %v6363
    %v6365 = vpop.f32.mrf.mxu0
    %v6366 = vadd.f32 %v6277, %v6365
    %6367 = vmatmul.bf16.gmra.mxu0 %v3497
    %v6368 = vpop.f32.mrf.mxu0
    %v6369 = vadd.f32 %v6280, %v6368
    %v6370 = vpop.f32.mrf.mxu0
    %v6371 = vadd.f32 %v6282, %v6370
    %6372 = vmatmul.bf16.gmra.mxu0 %v3501
    %v6373 = vpop.f32.mrf.mxu0
    %v6374 = vadd.f32 %v6285, %v6373
    %v6375 = vpop.f32.mrf.mxu0
    %v6376 = vadd.f32 %v6287, %v6375
    %6377 = vmatmul.bf16.gmra.mxu0 %v3505
    %v6378 = vpop.f32.mrf.mxu0
    %v6379 = vadd.f32 %v6290, %v6378
    %v6380 = vpop.f32.mrf.mxu0
    %v6381 = vadd.f32 %v6292, %v6380
    %6382 = vmatmul.bf16.gmra.mxu0 %v3509
    %v6383 = vpop.f32.mrf.mxu0
    %v6384 = vadd.f32 %v6295, %v6383
    %v6385 = vpop.f32.mrf.mxu0
    %v6386 = vadd.f32 %v6297, %v6385
    %6387 = vdwg.mxu0
    %6388 = vmatpush.bf16.msra.mxu0 %v4792
    %6389 = vmatpush.bf16.msra.mxu0 %v4784
    %6390 = vmatpush.bf16.msra.mxu0 %v4776
    %6391 = vmatpush.bf16.msra.mxu0 %v4768
    %6392 = vmatpush.bf16.msra.mxu0 %v4760
    %6393 = vmatpush.bf16.msra.mxu0 %v4752
    %6394 = vmatpush.bf16.msra.mxu0 %v4744
    %6395 = vmatpush.bf16.msra.mxu0 %v4736
    %6396 = vmatmul.bf16.gmra.mxu0 %v3450
    %v6397 = vpop.f32.mrf.mxu0
    %v6398 = vadd.f32 %v6309, %v6397
    %v6399 = vpop.f32.mrf.mxu0
    %v6400 = vadd.f32 %v6311, %v6399
    %6401 = vmatmul.bf16.gmra.mxu0 %v3454
    %v6402 = vpop.f32.mrf.mxu0
    %v6403 = vadd.f32 %v6314, %v6402
    %v6404 = vpop.f32.mrf.mxu0
    %v6405 = vadd.f32 %v6316, %v6404
    %6406 = vmatmul.bf16.gmra.mxu0 %v3458
    %v6407 = vpop.f32.mrf.mxu0
    %v6408 = vadd.f32 %v6319, %v6407
    %v6409 = vpop.f32.mrf.mxu0
    %v6410 = vadd.f32 %v6321, %v6409
    %6411 = vmatmul.bf16.gmra.mxu0 %v3462
    %v6412 = vpop.f32.mrf.mxu0
    %v6413 = vadd.f32 %v6324, %v6412
    %v6414 = vpop.f32.mrf.mxu0
    %v6415 = vadd.f32 %v6326, %v6414
    %6416 = vmatmul.bf16.gmra.mxu0 %v3466
    %v6417 = vpop.f32.mrf.mxu0
    %v6418 = vadd.f32 %v6329, %v6417
    %v6419 = vpop.f32.mrf.mxu0
    %v6420 = vadd.f32 %v6331, %v6419
    %6421 = vmatmul.bf16.gmra.mxu0 %v3470
    %v6422 = vpop.f32.mrf.mxu0
    %v6423 = vadd.f32 %v6334, %v6422
    %v6424 = vpop.f32.mrf.mxu0
    %v6425 = vadd.f32 %v6336, %v6424
    %6426 = vmatmul.bf16.gmra.mxu0 %v3474
    %v6427 = vpop.f32.mrf.mxu0
    %v6428 = vadd.f32 %v6339, %v6427
    %v6429 = vpop.f32.mrf.mxu0
    %v6430 = vadd.f32 %v6341, %v6429
    %6431 = vmatmul.bf16.gmra.mxu0 %v3478
    %v6432 = vpop.f32.mrf.mxu0
    %v6433 = vadd.f32 %v6344, %v6432
    %v6434 = vpop.f32.mrf.mxu0
    %v6435 = vadd.f32 %v6346, %v6434
    %6436 = vmatmul.bf16.gmra.mxu0 %v3482
    %v6437 = vpop.f32.mrf.mxu0
    %v6438 = vadd.f32 %v6349, %v6437
    %v6439 = vpop.f32.mrf.mxu0
    %v6440 = vadd.f32 %v6351, %v6439
    %6441 = vmatmul.bf16.gmra.mxu0 %v3486
    %v6442 = vpop.f32.mrf.mxu0
    %v6443 = vadd.f32 %v6354, %v6442
    %v6444 = vpop.f32.mrf.mxu0
    %v6445 = vadd.f32 %v6356, %v6444
    %6446 = vmatmul.bf16.gmra.mxu0 %v3490
    %v6447 = vpop.f32.mrf.mxu0
    %v6448 = vadd.f32 %v6359, %v6447
    %v6449 = vpop.f32.mrf.mxu0
    %v6450 = vadd.f32 %v6361, %v6449
    %6451 = vmatmul.bf16.gmra.mxu0 %v3494
    %v6452 = vpop.f32.mrf.mxu0
    %v6453 = vadd.f32 %v6364, %v6452
    %v6454 = vpop.f32.mrf.mxu0
    %v6455 = vadd.f32 %v6366, %v6454
    %6456 = vmatmul.bf16.gmra.mxu0 %v3498
    %v6457 = vpop.f32.mrf.mxu0
    %v6458 = vadd.f32 %v6369, %v6457
    %v6459 = vpop.f32.mrf.mxu0
    %v6460 = vadd.f32 %v6371, %v6459
    %6461 = vmatmul.bf16.gmra.mxu0 %v3502
    %v6462 = vpop.f32.mrf.mxu0
    %v6463 = vadd.f32 %v6374, %v6462
    %v6464 = vpop.f32.mrf.mxu0
    %v6465 = vadd.f32 %v6376, %v6464
    %6466 = vmatmul.bf16.gmra.mxu0 %v3506
    %v6467 = vpop.f32.mrf.mxu0
    %v6468 = vadd.f32 %v6379, %v6467
    %v6469 = vpop.f32.mrf.mxu0
    %v6470 = vadd.f32 %v6381, %v6469
    %6471 = vmatmul.bf16.gmra.mxu0 %v3510
    %v6472 = vpop.f32.mrf.mxu0
    %v6473 = vadd.f32 %v6384, %v6472
    %v6474 = vpop.f32.mrf.mxu0
    %v6475 = vadd.f32 %v6386, %v6474
    %6476 = vdwg.mxu0
    %6477 = vmatpush.bf16.msra.mxu0 %v4601
    %6478 = vmatpush.bf16.msra.mxu0 %v4593
    %6479 = vmatpush.bf16.msra.mxu0 %v4585
    %6480 = vmatpush.bf16.msra.mxu0 %v4577
    %6481 = vmatpush.bf16.msra.mxu0 %v4569
    %6482 = vmatpush.bf16.msra.mxu0 %v4561
    %6483 = vmatpush.bf16.msra.mxu0 %v4553
    %6484 = vmatpush.bf16.msra.mxu0 %v4545
    %6485 = vmatmul.bf16.gmra.mxu0 %v3447
    %v6486 = vpop.f32.mrf.mxu0
    %v6487 = vadd.f32 0.0, %v6486
    %v6488 = vpop.f32.mrf.mxu0
    %v6489 = vadd.f32 0.0, %v6488
    %6490 = vmatmul.bf16.gmra.mxu0 %v3451
    %v6491 = vpop.f32.mrf.mxu0
    %v6492 = vadd.f32 0.0, %v6491
    %v6493 = vpop.f32.mrf.mxu0
    %v6494 = vadd.f32 0.0, %v6493
    %6495 = vmatmul.bf16.gmra.mxu0 %v3455
    %v6496 = vpop.f32.mrf.mxu0
    %v6497 = vadd.f32 0.0, %v6496
    %v6498 = vpop.f32.mrf.mxu0
    %v6499 = vadd.f32 0.0, %v6498
    %6500 = vmatmul.bf16.gmra.mxu0 %v3459
    %v6501 = vpop.f32.mrf.mxu0
    %v6502 = vadd.f32 0.0, %v6501
    %v6503 = vpop.f32.mrf.mxu0
    %v6504 = vadd.f32 0.0, %v6503
    %6505 = vmatmul.bf16.gmra.mxu0 %v3463
    %v6506 = vpop.f32.mrf.mxu0
    %v6507 = vadd.f32 0.0, %v6506
    %v6508 = vpop.f32.mrf.mxu0
    %v6509 = vadd.f32 0.0, %v6508
    %6510 = vmatmul.bf16.gmra.mxu0 %v3467
    %v6511 = vpop.f32.mrf.mxu0
    %v6512 = vadd.f32 0.0, %v6511
    %v6513 = vpop.f32.mrf.mxu0
    %v6514 = vadd.f32 0.0, %v6513
    %6515 = vmatmul.bf16.gmra.mxu0 %v3471
    %v6516 = vpop.f32.mrf.mxu0
    %v6517 = vadd.f32 0.0, %v6516
    %v6518 = vpop.f32.mrf.mxu0
    %v6519 = vadd.f32 0.0, %v6518
    %6520 = vmatmul.bf16.gmra.mxu0 %v3475
    %v6521 = vpop.f32.mrf.mxu0
    %v6522 = vadd.f32 0.0, %v6521
    %v6523 = vpop.f32.mrf.mxu0
    %v6524 = vadd.f32 0.0, %v6523
    %6525 = vmatmul.bf16.gmra.mxu0 %v3479
    %v6526 = vpop.f32.mrf.mxu0
    %v6527 = vadd.f32 0.0, %v6526
    %v6528 = vpop.f32.mrf.mxu0
    %v6529 = vadd.f32 0.0, %v6528
    %6530 = vmatmul.bf16.gmra.mxu0 %v3483
    %v6531 = vpop.f32.mrf.mxu0
    %v6532 = vadd.f32 0.0, %v6531
    %v6533 = vpop.f32.mrf.mxu0
    %v6534 = vadd.f32 0.0, %v6533
    %6535 = vmatmul.bf16.gmra.mxu0 %v3487
    %v6536 = vpop.f32.mrf.mxu0
    %v6537 = vadd.f32 0.0, %v6536
    %v6538 = vpop.f32.mrf.mxu0
    %v6539 = vadd.f32 0.0, %v6538
    %6540 = vmatmul.bf16.gmra.mxu0 %v3491
    %v6541 = vpop.f32.mrf.mxu0
    %v6542 = vadd.f32 0.0, %v6541
    %v6543 = vpop.f32.mrf.mxu0
    %v6544 = vadd.f32 0.0, %v6543
    %6545 = vmatmul.bf16.gmra.mxu0 %v3495
    %v6546 = vpop.f32.mrf.mxu0
    %v6547 = vadd.f32 0.0, %v6546
    %v6548 = vpop.f32.mrf.mxu0
    %v6549 = vadd.f32 0.0, %v6548
    %6550 = vmatmul.bf16.gmra.mxu0 %v3499
    %v6551 = vpop.f32.mrf.mxu0
    %v6552 = vadd.f32 0.0, %v6551
    %v6553 = vpop.f32.mrf.mxu0
    %v6554 = vadd.f32 0.0, %v6553
    %6555 = vmatmul.bf16.gmra.mxu0 %v3503
    %v6556 = vpop.f32.mrf.mxu0
    %v6557 = vadd.f32 0.0, %v6556
    %v6558 = vpop.f32.mrf.mxu0
    %v6559 = vadd.f32 0.0, %v6558
    %6560 = vmatmul.bf16.gmra.mxu0 %v3507
    %v6561 = vpop.f32.mrf.mxu0
    %v6562 = vadd.f32 0.0, %v6561
    %v6563 = vpop.f32.mrf.mxu0
    %v6564 = vadd.f32 0.0, %v6563
    %6565 = vdwg.mxu0
    %6566 = vmatpush.bf16.msra.mxu0 %v4665
    %6567 = vmatpush.bf16.msra.mxu0 %v4657
    %6568 = vmatpush.bf16.msra.mxu0 %v4649
    %6569 = vmatpush.bf16.msra.mxu0 %v4641
    %6570 = vmatpush.bf16.msra.mxu0 %v4633
    %6571 = vmatpush.bf16.msra.mxu0 %v4625
    %6572 = vmatpush.bf16.msra.mxu0 %v4617
    %6573 = vmatpush.bf16.msra.mxu0 %v4609
    %6574 = vmatmul.bf16.gmra.mxu0 %v3448
    %v6575 = vpop.f32.mrf.mxu0
    %v6576 = vadd.f32 %v6487, %v6575
    %v6577 = vpop.f32.mrf.mxu0
    %v6578 = vadd.f32 %v6489, %v6577
    %6579 = vmatmul.bf16.gmra.mxu0 %v3452
    %v6580 = vpop.f32.mrf.mxu0
    %v6581 = vadd.f32 %v6492, %v6580
    %v6582 = vpop.f32.mrf.mxu0
    %v6583 = vadd.f32 %v6494, %v6582
    %6584 = vmatmul.bf16.gmra.mxu0 %v3456
    %v6585 = vpop.f32.mrf.mxu0
    %v6586 = vadd.f32 %v6497, %v6585
    %v6587 = vpop.f32.mrf.mxu0
    %v6588 = vadd.f32 %v6499, %v6587
    %6589 = vmatmul.bf16.gmra.mxu0 %v3460
    %v6590 = vpop.f32.mrf.mxu0
    %v6591 = vadd.f32 %v6502, %v6590
    %v6592 = vpop.f32.mrf.mxu0
    %v6593 = vadd.f32 %v6504, %v6592
    %6594 = vmatmul.bf16.gmra.mxu0 %v3464
    %v6595 = vpop.f32.mrf.mxu0
    %v6596 = vadd.f32 %v6507, %v6595
    %v6597 = vpop.f32.mrf.mxu0
    %v6598 = vadd.f32 %v6509, %v6597
    %6599 = vmatmul.bf16.gmra.mxu0 %v3468
    %v6600 = vpop.f32.mrf.mxu0
    %v6601 = vadd.f32 %v6512, %v6600
    %v6602 = vpop.f32.mrf.mxu0
    %v6603 = vadd.f32 %v6514, %v6602
    %6604 = vmatmul.bf16.gmra.mxu0 %v3472
    %v6605 = vpop.f32.mrf.mxu0
    %v6606 = vadd.f32 %v6517, %v6605
    %v6607 = vpop.f32.mrf.mxu0
    %v6608 = vadd.f32 %v6519, %v6607
    %6609 = vmatmul.bf16.gmra.mxu0 %v3476
    %v6610 = vpop.f32.mrf.mxu0
    %v6611 = vadd.f32 %v6522, %v6610
    %v6612 = vpop.f32.mrf.mxu0
    %v6613 = vadd.f32 %v6524, %v6612
    %6614 = vmatmul.bf16.gmra.mxu0 %v3480
    %v6615 = vpop.f32.mrf.mxu0
    %v6616 = vadd.f32 %v6527, %v6615
    %v6617 = vpop.f32.mrf.mxu0
    %v6618 = vadd.f32 %v6529, %v6617
    %6619 = vmatmul.bf16.gmra.mxu0 %v3484
    %v6620 = vpop.f32.mrf.mxu0
    %v6621 = vadd.f32 %v6532, %v6620
    %v6622 = vpop.f32.mrf.mxu0
    %v6623 = vadd.f32 %v6534, %v6622
    %6624 = vmatmul.bf16.gmra.mxu0 %v3488
    %v6625 = vpop.f32.mrf.mxu0
    %v6626 = vadd.f32 %v6537, %v6625
    %v6627 = vpop.f32.mrf.mxu0
    %v6628 = vadd.f32 %v6539, %v6627
    %6629 = vmatmul.bf16.gmra.mxu0 %v3492
    %v6630 = vpop.f32.mrf.mxu0
    %v6631 = vadd.f32 %v6542, %v6630
    %v6632 = vpop.f32.mrf.mxu0
    %v6633 = vadd.f32 %v6544, %v6632
    %6634 = vmatmul.bf16.gmra.mxu0 %v3496
    %v6635 = vpop.f32.mrf.mxu0
    %v6636 = vadd.f32 %v6547, %v6635
    %v6637 = vpop.f32.mrf.mxu0
    %v6638 = vadd.f32 %v6549, %v6637
    %6639 = vmatmul.bf16.gmra.mxu0 %v3500
    %v6640 = vpop.f32.mrf.mxu0
    %v6641 = vadd.f32 %v6552, %v6640
    %v6642 = vpop.f32.mrf.mxu0
    %v6643 = vadd.f32 %v6554, %v6642
    %6644 = vmatmul.bf16.gmra.mxu0 %v3504
    %v6645 = vpop.f32.mrf.mxu0
    %v6646 = vadd.f32 %v6557, %v6645
    %v6647 = vpop.f32.mrf.mxu0
    %v6648 = vadd.f32 %v6559, %v6647
    %6649 = vmatmul.bf16.gmra.mxu0 %v3508
    %v6650 = vpop.f32.mrf.mxu0
    %v6651 = vadd.f32 %v6562, %v6650
    %v6652 = vpop.f32.mrf.mxu0
    %v6653 = vadd.f32 %v6564, %v6652
    %6654 = vdwg.mxu0
    %6655 = vmatpush.bf16.msra.mxu0 %v4729
    %6656 = vmatpush.bf16.msra.mxu0 %v4721
    %6657 = vmatpush.bf16.msra.mxu0 %v4713
    %6658 = vmatpush.bf16.msra.mxu0 %v4705
    %6659 = vmatpush.bf16.msra.mxu0 %v4697
    %6660 = vmatpush.bf16.msra.mxu0 %v4689
    %6661 = vmatpush.bf16.msra.mxu0 %v4681
    %6662 = vmatpush.bf16.msra.mxu0 %v4673
    %6663 = vmatmul.bf16.gmra.mxu0 %v3449
    %v6664 = vpop.f32.mrf.mxu0
    %v6665 = vadd.f32 %v6576, %v6664
    %v6666 = vpop.f32.mrf.mxu0
    %v6667 = vadd.f32 %v6578, %v6666
    %6668 = vmatmul.bf16.gmra.mxu0 %v3453
    %v6669 = vpop.f32.mrf.mxu0
    %v6670 = vadd.f32 %v6581, %v6669
    %v6671 = vpop.f32.mrf.mxu0
    %v6672 = vadd.f32 %v6583, %v6671
    %6673 = vmatmul.bf16.gmra.mxu0 %v3457
    %v6674 = vpop.f32.mrf.mxu0
    %v6675 = vadd.f32 %v6586, %v6674
    %v6676 = vpop.f32.mrf.mxu0
    %v6677 = vadd.f32 %v6588, %v6676
    %6678 = vmatmul.bf16.gmra.mxu0 %v3461
    %v6679 = vpop.f32.mrf.mxu0
    %v6680 = vadd.f32 %v6591, %v6679
    %v6681 = vpop.f32.mrf.mxu0
    %v6682 = vadd.f32 %v6593, %v6681
    %6683 = vmatmul.bf16.gmra.mxu0 %v3465
    %v6684 = vpop.f32.mrf.mxu0
    %v6685 = vadd.f32 %v6596, %v6684
    %v6686 = vpop.f32.mrf.mxu0
    %v6687 = vadd.f32 %v6598, %v6686
    %6688 = vmatmul.bf16.gmra.mxu0 %v3469
    %v6689 = vpop.f32.mrf.mxu0
    %v6690 = vadd.f32 %v6601, %v6689
    %v6691 = vpop.f32.mrf.mxu0
    %v6692 = vadd.f32 %v6603, %v6691
    %6693 = vmatmul.bf16.gmra.mxu0 %v3473
    %v6694 = vpop.f32.mrf.mxu0
    %v6695 = vadd.f32 %v6606, %v6694
    %v6696 = vpop.f32.mrf.mxu0
    %v6697 = vadd.f32 %v6608, %v6696
    %6698 = vmatmul.bf16.gmra.mxu0 %v3477
    %v6699 = vpop.f32.mrf.mxu0
    %v6700 = vadd.f32 %v6611, %v6699
    %v6701 = vpop.f32.mrf.mxu0
    %v6702 = vadd.f32 %v6613, %v6701
    %6703 = vmatmul.bf16.gmra.mxu0 %v3481
    %v6704 = vpop.f32.mrf.mxu0
    %v6705 = vadd.f32 %v6616, %v6704
    %v6706 = vpop.f32.mrf.mxu0
    %v6707 = vadd.f32 %v6618, %v6706
    %6708 = vmatmul.bf16.gmra.mxu0 %v3485
    %v6709 = vpop.f32.mrf.mxu0
    %v6710 = vadd.f32 %v6621, %v6709
    %v6711 = vpop.f32.mrf.mxu0
    %v6712 = vadd.f32 %v6623, %v6711
    %6713 = vmatmul.bf16.gmra.mxu0 %v3489
    %v6714 = vpop.f32.mrf.mxu0
    %v6715 = vadd.f32 %v6626, %v6714
    %v6716 = vpop.f32.mrf.mxu0
    %v6717 = vadd.f32 %v6628, %v6716
    %6718 = vmatmul.bf16.gmra.mxu0 %v3493
    %v6719 = vpop.f32.mrf.mxu0
    %v6720 = vadd.f32 %v6631, %v6719
    %v6721 = vpop.f32.mrf.mxu0
    %v6722 = vadd.f32 %v6633, %v6721
    %6723 = vmatmul.bf16.gmra.mxu0 %v3497
    %v6724 = vpop.f32.mrf.mxu0
    %v6725 = vadd.f32 %v6636, %v6724
    %v6726 = vpop.f32.mrf.mxu0
    %v6727 = vadd.f32 %v6638, %v6726
    %6728 = vmatmul.bf16.gmra.mxu0 %v3501
    %v6729 = vpop.f32.mrf.mxu0
    %v6730 = vadd.f32 %v6641, %v6729
    %v6731 = vpop.f32.mrf.mxu0
    %v6732 = vadd.f32 %v6643, %v6731
    %6733 = vmatmul.bf16.gmra.mxu0 %v3505
    %v6734 = vpop.f32.mrf.mxu0
    %v6735 = vadd.f32 %v6646, %v6734
    %v6736 = vpop.f32.mrf.mxu0
    %v6737 = vadd.f32 %v6648, %v6736
    %6738 = vmatmul.bf16.gmra.mxu0 %v3509
    %v6739 = vpop.f32.mrf.mxu0
    %v6740 = vadd.f32 %v6651, %v6739
    %v6741 = vpop.f32.mrf.mxu0
    %v6742 = vadd.f32 %v6653, %v6741
    %6743 = vdwg.mxu0
    %6744 = vmatpush.bf16.msra.mxu0 %v4793
    %6745 = vmatpush.bf16.msra.mxu0 %v4785
    %6746 = vmatpush.bf16.msra.mxu0 %v4777
    %6747 = vmatpush.bf16.msra.mxu0 %v4769
    %6748 = vmatpush.bf16.msra.mxu0 %v4761
    %6749 = vmatpush.bf16.msra.mxu0 %v4753
    %6750 = vmatpush.bf16.msra.mxu0 %v4745
    %6751 = vmatpush.bf16.msra.mxu0 %v4737
    %6752 = vmatmul.bf16.gmra.mxu0 %v3450
    %v6753 = vpop.f32.mrf.mxu0
    %v6754 = vadd.f32 %v6665, %v6753
    %v6755 = vpop.f32.mrf.mxu0
    %v6756 = vadd.f32 %v6667, %v6755
    %6757 = vmatmul.bf16.gmra.mxu0 %v3454
    %v6758 = vpop.f32.mrf.mxu0
    %v6759 = vadd.f32 %v6670, %v6758
    %v6760 = vpop.f32.mrf.mxu0
    %v6761 = vadd.f32 %v6672, %v6760
    %6762 = vmatmul.bf16.gmra.mxu0 %v3458
    %v6763 = vpop.f32.mrf.mxu0
    %v6764 = vadd.f32 %v6675, %v6763
    %v6765 = vpop.f32.mrf.mxu0
    %v6766 = vadd.f32 %v6677, %v6765
    %6767 = vmatmul.bf16.gmra.mxu0 %v3462
    %v6768 = vpop.f32.mrf.mxu0
    %v6769 = vadd.f32 %v6680, %v6768
    %v6770 = vpop.f32.mrf.mxu0
    %v6771 = vadd.f32 %v6682, %v6770
    %6772 = vmatmul.bf16.gmra.mxu0 %v3466
    %v6773 = vpop.f32.mrf.mxu0
    %v6774 = vadd.f32 %v6685, %v6773
    %v6775 = vpop.f32.mrf.mxu0
    %v6776 = vadd.f32 %v6687, %v6775
    %6777 = vmatmul.bf16.gmra.mxu0 %v3470
    %v6778 = vpop.f32.mrf.mxu0
    %v6779 = vadd.f32 %v6690, %v6778
    %v6780 = vpop.f32.mrf.mxu0
    %v6781 = vadd.f32 %v6692, %v6780
    %6782 = vmatmul.bf16.gmra.mxu0 %v3474
    %v6783 = vpop.f32.mrf.mxu0
    %v6784 = vadd.f32 %v6695, %v6783
    %v6785 = vpop.f32.mrf.mxu0
    %v6786 = vadd.f32 %v6697, %v6785
    %6787 = vmatmul.bf16.gmra.mxu0 %v3478
    %v6788 = vpop.f32.mrf.mxu0
    %v6789 = vadd.f32 %v6700, %v6788
    %v6790 = vpop.f32.mrf.mxu0
    %v6791 = vadd.f32 %v6702, %v6790
    %6792 = vmatmul.bf16.gmra.mxu0 %v3482
    %v6793 = vpop.f32.mrf.mxu0
    %v6794 = vadd.f32 %v6705, %v6793
    %v6795 = vpop.f32.mrf.mxu0
    %v6796 = vadd.f32 %v6707, %v6795
    %6797 = vmatmul.bf16.gmra.mxu0 %v3486
    %v6798 = vpop.f32.mrf.mxu0
    %v6799 = vadd.f32 %v6710, %v6798
    %v6800 = vpop.f32.mrf.mxu0
    %v6801 = vadd.f32 %v6712, %v6800
    %6802 = vmatmul.bf16.gmra.mxu0 %v3490
    %v6803 = vpop.f32.mrf.mxu0
    %v6804 = vadd.f32 %v6715, %v6803
    %v6805 = vpop.f32.mrf.mxu0
    %v6806 = vadd.f32 %v6717, %v6805
    %6807 = vmatmul.bf16.gmra.mxu0 %v3494
    %v6808 = vpop.f32.mrf.mxu0
    %v6809 = vadd.f32 %v6720, %v6808
    %v6810 = vpop.f32.mrf.mxu0
    %v6811 = vadd.f32 %v6722, %v6810
    %6812 = vmatmul.bf16.gmra.mxu0 %v3498
    %v6813 = vpop.f32.mrf.mxu0
    %v6814 = vadd.f32 %v6725, %v6813
    %v6815 = vpop.f32.mrf.mxu0
    %v6816 = vadd.f32 %v6727, %v6815
    %6817 = vmatmul.bf16.gmra.mxu0 %v3502
    %v6818 = vpop.f32.mrf.mxu0
    %v6819 = vadd.f32 %v6730, %v6818
    %v6820 = vpop.f32.mrf.mxu0
    %v6821 = vadd.f32 %v6732, %v6820
    %6822 = vmatmul.bf16.gmra.mxu0 %v3506
    %v6823 = vpop.f32.mrf.mxu0
    %v6824 = vadd.f32 %v6735, %v6823
    %v6825 = vpop.f32.mrf.mxu0
    %v6826 = vadd.f32 %v6737, %v6825
    %6827 = vmatmul.bf16.gmra.mxu0 %v3510
    %v6828 = vpop.f32.mrf.mxu0
    %v6829 = vadd.f32 %v6740, %v6828
    %v6830 = vpop.f32.mrf.mxu0
    %v6831 = vadd.f32 %v6742, %v6830
    %6832 = vdwg.mxu0
    %6833 = vmatpush.bf16.msra.mxu0 %v4602
    %6834 = vmatpush.bf16.msra.mxu0 %v4594
    %6835 = vmatpush.bf16.msra.mxu0 %v4586
    %6836 = vmatpush.bf16.msra.mxu0 %v4578
    %6837 = vmatpush.bf16.msra.mxu0 %v4570
    %6838 = vmatpush.bf16.msra.mxu0 %v4562
    %6839 = vmatpush.bf16.msra.mxu0 %v4554
    %6840 = vmatpush.bf16.msra.mxu0 %v4546
    %6841 = vmatmul.bf16.gmra.mxu0 %v3447
    %v6842 = vpop.f32.mrf.mxu0
    %v6843 = vadd.f32 0.0, %v6842
    %v6844 = vpop.f32.mrf.mxu0
    %v6845 = vadd.f32 0.0, %v6844
    %6846 = vmatmul.bf16.gmra.mxu0 %v3451
    %v6847 = vpop.f32.mrf.mxu0
    %v6848 = vadd.f32 0.0, %v6847
    %v6849 = vpop.f32.mrf.mxu0
    %v6850 = vadd.f32 0.0, %v6849
    %6851 = vmatmul.bf16.gmra.mxu0 %v3455
    %v6852 = vpop.f32.mrf.mxu0
    %v6853 = vadd.f32 0.0, %v6852
    %v6854 = vpop.f32.mrf.mxu0
    %v6855 = vadd.f32 0.0, %v6854
    %6856 = vmatmul.bf16.gmra.mxu0 %v3459
    %v6857 = vpop.f32.mrf.mxu0
    %v6858 = vadd.f32 0.0, %v6857
    %v6859 = vpop.f32.mrf.mxu0
    %v6860 = vadd.f32 0.0, %v6859
    %6861 = vmatmul.bf16.gmra.mxu0 %v3463
    %v6862 = vpop.f32.mrf.mxu0
    %v6863 = vadd.f32 0.0, %v6862
    %v6864 = vpop.f32.mrf.mxu0
    %v6865 = vadd.f32 0.0, %v6864
    %6866 = vmatmul.bf16.gmra.mxu0 %v3467
    %v6867 = vpop.f32.mrf.mxu0
    %v6868 = vadd.f32 0.0, %v6867
    %v6869 = vpop.f32.mrf.mxu0
    %v6870 = vadd.f32 0.0, %v6869
    %6871 = vmatmul.bf16.gmra.mxu0 %v3471
    %v6872 = vpop.f32.mrf.mxu0
    %v6873 = vadd.f32 0.0, %v6872
    %v6874 = vpop.f32.mrf.mxu0
    %v6875 = vadd.f32 0.0, %v6874
    %6876 = vmatmul.bf16.gmra.mxu0 %v3475
    %v6877 = vpop.f32.mrf.mxu0
    %v6878 = vadd.f32 0.0, %v6877
    %v6879 = vpop.f32.mrf.mxu0
    %v6880 = vadd.f32 0.0, %v6879
    %6881 = vmatmul.bf16.gmra.mxu0 %v3479
    %v6882 = vpop.f32.mrf.mxu0
    %v6883 = vadd.f32 0.0, %v6882
    %v6884 = vpop.f32.mrf.mxu0
    %v6885 = vadd.f32 0.0, %v6884
    %6886 = vmatmul.bf16.gmra.mxu0 %v3483
    %v6887 = vpop.f32.mrf.mxu0
    %v6888 = vadd.f32 0.0, %v6887
    %v6889 = vpop.f32.mrf.mxu0
    %v6890 = vadd.f32 0.0, %v6889
    %6891 = vmatmul.bf16.gmra.mxu0 %v3487
    %v6892 = vpop.f32.mrf.mxu0
    %v6893 = vadd.f32 0.0, %v6892
    %v6894 = vpop.f32.mrf.mxu0
    %v6895 = vadd.f32 0.0, %v6894
    %6896 = vmatmul.bf16.gmra.mxu0 %v3491
    %v6897 = vpop.f32.mrf.mxu0
    %v6898 = vadd.f32 0.0, %v6897
    %v6899 = vpop.f32.mrf.mxu0
    %v6900 = vadd.f32 0.0, %v6899
    %6901 = vmatmul.bf16.gmra.mxu0 %v3495
    %v6902 = vpop.f32.mrf.mxu0
    %v6903 = vadd.f32 0.0, %v6902
    %v6904 = vpop.f32.mrf.mxu0
    %v6905 = vadd.f32 0.0, %v6904
    %6906 = vmatmul.bf16.gmra.mxu0 %v3499
    %v6907 = vpop.f32.mrf.mxu0
    %v6908 = vadd.f32 0.0, %v6907
    %v6909 = vpop.f32.mrf.mxu0
    %v6910 = vadd.f32 0.0, %v6909
    %6911 = vmatmul.bf16.gmra.mxu0 %v3503
    %v6912 = vpop.f32.mrf.mxu0
    %v6913 = vadd.f32 0.0, %v6912
    %v6914 = vpop.f32.mrf.mxu0
    %v6915 = vadd.f32 0.0, %v6914
    %6916 = vmatmul.bf16.gmra.mxu0 %v3507
    %v6917 = vpop.f32.mrf.mxu0
    %v6918 = vadd.f32 0.0, %v6917
    %v6919 = vpop.f32.mrf.mxu0
    %v6920 = vadd.f32 0.0, %v6919
    %6921 = vdwg.mxu0
    %6922 = vmatpush.bf16.msra.mxu0 %v4666
    %6923 = vmatpush.bf16.msra.mxu0 %v4658
    %6924 = vmatpush.bf16.msra.mxu0 %v4650
    %6925 = vmatpush.bf16.msra.mxu0 %v4642
    %6926 = vmatpush.bf16.msra.mxu0 %v4634
    %6927 = vmatpush.bf16.msra.mxu0 %v4626
    %6928 = vmatpush.bf16.msra.mxu0 %v4618
    %6929 = vmatpush.bf16.msra.mxu0 %v4610
    %6930 = vmatmul.bf16.gmra.mxu0 %v3448
    %v6931 = vpop.f32.mrf.mxu0
    %v6932 = vadd.f32 %v6843, %v6931
    %v6933 = vpop.f32.mrf.mxu0
    %v6934 = vadd.f32 %v6845, %v6933
    %6935 = vmatmul.bf16.gmra.mxu0 %v3452
    %v6936 = vpop.f32.mrf.mxu0
    %v6937 = vadd.f32 %v6848, %v6936
    %v6938 = vpop.f32.mrf.mxu0
    %v6939 = vadd.f32 %v6850, %v6938
    %6940 = vmatmul.bf16.gmra.mxu0 %v3456
    %v6941 = vpop.f32.mrf.mxu0
    %v6942 = vadd.f32 %v6853, %v6941
    %v6943 = vpop.f32.mrf.mxu0
    %v6944 = vadd.f32 %v6855, %v6943
    %6945 = vmatmul.bf16.gmra.mxu0 %v3460
    %v6946 = vpop.f32.mrf.mxu0
    %v6947 = vadd.f32 %v6858, %v6946
    %v6948 = vpop.f32.mrf.mxu0
    %v6949 = vadd.f32 %v6860, %v6948
    %6950 = vmatmul.bf16.gmra.mxu0 %v3464
    %v6951 = vpop.f32.mrf.mxu0
    %v6952 = vadd.f32 %v6863, %v6951
    %v6953 = vpop.f32.mrf.mxu0
    %v6954 = vadd.f32 %v6865, %v6953
    %6955 = vmatmul.bf16.gmra.mxu0 %v3468
    %v6956 = vpop.f32.mrf.mxu0
    %v6957 = vadd.f32 %v6868, %v6956
    %v6958 = vpop.f32.mrf.mxu0
    %v6959 = vadd.f32 %v6870, %v6958
    %6960 = vmatmul.bf16.gmra.mxu0 %v3472
    %v6961 = vpop.f32.mrf.mxu0
    %v6962 = vadd.f32 %v6873, %v6961
    %v6963 = vpop.f32.mrf.mxu0
    %v6964 = vadd.f32 %v6875, %v6963
    %6965 = vmatmul.bf16.gmra.mxu0 %v3476
    %v6966 = vpop.f32.mrf.mxu0
    %v6967 = vadd.f32 %v6878, %v6966
    %v6968 = vpop.f32.mrf.mxu0
    %v6969 = vadd.f32 %v6880, %v6968
    %6970 = vmatmul.bf16.gmra.mxu0 %v3480
    %v6971 = vpop.f32.mrf.mxu0
    %v6972 = vadd.f32 %v6883, %v6971
    %v6973 = vpop.f32.mrf.mxu0
    %v6974 = vadd.f32 %v6885, %v6973
    %6975 = vmatmul.bf16.gmra.mxu0 %v3484
    %v6976 = vpop.f32.mrf.mxu0
    %v6977 = vadd.f32 %v6888, %v6976
    %v6978 = vpop.f32.mrf.mxu0
    %v6979 = vadd.f32 %v6890, %v6978
    %6980 = vmatmul.bf16.gmra.mxu0 %v3488
    %v6981 = vpop.f32.mrf.mxu0
    %v6982 = vadd.f32 %v6893, %v6981
    %v6983 = vpop.f32.mrf.mxu0
    %v6984 = vadd.f32 %v6895, %v6983
    %6985 = vmatmul.bf16.gmra.mxu0 %v3492
    %v6986 = vpop.f32.mrf.mxu0
    %v6987 = vadd.f32 %v6898, %v6986
    %v6988 = vpop.f32.mrf.mxu0
    %v6989 = vadd.f32 %v6900, %v6988
    %6990 = vmatmul.bf16.gmra.mxu0 %v3496
    %v6991 = vpop.f32.mrf.mxu0
    %v6992 = vadd.f32 %v6903, %v6991
    %v6993 = vpop.f32.mrf.mxu0
    %v6994 = vadd.f32 %v6905, %v6993
    %6995 = vmatmul.bf16.gmra.mxu0 %v3500
    %v6996 = vpop.f32.mrf.mxu0
    %v6997 = vadd.f32 %v6908, %v6996
    %v6998 = vpop.f32.mrf.mxu0
    %v6999 = vadd.f32 %v6910, %v6998
    %7000 = vmatmul.bf16.gmra.mxu0 %v3504
    %v7001 = vpop.f32.mrf.mxu0
    %v7002 = vadd.f32 %v6913, %v7001
    %v7003 = vpop.f32.mrf.mxu0
    %v7004 = vadd.f32 %v6915, %v7003
    %7005 = vmatmul.bf16.gmra.mxu0 %v3508
    %v7006 = vpop.f32.mrf.mxu0
    %v7007 = vadd.f32 %v6918, %v7006
    %v7008 = vpop.f32.mrf.mxu0
    %v7009 = vadd.f32 %v6920, %v7008
    %7010 = vdwg.mxu0
    %7011 = vmatpush.bf16.msra.mxu0 %v4730
    %7012 = vmatpush.bf16.msra.mxu0 %v4722
    %7013 = vmatpush.bf16.msra.mxu0 %v4714
    %7014 = vmatpush.bf16.msra.mxu0 %v4706
    %7015 = vmatpush.bf16.msra.mxu0 %v4698
    %7016 = vmatpush.bf16.msra.mxu0 %v4690
    %7017 = vmatpush.bf16.msra.mxu0 %v4682
    %7018 = vmatpush.bf16.msra.mxu0 %v4674
    %7019 = vmatmul.bf16.gmra.mxu0 %v3449
    %v7020 = vpop.f32.mrf.mxu0
    %v7021 = vadd.f32 %v6932, %v7020
    %v7022 = vpop.f32.mrf.mxu0
    %v7023 = vadd.f32 %v6934, %v7022
    %7024 = vmatmul.bf16.gmra.mxu0 %v3453
    %v7025 = vpop.f32.mrf.mxu0
    %v7026 = vadd.f32 %v6937, %v7025
    %v7027 = vpop.f32.mrf.mxu0
    %v7028 = vadd.f32 %v6939, %v7027
    %7029 = vmatmul.bf16.gmra.mxu0 %v3457
    %v7030 = vpop.f32.mrf.mxu0
    %v7031 = vadd.f32 %v6942, %v7030
    %v7032 = vpop.f32.mrf.mxu0
    %v7033 = vadd.f32 %v6944, %v7032
    %7034 = vmatmul.bf16.gmra.mxu0 %v3461
    %v7035 = vpop.f32.mrf.mxu0
    %v7036 = vadd.f32 %v6947, %v7035
    %v7037 = vpop.f32.mrf.mxu0
    %v7038 = vadd.f32 %v6949, %v7037
    %7039 = vmatmul.bf16.gmra.mxu0 %v3465
    %v7040 = vpop.f32.mrf.mxu0
    %v7041 = vadd.f32 %v6952, %v7040
    %v7042 = vpop.f32.mrf.mxu0
    %v7043 = vadd.f32 %v6954, %v7042
    %7044 = vmatmul.bf16.gmra.mxu0 %v3469
    %v7045 = vpop.f32.mrf.mxu0
    %v7046 = vadd.f32 %v6957, %v7045
    %v7047 = vpop.f32.mrf.mxu0
    %v7048 = vadd.f32 %v6959, %v7047
    %7049 = vmatmul.bf16.gmra.mxu0 %v3473
    %v7050 = vpop.f32.mrf.mxu0
    %v7051 = vadd.f32 %v6962, %v7050
    %v7052 = vpop.f32.mrf.mxu0
    %v7053 = vadd.f32 %v6964, %v7052
    %7054 = vmatmul.bf16.gmra.mxu0 %v3477
    %v7055 = vpop.f32.mrf.mxu0
    %v7056 = vadd.f32 %v6967, %v7055
    %v7057 = vpop.f32.mrf.mxu0
    %v7058 = vadd.f32 %v6969, %v7057
    %7059 = vmatmul.bf16.gmra.mxu0 %v3481
    %v7060 = vpop.f32.mrf.mxu0
    %v7061 = vadd.f32 %v6972, %v7060
    %v7062 = vpop.f32.mrf.mxu0
    %v7063 = vadd.f32 %v6974, %v7062
    %7064 = vmatmul.bf16.gmra.mxu0 %v3485
    %v7065 = vpop.f32.mrf.mxu0
    %v7066 = vadd.f32 %v6977, %v7065
    %v7067 = vpop.f32.mrf.mxu0
    %v7068 = vadd.f32 %v6979, %v7067
    %7069 = vmatmul.bf16.gmra.mxu0 %v3489
    %v7070 = vpop.f32.mrf.mxu0
    %v7071 = vadd.f32 %v6982, %v7070
    %v7072 = vpop.f32.mrf.mxu0
    %v7073 = vadd.f32 %v6984, %v7072
    %7074 = vmatmul.bf16.gmra.mxu0 %v3493
    %v7075 = vpop.f32.mrf.mxu0
    %v7076 = vadd.f32 %v6987, %v7075
    %v7077 = vpop.f32.mrf.mxu0
    %v7078 = vadd.f32 %v6989, %v7077
    %7079 = vmatmul.bf16.gmra.mxu0 %v3497
    %v7080 = vpop.f32.mrf.mxu0
    %v7081 = vadd.f32 %v6992, %v7080
    %v7082 = vpop.f32.mrf.mxu0
    %v7083 = vadd.f32 %v6994, %v7082
    %7084 = vmatmul.bf16.gmra.mxu0 %v3501
    %v7085 = vpop.f32.mrf.mxu0
    %v7086 = vadd.f32 %v6997, %v7085
    %v7087 = vpop.f32.mrf.mxu0
    %v7088 = vadd.f32 %v6999, %v7087
    %7089 = vmatmul.bf16.gmra.mxu0 %v3505
    %v7090 = vpop.f32.mrf.mxu0
    %v7091 = vadd.f32 %v7002, %v7090
    %v7092 = vpop.f32.mrf.mxu0
    %v7093 = vadd.f32 %v7004, %v7092
    %7094 = vmatmul.bf16.gmra.mxu0 %v3509
    %v7095 = vpop.f32.mrf.mxu0
    %v7096 = vadd.f32 %v7007, %v7095
    %v7097 = vpop.f32.mrf.mxu0
    %v7098 = vadd.f32 %v7009, %v7097
    %7099 = vdwg.mxu0
    %7100 = vmatpush.bf16.msra.mxu0 %v4794
    %7101 = vmatpush.bf16.msra.mxu0 %v4786
    %7102 = vmatpush.bf16.msra.mxu0 %v4778
    %7103 = vmatpush.bf16.msra.mxu0 %v4770
    %7104 = vmatpush.bf16.msra.mxu0 %v4762
    %7105 = vmatpush.bf16.msra.mxu0 %v4754
    %7106 = vmatpush.bf16.msra.mxu0 %v4746
    %7107 = vmatpush.bf16.msra.mxu0 %v4738
    %7108 = vmatmul.bf16.gmra.mxu0 %v3450
    %v7109 = vpop.f32.mrf.mxu0
    %v7110 = vadd.f32 %v7021, %v7109
    %v7111 = vpop.f32.mrf.mxu0
    %v7112 = vadd.f32 %v7023, %v7111
    %7113 = vmatmul.bf16.gmra.mxu0 %v3454
    %v7114 = vpop.f32.mrf.mxu0
    %v7115 = vadd.f32 %v7026, %v7114
    %v7116 = vpop.f32.mrf.mxu0
    %v7117 = vadd.f32 %v7028, %v7116
    %7118 = vmatmul.bf16.gmra.mxu0 %v3458
    %v7119 = vpop.f32.mrf.mxu0
    %v7120 = vadd.f32 %v7031, %v7119
    %v7121 = vpop.f32.mrf.mxu0
    %v7122 = vadd.f32 %v7033, %v7121
    %7123 = vmatmul.bf16.gmra.mxu0 %v3462
    %v7124 = vpop.f32.mrf.mxu0
    %v7125 = vadd.f32 %v7036, %v7124
    %v7126 = vpop.f32.mrf.mxu0
    %v7127 = vadd.f32 %v7038, %v7126
    %7128 = vmatmul.bf16.gmra.mxu0 %v3466
    %v7129 = vpop.f32.mrf.mxu0
    %v7130 = vadd.f32 %v7041, %v7129
    %v7131 = vpop.f32.mrf.mxu0
    %v7132 = vadd.f32 %v7043, %v7131
    %7133 = vmatmul.bf16.gmra.mxu0 %v3470
    %v7134 = vpop.f32.mrf.mxu0
    %v7135 = vadd.f32 %v7046, %v7134
    %v7136 = vpop.f32.mrf.mxu0
    %v7137 = vadd.f32 %v7048, %v7136
    %7138 = vmatmul.bf16.gmra.mxu0 %v3474
    %v7139 = vpop.f32.mrf.mxu0
    %v7140 = vadd.f32 %v7051, %v7139
    %v7141 = vpop.f32.mrf.mxu0
    %v7142 = vadd.f32 %v7053, %v7141
    %7143 = vmatmul.bf16.gmra.mxu0 %v3478
    %v7144 = vpop.f32.mrf.mxu0
    %v7145 = vadd.f32 %v7056, %v7144
    %v7146 = vpop.f32.mrf.mxu0
    %v7147 = vadd.f32 %v7058, %v7146
    %7148 = vmatmul.bf16.gmra.mxu0 %v3482
    %v7149 = vpop.f32.mrf.mxu0
    %v7150 = vadd.f32 %v7061, %v7149
    %v7151 = vpop.f32.mrf.mxu0
    %v7152 = vadd.f32 %v7063, %v7151
    %7153 = vmatmul.bf16.gmra.mxu0 %v3486
    %v7154 = vpop.f32.mrf.mxu0
    %v7155 = vadd.f32 %v7066, %v7154
    %v7156 = vpop.f32.mrf.mxu0
    %v7157 = vadd.f32 %v7068, %v7156
    %7158 = vmatmul.bf16.gmra.mxu0 %v3490
    %v7159 = vpop.f32.mrf.mxu0
    %v7160 = vadd.f32 %v7071, %v7159
    %v7161 = vpop.f32.mrf.mxu0
    %v7162 = vadd.f32 %v7073, %v7161
    %7163 = vmatmul.bf16.gmra.mxu0 %v3494
    %v7164 = vpop.f32.mrf.mxu0
    %v7165 = vadd.f32 %v7076, %v7164
    %v7166 = vpop.f32.mrf.mxu0
    %v7167 = vadd.f32 %v7078, %v7166
    %7168 = vmatmul.bf16.gmra.mxu0 %v3498
    %v7169 = vpop.f32.mrf.mxu0
    %v7170 = vadd.f32 %v7081, %v7169
    %v7171 = vpop.f32.mrf.mxu0
    %v7172 = vadd.f32 %v7083, %v7171
    %7173 = vmatmul.bf16.gmra.mxu0 %v3502
    %v7174 = vpop.f32.mrf.mxu0
    %v7175 = vadd.f32 %v7086, %v7174
    %v7176 = vpop.f32.mrf.mxu0
    %v7177 = vadd.f32 %v7088, %v7176
    %7178 = vmatmul.bf16.gmra.mxu0 %v3506
    %v7179 = vpop.f32.mrf.mxu0
    %v7180 = vadd.f32 %v7091, %v7179
    %v7181 = vpop.f32.mrf.mxu0
    %v7182 = vadd.f32 %v7093, %v7181
    %7183 = vmatmul.bf16.gmra.mxu0 %v3510
    %v7184 = vpop.f32.mrf.mxu0
    %v7185 = vadd.f32 %v7096, %v7184
    %v7186 = vpop.f32.mrf.mxu0
    %v7187 = vadd.f32 %v7098, %v7186
    %7188 = vdwg.mxu0
    %7189 = vmatpush.bf16.msra.mxu0 %v4603
    %7190 = vmatpush.bf16.msra.mxu0 %v4595
    %7191 = vmatpush.bf16.msra.mxu0 %v4587
    %7192 = vmatpush.bf16.msra.mxu0 %v4579
    %7193 = vmatpush.bf16.msra.mxu0 %v4571
    %7194 = vmatpush.bf16.msra.mxu0 %v4563
    %7195 = vmatpush.bf16.msra.mxu0 %v4555
    %7196 = vmatpush.bf16.msra.mxu0 %v4547
    %7197 = vmatmul.bf16.gmra.mxu0 %v3447
    %v7198 = vpop.f32.mrf.mxu0
    %v7199 = vadd.f32 0.0, %v7198
    %v7200 = vpop.f32.mrf.mxu0
    %v7201 = vadd.f32 0.0, %v7200
    %7202 = vmatmul.bf16.gmra.mxu0 %v3451
    %v7203 = vpop.f32.mrf.mxu0
    %v7204 = vadd.f32 0.0, %v7203
    %v7205 = vpop.f32.mrf.mxu0
    %v7206 = vadd.f32 0.0, %v7205
    %7207 = vmatmul.bf16.gmra.mxu0 %v3455
    %v7208 = vpop.f32.mrf.mxu0
    %v7209 = vadd.f32 0.0, %v7208
    %v7210 = vpop.f32.mrf.mxu0
    %v7211 = vadd.f32 0.0, %v7210
    %7212 = vmatmul.bf16.gmra.mxu0 %v3459
    %v7213 = vpop.f32.mrf.mxu0
    %v7214 = vadd.f32 0.0, %v7213
    %v7215 = vpop.f32.mrf.mxu0
    %v7216 = vadd.f32 0.0, %v7215
    %7217 = vmatmul.bf16.gmra.mxu0 %v3463
    %v7218 = vpop.f32.mrf.mxu0
    %v7219 = vadd.f32 0.0, %v7218
    %v7220 = vpop.f32.mrf.mxu0
    %v7221 = vadd.f32 0.0, %v7220
    %7222 = vmatmul.bf16.gmra.mxu0 %v3467
    %v7223 = vpop.f32.mrf.mxu0
    %v7224 = vadd.f32 0.0, %v7223
    %v7225 = vpop.f32.mrf.mxu0
    %v7226 = vadd.f32 0.0, %v7225
    %7227 = vmatmul.bf16.gmra.mxu0 %v3471
    %v7228 = vpop.f32.mrf.mxu0
    %v7229 = vadd.f32 0.0, %v7228
    %v7230 = vpop.f32.mrf.mxu0
    %v7231 = vadd.f32 0.0, %v7230
    %7232 = vmatmul.bf16.gmra.mxu0 %v3475
    %v7233 = vpop.f32.mrf.mxu0
    %v7234 = vadd.f32 0.0, %v7233
    %v7235 = vpop.f32.mrf.mxu0
    %v7236 = vadd.f32 0.0, %v7235
    %7237 = vmatmul.bf16.gmra.mxu0 %v3479
    %v7238 = vpop.f32.mrf.mxu0
    %v7239 = vadd.f32 0.0, %v7238
    %v7240 = vpop.f32.mrf.mxu0
    %v7241 = vadd.f32 0.0, %v7240
    %7242 = vmatmul.bf16.gmra.mxu0 %v3483
    %v7243 = vpop.f32.mrf.mxu0
    %v7244 = vadd.f32 0.0, %v7243
    %v7245 = vpop.f32.mrf.mxu0
    %v7246 = vadd.f32 0.0, %v7245
    %7247 = vmatmul.bf16.gmra.mxu0 %v3487
    %v7248 = vpop.f32.mrf.mxu0
    %v7249 = vadd.f32 0.0, %v7248
    %v7250 = vpop.f32.mrf.mxu0
    %v7251 = vadd.f32 0.0, %v7250
    %7252 = vmatmul.bf16.gmra.mxu0 %v3491
    %v7253 = vpop.f32.mrf.mxu0
    %v7254 = vadd.f32 0.0, %v7253
    %v7255 = vpop.f32.mrf.mxu0
    %v7256 = vadd.f32 0.0, %v7255
    %7257 = vmatmul.bf16.gmra.mxu0 %v3495
    %v7258 = vpop.f32.mrf.mxu0
    %v7259 = vadd.f32 0.0, %v7258
    %v7260 = vpop.f32.mrf.mxu0
    %v7261 = vadd.f32 0.0, %v7260
    %7262 = vmatmul.bf16.gmra.mxu0 %v3499
    %v7263 = vpop.f32.mrf.mxu0
    %v7264 = vadd.f32 0.0, %v7263
    %v7265 = vpop.f32.mrf.mxu0
    %v7266 = vadd.f32 0.0, %v7265
    %7267 = vmatmul.bf16.gmra.mxu0 %v3503
    %v7268 = vpop.f32.mrf.mxu0
    %v7269 = vadd.f32 0.0, %v7268
    %v7270 = vpop.f32.mrf.mxu0
    %v7271 = vadd.f32 0.0, %v7270
    %7272 = vmatmul.bf16.gmra.mxu0 %v3507
    %v7273 = vpop.f32.mrf.mxu0
    %v7274 = vadd.f32 0.0, %v7273
    %v7275 = vpop.f32.mrf.mxu0
    %v7276 = vadd.f32 0.0, %v7275
    %7277 = vdwg.mxu0
    %7278 = vmatpush.bf16.msra.mxu0 %v4667
    %7279 = vmatpush.bf16.msra.mxu0 %v4659
    %7280 = vmatpush.bf16.msra.mxu0 %v4651
    %7281 = vmatpush.bf16.msra.mxu0 %v4643
    %7282 = vmatpush.bf16.msra.mxu0 %v4635
    %7283 = vmatpush.bf16.msra.mxu0 %v4627
    %7284 = vmatpush.bf16.msra.mxu0 %v4619
    %7285 = vmatpush.bf16.msra.mxu0 %v4611
    %7286 = vmatmul.bf16.gmra.mxu0 %v3448
    %v7287 = vpop.f32.mrf.mxu0
    %v7288 = vadd.f32 %v7199, %v7287
    %v7289 = vpop.f32.mrf.mxu0
    %v7290 = vadd.f32 %v7201, %v7289
    %7291 = vmatmul.bf16.gmra.mxu0 %v3452
    %v7292 = vpop.f32.mrf.mxu0
    %v7293 = vadd.f32 %v7204, %v7292
    %v7294 = vpop.f32.mrf.mxu0
    %v7295 = vadd.f32 %v7206, %v7294
    %7296 = vmatmul.bf16.gmra.mxu0 %v3456
    %v7297 = vpop.f32.mrf.mxu0
    %v7298 = vadd.f32 %v7209, %v7297
    %v7299 = vpop.f32.mrf.mxu0
    %v7300 = vadd.f32 %v7211, %v7299
    %7301 = vmatmul.bf16.gmra.mxu0 %v3460
    %v7302 = vpop.f32.mrf.mxu0
    %v7303 = vadd.f32 %v7214, %v7302
    %v7304 = vpop.f32.mrf.mxu0
    %v7305 = vadd.f32 %v7216, %v7304
    %7306 = vmatmul.bf16.gmra.mxu0 %v3464
    %v7307 = vpop.f32.mrf.mxu0
    %v7308 = vadd.f32 %v7219, %v7307
    %v7309 = vpop.f32.mrf.mxu0
    %v7310 = vadd.f32 %v7221, %v7309
    %7311 = vmatmul.bf16.gmra.mxu0 %v3468
    %v7312 = vpop.f32.mrf.mxu0
    %v7313 = vadd.f32 %v7224, %v7312
    %v7314 = vpop.f32.mrf.mxu0
    %v7315 = vadd.f32 %v7226, %v7314
    %7316 = vmatmul.bf16.gmra.mxu0 %v3472
    %v7317 = vpop.f32.mrf.mxu0
    %v7318 = vadd.f32 %v7229, %v7317
    %v7319 = vpop.f32.mrf.mxu0
    %v7320 = vadd.f32 %v7231, %v7319
    %7321 = vmatmul.bf16.gmra.mxu0 %v3476
    %v7322 = vpop.f32.mrf.mxu0
    %v7323 = vadd.f32 %v7234, %v7322
    %v7324 = vpop.f32.mrf.mxu0
    %v7325 = vadd.f32 %v7236, %v7324
    %7326 = vmatmul.bf16.gmra.mxu0 %v3480
    %v7327 = vpop.f32.mrf.mxu0
    %v7328 = vadd.f32 %v7239, %v7327
    %v7329 = vpop.f32.mrf.mxu0
    %v7330 = vadd.f32 %v7241, %v7329
    %7331 = vmatmul.bf16.gmra.mxu0 %v3484
    %v7332 = vpop.f32.mrf.mxu0
    %v7333 = vadd.f32 %v7244, %v7332
    %v7334 = vpop.f32.mrf.mxu0
    %v7335 = vadd.f32 %v7246, %v7334
    %7336 = vmatmul.bf16.gmra.mxu0 %v3488
    %v7337 = vpop.f32.mrf.mxu0
    %v7338 = vadd.f32 %v7249, %v7337
    %v7339 = vpop.f32.mrf.mxu0
    %v7340 = vadd.f32 %v7251, %v7339
    %7341 = vmatmul.bf16.gmra.mxu0 %v3492
    %v7342 = vpop.f32.mrf.mxu0
    %v7343 = vadd.f32 %v7254, %v7342
    %v7344 = vpop.f32.mrf.mxu0
    %v7345 = vadd.f32 %v7256, %v7344
    %7346 = vmatmul.bf16.gmra.mxu0 %v3496
    %v7347 = vpop.f32.mrf.mxu0
    %v7348 = vadd.f32 %v7259, %v7347
    %v7349 = vpop.f32.mrf.mxu0
    %v7350 = vadd.f32 %v7261, %v7349
    %7351 = vmatmul.bf16.gmra.mxu0 %v3500
    %v7352 = vpop.f32.mrf.mxu0
    %v7353 = vadd.f32 %v7264, %v7352
    %v7354 = vpop.f32.mrf.mxu0
    %v7355 = vadd.f32 %v7266, %v7354
    %7356 = vmatmul.bf16.gmra.mxu0 %v3504
    %v7357 = vpop.f32.mrf.mxu0
    %v7358 = vadd.f32 %v7269, %v7357
    %v7359 = vpop.f32.mrf.mxu0
    %v7360 = vadd.f32 %v7271, %v7359
    %7361 = vmatmul.bf16.gmra.mxu0 %v3508
    %v7362 = vpop.f32.mrf.mxu0
    %v7363 = vadd.f32 %v7274, %v7362
    %v7364 = vpop.f32.mrf.mxu0
    %v7365 = vadd.f32 %v7276, %v7364
    %7366 = vdwg.mxu0
    %7367 = vmatpush.bf16.msra.mxu0 %v4731
    %7368 = vmatpush.bf16.msra.mxu0 %v4723
    %7369 = vmatpush.bf16.msra.mxu0 %v4715
    %7370 = vmatpush.bf16.msra.mxu0 %v4707
    %7371 = vmatpush.bf16.msra.mxu0 %v4699
    %7372 = vmatpush.bf16.msra.mxu0 %v4691
    %7373 = vmatpush.bf16.msra.mxu0 %v4683
    %7374 = vmatpush.bf16.msra.mxu0 %v4675
    %7375 = vmatmul.bf16.gmra.mxu0 %v3449
    %v7376 = vpop.f32.mrf.mxu0
    %v7377 = vadd.f32 %v7288, %v7376
    %v7378 = vpop.f32.mrf.mxu0
    %v7379 = vadd.f32 %v7290, %v7378
    %7380 = vmatmul.bf16.gmra.mxu0 %v3453
    %v7381 = vpop.f32.mrf.mxu0
    %v7382 = vadd.f32 %v7293, %v7381
    %v7383 = vpop.f32.mrf.mxu0
    %v7384 = vadd.f32 %v7295, %v7383
    %7385 = vmatmul.bf16.gmra.mxu0 %v3457
    %v7386 = vpop.f32.mrf.mxu0
    %v7387 = vadd.f32 %v7298, %v7386
    %v7388 = vpop.f32.mrf.mxu0
    %v7389 = vadd.f32 %v7300, %v7388
    %7390 = vmatmul.bf16.gmra.mxu0 %v3461
    %v7391 = vpop.f32.mrf.mxu0
    %v7392 = vadd.f32 %v7303, %v7391
    %v7393 = vpop.f32.mrf.mxu0
    %v7394 = vadd.f32 %v7305, %v7393
    %7395 = vmatmul.bf16.gmra.mxu0 %v3465
    %v7396 = vpop.f32.mrf.mxu0
    %v7397 = vadd.f32 %v7308, %v7396
    %v7398 = vpop.f32.mrf.mxu0
    %v7399 = vadd.f32 %v7310, %v7398
    %7400 = vmatmul.bf16.gmra.mxu0 %v3469
    %v7401 = vpop.f32.mrf.mxu0
    %v7402 = vadd.f32 %v7313, %v7401
    %v7403 = vpop.f32.mrf.mxu0
    %v7404 = vadd.f32 %v7315, %v7403
    %7405 = vmatmul.bf16.gmra.mxu0 %v3473
    %v7406 = vpop.f32.mrf.mxu0
    %v7407 = vadd.f32 %v7318, %v7406
    %v7408 = vpop.f32.mrf.mxu0
    %v7409 = vadd.f32 %v7320, %v7408
    %7410 = vmatmul.bf16.gmra.mxu0 %v3477
    %v7411 = vpop.f32.mrf.mxu0
    %v7412 = vadd.f32 %v7323, %v7411
    %v7413 = vpop.f32.mrf.mxu0
    %v7414 = vadd.f32 %v7325, %v7413
    %7415 = vmatmul.bf16.gmra.mxu0 %v3481
    %v7416 = vpop.f32.mrf.mxu0
    %v7417 = vadd.f32 %v7328, %v7416
    %v7418 = vpop.f32.mrf.mxu0
    %v7419 = vadd.f32 %v7330, %v7418
    %7420 = vmatmul.bf16.gmra.mxu0 %v3485
    %v7421 = vpop.f32.mrf.mxu0
    %v7422 = vadd.f32 %v7333, %v7421
    %v7423 = vpop.f32.mrf.mxu0
    %v7424 = vadd.f32 %v7335, %v7423
    %7425 = vmatmul.bf16.gmra.mxu0 %v3489
    %v7426 = vpop.f32.mrf.mxu0
    %v7427 = vadd.f32 %v7338, %v7426
    %v7428 = vpop.f32.mrf.mxu0
    %v7429 = vadd.f32 %v7340, %v7428
    %7430 = vmatmul.bf16.gmra.mxu0 %v3493
    %v7431 = vpop.f32.mrf.mxu0
    %v7432 = vadd.f32 %v7343, %v7431
    %v7433 = vpop.f32.mrf.mxu0
    %v7434 = vadd.f32 %v7345, %v7433
    %7435 = vmatmul.bf16.gmra.mxu0 %v3497
    %v7436 = vpop.f32.mrf.mxu0
    %v7437 = vadd.f32 %v7348, %v7436
    %v7438 = vpop.f32.mrf.mxu0
    %v7439 = vadd.f32 %v7350, %v7438
    %7440 = vmatmul.bf16.gmra.mxu0 %v3501
    %v7441 = vpop.f32.mrf.mxu0
    %v7442 = vadd.f32 %v7353, %v7441
    %v7443 = vpop.f32.mrf.mxu0
    %v7444 = vadd.f32 %v7355, %v7443
    %7445 = vmatmul.bf16.gmra.mxu0 %v3505
    %v7446 = vpop.f32.mrf.mxu0
    %v7447 = vadd.f32 %v7358, %v7446
    %v7448 = vpop.f32.mrf.mxu0
    %v7449 = vadd.f32 %v7360, %v7448
    %7450 = vmatmul.bf16.gmra.mxu0 %v3509
    %v7451 = vpop.f32.mrf.mxu0
    %v7452 = vadd.f32 %v7363, %v7451
    %v7453 = vpop.f32.mrf.mxu0
    %v7454 = vadd.f32 %v7365, %v7453
    %7455 = vdwg.mxu0
    %7456 = vmatpush.bf16.msra.mxu0 %v4795
    %7457 = vmatpush.bf16.msra.mxu0 %v4787
    %7458 = vmatpush.bf16.msra.mxu0 %v4779
    %7459 = vmatpush.bf16.msra.mxu0 %v4771
    %7460 = vmatpush.bf16.msra.mxu0 %v4763
    %7461 = vmatpush.bf16.msra.mxu0 %v4755
    %7462 = vmatpush.bf16.msra.mxu0 %v4747
    %7463 = vmatpush.bf16.msra.mxu0 %v4739
    %7464 = vmatmul.bf16.gmra.mxu0 %v3450
    %v7465 = vpop.f32.mrf.mxu0
    %v7466 = vadd.f32 %v7377, %v7465
    %v7467 = vpop.f32.mrf.mxu0
    %v7468 = vadd.f32 %v7379, %v7467
    %7469 = vmatmul.bf16.gmra.mxu0 %v3454
    %v7470 = vpop.f32.mrf.mxu0
    %v7471 = vadd.f32 %v7382, %v7470
    %v7472 = vpop.f32.mrf.mxu0
    %v7473 = vadd.f32 %v7384, %v7472
    %7474 = vmatmul.bf16.gmra.mxu0 %v3458
    %v7475 = vpop.f32.mrf.mxu0
    %v7476 = vadd.f32 %v7387, %v7475
    %v7477 = vpop.f32.mrf.mxu0
    %v7478 = vadd.f32 %v7389, %v7477
    %7479 = vmatmul.bf16.gmra.mxu0 %v3462
    %v7480 = vpop.f32.mrf.mxu0
    %v7481 = vadd.f32 %v7392, %v7480
    %v7482 = vpop.f32.mrf.mxu0
    %v7483 = vadd.f32 %v7394, %v7482
    %7484 = vmatmul.bf16.gmra.mxu0 %v3466
    %v7485 = vpop.f32.mrf.mxu0
    %v7486 = vadd.f32 %v7397, %v7485
    %v7487 = vpop.f32.mrf.mxu0
    %v7488 = vadd.f32 %v7399, %v7487
    %7489 = vmatmul.bf16.gmra.mxu0 %v3470
    %v7490 = vpop.f32.mrf.mxu0
    %v7491 = vadd.f32 %v7402, %v7490
    %v7492 = vpop.f32.mrf.mxu0
    %v7493 = vadd.f32 %v7404, %v7492
    %7494 = vmatmul.bf16.gmra.mxu0 %v3474
    %v7495 = vpop.f32.mrf.mxu0
    %v7496 = vadd.f32 %v7407, %v7495
    %v7497 = vpop.f32.mrf.mxu0
    %v7498 = vadd.f32 %v7409, %v7497
    %7499 = vmatmul.bf16.gmra.mxu0 %v3478
    %v7500 = vpop.f32.mrf.mxu0
    %v7501 = vadd.f32 %v7412, %v7500
    %v7502 = vpop.f32.mrf.mxu0
    %v7503 = vadd.f32 %v7414, %v7502
    %7504 = vmatmul.bf16.gmra.mxu0 %v3482
    %v7505 = vpop.f32.mrf.mxu0
    %v7506 = vadd.f32 %v7417, %v7505
    %v7507 = vpop.f32.mrf.mxu0
    %v7508 = vadd.f32 %v7419, %v7507
    %7509 = vmatmul.bf16.gmra.mxu0 %v3486
    %v7510 = vpop.f32.mrf.mxu0
    %v7511 = vadd.f32 %v7422, %v7510
    %v7512 = vpop.f32.mrf.mxu0
    %v7513 = vadd.f32 %v7424, %v7512
    %7514 = vmatmul.bf16.gmra.mxu0 %v3490
    %v7515 = vpop.f32.mrf.mxu0
    %v7516 = vadd.f32 %v7427, %v7515
    %v7517 = vpop.f32.mrf.mxu0
    %v7518 = vadd.f32 %v7429, %v7517
    %7519 = vmatmul.bf16.gmra.mxu0 %v3494
    %v7520 = vpop.f32.mrf.mxu0
    %v7521 = vadd.f32 %v7432, %v7520
    %v7522 = vpop.f32.mrf.mxu0
    %v7523 = vadd.f32 %v7434, %v7522
    %7524 = vmatmul.bf16.gmra.mxu0 %v3498
    %v7525 = vpop.f32.mrf.mxu0
    %v7526 = vadd.f32 %v7437, %v7525
    %v7527 = vpop.f32.mrf.mxu0
    %v7528 = vadd.f32 %v7439, %v7527
    %7529 = vmatmul.bf16.gmra.mxu0 %v3502
    %v7530 = vpop.f32.mrf.mxu0
    %v7531 = vadd.f32 %v7442, %v7530
    %v7532 = vpop.f32.mrf.mxu0
    %v7533 = vadd.f32 %v7444, %v7532
    %7534 = vmatmul.bf16.gmra.mxu0 %v3506
    %v7535 = vpop.f32.mrf.mxu0
    %v7536 = vadd.f32 %v7447, %v7535
    %v7537 = vpop.f32.mrf.mxu0
    %v7538 = vadd.f32 %v7449, %v7537
    %7539 = vmatmul.bf16.gmra.mxu0 %v3510
    %v7540 = vpop.f32.mrf.mxu0
    %v7541 = vadd.f32 %v7452, %v7540
    %v7542 = vpop.f32.mrf.mxu0
    %v7543 = vadd.f32 %v7454, %v7542
    %7544 = vdwg.mxu0
    %7545 = vmatpush.bf16.msra.mxu0 %v4604
    %7546 = vmatpush.bf16.msra.mxu0 %v4596
    %7547 = vmatpush.bf16.msra.mxu0 %v4588
    %7548 = vmatpush.bf16.msra.mxu0 %v4580
    %7549 = vmatpush.bf16.msra.mxu0 %v4572
    %7550 = vmatpush.bf16.msra.mxu0 %v4564
    %7551 = vmatpush.bf16.msra.mxu0 %v4556
    %7552 = vmatpush.bf16.msra.mxu0 %v4548
    %7553 = vmatmul.bf16.gmra.mxu0 %v3447
    %v7554 = vpop.f32.mrf.mxu0
    %v7555 = vadd.f32 0.0, %v7554
    %v7556 = vpop.f32.mrf.mxu0
    %v7557 = vadd.f32 0.0, %v7556
    %7558 = vmatmul.bf16.gmra.mxu0 %v3451
    %v7559 = vpop.f32.mrf.mxu0
    %v7560 = vadd.f32 0.0, %v7559
    %v7561 = vpop.f32.mrf.mxu0
    %v7562 = vadd.f32 0.0, %v7561
    %7563 = vmatmul.bf16.gmra.mxu0 %v3455
    %v7564 = vpop.f32.mrf.mxu0
    %v7565 = vadd.f32 0.0, %v7564
    %v7566 = vpop.f32.mrf.mxu0
    %v7567 = vadd.f32 0.0, %v7566
    %7568 = vmatmul.bf16.gmra.mxu0 %v3459
    %v7569 = vpop.f32.mrf.mxu0
    %v7570 = vadd.f32 0.0, %v7569
    %v7571 = vpop.f32.mrf.mxu0
    %v7572 = vadd.f32 0.0, %v7571
    %7573 = vmatmul.bf16.gmra.mxu0 %v3463
    %v7574 = vpop.f32.mrf.mxu0
    %v7575 = vadd.f32 0.0, %v7574
    %v7576 = vpop.f32.mrf.mxu0
    %v7577 = vadd.f32 0.0, %v7576
    %7578 = vmatmul.bf16.gmra.mxu0 %v3467
    %v7579 = vpop.f32.mrf.mxu0
    %v7580 = vadd.f32 0.0, %v7579
    %v7581 = vpop.f32.mrf.mxu0
    %v7582 = vadd.f32 0.0, %v7581
    %7583 = vmatmul.bf16.gmra.mxu0 %v3471
    %v7584 = vpop.f32.mrf.mxu0
    %v7585 = vadd.f32 0.0, %v7584
    %v7586 = vpop.f32.mrf.mxu0
    %v7587 = vadd.f32 0.0, %v7586
    %7588 = vmatmul.bf16.gmra.mxu0 %v3475
    %v7589 = vpop.f32.mrf.mxu0
    %v7590 = vadd.f32 0.0, %v7589
    %v7591 = vpop.f32.mrf.mxu0
    %v7592 = vadd.f32 0.0, %v7591
    %7593 = vmatmul.bf16.gmra.mxu0 %v3479
    %v7594 = vpop.f32.mrf.mxu0
    %v7595 = vadd.f32 0.0, %v7594
    %v7596 = vpop.f32.mrf.mxu0
    %v7597 = vadd.f32 0.0, %v7596
    %7598 = vmatmul.bf16.gmra.mxu0 %v3483
    %v7599 = vpop.f32.mrf.mxu0
    %v7600 = vadd.f32 0.0, %v7599
    %v7601 = vpop.f32.mrf.mxu0
    %v7602 = vadd.f32 0.0, %v7601
    %7603 = vmatmul.bf16.gmra.mxu0 %v3487
    %v7604 = vpop.f32.mrf.mxu0
    %v7605 = vadd.f32 0.0, %v7604
    %v7606 = vpop.f32.mrf.mxu0
    %v7607 = vadd.f32 0.0, %v7606
    %7608 = vmatmul.bf16.gmra.mxu0 %v3491
    %v7609 = vpop.f32.mrf.mxu0
    %v7610 = vadd.f32 0.0, %v7609
    %v7611 = vpop.f32.mrf.mxu0
    %v7612 = vadd.f32 0.0, %v7611
    %7613 = vmatmul.bf16.gmra.mxu0 %v3495
    %v7614 = vpop.f32.mrf.mxu0
    %v7615 = vadd.f32 0.0, %v7614
    %v7616 = vpop.f32.mrf.mxu0
    %v7617 = vadd.f32 0.0, %v7616
    %7618 = vmatmul.bf16.gmra.mxu0 %v3499
    %v7619 = vpop.f32.mrf.mxu0
    %v7620 = vadd.f32 0.0, %v7619
    %v7621 = vpop.f32.mrf.mxu0
    %v7622 = vadd.f32 0.0, %v7621
    %7623 = vmatmul.bf16.gmra.mxu0 %v3503
    %v7624 = vpop.f32.mrf.mxu0
    %v7625 = vadd.f32 0.0, %v7624
    %v7626 = vpop.f32.mrf.mxu0
    %v7627 = vadd.f32 0.0, %v7626
    %7628 = vmatmul.bf16.gmra.mxu0 %v3507
    %v7629 = vpop.f32.mrf.mxu0
    %v7630 = vadd.f32 0.0, %v7629
    %v7631 = vpop.f32.mrf.mxu0
    %v7632 = vadd.f32 0.0, %v7631
    %7633 = vdwg.mxu0
    %7634 = vmatpush.bf16.msra.mxu0 %v4668
    %7635 = vmatpush.bf16.msra.mxu0 %v4660
    %7636 = vmatpush.bf16.msra.mxu0 %v4652
    %7637 = vmatpush.bf16.msra.mxu0 %v4644
    %7638 = vmatpush.bf16.msra.mxu0 %v4636
    %7639 = vmatpush.bf16.msra.mxu0 %v4628
    %7640 = vmatpush.bf16.msra.mxu0 %v4620
    %7641 = vmatpush.bf16.msra.mxu0 %v4612
    %7642 = vmatmul.bf16.gmra.mxu0 %v3448
    %v7643 = vpop.f32.mrf.mxu0
    %v7644 = vadd.f32 %v7555, %v7643
    %v7645 = vpop.f32.mrf.mxu0
    %v7646 = vadd.f32 %v7557, %v7645
    %7647 = vmatmul.bf16.gmra.mxu0 %v3452
    %v7648 = vpop.f32.mrf.mxu0
    %v7649 = vadd.f32 %v7560, %v7648
    %v7650 = vpop.f32.mrf.mxu0
    %v7651 = vadd.f32 %v7562, %v7650
    %7652 = vmatmul.bf16.gmra.mxu0 %v3456
    %v7653 = vpop.f32.mrf.mxu0
    %v7654 = vadd.f32 %v7565, %v7653
    %v7655 = vpop.f32.mrf.mxu0
    %v7656 = vadd.f32 %v7567, %v7655
    %7657 = vmatmul.bf16.gmra.mxu0 %v3460
    %v7658 = vpop.f32.mrf.mxu0
    %v7659 = vadd.f32 %v7570, %v7658
    %v7660 = vpop.f32.mrf.mxu0
    %v7661 = vadd.f32 %v7572, %v7660
    %7662 = vmatmul.bf16.gmra.mxu0 %v3464
    %v7663 = vpop.f32.mrf.mxu0
    %v7664 = vadd.f32 %v7575, %v7663
    %v7665 = vpop.f32.mrf.mxu0
    %v7666 = vadd.f32 %v7577, %v7665
    %7667 = vmatmul.bf16.gmra.mxu0 %v3468
    %v7668 = vpop.f32.mrf.mxu0
    %v7669 = vadd.f32 %v7580, %v7668
    %v7670 = vpop.f32.mrf.mxu0
    %v7671 = vadd.f32 %v7582, %v7670
    %7672 = vmatmul.bf16.gmra.mxu0 %v3472
    %v7673 = vpop.f32.mrf.mxu0
    %v7674 = vadd.f32 %v7585, %v7673
    %v7675 = vpop.f32.mrf.mxu0
    %v7676 = vadd.f32 %v7587, %v7675
    %7677 = vmatmul.bf16.gmra.mxu0 %v3476
    %v7678 = vpop.f32.mrf.mxu0
    %v7679 = vadd.f32 %v7590, %v7678
    %v7680 = vpop.f32.mrf.mxu0
    %v7681 = vadd.f32 %v7592, %v7680
    %7682 = vmatmul.bf16.gmra.mxu0 %v3480
    %v7683 = vpop.f32.mrf.mxu0
    %v7684 = vadd.f32 %v7595, %v7683
    %v7685 = vpop.f32.mrf.mxu0
    %v7686 = vadd.f32 %v7597, %v7685
    %7687 = vmatmul.bf16.gmra.mxu0 %v3484
    %v7688 = vpop.f32.mrf.mxu0
    %v7689 = vadd.f32 %v7600, %v7688
    %v7690 = vpop.f32.mrf.mxu0
    %v7691 = vadd.f32 %v7602, %v7690
    %7692 = vmatmul.bf16.gmra.mxu0 %v3488
    %v7693 = vpop.f32.mrf.mxu0
    %v7694 = vadd.f32 %v7605, %v7693
    %v7695 = vpop.f32.mrf.mxu0
    %v7696 = vadd.f32 %v7607, %v7695
    %7697 = vmatmul.bf16.gmra.mxu0 %v3492
    %v7698 = vpop.f32.mrf.mxu0
    %v7699 = vadd.f32 %v7610, %v7698
    %v7700 = vpop.f32.mrf.mxu0
    %v7701 = vadd.f32 %v7612, %v7700
    %7702 = vmatmul.bf16.gmra.mxu0 %v3496
    %v7703 = vpop.f32.mrf.mxu0
    %v7704 = vadd.f32 %v7615, %v7703
    %v7705 = vpop.f32.mrf.mxu0
    %v7706 = vadd.f32 %v7617, %v7705
    %7707 = vmatmul.bf16.gmra.mxu0 %v3500
    %v7708 = vpop.f32.mrf.mxu0
    %v7709 = vadd.f32 %v7620, %v7708
    %v7710 = vpop.f32.mrf.mxu0
    %v7711 = vadd.f32 %v7622, %v7710
    %7712 = vmatmul.bf16.gmra.mxu0 %v3504
    %v7713 = vpop.f32.mrf.mxu0
    %v7714 = vadd.f32 %v7625, %v7713
    %v7715 = vpop.f32.mrf.mxu0
    %v7716 = vadd.f32 %v7627, %v7715
    %7717 = vmatmul.bf16.gmra.mxu0 %v3508
    %v7718 = vpop.f32.mrf.mxu0
    %v7719 = vadd.f32 %v7630, %v7718
    %v7720 = vpop.f32.mrf.mxu0
    %v7721 = vadd.f32 %v7632, %v7720
    %7722 = vdwg.mxu0
    %7723 = vmatpush.bf16.msra.mxu0 %v4732
    %7724 = vmatpush.bf16.msra.mxu0 %v4724
    %7725 = vmatpush.bf16.msra.mxu0 %v4716
    %7726 = vmatpush.bf16.msra.mxu0 %v4708
    %7727 = vmatpush.bf16.msra.mxu0 %v4700
    %7728 = vmatpush.bf16.msra.mxu0 %v4692
    %7729 = vmatpush.bf16.msra.mxu0 %v4684
    %7730 = vmatpush.bf16.msra.mxu0 %v4676
    %7731 = vmatmul.bf16.gmra.mxu0 %v3449
    %v7732 = vpop.f32.mrf.mxu0
    %v7733 = vadd.f32 %v7644, %v7732
    %v7734 = vpop.f32.mrf.mxu0
    %v7735 = vadd.f32 %v7646, %v7734
    %7736 = vmatmul.bf16.gmra.mxu0 %v3453
    %v7737 = vpop.f32.mrf.mxu0
    %v7738 = vadd.f32 %v7649, %v7737
    %v7739 = vpop.f32.mrf.mxu0
    %v7740 = vadd.f32 %v7651, %v7739
    %7741 = vmatmul.bf16.gmra.mxu0 %v3457
    %v7742 = vpop.f32.mrf.mxu0
    %v7743 = vadd.f32 %v7654, %v7742
    %v7744 = vpop.f32.mrf.mxu0
    %v7745 = vadd.f32 %v7656, %v7744
    %7746 = vmatmul.bf16.gmra.mxu0 %v3461
    %v7747 = vpop.f32.mrf.mxu0
    %v7748 = vadd.f32 %v7659, %v7747
    %v7749 = vpop.f32.mrf.mxu0
    %v7750 = vadd.f32 %v7661, %v7749
    %7751 = vmatmul.bf16.gmra.mxu0 %v3465
    %v7752 = vpop.f32.mrf.mxu0
    %v7753 = vadd.f32 %v7664, %v7752
    %v7754 = vpop.f32.mrf.mxu0
    %v7755 = vadd.f32 %v7666, %v7754
    %7756 = vmatmul.bf16.gmra.mxu0 %v3469
    %v7757 = vpop.f32.mrf.mxu0
    %v7758 = vadd.f32 %v7669, %v7757
    %v7759 = vpop.f32.mrf.mxu0
    %v7760 = vadd.f32 %v7671, %v7759
    %7761 = vmatmul.bf16.gmra.mxu0 %v3473
    %v7762 = vpop.f32.mrf.mxu0
    %v7763 = vadd.f32 %v7674, %v7762
    %v7764 = vpop.f32.mrf.mxu0
    %v7765 = vadd.f32 %v7676, %v7764
    %7766 = vmatmul.bf16.gmra.mxu0 %v3477
    %v7767 = vpop.f32.mrf.mxu0
    %v7768 = vadd.f32 %v7679, %v7767
    %v7769 = vpop.f32.mrf.mxu0
    %v7770 = vadd.f32 %v7681, %v7769
    %7771 = vmatmul.bf16.gmra.mxu0 %v3481
    %v7772 = vpop.f32.mrf.mxu0
    %v7773 = vadd.f32 %v7684, %v7772
    %v7774 = vpop.f32.mrf.mxu0
    %v7775 = vadd.f32 %v7686, %v7774
    %7776 = vmatmul.bf16.gmra.mxu0 %v3485
    %v7777 = vpop.f32.mrf.mxu0
    %v7778 = vadd.f32 %v7689, %v7777
    %v7779 = vpop.f32.mrf.mxu0
    %v7780 = vadd.f32 %v7691, %v7779
    %7781 = vmatmul.bf16.gmra.mxu0 %v3489
    %v7782 = vpop.f32.mrf.mxu0
    %v7783 = vadd.f32 %v7694, %v7782
    %v7784 = vpop.f32.mrf.mxu0
    %v7785 = vadd.f32 %v7696, %v7784
    %7786 = vmatmul.bf16.gmra.mxu0 %v3493
    %v7787 = vpop.f32.mrf.mxu0
    %v7788 = vadd.f32 %v7699, %v7787
    %v7789 = vpop.f32.mrf.mxu0
    %v7790 = vadd.f32 %v7701, %v7789
    %7791 = vmatmul.bf16.gmra.mxu0 %v3497
    %v7792 = vpop.f32.mrf.mxu0
    %v7793 = vadd.f32 %v7704, %v7792
    %v7794 = vpop.f32.mrf.mxu0
    %v7795 = vadd.f32 %v7706, %v7794
    %7796 = vmatmul.bf16.gmra.mxu0 %v3501
    %v7797 = vpop.f32.mrf.mxu0
    %v7798 = vadd.f32 %v7709, %v7797
    %v7799 = vpop.f32.mrf.mxu0
    %v7800 = vadd.f32 %v7711, %v7799
    %7801 = vmatmul.bf16.gmra.mxu0 %v3505
    %v7802 = vpop.f32.mrf.mxu0
    %v7803 = vadd.f32 %v7714, %v7802
    %v7804 = vpop.f32.mrf.mxu0
    %v7805 = vadd.f32 %v7716, %v7804
    %7806 = vmatmul.bf16.gmra.mxu0 %v3509
    %v7807 = vpop.f32.mrf.mxu0
    %v7808 = vadd.f32 %v7719, %v7807
    %v7809 = vpop.f32.mrf.mxu0
    %v7810 = vadd.f32 %v7721, %v7809
    %7811 = vdwg.mxu0
    %7812 = vmatpush.bf16.msra.mxu0 %v4796
    %7813 = vmatpush.bf16.msra.mxu0 %v4788
    %7814 = vmatpush.bf16.msra.mxu0 %v4780
    %7815 = vmatpush.bf16.msra.mxu0 %v4772
    %7816 = vmatpush.bf16.msra.mxu0 %v4764
    %7817 = vmatpush.bf16.msra.mxu0 %v4756
    %7818 = vmatpush.bf16.msra.mxu0 %v4748
    %7819 = vmatpush.bf16.msra.mxu0 %v4740
    %7820 = vmatmul.bf16.gmra.mxu0 %v3450
    %v7821 = vpop.f32.mrf.mxu0
    %v7822 = vadd.f32 %v7733, %v7821
    %v7823 = vpop.f32.mrf.mxu0
    %v7824 = vadd.f32 %v7735, %v7823
    %7825 = vmatmul.bf16.gmra.mxu0 %v3454
    %v7826 = vpop.f32.mrf.mxu0
    %v7827 = vadd.f32 %v7738, %v7826
    %v7828 = vpop.f32.mrf.mxu0
    %v7829 = vadd.f32 %v7740, %v7828
    %7830 = vmatmul.bf16.gmra.mxu0 %v3458
    %v7831 = vpop.f32.mrf.mxu0
    %v7832 = vadd.f32 %v7743, %v7831
    %v7833 = vpop.f32.mrf.mxu0
    %v7834 = vadd.f32 %v7745, %v7833
    %7835 = vmatmul.bf16.gmra.mxu0 %v3462
    %v7836 = vpop.f32.mrf.mxu0
    %v7837 = vadd.f32 %v7748, %v7836
    %v7838 = vpop.f32.mrf.mxu0
    %v7839 = vadd.f32 %v7750, %v7838
    %7840 = vmatmul.bf16.gmra.mxu0 %v3466
    %v7841 = vpop.f32.mrf.mxu0
    %v7842 = vadd.f32 %v7753, %v7841
    %v7843 = vpop.f32.mrf.mxu0
    %v7844 = vadd.f32 %v7755, %v7843
    %7845 = vmatmul.bf16.gmra.mxu0 %v3470
    %v7846 = vpop.f32.mrf.mxu0
    %v7847 = vadd.f32 %v7758, %v7846
    %v7848 = vpop.f32.mrf.mxu0
    %v7849 = vadd.f32 %v7760, %v7848
    %7850 = vmatmul.bf16.gmra.mxu0 %v3474
    %v7851 = vpop.f32.mrf.mxu0
    %v7852 = vadd.f32 %v7763, %v7851
    %v7853 = vpop.f32.mrf.mxu0
    %v7854 = vadd.f32 %v7765, %v7853
    %7855 = vmatmul.bf16.gmra.mxu0 %v3478
    %v7856 = vpop.f32.mrf.mxu0
    %v7857 = vadd.f32 %v7768, %v7856
    %v7858 = vpop.f32.mrf.mxu0
    %v7859 = vadd.f32 %v7770, %v7858
    %7860 = vmatmul.bf16.gmra.mxu0 %v3482
    %v7861 = vpop.f32.mrf.mxu0
    %v7862 = vadd.f32 %v7773, %v7861
    %v7863 = vpop.f32.mrf.mxu0
    %v7864 = vadd.f32 %v7775, %v7863
    %7865 = vmatmul.bf16.gmra.mxu0 %v3486
    %v7866 = vpop.f32.mrf.mxu0
    %v7867 = vadd.f32 %v7778, %v7866
    %v7868 = vpop.f32.mrf.mxu0
    %v7869 = vadd.f32 %v7780, %v7868
    %7870 = vmatmul.bf16.gmra.mxu0 %v3490
    %v7871 = vpop.f32.mrf.mxu0
    %v7872 = vadd.f32 %v7783, %v7871
    %v7873 = vpop.f32.mrf.mxu0
    %v7874 = vadd.f32 %v7785, %v7873
    %7875 = vmatmul.bf16.gmra.mxu0 %v3494
    %v7876 = vpop.f32.mrf.mxu0
    %v7877 = vadd.f32 %v7788, %v7876
    %v7878 = vpop.f32.mrf.mxu0
    %v7879 = vadd.f32 %v7790, %v7878
    %7880 = vmatmul.bf16.gmra.mxu0 %v3498
    %v7881 = vpop.f32.mrf.mxu0
    %v7882 = vadd.f32 %v7793, %v7881
    %v7883 = vpop.f32.mrf.mxu0
    %v7884 = vadd.f32 %v7795, %v7883
    %7885 = vmatmul.bf16.gmra.mxu0 %v3502
    %v7886 = vpop.f32.mrf.mxu0
    %v7887 = vadd.f32 %v7798, %v7886
    %v7888 = vpop.f32.mrf.mxu0
    %v7889 = vadd.f32 %v7800, %v7888
    %7890 = vmatmul.bf16.gmra.mxu0 %v3506
    %v7891 = vpop.f32.mrf.mxu0
    %v7892 = vadd.f32 %v7803, %v7891
    %v7893 = vpop.f32.mrf.mxu0
    %v7894 = vadd.f32 %v7805, %v7893
    %7895 = vmatmul.bf16.gmra.mxu0 %v3510
    %v7896 = vpop.f32.mrf.mxu0
    %v7897 = vadd.f32 %v7808, %v7896
    %v7898 = vpop.f32.mrf.mxu0
    %v7899 = vadd.f32 %v7810, %v7898
    %7900 = vdwg.mxu0
    %v7901 = vadd.f32 %v5330, %v5332
    %v7902 = vadd.f32 %v7901, %v5335
    %v7903 = vadd.f32 %v7902, %v5337
    %v7904 = vadd.f32 %v7903, %v5340
    %v7905 = vadd.f32 %v7904, %v5342
    %v7906 = vadd.f32 %v7905, %v5345
    %v7907 = vadd.f32 %v7906, %v5347
    %v7908 = vadd.f32 %v7907, %v5350
    %v7909 = vadd.f32 %v7908, %v5352
    %v7910 = vadd.f32 %v7909, %v5355
    %v7911 = vadd.f32 %v7910, %v5357
    %v7912 = vadd.f32 %v7911, %v5360
    %v7913 = vadd.f32 %v7912, %v5362
    %v7914 = vadd.f32 %v7913, %v5365
    %v7915 = vadd.f32 %v7914, %v5367
    %v7916 = vadd.f32 %v7915, %v5370
    %v7917 = vadd.f32 %v7916, %v5372
    %v7918 = vadd.f32 %v7917, %v5375
    %v7919 = vadd.f32 %v7918, %v5377
    %v7920 = vadd.f32 %v7919, %v5380
    %v7921 = vadd.f32 %v7920, %v5382
    %v7922 = vadd.f32 %v7921, %v5385
    %v7923 = vadd.f32 %v7922, %v5387
    %v7924 = vadd.f32 %v7923, %v5390
    %v7925 = vadd.f32 %v7924, %v5392
    %v7926 = vadd.f32 %v7925, %v5395
    %v7927 = vadd.f32 %v7926, %v5397
    %v7928 = vadd.f32 %v7927, %v5400
    %v7929 = vadd.f32 %v7928, %v5402
    %v7930 = vadd.f32 %v7929, %v5405
    %v7931 = vadd.f32 %v7930, %v5407
    %v7932 = vrot.slane %v7931, 4
    %v7933 = vadd.f32 %v7931, %v7932
    %v7934 = vrot.slane %v7933, 2
    %v7935 = vadd.f32 %v7933, %v7934
    %v7936 = vrot.slane %v7935, 1
    %v7937 = vadd.f32 %v7935, %v7936
    %v7938 = vadd.f32 %v5686, %v5688
    %v7939 = vadd.f32 %v7938, %v5691
    %v7940 = vadd.f32 %v7939, %v5693
    %v7941 = vadd.f32 %v7940, %v5696
    %v7942 = vadd.f32 %v7941, %v5698
    %v7943 = vadd.f32 %v7942, %v5701
    %v7944 = vadd.f32 %v7943, %v5703
    %v7945 = vadd.f32 %v7944, %v5706
    %v7946 = vadd.f32 %v7945, %v5708
    %v7947 = vadd.f32 %v7946, %v5711
    %v7948 = vadd.f32 %v7947, %v5713
    %v7949 = vadd.f32 %v7948, %v5716
    %v7950 = vadd.f32 %v7949, %v5718
    %v7951 = vadd.f32 %v7950, %v5721
    %v7952 = vadd.f32 %v7951, %v5723
    %v7953 = vadd.f32 %v7952, %v5726
    %v7954 = vadd.f32 %v7953, %v5728
    %v7955 = vadd.f32 %v7954, %v5731
    %v7956 = vadd.f32 %v7955, %v5733
    %v7957 = vadd.f32 %v7956, %v5736
    %v7958 = vadd.f32 %v7957, %v5738
    %v7959 = vadd.f32 %v7958, %v5741
    %v7960 = vadd.f32 %v7959, %v5743
    %v7961 = vadd.f32 %v7960, %v5746
    %v7962 = vadd.f32 %v7961, %v5748
    %v7963 = vadd.f32 %v7962, %v5751
    %v7964 = vadd.f32 %v7963, %v5753
    %v7965 = vadd.f32 %v7964, %v5756
    %v7966 = vadd.f32 %v7965, %v5758
    %v7967 = vadd.f32 %v7966, %v5761
    %v7968 = vadd.f32 %v7967, %v5763
    %v7969 = vrot.slane %v7968, 4
    %v7970 = vadd.f32 %v7968, %v7969
    %v7971 = vrot.slane %v7970, 2
    %v7972 = vadd.f32 %v7970, %v7971
    %v7973 = vrot.slane %v7972, 1
    %v7974 = vadd.f32 %v7972, %v7973
    %v7975 = vadd.f32 %v6042, %v6044
    %v7976 = vadd.f32 %v7975, %v6047
    %v7977 = vadd.f32 %v7976, %v6049
    %v7978 = vadd.f32 %v7977, %v6052
    %v7979 = vadd.f32 %v7978, %v6054
    %v7980 = vadd.f32 %v7979, %v6057
    %v7981 = vadd.f32 %v7980, %v6059
    %v7982 = vadd.f32 %v7981, %v6062
    %v7983 = vadd.f32 %v7982, %v6064
    %v7984 = vadd.f32 %v7983, %v6067
    %v7985 = vadd.f32 %v7984, %v6069
    %v7986 = vadd.f32 %v7985, %v6072
    %v7987 = vadd.f32 %v7986, %v6074
    %v7988 = vadd.f32 %v7987, %v6077
    %v7989 = vadd.f32 %v7988, %v6079
    %v7990 = vadd.f32 %v7989, %v6082
    %v7991 = vadd.f32 %v7990, %v6084
    %v7992 = vadd.f32 %v7991, %v6087
    %v7993 = vadd.f32 %v7992, %v6089
    %v7994 = vadd.f32 %v7993, %v6092
    %v7995 = vadd.f32 %v7994, %v6094
    %v7996 = vadd.f32 %v7995, %v6097
    %v7997 = vadd.f32 %v7996, %v6099
    %v7998 = vadd.f32 %v7997, %v6102
    %v7999 = vadd.f32 %v7998, %v6104
    %v8000 = vadd.f32 %v7999, %v6107
    %v8001 = vadd.f32 %v8000, %v6109
    %v8002 = vadd.f32 %v8001, %v6112
    %v8003 = vadd.f32 %v8002, %v6114
    %v8004 = vadd.f32 %v8003, %v6117
    %v8005 = vadd.f32 %v8004, %v6119
    %v8006 = vrot.slane %v8005, 4
    %v8007 = vadd.f32 %v8005, %v8006
    %v8008 = vrot.slane %v8007, 2
    %v8009 = vadd.f32 %v8007, %v8008
    %v8010 = vrot.slane %v8009, 1
    %v8011 = vadd.f32 %v8009, %v8010
    %v8012 = vadd.f32 %v6398, %v6400
    %v8013 = vadd.f32 %v8012, %v6403
    %v8014 = vadd.f32 %v8013, %v6405
    %v8015 = vadd.f32 %v8014, %v6408
    %v8016 = vadd.f32 %v8015, %v6410
    %v8017 = vadd.f32 %v8016, %v6413
    %v8018 = vadd.f32 %v8017, %v6415
    %v8019 = vadd.f32 %v8018, %v6418
    %v8020 = vadd.f32 %v8019, %v6420
    %v8021 = vadd.f32 %v8020, %v6423
    %v8022 = vadd.f32 %v8021, %v6425
    %v8023 = vadd.f32 %v8022, %v6428
    %v8024 = vadd.f32 %v8023, %v6430
    %v8025 = vadd.f32 %v8024, %v6433
    %v8026 = vadd.f32 %v8025, %v6435
    %v8027 = vadd.f32 %v8026, %v6438
    %v8028 = vadd.f32 %v8027, %v6440
    %v8029 = vadd.f32 %v8028, %v6443
    %v8030 = vadd.f32 %v8029, %v6445
    %v8031 = vadd.f32 %v8030, %v6448
    %v8032 = vadd.f32 %v8031, %v6450
    %v8033 = vadd.f32 %v8032, %v6453
    %v8034 = vadd.f32 %v8033, %v6455
    %v8035 = vadd.f32 %v8034, %v6458
    %v8036 = vadd.f32 %v8035, %v6460
    %v8037 = vadd.f32 %v8036, %v6463
    %v8038 = vadd.f32 %v8037, %v6465
    %v8039 = vadd.f32 %v8038, %v6468
    %v8040 = vadd.f32 %v8039, %v6470
    %v8041 = vadd.f32 %v8040, %v6473
    %v8042 = vadd.f32 %v8041, %v6475
    %v8043 = vrot.slane %v8042, 4
    %v8044 = vadd.f32 %v8042, %v8043
    %v8045 = vrot.slane %v8044, 2
    %v8046 = vadd.f32 %v8044, %v8045
    %v8047 = vrot.slane %v8046, 1
    %v8048 = vadd.f32 %v8046, %v8047
    %v8049 = vadd.f32 %v6754, %v6756
    %v8050 = vadd.f32 %v8049, %v6759
    %v8051 = vadd.f32 %v8050, %v6761
    %v8052 = vadd.f32 %v8051, %v6764
    %v8053 = vadd.f32 %v8052, %v6766
    %v8054 = vadd.f32 %v8053, %v6769
    %v8055 = vadd.f32 %v8054, %v6771
    %v8056 = vadd.f32 %v8055, %v6774
    %v8057 = vadd.f32 %v8056, %v6776
    %v8058 = vadd.f32 %v8057, %v6779
    %v8059 = vadd.f32 %v8058, %v6781
    %v8060 = vadd.f32 %v8059, %v6784
    %v8061 = vadd.f32 %v8060, %v6786
    %v8062 = vadd.f32 %v8061, %v6789
    %v8063 = vadd.f32 %v8062, %v6791
    %v8064 = vadd.f32 %v8063, %v6794
    %v8065 = vadd.f32 %v8064, %v6796
    %v8066 = vadd.f32 %v8065, %v6799
    %v8067 = vadd.f32 %v8066, %v6801
    %v8068 = vadd.f32 %v8067, %v6804
    %v8069 = vadd.f32 %v8068, %v6806
    %v8070 = vadd.f32 %v8069, %v6809
    %v8071 = vadd.f32 %v8070, %v6811
    %v8072 = vadd.f32 %v8071, %v6814
    %v8073 = vadd.f32 %v8072, %v6816
    %v8074 = vadd.f32 %v8073, %v6819
    %v8075 = vadd.f32 %v8074, %v6821
    %v8076 = vadd.f32 %v8075, %v6824
    %v8077 = vadd.f32 %v8076, %v6826
    %v8078 = vadd.f32 %v8077, %v6829
    %v8079 = vadd.f32 %v8078, %v6831
    %v8080 = vrot.slane %v8079, 4
    %v8081 = vadd.f32 %v8079, %v8080
    %v8082 = vrot.slane %v8081, 2
    %v8083 = vadd.f32 %v8081, %v8082
    %v8084 = vrot.slane %v8083, 1
    %v8085 = vadd.f32 %v8083, %v8084
    %v8086 = vadd.f32 %v7110, %v7112
    %v8087 = vadd.f32 %v8086, %v7115
    %v8088 = vadd.f32 %v8087, %v7117
    %v8089 = vadd.f32 %v8088, %v7120
    %v8090 = vadd.f32 %v8089, %v7122
    %v8091 = vadd.f32 %v8090, %v7125
    %v8092 = vadd.f32 %v8091, %v7127
    %v8093 = vadd.f32 %v8092, %v7130
    %v8094 = vadd.f32 %v8093, %v7132
    %v8095 = vadd.f32 %v8094, %v7135
    %v8096 = vadd.f32 %v8095, %v7137
    %v8097 = vadd.f32 %v8096, %v7140
    %v8098 = vadd.f32 %v8097, %v7142
    %v8099 = vadd.f32 %v8098, %v7145
    %v8100 = vadd.f32 %v8099, %v7147
    %v8101 = vadd.f32 %v8100, %v7150
    %v8102 = vadd.f32 %v8101, %v7152
    %v8103 = vadd.f32 %v8102, %v7155
    %v8104 = vadd.f32 %v8103, %v7157
    %v8105 = vadd.f32 %v8104, %v7160
    %v8106 = vadd.f32 %v8105, %v7162
    %v8107 = vadd.f32 %v8106, %v7165
    %v8108 = vadd.f32 %v8107, %v7167
    %v8109 = vadd.f32 %v8108, %v7170
    %v8110 = vadd.f32 %v8109, %v7172
    %v8111 = vadd.f32 %v8110, %v7175
    %v8112 = vadd.f32 %v8111, %v7177
    %v8113 = vadd.f32 %v8112, %v7180
    %v8114 = vadd.f32 %v8113, %v7182
    %v8115 = vadd.f32 %v8114, %v7185
    %v8116 = vadd.f32 %v8115, %v7187
    %v8117 = vrot.slane %v8116, 4
    %v8118 = vadd.f32 %v8116, %v8117
    %v8119 = vrot.slane %v8118, 2
    %v8120 = vadd.f32 %v8118, %v8119
    %v8121 = vrot.slane %v8120, 1
    %v8122 = vadd.f32 %v8120, %v8121
    %v8123 = vadd.f32 %v7466, %v7468
    %v8124 = vadd.f32 %v8123, %v7471
    %v8125 = vadd.f32 %v8124, %v7473
    %v8126 = vadd.f32 %v8125, %v7476
    %v8127 = vadd.f32 %v8126, %v7478
    %v8128 = vadd.f32 %v8127, %v7481
    %v8129 = vadd.f32 %v8128, %v7483
    %v8130 = vadd.f32 %v8129, %v7486
    %v8131 = vadd.f32 %v8130, %v7488
    %v8132 = vadd.f32 %v8131, %v7491
    %v8133 = vadd.f32 %v8132, %v7493
    %v8134 = vadd.f32 %v8133, %v7496
    %v8135 = vadd.f32 %v8134, %v7498
    %v8136 = vadd.f32 %v8135, %v7501
    %v8137 = vadd.f32 %v8136, %v7503
    %v8138 = vadd.f32 %v8137, %v7506
    %v8139 = vadd.f32 %v8138, %v7508
    %v8140 = vadd.f32 %v8139, %v7511
    %v8141 = vadd.f32 %v8140, %v7513
    %v8142 = vadd.f32 %v8141, %v7516
    %v8143 = vadd.f32 %v8142, %v7518
    %v8144 = vadd.f32 %v8143, %v7521
    %v8145 = vadd.f32 %v8144, %v7523
    %v8146 = vadd.f32 %v8145, %v7526
    %v8147 = vadd.f32 %v8146, %v7528
    %v8148 = vadd.f32 %v8147, %v7531
    %v8149 = vadd.f32 %v8148, %v7533
    %v8150 = vadd.f32 %v8149, %v7536
    %v8151 = vadd.f32 %v8150, %v7538
    %v8152 = vadd.f32 %v8151, %v7541
    %v8153 = vadd.f32 %v8152, %v7543
    %v8154 = vrot.slane %v8153, 4
    %v8155 = vadd.f32 %v8153, %v8154
    %v8156 = vrot.slane %v8155, 2
    %v8157 = vadd.f32 %v8155, %v8156
    %v8158 = vrot.slane %v8157, 1
    %v8159 = vadd.f32 %v8157, %v8158
    %v8160 = vadd.f32 %v7822, %v7824
    %v8161 = vadd.f32 %v8160, %v7827
    %v8162 = vadd.f32 %v8161, %v7829
    %v8163 = vadd.f32 %v8162, %v7832
    %v8164 = vadd.f32 %v8163, %v7834
    %v8165 = vadd.f32 %v8164, %v7837
    %v8166 = vadd.f32 %v8165, %v7839
    %v8167 = vadd.f32 %v8166, %v7842
    %v8168 = vadd.f32 %v8167, %v7844
    %v8169 = vadd.f32 %v8168, %v7847
    %v8170 = vadd.f32 %v8169, %v7849
    %v8171 = vadd.f32 %v8170, %v7852
    %v8172 = vadd.f32 %v8171, %v7854
    %v8173 = vadd.f32 %v8172, %v7857
    %v8174 = vadd.f32 %v8173, %v7859
    %v8175 = vadd.f32 %v8174, %v7862
    %v8176 = vadd.f32 %v8175, %v7864
    %v8177 = vadd.f32 %v8176, %v7867
    %v8178 = vadd.f32 %v8177, %v7869
    %v8179 = vadd.f32 %v8178, %v7872
    %v8180 = vadd.f32 %v8179, %v7874
    %v8181 = vadd.f32 %v8180, %v7877
    %v8182 = vadd.f32 %v8181, %v7879
    %v8183 = vadd.f32 %v8182, %v7882
    %v8184 = vadd.f32 %v8183, %v7884
    %v8185 = vadd.f32 %v8184, %v7887
    %v8186 = vadd.f32 %v8185, %v7889
    %v8187 = vadd.f32 %v8186, %v7892
    %v8188 = vadd.f32 %v8187, %v7894
    %v8189 = vadd.f32 %v8188, %v7897
    %v8190 = vadd.f32 %v8189, %v7899
    %v8191 = vrot.slane %v8190, 4
    %v8192 = vadd.f32 %v8190, %v8191
    %v8193 = vrot.slane %v8192, 2
    %v8194 = vadd.f32 %v8192, %v8193
    %v8195 = vrot.slane %v8194, 1
    %v8196 = vadd.f32 %v8194, %v8195
    %v8197 = vmul.f32 %v7937, %v829
    %v8198 = vmul.f32 %v7974, %v829
    %v8199 = vmul.f32 %v8011, %v829
    %v8200 = vmul.f32 %v8048, %v829
    %v8201 = vmul.f32 %v8085, %v829
    %v8202 = vmul.f32 %v8122, %v829
    %v8203 = vmul.f32 %v8159, %v829
    %v8204 = vmul.f32 %v8196, %v829
    %v8205 = vmul.f32 %v5330, %v5330
    %v8206 = vmul.f32 %v5686, %v5686
    %v8207 = vmul.f32 %v6042, %v6042
    %v8208 = vmul.f32 %v6398, %v6398
    %v8209 = vmul.f32 %v6754, %v6754
    %v8210 = vmul.f32 %v7110, %v7110
    %v8211 = vmul.f32 %v7466, %v7466
    %v8212 = vmul.f32 %v7822, %v7822
    %v8213 = vmul.f32 %v5332, %v5332
    %v8214 = vmul.f32 %v5688, %v5688
    %v8215 = vmul.f32 %v6044, %v6044
    %v8216 = vmul.f32 %v6400, %v6400
    %v8217 = vmul.f32 %v6756, %v6756
    %v8218 = vmul.f32 %v7112, %v7112
    %v8219 = vmul.f32 %v7468, %v7468
    %v8220 = vmul.f32 %v7824, %v7824
    %v8221 = vmul.f32 %v5335, %v5335
    %v8222 = vmul.f32 %v5691, %v5691
    %v8223 = vmul.f32 %v6047, %v6047
    %v8224 = vmul.f32 %v6403, %v6403
    %v8225 = vmul.f32 %v6759, %v6759
    %v8226 = vmul.f32 %v7115, %v7115
    %v8227 = vmul.f32 %v7471, %v7471
    %v8228 = vmul.f32 %v7827, %v7827
    %v8229 = vmul.f32 %v5337, %v5337
    %v8230 = vmul.f32 %v5693, %v5693
    %v8231 = vmul.f32 %v6049, %v6049
    %v8232 = vmul.f32 %v6405, %v6405
    %v8233 = vmul.f32 %v6761, %v6761
    %v8234 = vmul.f32 %v7117, %v7117
    %v8235 = vmul.f32 %v7473, %v7473
    %v8236 = vmul.f32 %v7829, %v7829
    %v8237 = vmul.f32 %v5340, %v5340
    %v8238 = vmul.f32 %v5696, %v5696
    %v8239 = vmul.f32 %v6052, %v6052
    %v8240 = vmul.f32 %v6408, %v6408
    %v8241 = vmul.f32 %v6764, %v6764
    %v8242 = vmul.f32 %v7120, %v7120
    %v8243 = vmul.f32 %v7476, %v7476
    %v8244 = vmul.f32 %v7832, %v7832
    %v8245 = vmul.f32 %v5342, %v5342
    %v8246 = vmul.f32 %v5698, %v5698
    %v8247 = vmul.f32 %v6054, %v6054
    %v8248 = vmul.f32 %v6410, %v6410
    %v8249 = vmul.f32 %v6766, %v6766
    %v8250 = vmul.f32 %v7122, %v7122
    %v8251 = vmul.f32 %v7478, %v7478
    %v8252 = vmul.f32 %v7834, %v7834
    %v8253 = vmul.f32 %v5345, %v5345
    %v8254 = vmul.f32 %v5701, %v5701
    %v8255 = vmul.f32 %v6057, %v6057
    %v8256 = vmul.f32 %v6413, %v6413
    %v8257 = vmul.f32 %v6769, %v6769
    %v8258 = vmul.f32 %v7125, %v7125
    %v8259 = vmul.f32 %v7481, %v7481
    %v8260 = vmul.f32 %v7837, %v7837
    %v8261 = vmul.f32 %v5347, %v5347
    %v8262 = vmul.f32 %v5703, %v5703
    %v8263 = vmul.f32 %v6059, %v6059
    %v8264 = vmul.f32 %v6415, %v6415
    %v8265 = vmul.f32 %v6771, %v6771
    %v8266 = vmul.f32 %v7127, %v7127
    %v8267 = vmul.f32 %v7483, %v7483
    %v8268 = vmul.f32 %v7839, %v7839
    %v8269 = vmul.f32 %v5350, %v5350
    %v8270 = vmul.f32 %v5706, %v5706
    %v8271 = vmul.f32 %v6062, %v6062
    %v8272 = vmul.f32 %v6418, %v6418
    %v8273 = vmul.f32 %v6774, %v6774
    %v8274 = vmul.f32 %v7130, %v7130
    %v8275 = vmul.f32 %v7486, %v7486
    %v8276 = vmul.f32 %v7842, %v7842
    %v8277 = vmul.f32 %v5352, %v5352
    %v8278 = vmul.f32 %v5708, %v5708
    %v8279 = vmul.f32 %v6064, %v6064
    %v8280 = vmul.f32 %v6420, %v6420
    %v8281 = vmul.f32 %v6776, %v6776
    %v8282 = vmul.f32 %v7132, %v7132
    %v8283 = vmul.f32 %v7488, %v7488
    %v8284 = vmul.f32 %v7844, %v7844
    %v8285 = vmul.f32 %v5355, %v5355
    %v8286 = vmul.f32 %v5711, %v5711
    %v8287 = vmul.f32 %v6067, %v6067
    %v8288 = vmul.f32 %v6423, %v6423
    %v8289 = vmul.f32 %v6779, %v6779
    %v8290 = vmul.f32 %v7135, %v7135
    %v8291 = vmul.f32 %v7491, %v7491
    %v8292 = vmul.f32 %v7847, %v7847
    %v8293 = vmul.f32 %v5357, %v5357
    %v8294 = vmul.f32 %v5713, %v5713
    %v8295 = vmul.f32 %v6069, %v6069
    %v8296 = vmul.f32 %v6425, %v6425
    %v8297 = vmul.f32 %v6781, %v6781
    %v8298 = vmul.f32 %v7137, %v7137
    %v8299 = vmul.f32 %v7493, %v7493
    %v8300 = vmul.f32 %v7849, %v7849
    %v8301 = vmul.f32 %v5360, %v5360
    %v8302 = vmul.f32 %v5716, %v5716
    %v8303 = vmul.f32 %v6072, %v6072
    %v8304 = vmul.f32 %v6428, %v6428
    %v8305 = vmul.f32 %v6784, %v6784
    %v8306 = vmul.f32 %v7140, %v7140
    %v8307 = vmul.f32 %v7496, %v7496
    %v8308 = vmul.f32 %v7852, %v7852
    %v8309 = vmul.f32 %v5362, %v5362
    %v8310 = vmul.f32 %v5718, %v5718
    %v8311 = vmul.f32 %v6074, %v6074
    %v8312 = vmul.f32 %v6430, %v6430
    %v8313 = vmul.f32 %v6786, %v6786
    %v8314 = vmul.f32 %v7142, %v7142
    %v8315 = vmul.f32 %v7498, %v7498
    %v8316 = vmul.f32 %v7854, %v7854
    %v8317 = vmul.f32 %v5365, %v5365
    %v8318 = vmul.f32 %v5721, %v5721
    %v8319 = vmul.f32 %v6077, %v6077
    %v8320 = vmul.f32 %v6433, %v6433
    %v8321 = vmul.f32 %v6789, %v6789
    %v8322 = vmul.f32 %v7145, %v7145
    %v8323 = vmul.f32 %v7501, %v7501
    %v8324 = vmul.f32 %v7857, %v7857
    %v8325 = vmul.f32 %v5367, %v5367
    %v8326 = vmul.f32 %v5723, %v5723
    %v8327 = vmul.f32 %v6079, %v6079
    %v8328 = vmul.f32 %v6435, %v6435
    %v8329 = vmul.f32 %v6791, %v6791
    %v8330 = vmul.f32 %v7147, %v7147
    %v8331 = vmul.f32 %v7503, %v7503
    %v8332 = vmul.f32 %v7859, %v7859
    %v8333 = vmul.f32 %v5370, %v5370
    %v8334 = vmul.f32 %v5726, %v5726
    %v8335 = vmul.f32 %v6082, %v6082
    %v8336 = vmul.f32 %v6438, %v6438
    %v8337 = vmul.f32 %v6794, %v6794
    %v8338 = vmul.f32 %v7150, %v7150
    %v8339 = vmul.f32 %v7506, %v7506
    %v8340 = vmul.f32 %v7862, %v7862
    %v8341 = vmul.f32 %v5372, %v5372
    %v8342 = vmul.f32 %v5728, %v5728
    %v8343 = vmul.f32 %v6084, %v6084
    %v8344 = vmul.f32 %v6440, %v6440
    %v8345 = vmul.f32 %v6796, %v6796
    %v8346 = vmul.f32 %v7152, %v7152
    %v8347 = vmul.f32 %v7508, %v7508
    %v8348 = vmul.f32 %v7864, %v7864
    %v8349 = vmul.f32 %v5375, %v5375
    %v8350 = vmul.f32 %v5731, %v5731
    %v8351 = vmul.f32 %v6087, %v6087
    %v8352 = vmul.f32 %v6443, %v6443
    %v8353 = vmul.f32 %v6799, %v6799
    %v8354 = vmul.f32 %v7155, %v7155
    %v8355 = vmul.f32 %v7511, %v7511
    %v8356 = vmul.f32 %v7867, %v7867
    %v8357 = vmul.f32 %v5377, %v5377
    %v8358 = vmul.f32 %v5733, %v5733
    %v8359 = vmul.f32 %v6089, %v6089
    %v8360 = vmul.f32 %v6445, %v6445
    %v8361 = vmul.f32 %v6801, %v6801
    %v8362 = vmul.f32 %v7157, %v7157
    %v8363 = vmul.f32 %v7513, %v7513
    %v8364 = vmul.f32 %v7869, %v7869
    %v8365 = vmul.f32 %v5380, %v5380
    %v8366 = vmul.f32 %v5736, %v5736
    %v8367 = vmul.f32 %v6092, %v6092
    %v8368 = vmul.f32 %v6448, %v6448
    %v8369 = vmul.f32 %v6804, %v6804
    %v8370 = vmul.f32 %v7160, %v7160
    %v8371 = vmul.f32 %v7516, %v7516
    %v8372 = vmul.f32 %v7872, %v7872
    %v8373 = vmul.f32 %v5382, %v5382
    %v8374 = vmul.f32 %v5738, %v5738
    %v8375 = vmul.f32 %v6094, %v6094
    %v8376 = vmul.f32 %v6450, %v6450
    %v8377 = vmul.f32 %v6806, %v6806
    %v8378 = vmul.f32 %v7162, %v7162
    %v8379 = vmul.f32 %v7518, %v7518
    %v8380 = vmul.f32 %v7874, %v7874
    %v8381 = vmul.f32 %v5385, %v5385
    %v8382 = vmul.f32 %v5741, %v5741
    %v8383 = vmul.f32 %v6097, %v6097
    %v8384 = vmul.f32 %v6453, %v6453
    %v8385 = vmul.f32 %v6809, %v6809
    %v8386 = vmul.f32 %v7165, %v7165
    %v8387 = vmul.f32 %v7521, %v7521
    %v8388 = vmul.f32 %v7877, %v7877
    %v8389 = vmul.f32 %v5387, %v5387
    %v8390 = vmul.f32 %v5743, %v5743
    %v8391 = vmul.f32 %v6099, %v6099
    %v8392 = vmul.f32 %v6455, %v6455
    %v8393 = vmul.f32 %v6811, %v6811
    %v8394 = vmul.f32 %v7167, %v7167
    %v8395 = vmul.f32 %v7523, %v7523
    %v8396 = vmul.f32 %v7879, %v7879
    %v8397 = vmul.f32 %v5390, %v5390
    %v8398 = vmul.f32 %v5746, %v5746
    %v8399 = vmul.f32 %v6102, %v6102
    %v8400 = vmul.f32 %v6458, %v6458
    %v8401 = vmul.f32 %v6814, %v6814
    %v8402 = vmul.f32 %v7170, %v7170
    %v8403 = vmul.f32 %v7526, %v7526
    %v8404 = vmul.f32 %v7882, %v7882
    %v8405 = vmul.f32 %v5392, %v5392
    %v8406 = vmul.f32 %v5748, %v5748
    %v8407 = vmul.f32 %v6104, %v6104
    %v8408 = vmul.f32 %v6460, %v6460
    %v8409 = vmul.f32 %v6816, %v6816
    %v8410 = vmul.f32 %v7172, %v7172
    %v8411 = vmul.f32 %v7528, %v7528
    %v8412 = vmul.f32 %v7884, %v7884
    %v8413 = vmul.f32 %v5395, %v5395
    %v8414 = vmul.f32 %v5751, %v5751
    %v8415 = vmul.f32 %v6107, %v6107
    %v8416 = vmul.f32 %v6463, %v6463
    %v8417 = vmul.f32 %v6819, %v6819
    %v8418 = vmul.f32 %v7175, %v7175
    %v8419 = vmul.f32 %v7531, %v7531
    %v8420 = vmul.f32 %v7887, %v7887
    %v8421 = vmul.f32 %v5397, %v5397
    %v8422 = vmul.f32 %v5753, %v5753
    %v8423 = vmul.f32 %v6109, %v6109
    %v8424 = vmul.f32 %v6465, %v6465
    %v8425 = vmul.f32 %v6821, %v6821
    %v8426 = vmul.f32 %v7177, %v7177
    %v8427 = vmul.f32 %v7533, %v7533
    %v8428 = vmul.f32 %v7889, %v7889
    %v8429 = vmul.f32 %v5400, %v5400
    %v8430 = vmul.f32 %v5756, %v5756
    %v8431 = vmul.f32 %v6112, %v6112
    %v8432 = vmul.f32 %v6468, %v6468
    %v8433 = vmul.f32 %v6824, %v6824
    %v8434 = vmul.f32 %v7180, %v7180
    %v8435 = vmul.f32 %v7536, %v7536
    %v8436 = vmul.f32 %v7892, %v7892
    %v8437 = vmul.f32 %v5402, %v5402
    %v8438 = vmul.f32 %v5758, %v5758
    %v8439 = vmul.f32 %v6114, %v6114
    %v8440 = vmul.f32 %v6470, %v6470
    %v8441 = vmul.f32 %v6826, %v6826
    %v8442 = vmul.f32 %v7182, %v7182
    %v8443 = vmul.f32 %v7538, %v7538
    %v8444 = vmul.f32 %v7894, %v7894
    %v8445 = vmul.f32 %v5405, %v5405
    %v8446 = vmul.f32 %v5761, %v5761
    %v8447 = vmul.f32 %v6117, %v6117
    %v8448 = vmul.f32 %v6473, %v6473
    %v8449 = vmul.f32 %v6829, %v6829
    %v8450 = vmul.f32 %v7185, %v7185
    %v8451 = vmul.f32 %v7541, %v7541
    %v8452 = vmul.f32 %v7897, %v7897
    %v8453 = vmul.f32 %v5407, %v5407
    %v8454 = vmul.f32 %v5763, %v5763
    %v8455 = vmul.f32 %v6119, %v6119
    %v8456 = vmul.f32 %v6475, %v6475
    %v8457 = vmul.f32 %v6831, %v6831
    %v8458 = vmul.f32 %v7187, %v7187
    %v8459 = vmul.f32 %v7543, %v7543
    %v8460 = vmul.f32 %v7899, %v7899
    %v8461 = vadd.f32 %v8205, %v8213
    %v8462 = vadd.f32 %v8461, %v8221
    %v8463 = vadd.f32 %v8462, %v8229
    %v8464 = vadd.f32 %v8463, %v8237
    %v8465 = vadd.f32 %v8464, %v8245
    %v8466 = vadd.f32 %v8465, %v8253
    %v8467 = vadd.f32 %v8466, %v8261
    %v8468 = vadd.f32 %v8467, %v8269
    %v8469 = vadd.f32 %v8468, %v8277
    %v8470 = vadd.f32 %v8469, %v8285
    %v8471 = vadd.f32 %v8470, %v8293
    %v8472 = vadd.f32 %v8471, %v8301
    %v8473 = vadd.f32 %v8472, %v8309
    %v8474 = vadd.f32 %v8473, %v8317
    %v8475 = vadd.f32 %v8474, %v8325
    %v8476 = vadd.f32 %v8475, %v8333
    %v8477 = vadd.f32 %v8476, %v8341
    %v8478 = vadd.f32 %v8477, %v8349
    %v8479 = vadd.f32 %v8478, %v8357
    %v8480 = vadd.f32 %v8479, %v8365
    %v8481 = vadd.f32 %v8480, %v8373
    %v8482 = vadd.f32 %v8481, %v8381
    %v8483 = vadd.f32 %v8482, %v8389
    %v8484 = vadd.f32 %v8483, %v8397
    %v8485 = vadd.f32 %v8484, %v8405
    %v8486 = vadd.f32 %v8485, %v8413
    %v8487 = vadd.f32 %v8486, %v8421
    %v8488 = vadd.f32 %v8487, %v8429
    %v8489 = vadd.f32 %v8488, %v8437
    %v8490 = vadd.f32 %v8489, %v8445
    %v8491 = vadd.f32 %v8490, %v8453
    %v8492 = vrot.slane %v8491, 4
    %v8493 = vadd.f32 %v8491, %v8492
    %v8494 = vrot.slane %v8493, 2
    %v8495 = vadd.f32 %v8493, %v8494
    %v8496 = vrot.slane %v8495, 1
    %v8497 = vadd.f32 %v8495, %v8496
    %v8498 = vadd.f32 %v8206, %v8214
    %v8499 = vadd.f32 %v8498, %v8222
    %v8500 = vadd.f32 %v8499, %v8230
    %v8501 = vadd.f32 %v8500, %v8238
    %v8502 = vadd.f32 %v8501, %v8246
    %v8503 = vadd.f32 %v8502, %v8254
    %v8504 = vadd.f32 %v8503, %v8262
    %v8505 = vadd.f32 %v8504, %v8270
    %v8506 = vadd.f32 %v8505, %v8278
    %v8507 = vadd.f32 %v8506, %v8286
    %v8508 = vadd.f32 %v8507, %v8294
    %v8509 = vadd.f32 %v8508, %v8302
    %v8510 = vadd.f32 %v8509, %v8310
    %v8511 = vadd.f32 %v8510, %v8318
    %v8512 = vadd.f32 %v8511, %v8326
    %v8513 = vadd.f32 %v8512, %v8334
    %v8514 = vadd.f32 %v8513, %v8342
    %v8515 = vadd.f32 %v8514, %v8350
    %v8516 = vadd.f32 %v8515, %v8358
    %v8517 = vadd.f32 %v8516, %v8366
    %v8518 = vadd.f32 %v8517, %v8374
    %v8519 = vadd.f32 %v8518, %v8382
    %v8520 = vadd.f32 %v8519, %v8390
    %v8521 = vadd.f32 %v8520, %v8398
    %v8522 = vadd.f32 %v8521, %v8406
    %v8523 = vadd.f32 %v8522, %v8414
    %v8524 = vadd.f32 %v8523, %v8422
    %v8525 = vadd.f32 %v8524, %v8430
    %v8526 = vadd.f32 %v8525, %v8438
    %v8527 = vadd.f32 %v8526, %v8446
    %v8528 = vadd.f32 %v8527, %v8454
    %v8529 = vrot.slane %v8528, 4
    %v8530 = vadd.f32 %v8528, %v8529
    %v8531 = vrot.slane %v8530, 2
    %v8532 = vadd.f32 %v8530, %v8531
    %v8533 = vrot.slane %v8532, 1
    %v8534 = vadd.f32 %v8532, %v8533
    %v8535 = vadd.f32 %v8207, %v8215
    %v8536 = vadd.f32 %v8535, %v8223
    %v8537 = vadd.f32 %v8536, %v8231
    %v8538 = vadd.f32 %v8537, %v8239
    %v8539 = vadd.f32 %v8538, %v8247
    %v8540 = vadd.f32 %v8539, %v8255
    %v8541 = vadd.f32 %v8540, %v8263
    %v8542 = vadd.f32 %v8541, %v8271
    %v8543 = vadd.f32 %v8542, %v8279
    %v8544 = vadd.f32 %v8543, %v8287
    %v8545 = vadd.f32 %v8544, %v8295
    %v8546 = vadd.f32 %v8545, %v8303
    %v8547 = vadd.f32 %v8546, %v8311
    %v8548 = vadd.f32 %v8547, %v8319
    %v8549 = vadd.f32 %v8548, %v8327
    %v8550 = vadd.f32 %v8549, %v8335
    %v8551 = vadd.f32 %v8550, %v8343
    %v8552 = vadd.f32 %v8551, %v8351
    %v8553 = vadd.f32 %v8552, %v8359
    %v8554 = vadd.f32 %v8553, %v8367
    %v8555 = vadd.f32 %v8554, %v8375
    %v8556 = vadd.f32 %v8555, %v8383
    %v8557 = vadd.f32 %v8556, %v8391
    %v8558 = vadd.f32 %v8557, %v8399
    %v8559 = vadd.f32 %v8558, %v8407
    %v8560 = vadd.f32 %v8559, %v8415
    %v8561 = vadd.f32 %v8560, %v8423
    %v8562 = vadd.f32 %v8561, %v8431
    %v8563 = vadd.f32 %v8562, %v8439
    %v8564 = vadd.f32 %v8563, %v8447
    %v8565 = vadd.f32 %v8564, %v8455
    %v8566 = vrot.slane %v8565, 4
    %v8567 = vadd.f32 %v8565, %v8566
    %v8568 = vrot.slane %v8567, 2
    %v8569 = vadd.f32 %v8567, %v8568
    %v8570 = vrot.slane %v8569, 1
    %v8571 = vadd.f32 %v8569, %v8570
    %v8572 = vadd.f32 %v8208, %v8216
    %v8573 = vadd.f32 %v8572, %v8224
    %v8574 = vadd.f32 %v8573, %v8232
    %v8575 = vadd.f32 %v8574, %v8240
    %v8576 = vadd.f32 %v8575, %v8248
    %v8577 = vadd.f32 %v8576, %v8256
    %v8578 = vadd.f32 %v8577, %v8264
    %v8579 = vadd.f32 %v8578, %v8272
    %v8580 = vadd.f32 %v8579, %v8280
    %v8581 = vadd.f32 %v8580, %v8288
    %v8582 = vadd.f32 %v8581, %v8296
    %v8583 = vadd.f32 %v8582, %v8304
    %v8584 = vadd.f32 %v8583, %v8312
    %v8585 = vadd.f32 %v8584, %v8320
    %v8586 = vadd.f32 %v8585, %v8328
    %v8587 = vadd.f32 %v8586, %v8336
    %v8588 = vadd.f32 %v8587, %v8344
    %v8589 = vadd.f32 %v8588, %v8352
    %v8590 = vadd.f32 %v8589, %v8360
    %v8591 = vadd.f32 %v8590, %v8368
    %v8592 = vadd.f32 %v8591, %v8376
    %v8593 = vadd.f32 %v8592, %v8384
    %v8594 = vadd.f32 %v8593, %v8392
    %v8595 = vadd.f32 %v8594, %v8400
    %v8596 = vadd.f32 %v8595, %v8408
    %v8597 = vadd.f32 %v8596, %v8416
    %v8598 = vadd.f32 %v8597, %v8424
    %v8599 = vadd.f32 %v8598, %v8432
    %v8600 = vadd.f32 %v8599, %v8440
    %v8601 = vadd.f32 %v8600, %v8448
    %v8602 = vadd.f32 %v8601, %v8456
    %v8603 = vrot.slane %v8602, 4
    %v8604 = vadd.f32 %v8602, %v8603
    %v8605 = vrot.slane %v8604, 2
    %v8606 = vadd.f32 %v8604, %v8605
    %v8607 = vrot.slane %v8606, 1
    %v8608 = vadd.f32 %v8606, %v8607
    %v8609 = vadd.f32 %v8209, %v8217
    %v8610 = vadd.f32 %v8609, %v8225
    %v8611 = vadd.f32 %v8610, %v8233
    %v8612 = vadd.f32 %v8611, %v8241
    %v8613 = vadd.f32 %v8612, %v8249
    %v8614 = vadd.f32 %v8613, %v8257
    %v8615 = vadd.f32 %v8614, %v8265
    %v8616 = vadd.f32 %v8615, %v8273
    %v8617 = vadd.f32 %v8616, %v8281
    %v8618 = vadd.f32 %v8617, %v8289
    %v8619 = vadd.f32 %v8618, %v8297
    %v8620 = vadd.f32 %v8619, %v8305
    %v8621 = vadd.f32 %v8620, %v8313
    %v8622 = vadd.f32 %v8621, %v8321
    %v8623 = vadd.f32 %v8622, %v8329
    %v8624 = vadd.f32 %v8623, %v8337
    %v8625 = vadd.f32 %v8624, %v8345
    %v8626 = vadd.f32 %v8625, %v8353
    %v8627 = vadd.f32 %v8626, %v8361
    %v8628 = vadd.f32 %v8627, %v8369
    %v8629 = vadd.f32 %v8628, %v8377
    %v8630 = vadd.f32 %v8629, %v8385
    %v8631 = vadd.f32 %v8630, %v8393
    %v8632 = vadd.f32 %v8631, %v8401
    %v8633 = vadd.f32 %v8632, %v8409
    %v8634 = vadd.f32 %v8633, %v8417
    %v8635 = vadd.f32 %v8634, %v8425
    %v8636 = vadd.f32 %v8635, %v8433
    %v8637 = vadd.f32 %v8636, %v8441
    %v8638 = vadd.f32 %v8637, %v8449
    %v8639 = vadd.f32 %v8638, %v8457
    %v8640 = vrot.slane %v8639, 4
    %v8641 = vadd.f32 %v8639, %v8640
    %v8642 = vrot.slane %v8641, 2
    %v8643 = vadd.f32 %v8641, %v8642
    %v8644 = vrot.slane %v8643, 1
    %v8645 = vadd.f32 %v8643, %v8644
    %v8646 = vadd.f32 %v8210, %v8218
    %v8647 = vadd.f32 %v8646, %v8226
    %v8648 = vadd.f32 %v8647, %v8234
    %v8649 = vadd.f32 %v8648, %v8242
    %v8650 = vadd.f32 %v8649, %v8250
    %v8651 = vadd.f32 %v8650, %v8258
    %v8652 = vadd.f32 %v8651, %v8266
    %v8653 = vadd.f32 %v8652, %v8274
    %v8654 = vadd.f32 %v8653, %v8282
    %v8655 = vadd.f32 %v8654, %v8290
    %v8656 = vadd.f32 %v8655, %v8298
    %v8657 = vadd.f32 %v8656, %v8306
    %v8658 = vadd.f32 %v8657, %v8314
    %v8659 = vadd.f32 %v8658, %v8322
    %v8660 = vadd.f32 %v8659, %v8330
    %v8661 = vadd.f32 %v8660, %v8338
    %v8662 = vadd.f32 %v8661, %v8346
    %v8663 = vadd.f32 %v8662, %v8354
    %v8664 = vadd.f32 %v8663, %v8362
    %v8665 = vadd.f32 %v8664, %v8370
    %v8666 = vadd.f32 %v8665, %v8378
    %v8667 = vadd.f32 %v8666, %v8386
    %v8668 = vadd.f32 %v8667, %v8394
    %v8669 = vadd.f32 %v8668, %v8402
    %v8670 = vadd.f32 %v8669, %v8410
    %v8671 = vadd.f32 %v8670, %v8418
    %v8672 = vadd.f32 %v8671, %v8426
    %v8673 = vadd.f32 %v8672, %v8434
    %v8674 = vadd.f32 %v8673, %v8442
    %v8675 = vadd.f32 %v8674, %v8450
    %v8676 = vadd.f32 %v8675, %v8458
    %v8677 = vrot.slane %v8676, 4
    %v8678 = vadd.f32 %v8676, %v8677
    %v8679 = vrot.slane %v8678, 2
    %v8680 = vadd.f32 %v8678, %v8679
    %v8681 = vrot.slane %v8680, 1
    %v8682 = vadd.f32 %v8680, %v8681
    %v8683 = vadd.f32 %v8211, %v8219
    %v8684 = vadd.f32 %v8683, %v8227
    %v8685 = vadd.f32 %v8684, %v8235
    %v8686 = vadd.f32 %v8685, %v8243
    %v8687 = vadd.f32 %v8686, %v8251
    %v8688 = vadd.f32 %v8687, %v8259
    %v8689 = vadd.f32 %v8688, %v8267
    %v8690 = vadd.f32 %v8689, %v8275
    %v8691 = vadd.f32 %v8690, %v8283
    %v8692 = vadd.f32 %v8691, %v8291
    %v8693 = vadd.f32 %v8692, %v8299
    %v8694 = vadd.f32 %v8693, %v8307
    %v8695 = vadd.f32 %v8694, %v8315
    %v8696 = vadd.f32 %v8695, %v8323
    %v8697 = vadd.f32 %v8696, %v8331
    %v8698 = vadd.f32 %v8697, %v8339
    %v8699 = vadd.f32 %v8698, %v8347
    %v8700 = vadd.f32 %v8699, %v8355
    %v8701 = vadd.f32 %v8700, %v8363
    %v8702 = vadd.f32 %v8701, %v8371
    %v8703 = vadd.f32 %v8702, %v8379
    %v8704 = vadd.f32 %v8703, %v8387
    %v8705 = vadd.f32 %v8704, %v8395
    %v8706 = vadd.f32 %v8705, %v8403
    %v8707 = vadd.f32 %v8706, %v8411
    %v8708 = vadd.f32 %v8707, %v8419
    %v8709 = vadd.f32 %v8708, %v8427
    %v8710 = vadd.f32 %v8709, %v8435
    %v8711 = vadd.f32 %v8710, %v8443
    %v8712 = vadd.f32 %v8711, %v8451
    %v8713 = vadd.f32 %v8712, %v8459
    %v8714 = vrot.slane %v8713, 4
    %v8715 = vadd.f32 %v8713, %v8714
    %v8716 = vrot.slane %v8715, 2
    %v8717 = vadd.f32 %v8715, %v8716
    %v8718 = vrot.slane %v8717, 1
    %v8719 = vadd.f32 %v8717, %v8718
    %v8720 = vadd.f32 %v8212, %v8220
    %v8721 = vadd.f32 %v8720, %v8228
    %v8722 = vadd.f32 %v8721, %v8236
    %v8723 = vadd.f32 %v8722, %v8244
    %v8724 = vadd.f32 %v8723, %v8252
    %v8725 = vadd.f32 %v8724, %v8260
    %v8726 = vadd.f32 %v8725, %v8268
    %v8727 = vadd.f32 %v8726, %v8276
    %v8728 = vadd.f32 %v8727, %v8284
    %v8729 = vadd.f32 %v8728, %v8292
    %v8730 = vadd.f32 %v8729, %v8300
    %v8731 = vadd.f32 %v8730, %v8308
    %v8732 = vadd.f32 %v8731, %v8316
    %v8733 = vadd.f32 %v8732, %v8324
    %v8734 = vadd.f32 %v8733, %v8332
    %v8735 = vadd.f32 %v8734, %v8340
    %v8736 = vadd.f32 %v8735, %v8348
    %v8737 = vadd.f32 %v8736, %v8356
    %v8738 = vadd.f32 %v8737, %v8364
    %v8739 = vadd.f32 %v8738, %v8372
    %v8740 = vadd.f32 %v8739, %v8380
    %v8741 = vadd.f32 %v8740, %v8388
    %v8742 = vadd.f32 %v8741, %v8396
    %v8743 = vadd.f32 %v8742, %v8404
    %v8744 = vadd.f32 %v8743, %v8412
    %v8745 = vadd.f32 %v8744, %v8420
    %v8746 = vadd.f32 %v8745, %v8428
    %v8747 = vadd.f32 %v8746, %v8436
    %v8748 = vadd.f32 %v8747, %v8444
    %v8749 = vadd.f32 %v8748, %v8452
    %v8750 = vadd.f32 %v8749, %v8460
    %v8751 = vrot.slane %v8750, 4
    %v8752 = vadd.f32 %v8750, %v8751
    %v8753 = vrot.slane %v8752, 2
    %v8754 = vadd.f32 %v8752, %v8753
    %v8755 = vrot.slane %v8754, 1
    %v8756 = vadd.f32 %v8754, %v8755
    %v8757 = vmul.f32 %v8497, %v829
    %v8758 = vmul.f32 %v8534, %v829
    %v8759 = vmul.f32 %v8571, %v829
    %v8760 = vmul.f32 %v8608, %v829
    %v8761 = vmul.f32 %v8645, %v829
    %v8762 = vmul.f32 %v8682, %v829
    %v8763 = vmul.f32 %v8719, %v829
    %v8764 = vmul.f32 %v8756, %v829
    %v8765 = vmul.f32 %v8197, %v8197
    %v8766 = vmul.f32 %v8198, %v8198
    %v8767 = vmul.f32 %v8199, %v8199
    %v8768 = vmul.f32 %v8200, %v8200
    %v8769 = vmul.f32 %v8201, %v8201
    %v8770 = vmul.f32 %v8202, %v8202
    %v8771 = vmul.f32 %v8203, %v8203
    %v8772 = vmul.f32 %v8204, %v8204
    %v8773 = vsub.f32 %v8757, %v8765
    %v8774 = vsub.f32 %v8758, %v8766
    %v8775 = vsub.f32 %v8759, %v8767
    %v8776 = vsub.f32 %v8760, %v8768
    %v8777 = vsub.f32 %v8761, %v8769
    %v8778 = vsub.f32 %v8762, %v8770
    %v8779 = vsub.f32 %v8763, %v8771
    %v8780 = vsub.f32 %v8764, %v8772
    %v8781 = vadd.f32 %v8773, 0.8
    %v8782 = vadd.f32 %v8774, 0.8
    %v8783 = vadd.f32 %v8775, 0.8
    %v8784 = vadd.f32 %v8776, 0.8
    %v8785 = vadd.f32 %v8777, 0.8
    %v8786 = vadd.f32 %v8778, 0.8
    %v8787 = vadd.f32 %v8779, 0.8
    %v8788 = vadd.f32 %v8780, 0.8
    %v8789 = vrsqrt.pop %v8781
    %v8790 = vmul.f32 %v8789, %v8781
    %v8791 = vmul.f32 %v8790, %v8789
    %v8792 = vmul.f32 0.5, %v8791
    %v8793 = vsub.f32 1.5, %v8792
    %v8794 = vmul.f32 %v8789, %v8793
    %vm8795 = vweird.f32 %v8781
    %vm8796 = vweird.f32 %v8789
    %vm8797 = vmor %vm8795, %vm8796
    %v8798 = vsel %vm8797, %v8789, %v8794
    %v8799 = vrsqrt.pop %v8782
    %v8800 = vmul.f32 %v8799, %v8782
    %v8801 = vmul.f32 %v8800, %v8799
    %v8802 = vmul.f32 0.5, %v8801
    %v8803 = vsub.f32 1.5, %v8802
    %v8804 = vmul.f32 %v8799, %v8803
    %vm8805 = vweird.f32 %v8782
    %vm8806 = vweird.f32 %v8799
    %vm8807 = vmor %vm8805, %vm8806
    %v8808 = vsel %vm8807, %v8799, %v8804
    %v8809 = vrsqrt.pop %v8783
    %v8810 = vmul.f32 %v8809, %v8783
    %v8811 = vmul.f32 %v8810, %v8809
    %v8812 = vmul.f32 0.5, %v8811
    %v8813 = vsub.f32 1.5, %v8812
    %v8814 = vmul.f32 %v8809, %v8813
    %vm8815 = vweird.f32 %v8783
    %vm8816 = vweird.f32 %v8809
    %vm8817 = vmor %vm8815, %vm8816
    %v8818 = vsel %vm8817, %v8809, %v8814
    %v8819 = vrsqrt.pop %v8784
    %v8820 = vmul.f32 %v8819, %v8784
    %v8821 = vmul.f32 %v8820, %v8819
    %v8822 = vmul.f32 0.5, %v8821
    %v8823 = vsub.f32 1.5, %v8822
    %v8824 = vmul.f32 %v8819, %v8823
    %vm8825 = vweird.f32 %v8784
    %vm8826 = vweird.f32 %v8819
    %vm8827 = vmor %vm8825, %vm8826
    %v8828 = vsel %vm8827, %v8819, %v8824
    %v8829 = vrsqrt.pop %v8785
    %v8830 = vmul.f32 %v8829, %v8785
    %v8831 = vmul.f32 %v8830, %v8829
    %v8832 = vmul.f32 0.5, %v8831
    %v8833 = vsub.f32 1.5, %v8832
    %v8834 = vmul.f32 %v8829, %v8833
    %vm8835 = vweird.f32 %v8785
    %vm8836 = vweird.f32 %v8829
    %vm8837 = vmor %vm8835, %vm8836
    %v8838 = vsel %vm8837, %v8829, %v8834
    %v8839 = vrsqrt.pop %v8786
    %v8840 = vmul.f32 %v8839, %v8786
    %v8841 = vmul.f32 %v8840, %v8839
    %v8842 = vmul.f32 0.5, %v8841
    %v8843 = vsub.f32 1.5, %v8842
    %v8844 = vmul.f32 %v8839, %v8843
    %vm8845 = vweird.f32 %v8786
    %vm8846 = vweird.f32 %v8839
    %vm8847 = vmor %vm8845, %vm8846
    %v8848 = vsel %vm8847, %v8839, %v8844
    %v8849 = vrsqrt.pop %v8787
    %v8850 = vmul.f32 %v8849, %v8787
    %v8851 = vmul.f32 %v8850, %v8849
    %v8852 = vmul.f32 0.5, %v8851
    %v8853 = vsub.f32 1.5, %v8852
    %v8854 = vmul.f32 %v8849, %v8853
    %vm8855 = vweird.f32 %v8787
    %vm8856 = vweird.f32 %v8849
    %vm8857 = vmor %vm8855, %vm8856
    %v8858 = vsel %vm8857, %v8849, %v8854
    %v8859 = vrsqrt.pop %v8788
    %v8860 = vmul.f32 %v8859, %v8788
    %v8861 = vmul.f32 %v8860, %v8859
    %v8862 = vmul.f32 0.5, %v8861
    %v8863 = vsub.f32 1.5, %v8862
    %v8864 = vmul.f32 %v8859, %v8863
    %vm8865 = vweird.f32 %v8788
    %vm8866 = vweird.f32 %v8859
    %vm8867 = vmor %vm8865, %vm8866
    %v8868 = vsel %vm8867, %v8859, %v8864
    %v8870 = vperm.slane %v3771, 0
    %v8871 = vperm.slane %v3771, 1
    %v8872 = vperm.slane %v3771, 2
    %v8873 = vperm.slane %v3771, 3
    %v8874 = vperm.slane %v3771, 4
    %v8875 = vperm.slane %v3771, 5
    %v8876 = vperm.slane %v3771, 6
    %v8877 = vperm.slane %v3771, 7
    %v8886 = vmul.f32 %v8798, %v8870
    %v8887 = vmul.f32 %v8808, %v8871
    %v8888 = vmul.f32 %v8818, %v8872
    %v8889 = vmul.f32 %v8828, %v8873
    %v8890 = vmul.f32 %v8838, %v8874
    %v8891 = vmul.f32 %v8848, %v8875
    %v8892 = vmul.f32 %v8858, %v8876
    %v8893 = vmul.f32 %v8868, %v8877
    %v8894 = vmul.f32 %v8197, %v8886
    %v8895 = vmul.f32 %v8198, %v8887
    %v8896 = vmul.f32 %v8199, %v8888
    %v8897 = vmul.f32 %v8200, %v8889
    %v8898 = vmul.f32 %v8201, %v8890
    %v8899 = vmul.f32 %v8202, %v8891
    %v8900 = vmul.f32 %v8203, %v8892
    %v8901 = vmul.f32 %v8204, %v8893
    %v8910 = vrot.slane %v8895, 7
    %v8911 = vrot.slane %v8896, 6
    %v8912 = vrot.slane %v8897, 5
    %v8913 = vrot.slane %v8898, 4
    %v8914 = vrot.slane %v8899, 3
    %v8915 = vrot.slane %v8900, 2
    %v8916 = vrot.slane %v8901, 1
    %v8917 = vsel %vm1010, %v8894, %v8910
    %v8918 = vsel %vm2916, %v8911, %v8912
    %v8919 = vsel %vm2918, %v8917, %v8918
    %vm8920 = vcmask 1044484
    %v8921 = vsel %vm8920, %v8913, %v8914
    %vm8922 = vcmask 1046534
    %v8923 = vsel %vm8922, %v8915, %v8916
    %vm8924 = vcmask 1045508
    %v8925 = vsel %vm8924, %v8921, %v8923
    %v8926 = vsel %vm300, %v8919, %v8925
    %v8928 = vsub.f32 %v3772, %v8926
    %v8929 = vperm.slane %v8886, 0
    %v8930 = vperm.slane %v8887, 0
    %v8931 = vperm.slane %v8888, 0
    %v8932 = vperm.slane %v8889, 0
    %v8933 = vperm.slane %v8890, 0
    %v8934 = vperm.slane %v8891, 0
    %v8935 = vperm.slane %v8892, 0
    %v8936 = vperm.slane %v8893, 0
    %v8937 = vmul.f32 %v5330, %v8929
    %v8938 = vmul.f32 %v5686, %v8930
    %v8939 = vmul.f32 %v6042, %v8931
    %v8940 = vmul.f32 %v6398, %v8932
    %v8941 = vmul.f32 %v6754, %v8933
    %v8942 = vmul.f32 %v7110, %v8934
    %v8943 = vmul.f32 %v7466, %v8935
    %v8944 = vmul.f32 %v7822, %v8936
    %v8945 = vmul.f32 %v5332, %v8929
    %v8946 = vmul.f32 %v5688, %v8930
    %v8947 = vmul.f32 %v6044, %v8931
    %v8948 = vmul.f32 %v6400, %v8932
    %v8949 = vmul.f32 %v6756, %v8933
    %v8950 = vmul.f32 %v7112, %v8934
    %v8951 = vmul.f32 %v7468, %v8935
    %v8952 = vmul.f32 %v7824, %v8936
    %v8953 = vmul.f32 %v5335, %v8929
    %v8954 = vmul.f32 %v5691, %v8930
    %v8955 = vmul.f32 %v6047, %v8931
    %v8956 = vmul.f32 %v6403, %v8932
    %v8957 = vmul.f32 %v6759, %v8933
    %v8958 = vmul.f32 %v7115, %v8934
    %v8959 = vmul.f32 %v7471, %v8935
    %v8960 = vmul.f32 %v7827, %v8936
    %v8961 = vmul.f32 %v5337, %v8929
    %v8962 = vmul.f32 %v5693, %v8930
    %v8963 = vmul.f32 %v6049, %v8931
    %v8964 = vmul.f32 %v6405, %v8932
    %v8965 = vmul.f32 %v6761, %v8933
    %v8966 = vmul.f32 %v7117, %v8934
    %v8967 = vmul.f32 %v7473, %v8935
    %v8968 = vmul.f32 %v7829, %v8936
    %v8969 = vmul.f32 %v5340, %v8929
    %v8970 = vmul.f32 %v5696, %v8930
    %v8971 = vmul.f32 %v6052, %v8931
    %v8972 = vmul.f32 %v6408, %v8932
    %v8973 = vmul.f32 %v6764, %v8933
    %v8974 = vmul.f32 %v7120, %v8934
    %v8975 = vmul.f32 %v7476, %v8935
    %v8976 = vmul.f32 %v7832, %v8936
    %v8977 = vmul.f32 %v5342, %v8929
    %v8978 = vmul.f32 %v5698, %v8930
    %v8979 = vmul.f32 %v6054, %v8931
    %v8980 = vmul.f32 %v6410, %v8932
    %v8981 = vmul.f32 %v6766, %v8933
    %v8982 = vmul.f32 %v7122, %v8934
    %v8983 = vmul.f32 %v7478, %v8935
    %v8984 = vmul.f32 %v7834, %v8936
    %v8985 = vmul.f32 %v5345, %v8929
    %v8986 = vmul.f32 %v5701, %v8930
    %v8987 = vmul.f32 %v6057, %v8931
    %v8988 = vmul.f32 %v6413, %v8932
    %v8989 = vmul.f32 %v6769, %v8933
    %v8990 = vmul.f32 %v7125, %v8934
    %v8991 = vmul.f32 %v7481, %v8935
    %v8992 = vmul.f32 %v7837, %v8936
    %v8993 = vmul.f32 %v5347, %v8929
    %v8994 = vmul.f32 %v5703, %v8930
    %v8995 = vmul.f32 %v6059, %v8931
    %v8996 = vmul.f32 %v6415, %v8932
    %v8997 = vmul.f32 %v6771, %v8933
    %v8998 = vmul.f32 %v7127, %v8934
    %v8999 = vmul.f32 %v7483, %v8935
    %v9000 = vmul.f32 %v7839, %v8936
    %v9001 = vmul.f32 %v5350, %v8929
    %v9002 = vmul.f32 %v5706, %v8930
    %v9003 = vmul.f32 %v6062, %v8931
    %v9004 = vmul.f32 %v6418, %v8932
    %v9005 = vmul.f32 %v6774, %v8933
    %v9006 = vmul.f32 %v7130, %v8934
    %v9007 = vmul.f32 %v7486, %v8935
    %v9008 = vmul.f32 %v7842, %v8936
    %v9009 = vmul.f32 %v5352, %v8929
    %v9010 = vmul.f32 %v5708, %v8930
    %v9011 = vmul.f32 %v6064, %v8931
    %v9012 = vmul.f32 %v6420, %v8932
    %v9013 = vmul.f32 %v6776, %v8933
    %v9014 = vmul.f32 %v7132, %v8934
    %v9015 = vmul.f32 %v7488, %v8935
    %v9016 = vmul.f32 %v7844, %v8936
    %v9017 = vmul.f32 %v5355, %v8929
    %v9018 = vmul.f32 %v5711, %v8930
    %v9019 = vmul.f32 %v6067, %v8931
    %v9020 = vmul.f32 %v6423, %v8932
    %v9021 = vmul.f32 %v6779, %v8933
    %v9022 = vmul.f32 %v7135, %v8934
    %v9023 = vmul.f32 %v7491, %v8935
    %v9024 = vmul.f32 %v7847, %v8936
    %v9025 = vmul.f32 %v5357, %v8929
    %v9026 = vmul.f32 %v5713, %v8930
    %v9027 = vmul.f32 %v6069, %v8931
    %v9028 = vmul.f32 %v6425, %v8932
    %v9029 = vmul.f32 %v6781, %v8933
    %v9030 = vmul.f32 %v7137, %v8934
    %v9031 = vmul.f32 %v7493, %v8935
    %v9032 = vmul.f32 %v7849, %v8936
    %v9033 = vmul.f32 %v5360, %v8929
    %v9034 = vmul.f32 %v5716, %v8930
    %v9035 = vmul.f32 %v6072, %v8931
    %v9036 = vmul.f32 %v6428, %v8932
    %v9037 = vmul.f32 %v6784, %v8933
    %v9038 = vmul.f32 %v7140, %v8934
    %v9039 = vmul.f32 %v7496, %v8935
    %v9040 = vmul.f32 %v7852, %v8936
    %v9041 = vmul.f32 %v5362, %v8929
    %v9042 = vmul.f32 %v5718, %v8930
    %v9043 = vmul.f32 %v6074, %v8931
    %v9044 = vmul.f32 %v6430, %v8932
    %v9045 = vmul.f32 %v6786, %v8933
    %v9046 = vmul.f32 %v7142, %v8934
    %v9047 = vmul.f32 %v7498, %v8935
    %v9048 = vmul.f32 %v7854, %v8936
    %v9049 = vmul.f32 %v5365, %v8929
    %v9050 = vmul.f32 %v5721, %v8930
    %v9051 = vmul.f32 %v6077, %v8931
    %v9052 = vmul.f32 %v6433, %v8932
    %v9053 = vmul.f32 %v6789, %v8933
    %v9054 = vmul.f32 %v7145, %v8934
    %v9055 = vmul.f32 %v7501, %v8935
    %v9056 = vmul.f32 %v7857, %v8936
    %v9057 = vmul.f32 %v5367, %v8929
    %v9058 = vmul.f32 %v5723, %v8930
    %v9059 = vmul.f32 %v6079, %v8931
    %v9060 = vmul.f32 %v6435, %v8932
    %v9061 = vmul.f32 %v6791, %v8933
    %v9062 = vmul.f32 %v7147, %v8934
    %v9063 = vmul.f32 %v7503, %v8935
    %v9064 = vmul.f32 %v7859, %v8936
    %v9065 = vmul.f32 %v5370, %v8929
    %v9066 = vmul.f32 %v5726, %v8930
    %v9067 = vmul.f32 %v6082, %v8931
    %v9068 = vmul.f32 %v6438, %v8932
    %v9069 = vmul.f32 %v6794, %v8933
    %v9070 = vmul.f32 %v7150, %v8934
    %v9071 = vmul.f32 %v7506, %v8935
    %v9072 = vmul.f32 %v7862, %v8936
    %v9073 = vmul.f32 %v5372, %v8929
    %v9074 = vmul.f32 %v5728, %v8930
    %v9075 = vmul.f32 %v6084, %v8931
    %v9076 = vmul.f32 %v6440, %v8932
    %v9077 = vmul.f32 %v6796, %v8933
    %v9078 = vmul.f32 %v7152, %v8934
    %v9079 = vmul.f32 %v7508, %v8935
    %v9080 = vmul.f32 %v7864, %v8936
    %v9081 = vmul.f32 %v5375, %v8929
    %v9082 = vmul.f32 %v5731, %v8930
    %v9083 = vmul.f32 %v6087, %v8931
    %v9084 = vmul.f32 %v6443, %v8932
    %v9085 = vmul.f32 %v6799, %v8933
    %v9086 = vmul.f32 %v7155, %v8934
    %v9087 = vmul.f32 %v7511, %v8935
    %v9088 = vmul.f32 %v7867, %v8936
    %v9089 = vmul.f32 %v5377, %v8929
    %v9090 = vmul.f32 %v5733, %v8930
    %v9091 = vmul.f32 %v6089, %v8931
    %v9092 = vmul.f32 %v6445, %v8932
    %v9093 = vmul.f32 %v6801, %v8933
    %v9094 = vmul.f32 %v7157, %v8934
    %v9095 = vmul.f32 %v7513, %v8935
    %v9096 = vmul.f32 %v7869, %v8936
    %v9097 = vmul.f32 %v5380, %v8929
    %v9098 = vmul.f32 %v5736, %v8930
    %v9099 = vmul.f32 %v6092, %v8931
    %v9100 = vmul.f32 %v6448, %v8932
    %v9101 = vmul.f32 %v6804, %v8933
    %v9102 = vmul.f32 %v7160, %v8934
    %v9103 = vmul.f32 %v7516, %v8935
    %v9104 = vmul.f32 %v7872, %v8936
    %v9105 = vmul.f32 %v5382, %v8929
    %v9106 = vmul.f32 %v5738, %v8930
    %v9107 = vmul.f32 %v6094, %v8931
    %v9108 = vmul.f32 %v6450, %v8932
    %v9109 = vmul.f32 %v6806, %v8933
    %v9110 = vmul.f32 %v7162, %v8934
    %v9111 = vmul.f32 %v7518, %v8935
    %v9112 = vmul.f32 %v7874, %v8936
    %v9113 = vmul.f32 %v5385, %v8929
    %v9114 = vmul.f32 %v5741, %v8930
    %v9115 = vmul.f32 %v6097, %v8931
    %v9116 = vmul.f32 %v6453, %v8932
    %v9117 = vmul.f32 %v6809, %v8933
    %v9118 = vmul.f32 %v7165, %v8934
    %v9119 = vmul.f32 %v7521, %v8935
    %v9120 = vmul.f32 %v7877, %v8936
    %v9121 = vmul.f32 %v5387, %v8929
    %v9122 = vmul.f32 %v5743, %v8930
    %v9123 = vmul.f32 %v6099, %v8931
    %v9124 = vmul.f32 %v6455, %v8932
    %v9125 = vmul.f32 %v6811, %v8933
    %v9126 = vmul.f32 %v7167, %v8934
    %v9127 = vmul.f32 %v7523, %v8935
    %v9128 = vmul.f32 %v7879, %v8936
    %v9129 = vmul.f32 %v5390, %v8929
    %v9130 = vmul.f32 %v5746, %v8930
    %v9131 = vmul.f32 %v6102, %v8931
    %v9132 = vmul.f32 %v6458, %v8932
    %v9133 = vmul.f32 %v6814, %v8933
    %v9134 = vmul.f32 %v7170, %v8934
    %v9135 = vmul.f32 %v7526, %v8935
    %v9136 = vmul.f32 %v7882, %v8936
    %v9137 = vmul.f32 %v5392, %v8929
    %v9138 = vmul.f32 %v5748, %v8930
    %v9139 = vmul.f32 %v6104, %v8931
    %v9140 = vmul.f32 %v6460, %v8932
    %v9141 = vmul.f32 %v6816, %v8933
    %v9142 = vmul.f32 %v7172, %v8934
    %v9143 = vmul.f32 %v7528, %v8935
    %v9144 = vmul.f32 %v7884, %v8936
    %v9145 = vmul.f32 %v5395, %v8929
    %v9146 = vmul.f32 %v5751, %v8930
    %v9147 = vmul.f32 %v6107, %v8931
    %v9148 = vmul.f32 %v6463, %v8932
    %v9149 = vmul.f32 %v6819, %v8933
    %v9150 = vmul.f32 %v7175, %v8934
    %v9151 = vmul.f32 %v7531, %v8935
    %v9152 = vmul.f32 %v7887, %v8936
    %v9153 = vmul.f32 %v5397, %v8929
    %v9154 = vmul.f32 %v5753, %v8930
    %v9155 = vmul.f32 %v6109, %v8931
    %v9156 = vmul.f32 %v6465, %v8932
    %v9157 = vmul.f32 %v6821, %v8933
    %v9158 = vmul.f32 %v7177, %v8934
    %v9159 = vmul.f32 %v7533, %v8935
    %v9160 = vmul.f32 %v7889, %v8936
    %v9161 = vmul.f32 %v5400, %v8929
    %v9162 = vmul.f32 %v5756, %v8930
    %v9163 = vmul.f32 %v6112, %v8931
    %v9164 = vmul.f32 %v6468, %v8932
    %v9165 = vmul.f32 %v6824, %v8933
    %v9166 = vmul.f32 %v7180, %v8934
    %v9167 = vmul.f32 %v7536, %v8935
    %v9168 = vmul.f32 %v7892, %v8936
    %v9169 = vmul.f32 %v5402, %v8929
    %v9170 = vmul.f32 %v5758, %v8930
    %v9171 = vmul.f32 %v6114, %v8931
    %v9172 = vmul.f32 %v6470, %v8932
    %v9173 = vmul.f32 %v6826, %v8933
    %v9174 = vmul.f32 %v7182, %v8934
    %v9175 = vmul.f32 %v7538, %v8935
    %v9176 = vmul.f32 %v7894, %v8936
    %v9177 = vmul.f32 %v5405, %v8929
    %v9178 = vmul.f32 %v5761, %v8930
    %v9179 = vmul.f32 %v6117, %v8931
    %v9180 = vmul.f32 %v6473, %v8932
    %v9181 = vmul.f32 %v6829, %v8933
    %v9182 = vmul.f32 %v7185, %v8934
    %v9183 = vmul.f32 %v7541, %v8935
    %v9184 = vmul.f32 %v7897, %v8936
    %v9185 = vmul.f32 %v5407, %v8929
    %v9186 = vmul.f32 %v5763, %v8930
    %v9187 = vmul.f32 %v6119, %v8931
    %v9188 = vmul.f32 %v6475, %v8932
    %v9189 = vmul.f32 %v6831, %v8933
    %v9190 = vmul.f32 %v7187, %v8934
    %v9191 = vmul.f32 %v7543, %v8935
    %v9192 = vmul.f32 %v7899, %v8936
    %v9194 = vperm.slane %v8928, 0
    %v9195 = vperm.slane %v8928, 1
    %v9196 = vperm.slane %v8928, 2
    %v9197 = vperm.slane %v8928, 3
    %v9198 = vperm.slane %v8928, 4
    %v9199 = vperm.slane %v8928, 5
    %v9200 = vperm.slane %v8928, 6
    %v9201 = vperm.slane %v8928, 7
    %v9210 = vadd.f32 %v8937, %v9194
    %v9211 = vadd.f32 %v8938, %v9195
    %v9212 = vadd.f32 %v8939, %v9196
    %v9213 = vadd.f32 %v8940, %v9197
    %v9214 = vadd.f32 %v8941, %v9198
    %v9215 = vadd.f32 %v8942, %v9199
    %v9216 = vadd.f32 %v8943, %v9200
    %v9217 = vadd.f32 %v8944, %v9201
    %v9218 = vadd.f32 %v8945, %v9194
    %v9219 = vadd.f32 %v8946, %v9195
    %v9220 = vadd.f32 %v8947, %v9196
    %v9221 = vadd.f32 %v8948, %v9197
    %v9222 = vadd.f32 %v8949, %v9198
    %v9223 = vadd.f32 %v8950, %v9199
    %v9224 = vadd.f32 %v8951, %v9200
    %v9225 = vadd.f32 %v8952, %v9201
    %v9226 = vadd.f32 %v8953, %v9194
    %v9227 = vadd.f32 %v8954, %v9195
    %v9228 = vadd.f32 %v8955, %v9196
    %v9229 = vadd.f32 %v8956, %v9197
    %v9230 = vadd.f32 %v8957, %v9198
    %v9231 = vadd.f32 %v8958, %v9199
    %v9232 = vadd.f32 %v8959, %v9200
    %v9233 = vadd.f32 %v8960, %v9201
    %v9234 = vadd.f32 %v8961, %v9194
    %v9235 = vadd.f32 %v8962, %v9195
    %v9236 = vadd.f32 %v8963, %v9196
    %v9237 = vadd.f32 %v8964, %v9197
    %v9238 = vadd.f32 %v8965, %v9198
    %v9239 = vadd.f32 %v8966, %v9199
    %v9240 = vadd.f32 %v8967, %v9200
    %v9241 = vadd.f32 %v8968, %v9201
    %v9242 = vadd.f32 %v8969, %v9194
    %v9243 = vadd.f32 %v8970, %v9195
    %v9244 = vadd.f32 %v8971, %v9196
    %v9245 = vadd.f32 %v8972, %v9197
    %v9246 = vadd.f32 %v8973, %v9198
    %v9247 = vadd.f32 %v8974, %v9199
    %v9248 = vadd.f32 %v8975, %v9200
    %v9249 = vadd.f32 %v8976, %v9201
    %v9250 = vadd.f32 %v8977, %v9194
    %v9251 = vadd.f32 %v8978, %v9195
    %v9252 = vadd.f32 %v8979, %v9196
    %v9253 = vadd.f32 %v8980, %v9197
    %v9254 = vadd.f32 %v8981, %v9198
    %v9255 = vadd.f32 %v8982, %v9199
    %v9256 = vadd.f32 %v8983, %v9200
    %v9257 = vadd.f32 %v8984, %v9201
    %v9258 = vadd.f32 %v8985, %v9194
    %v9259 = vadd.f32 %v8986, %v9195
    %v9260 = vadd.f32 %v8987, %v9196
    %v9261 = vadd.f32 %v8988, %v9197
    %v9262 = vadd.f32 %v8989, %v9198
    %v9263 = vadd.f32 %v8990, %v9199
    %v9264 = vadd.f32 %v8991, %v9200
    %v9265 = vadd.f32 %v8992, %v9201
    %v9266 = vadd.f32 %v8993, %v9194
    %v9267 = vadd.f32 %v8994, %v9195
    %v9268 = vadd.f32 %v8995, %v9196
    %v9269 = vadd.f32 %v8996, %v9197
    %v9270 = vadd.f32 %v8997, %v9198
    %v9271 = vadd.f32 %v8998, %v9199
    %v9272 = vadd.f32 %v8999, %v9200
    %v9273 = vadd.f32 %v9000, %v9201
    %v9274 = vadd.f32 %v9001, %v9194
    %v9275 = vadd.f32 %v9002, %v9195
    %v9276 = vadd.f32 %v9003, %v9196
    %v9277 = vadd.f32 %v9004, %v9197
    %v9278 = vadd.f32 %v9005, %v9198
    %v9279 = vadd.f32 %v9006, %v9199
    %v9280 = vadd.f32 %v9007, %v9200
    %v9281 = vadd.f32 %v9008, %v9201
    %v9282 = vadd.f32 %v9009, %v9194
    %v9283 = vadd.f32 %v9010, %v9195
    %v9284 = vadd.f32 %v9011, %v9196
    %v9285 = vadd.f32 %v9012, %v9197
    %v9286 = vadd.f32 %v9013, %v9198
    %v9287 = vadd.f32 %v9014, %v9199
    %v9288 = vadd.f32 %v9015, %v9200
    %v9289 = vadd.f32 %v9016, %v9201
    %v9290 = vadd.f32 %v9017, %v9194
    %v9291 = vadd.f32 %v9018, %v9195
    %v9292 = vadd.f32 %v9019, %v9196
    %v9293 = vadd.f32 %v9020, %v9197
    %v9294 = vadd.f32 %v9021, %v9198
    %v9295 = vadd.f32 %v9022, %v9199
    %v9296 = vadd.f32 %v9023, %v9200
    %v9297 = vadd.f32 %v9024, %v9201
    %v9298 = vadd.f32 %v9025, %v9194
    %v9299 = vadd.f32 %v9026, %v9195
    %v9300 = vadd.f32 %v9027, %v9196
    %v9301 = vadd.f32 %v9028, %v9197
    %v9302 = vadd.f32 %v9029, %v9198
    %v9303 = vadd.f32 %v9030, %v9199
    %v9304 = vadd.f32 %v9031, %v9200
    %v9305 = vadd.f32 %v9032, %v9201
    %v9306 = vadd.f32 %v9033, %v9194
    %v9307 = vadd.f32 %v9034, %v9195
    %v9308 = vadd.f32 %v9035, %v9196
    %v9309 = vadd.f32 %v9036, %v9197
    %v9310 = vadd.f32 %v9037, %v9198
    %v9311 = vadd.f32 %v9038, %v9199
    %v9312 = vadd.f32 %v9039, %v9200
    %v9313 = vadd.f32 %v9040, %v9201
    %v9314 = vadd.f32 %v9041, %v9194
    %v9315 = vadd.f32 %v9042, %v9195
    %v9316 = vadd.f32 %v9043, %v9196
    %v9317 = vadd.f32 %v9044, %v9197
    %v9318 = vadd.f32 %v9045, %v9198
    %v9319 = vadd.f32 %v9046, %v9199
    %v9320 = vadd.f32 %v9047, %v9200
    %v9321 = vadd.f32 %v9048, %v9201
    %v9322 = vadd.f32 %v9049, %v9194
    %v9323 = vadd.f32 %v9050, %v9195
    %v9324 = vadd.f32 %v9051, %v9196
    %v9325 = vadd.f32 %v9052, %v9197
    %v9326 = vadd.f32 %v9053, %v9198
    %v9327 = vadd.f32 %v9054, %v9199
    %v9328 = vadd.f32 %v9055, %v9200
    %v9329 = vadd.f32 %v9056, %v9201
    %v9330 = vadd.f32 %v9057, %v9194
    %v9331 = vadd.f32 %v9058, %v9195
    %v9332 = vadd.f32 %v9059, %v9196
    %v9333 = vadd.f32 %v9060, %v9197
    %v9334 = vadd.f32 %v9061, %v9198
    %v9335 = vadd.f32 %v9062, %v9199
    %v9336 = vadd.f32 %v9063, %v9200
    %v9337 = vadd.f32 %v9064, %v9201
    %v9338 = vadd.f32 %v9065, %v9194
    %v9339 = vadd.f32 %v9066, %v9195
    %v9340 = vadd.f32 %v9067, %v9196
    %v9341 = vadd.f32 %v9068, %v9197
    %v9342 = vadd.f32 %v9069, %v9198
    %v9343 = vadd.f32 %v9070, %v9199
    %v9344 = vadd.f32 %v9071, %v9200
    %v9345 = vadd.f32 %v9072, %v9201
    %v9346 = vadd.f32 %v9073, %v9194
    %v9347 = vadd.f32 %v9074, %v9195
    %v9348 = vadd.f32 %v9075, %v9196
    %v9349 = vadd.f32 %v9076, %v9197
    %v9350 = vadd.f32 %v9077, %v9198
    %v9351 = vadd.f32 %v9078, %v9199
    %v9352 = vadd.f32 %v9079, %v9200
    %v9353 = vadd.f32 %v9080, %v9201
    %v9354 = vadd.f32 %v9081, %v9194
    %v9355 = vadd.f32 %v9082, %v9195
    %v9356 = vadd.f32 %v9083, %v9196
    %v9357 = vadd.f32 %v9084, %v9197
    %v9358 = vadd.f32 %v9085, %v9198
    %v9359 = vadd.f32 %v9086, %v9199
    %v9360 = vadd.f32 %v9087, %v9200
    %v9361 = vadd.f32 %v9088, %v9201
    %v9362 = vadd.f32 %v9089, %v9194
    %v9363 = vadd.f32 %v9090, %v9195
    %v9364 = vadd.f32 %v9091, %v9196
    %v9365 = vadd.f32 %v9092, %v9197
    %v9366 = vadd.f32 %v9093, %v9198
    %v9367 = vadd.f32 %v9094, %v9199
    %v9368 = vadd.f32 %v9095, %v9200
    %v9369 = vadd.f32 %v9096, %v9201
    %v9370 = vadd.f32 %v9097, %v9194
    %v9371 = vadd.f32 %v9098, %v9195
    %v9372 = vadd.f32 %v9099, %v9196
    %v9373 = vadd.f32 %v9100, %v9197
    %v9374 = vadd.f32 %v9101, %v9198
    %v9375 = vadd.f32 %v9102, %v9199
    %v9376 = vadd.f32 %v9103, %v9200
    %v9377 = vadd.f32 %v9104, %v9201
    %v9378 = vadd.f32 %v9105, %v9194
    %v9379 = vadd.f32 %v9106, %v9195
    %v9380 = vadd.f32 %v9107, %v9196
    %v9381 = vadd.f32 %v9108, %v9197
    %v9382 = vadd.f32 %v9109, %v9198
    %v9383 = vadd.f32 %v9110, %v9199
    %v9384 = vadd.f32 %v9111, %v9200
    %v9385 = vadd.f32 %v9112, %v9201
    %v9386 = vadd.f32 %v9113, %v9194
    %v9387 = vadd.f32 %v9114, %v9195
    %v9388 = vadd.f32 %v9115, %v9196
    %v9389 = vadd.f32 %v9116, %v9197
    %v9390 = vadd.f32 %v9117, %v9198
    %v9391 = vadd.f32 %v9118, %v9199
    %v9392 = vadd.f32 %v9119, %v9200
    %v9393 = vadd.f32 %v9120, %v9201
    %v9394 = vadd.f32 %v9121, %v9194
    %v9395 = vadd.f32 %v9122, %v9195
    %v9396 = vadd.f32 %v9123, %v9196
    %v9397 = vadd.f32 %v9124, %v9197
    %v9398 = vadd.f32 %v9125, %v9198
    %v9399 = vadd.f32 %v9126, %v9199
    %v9400 = vadd.f32 %v9127, %v9200
    %v9401 = vadd.f32 %v9128, %v9201
    %v9402 = vadd.f32 %v9129, %v9194
    %v9403 = vadd.f32 %v9130, %v9195
    %v9404 = vadd.f32 %v9131, %v9196
    %v9405 = vadd.f32 %v9132, %v9197
    %v9406 = vadd.f32 %v9133, %v9198
    %v9407 = vadd.f32 %v9134, %v9199
    %v9408 = vadd.f32 %v9135, %v9200
    %v9409 = vadd.f32 %v9136, %v9201
    %v9410 = vadd.f32 %v9137, %v9194
    %v9411 = vadd.f32 %v9138, %v9195
    %v9412 = vadd.f32 %v9139, %v9196
    %v9413 = vadd.f32 %v9140, %v9197
    %v9414 = vadd.f32 %v9141, %v9198
    %v9415 = vadd.f32 %v9142, %v9199
    %v9416 = vadd.f32 %v9143, %v9200
    %v9417 = vadd.f32 %v9144, %v9201
    %v9418 = vadd.f32 %v9145, %v9194
    %v9419 = vadd.f32 %v9146, %v9195
    %v9420 = vadd.f32 %v9147, %v9196
    %v9421 = vadd.f32 %v9148, %v9197
    %v9422 = vadd.f32 %v9149, %v9198
    %v9423 = vadd.f32 %v9150, %v9199
    %v9424 = vadd.f32 %v9151, %v9200
    %v9425 = vadd.f32 %v9152, %v9201
    %v9426 = vadd.f32 %v9153, %v9194
    %v9427 = vadd.f32 %v9154, %v9195
    %v9428 = vadd.f32 %v9155, %v9196
    %v9429 = vadd.f32 %v9156, %v9197
    %v9430 = vadd.f32 %v9157, %v9198
    %v9431 = vadd.f32 %v9158, %v9199
    %v9432 = vadd.f32 %v9159, %v9200
    %v9433 = vadd.f32 %v9160, %v9201
    %v9434 = vadd.f32 %v9161, %v9194
    %v9435 = vadd.f32 %v9162, %v9195
    %v9436 = vadd.f32 %v9163, %v9196
    %v9437 = vadd.f32 %v9164, %v9197
    %v9438 = vadd.f32 %v9165, %v9198
    %v9439 = vadd.f32 %v9166, %v9199
    %v9440 = vadd.f32 %v9167, %v9200
    %v9441 = vadd.f32 %v9168, %v9201
    %v9442 = vadd.f32 %v9169, %v9194
    %v9443 = vadd.f32 %v9170, %v9195
    %v9444 = vadd.f32 %v9171, %v9196
    %v9445 = vadd.f32 %v9172, %v9197
    %v9446 = vadd.f32 %v9173, %v9198
    %v9447 = vadd.f32 %v9174, %v9199
    %v9448 = vadd.f32 %v9175, %v9200
    %v9449 = vadd.f32 %v9176, %v9201
    %v9450 = vadd.f32 %v9177, %v9194
    %v9451 = vadd.f32 %v9178, %v9195
    %v9452 = vadd.f32 %v9179, %v9196
    %v9453 = vadd.f32 %v9180, %v9197
    %v9454 = vadd.f32 %v9181, %v9198
    %v9455 = vadd.f32 %v9182, %v9199
    %v9456 = vadd.f32 %v9183, %v9200
    %v9457 = vadd.f32 %v9184, %v9201
    %v9458 = vadd.f32 %v9185, %v9194
    %v9459 = vadd.f32 %v9186, %v9195
    %v9460 = vadd.f32 %v9187, %v9196
    %v9461 = vadd.f32 %v9188, %v9197
    %v9462 = vadd.f32 %v9189, %v9198
    %v9463 = vadd.f32 %v9190, %v9199
    %v9464 = vadd.f32 %v9191, %v9200
    %v9465 = vadd.f32 %v9192, %v9201
    %v9466 = vmul.f32 %v9210, 0.2
    %v9467 = vmul.f32 %v9211, 0.2
    %v9468 = vmul.f32 %v9212, 0.2
    %v9469 = vmul.f32 %v9213, 0.2
    %v9470 = vmul.f32 %v9214, 0.2
    %v9471 = vmul.f32 %v9215, 0.2
    %v9472 = vmul.f32 %v9216, 0.2
    %v9473 = vmul.f32 %v9217, 0.2
    %v9474 = vmul.f32 %v9218, 0.2
    %v9475 = vmul.f32 %v9219, 0.2
    %v9476 = vmul.f32 %v9220, 0.2
    %v9477 = vmul.f32 %v9221, 0.2
    %v9478 = vmul.f32 %v9222, 0.2
    %v9479 = vmul.f32 %v9223, 0.2
    %v9480 = vmul.f32 %v9224, 0.2
    %v9481 = vmul.f32 %v9225, 0.2
    %v9482 = vmul.f32 %v9226, 0.2
    %v9483 = vmul.f32 %v9227, 0.2
    %v9484 = vmul.f32 %v9228, 0.2
    %v9485 = vmul.f32 %v9229, 0.2
    %v9486 = vmul.f32 %v9230, 0.2
    %v9487 = vmul.f32 %v9231, 0.2
    %v9488 = vmul.f32 %v9232, 0.2
    %v9489 = vmul.f32 %v9233, 0.2
    %v9490 = vmul.f32 %v9234, 0.2
    %v9491 = vmul.f32 %v9235, 0.2
    %v9492 = vmul.f32 %v9236, 0.2
    %v9493 = vmul.f32 %v9237, 0.2
    %v9494 = vmul.f32 %v9238, 0.2
    %v9495 = vmul.f32 %v9239, 0.2
    %v9496 = vmul.f32 %v9240, 0.2
    %v9497 = vmul.f32 %v9241, 0.2
    %v9498 = vmul.f32 %v9242, 0.2
    %v9499 = vmul.f32 %v9243, 0.2
    %v9500 = vmul.f32 %v9244, 0.2
    %v9501 = vmul.f32 %v9245, 0.2
    %v9502 = vmul.f32 %v9246, 0.2
    %v9503 = vmul.f32 %v9247, 0.2
    %v9504 = vmul.f32 %v9248, 0.2
    %v9505 = vmul.f32 %v9249, 0.2
    %v9506 = vmul.f32 %v9250, 0.2
    %v9507 = vmul.f32 %v9251, 0.2
    %v9508 = vmul.f32 %v9252, 0.2
    %v9509 = vmul.f32 %v9253, 0.2
    %v9510 = vmul.f32 %v9254, 0.2
    %v9511 = vmul.f32 %v9255, 0.2
    %v9512 = vmul.f32 %v9256, 0.2
    %v9513 = vmul.f32 %v9257, 0.2
    %v9514 = vmul.f32 %v9258, 0.2
    %v9515 = vmul.f32 %v9259, 0.2
    %v9516 = vmul.f32 %v9260, 0.2
    %v9517 = vmul.f32 %v9261, 0.2
    %v9518 = vmul.f32 %v9262, 0.2
    %v9519 = vmul.f32 %v9263, 0.2
    %v9520 = vmul.f32 %v9264, 0.2
    %v9521 = vmul.f32 %v9265, 0.2
    %v9522 = vmul.f32 %v9266, 0.2
    %v9523 = vmul.f32 %v9267, 0.2
    %v9524 = vmul.f32 %v9268, 0.2
    %v9525 = vmul.f32 %v9269, 0.2
    %v9526 = vmul.f32 %v9270, 0.2
    %v9527 = vmul.f32 %v9271, 0.2
    %v9528 = vmul.f32 %v9272, 0.2
    %v9529 = vmul.f32 %v9273, 0.2
    %v9530 = vmul.f32 %v9274, 0.2
    %v9531 = vmul.f32 %v9275, 0.2
    %v9532 = vmul.f32 %v9276, 0.2
    %v9533 = vmul.f32 %v9277, 0.2
    %v9534 = vmul.f32 %v9278, 0.2
    %v9535 = vmul.f32 %v9279, 0.2
    %v9536 = vmul.f32 %v9280, 0.2
    %v9537 = vmul.f32 %v9281, 0.2
    %v9538 = vmul.f32 %v9282, 0.2
    %v9539 = vmul.f32 %v9283, 0.2
    %v9540 = vmul.f32 %v9284, 0.2
    %v9541 = vmul.f32 %v9285, 0.2
    %v9542 = vmul.f32 %v9286, 0.2
    %v9543 = vmul.f32 %v9287, 0.2
    %v9544 = vmul.f32 %v9288, 0.2
    %v9545 = vmul.f32 %v9289, 0.2
    %v9546 = vmul.f32 %v9290, 0.2
    %v9547 = vmul.f32 %v9291, 0.2
    %v9548 = vmul.f32 %v9292, 0.2
    %v9549 = vmul.f32 %v9293, 0.2
    %v9550 = vmul.f32 %v9294, 0.2
    %v9551 = vmul.f32 %v9295, 0.2
    %v9552 = vmul.f32 %v9296, 0.2
    %v9553 = vmul.f32 %v9297, 0.2
    %v9554 = vmul.f32 %v9298, 0.2
    %v9555 = vmul.f32 %v9299, 0.2
    %v9556 = vmul.f32 %v9300, 0.2
    %v9557 = vmul.f32 %v9301, 0.2
    %v9558 = vmul.f32 %v9302, 0.2
    %v9559 = vmul.f32 %v9303, 0.2
    %v9560 = vmul.f32 %v9304, 0.2
    %v9561 = vmul.f32 %v9305, 0.2
    %v9562 = vmul.f32 %v9306, 0.2
    %v9563 = vmul.f32 %v9307, 0.2
    %v9564 = vmul.f32 %v9308, 0.2
    %v9565 = vmul.f32 %v9309, 0.2
    %v9566 = vmul.f32 %v9310, 0.2
    %v9567 = vmul.f32 %v9311, 0.2
    %v9568 = vmul.f32 %v9312, 0.2
    %v9569 = vmul.f32 %v9313, 0.2
    %v9570 = vmul.f32 %v9314, 0.2
    %v9571 = vmul.f32 %v9315, 0.2
    %v9572 = vmul.f32 %v9316, 0.2
    %v9573 = vmul.f32 %v9317, 0.2
    %v9574 = vmul.f32 %v9318, 0.2
    %v9575 = vmul.f32 %v9319, 0.2
    %v9576 = vmul.f32 %v9320, 0.2
    %v9577 = vmul.f32 %v9321, 0.2
    %v9578 = vmul.f32 %v9322, 0.2
    %v9579 = vmul.f32 %v9323, 0.2
    %v9580 = vmul.f32 %v9324, 0.2
    %v9581 = vmul.f32 %v9325, 0.2
    %v9582 = vmul.f32 %v9326, 0.2
    %v9583 = vmul.f32 %v9327, 0.2
    %v9584 = vmul.f32 %v9328, 0.2
    %v9585 = vmul.f32 %v9329, 0.2
    %v9586 = vmul.f32 %v9330, 0.2
    %v9587 = vmul.f32 %v9331, 0.2
    %v9588 = vmul.f32 %v9332, 0.2
    %v9589 = vmul.f32 %v9333, 0.2
    %v9590 = vmul.f32 %v9334, 0.2
    %v9591 = vmul.f32 %v9335, 0.2
    %v9592 = vmul.f32 %v9336, 0.2
    %v9593 = vmul.f32 %v9337, 0.2
    %v9594 = vmul.f32 %v9338, 0.2
    %v9595 = vmul.f32 %v9339, 0.2
    %v9596 = vmul.f32 %v9340, 0.2
    %v9597 = vmul.f32 %v9341, 0.2
    %v9598 = vmul.f32 %v9342, 0.2
    %v9599 = vmul.f32 %v9343, 0.2
    %v9600 = vmul.f32 %v9344, 0.2
    %v9601 = vmul.f32 %v9345, 0.2
    %v9602 = vmul.f32 %v9346, 0.2
    %v9603 = vmul.f32 %v9347, 0.2
    %v9604 = vmul.f32 %v9348, 0.2
    %v9605 = vmul.f32 %v9349, 0.2
    %v9606 = vmul.f32 %v9350, 0.2
    %v9607 = vmul.f32 %v9351, 0.2
    %v9608 = vmul.f32 %v9352, 0.2
    %v9609 = vmul.f32 %v9353, 0.2
    %v9610 = vmul.f32 %v9354, 0.2
    %v9611 = vmul.f32 %v9355, 0.2
    %v9612 = vmul.f32 %v9356, 0.2
    %v9613 = vmul.f32 %v9357, 0.2
    %v9614 = vmul.f32 %v9358, 0.2
    %v9615 = vmul.f32 %v9359, 0.2
    %v9616 = vmul.f32 %v9360, 0.2
    %v9617 = vmul.f32 %v9361, 0.2
    %v9618 = vmul.f32 %v9362, 0.2
    %v9619 = vmul.f32 %v9363, 0.2
    %v9620 = vmul.f32 %v9364, 0.2
    %v9621 = vmul.f32 %v9365, 0.2
    %v9622 = vmul.f32 %v9366, 0.2
    %v9623 = vmul.f32 %v9367, 0.2
    %v9624 = vmul.f32 %v9368, 0.2
    %v9625 = vmul.f32 %v9369, 0.2
    %v9626 = vmul.f32 %v9370, 0.2
    %v9627 = vmul.f32 %v9371, 0.2
    %v9628 = vmul.f32 %v9372, 0.2
    %v9629 = vmul.f32 %v9373, 0.2
    %v9630 = vmul.f32 %v9374, 0.2
    %v9631 = vmul.f32 %v9375, 0.2
    %v9632 = vmul.f32 %v9376, 0.2
    %v9633 = vmul.f32 %v9377, 0.2
    %v9634 = vmul.f32 %v9378, 0.2
    %v9635 = vmul.f32 %v9379, 0.2
    %v9636 = vmul.f32 %v9380, 0.2
    %v9637 = vmul.f32 %v9381, 0.2
    %v9638 = vmul.f32 %v9382, 0.2
    %v9639 = vmul.f32 %v9383, 0.2
    %v9640 = vmul.f32 %v9384, 0.2
    %v9641 = vmul.f32 %v9385, 0.2
    %v9642 = vmul.f32 %v9386, 0.2
    %v9643 = vmul.f32 %v9387, 0.2
    %v9644 = vmul.f32 %v9388, 0.2
    %v9645 = vmul.f32 %v9389, 0.2
    %v9646 = vmul.f32 %v9390, 0.2
    %v9647 = vmul.f32 %v9391, 0.2
    %v9648 = vmul.f32 %v9392, 0.2
    %v9649 = vmul.f32 %v9393, 0.2
    %v9650 = vmul.f32 %v9394, 0.2
    %v9651 = vmul.f32 %v9395, 0.2
    %v9652 = vmul.f32 %v9396, 0.2
    %v9653 = vmul.f32 %v9397, 0.2
    %v9654 = vmul.f32 %v9398, 0.2
    %v9655 = vmul.f32 %v9399, 0.2
    %v9656 = vmul.f32 %v9400, 0.2
    %v9657 = vmul.f32 %v9401, 0.2
    %v9658 = vmul.f32 %v9402, 0.2
    %v9659 = vmul.f32 %v9403, 0.2
    %v9660 = vmul.f32 %v9404, 0.2
    %v9661 = vmul.f32 %v9405, 0.2
    %v9662 = vmul.f32 %v9406, 0.2
    %v9663 = vmul.f32 %v9407, 0.2
    %v9664 = vmul.f32 %v9408, 0.2
    %v9665 = vmul.f32 %v9409, 0.2
    %v9666 = vmul.f32 %v9410, 0.2
    %v9667 = vmul.f32 %v9411, 0.2
    %v9668 = vmul.f32 %v9412, 0.2
    %v9669 = vmul.f32 %v9413, 0.2
    %v9670 = vmul.f32 %v9414, 0.2
    %v9671 = vmul.f32 %v9415, 0.2
    %v9672 = vmul.f32 %v9416, 0.2
    %v9673 = vmul.f32 %v9417, 0.2
    %v9674 = vmul.f32 %v9418, 0.2
    %v9675 = vmul.f32 %v9419, 0.2
    %v9676 = vmul.f32 %v9420, 0.2
    %v9677 = vmul.f32 %v9421, 0.2
    %v9678 = vmul.f32 %v9422, 0.2
    %v9679 = vmul.f32 %v9423, 0.2
    %v9680 = vmul.f32 %v9424, 0.2
    %v9681 = vmul.f32 %v9425, 0.2
    %v9682 = vmul.f32 %v9426, 0.2
    %v9683 = vmul.f32 %v9427, 0.2
    %v9684 = vmul.f32 %v9428, 0.2
    %v9685 = vmul.f32 %v9429, 0.2
    %v9686 = vmul.f32 %v9430, 0.2
    %v9687 = vmul.f32 %v9431, 0.2
    %v9688 = vmul.f32 %v9432, 0.2
    %v9689 = vmul.f32 %v9433, 0.2
    %v9690 = vmul.f32 %v9434, 0.2
    %v9691 = vmul.f32 %v9435, 0.2
    %v9692 = vmul.f32 %v9436, 0.2
    %v9693 = vmul.f32 %v9437, 0.2
    %v9694 = vmul.f32 %v9438, 0.2
    %v9695 = vmul.f32 %v9439, 0.2
    %v9696 = vmul.f32 %v9440, 0.2
    %v9697 = vmul.f32 %v9441, 0.2
    %v9698 = vmul.f32 %v9442, 0.2
    %v9699 = vmul.f32 %v9443, 0.2
    %v9700 = vmul.f32 %v9444, 0.2
    %v9701 = vmul.f32 %v9445, 0.2
    %v9702 = vmul.f32 %v9446, 0.2
    %v9703 = vmul.f32 %v9447, 0.2
    %v9704 = vmul.f32 %v9448, 0.2
    %v9705 = vmul.f32 %v9449, 0.2
    %v9706 = vmul.f32 %v9450, 0.2
    %v9707 = vmul.f32 %v9451, 0.2
    %v9708 = vmul.f32 %v9452, 0.2
    %v9709 = vmul.f32 %v9453, 0.2
    %v9710 = vmul.f32 %v9454, 0.2
    %v9711 = vmul.f32 %v9455, 0.2
    %v9712 = vmul.f32 %v9456, 0.2
    %v9713 = vmul.f32 %v9457, 0.2
    %v9714 = vmul.f32 %v9458, 0.2
    %v9715 = vmul.f32 %v9459, 0.2
    %v9716 = vmul.f32 %v9460, 0.2
    %v9717 = vmul.f32 %v9461, 0.2
    %v9718 = vmul.f32 %v9462, 0.2
    %v9719 = vmul.f32 %v9463, 0.2
    %v9720 = vmul.f32 %v9464, 0.2
    %v9721 = vmul.f32 %v9465, 0.2
    %v9722 = vmax.f32 %v9210, %v9466
    %v9723 = vmax.f32 %v9211, %v9467
    %v9724 = vmax.f32 %v9212, %v9468
    %v9725 = vmax.f32 %v9213, %v9469
    %v9726 = vmax.f32 %v9214, %v9470
    %v9727 = vmax.f32 %v9215, %v9471
    %v9728 = vmax.f32 %v9216, %v9472
    %v9729 = vmax.f32 %v9217, %v9473
    %v9730 = vmax.f32 %v9218, %v9474
    %v9731 = vmax.f32 %v9219, %v9475
    %v9732 = vmax.f32 %v9220, %v9476
    %v9733 = vmax.f32 %v9221, %v9477
    %v9734 = vmax.f32 %v9222, %v9478
    %v9735 = vmax.f32 %v9223, %v9479
    %v9736 = vmax.f32 %v9224, %v9480
    %v9737 = vmax.f32 %v9225, %v9481
    %v9738 = vmax.f32 %v9226, %v9482
    %v9739 = vmax.f32 %v9227, %v9483
    %v9740 = vmax.f32 %v9228, %v9484
    %v9741 = vmax.f32 %v9229, %v9485
    %v9742 = vmax.f32 %v9230, %v9486
    %v9743 = vmax.f32 %v9231, %v9487
    %v9744 = vmax.f32 %v9232, %v9488
    %v9745 = vmax.f32 %v9233, %v9489
    %v9746 = vmax.f32 %v9234, %v9490
    %v9747 = vmax.f32 %v9235, %v9491
    %v9748 = vmax.f32 %v9236, %v9492
    %v9749 = vmax.f32 %v9237, %v9493
    %v9750 = vmax.f32 %v9238, %v9494
    %v9751 = vmax.f32 %v9239, %v9495
    %v9752 = vmax.f32 %v9240, %v9496
    %v9753 = vmax.f32 %v9241, %v9497
    %v9754 = vmax.f32 %v9242, %v9498
    %v9755 = vmax.f32 %v9243, %v9499
    %v9756 = vmax.f32 %v9244, %v9500
    %v9757 = vmax.f32 %v9245, %v9501
    %v9758 = vmax.f32 %v9246, %v9502
    %v9759 = vmax.f32 %v9247, %v9503
    %v9760 = vmax.f32 %v9248, %v9504
    %v9761 = vmax.f32 %v9249, %v9505
    %v9762 = vmax.f32 %v9250, %v9506
    %v9763 = vmax.f32 %v9251, %v9507
    %v9764 = vmax.f32 %v9252, %v9508
    %v9765 = vmax.f32 %v9253, %v9509
    %v9766 = vmax.f32 %v9254, %v9510
    %v9767 = vmax.f32 %v9255, %v9511
    %v9768 = vmax.f32 %v9256, %v9512
    %v9769 = vmax.f32 %v9257, %v9513
    %v9770 = vmax.f32 %v9258, %v9514
    %v9771 = vmax.f32 %v9259, %v9515
    %v9772 = vmax.f32 %v9260, %v9516
    %v9773 = vmax.f32 %v9261, %v9517
    %v9774 = vmax.f32 %v9262, %v9518
    %v9775 = vmax.f32 %v9263, %v9519
    %v9776 = vmax.f32 %v9264, %v9520
    %v9777 = vmax.f32 %v9265, %v9521
    %v9778 = vmax.f32 %v9266, %v9522
    %v9779 = vmax.f32 %v9267, %v9523
    %v9780 = vmax.f32 %v9268, %v9524
    %v9781 = vmax.f32 %v9269, %v9525
    %v9782 = vmax.f32 %v9270, %v9526
    %v9783 = vmax.f32 %v9271, %v9527
    %v9784 = vmax.f32 %v9272, %v9528
    %v9785 = vmax.f32 %v9273, %v9529
    %v9786 = vmax.f32 %v9274, %v9530
    %v9787 = vmax.f32 %v9275, %v9531
    %v9788 = vmax.f32 %v9276, %v9532
    %v9789 = vmax.f32 %v9277, %v9533
    %v9790 = vmax.f32 %v9278, %v9534
    %v9791 = vmax.f32 %v9279, %v9535
    %v9792 = vmax.f32 %v9280, %v9536
    %v9793 = vmax.f32 %v9281, %v9537
    %v9794 = vmax.f32 %v9282, %v9538
    %v9795 = vmax.f32 %v9283, %v9539
    %v9796 = vmax.f32 %v9284, %v9540
    %v9797 = vmax.f32 %v9285, %v9541
    %v9798 = vmax.f32 %v9286, %v9542
    %v9799 = vmax.f32 %v9287, %v9543
    %v9800 = vmax.f32 %v9288, %v9544
    %v9801 = vmax.f32 %v9289, %v9545
    %v9802 = vmax.f32 %v9290, %v9546
    %v9803 = vmax.f32 %v9291, %v9547
    %v9804 = vmax.f32 %v9292, %v9548
    %v9805 = vmax.f32 %v9293, %v9549
    %v9806 = vmax.f32 %v9294, %v9550
    %v9807 = vmax.f32 %v9295, %v9551
    %v9808 = vmax.f32 %v9296, %v9552
    %v9809 = vmax.f32 %v9297, %v9553
    %v9810 = vmax.f32 %v9298, %v9554
    %v9811 = vmax.f32 %v9299, %v9555
    %v9812 = vmax.f32 %v9300, %v9556
    %v9813 = vmax.f32 %v9301, %v9557
    %v9814 = vmax.f32 %v9302, %v9558
    %v9815 = vmax.f32 %v9303, %v9559
    %v9816 = vmax.f32 %v9304, %v9560
    %v9817 = vmax.f32 %v9305, %v9561
    %v9818 = vmax.f32 %v9306, %v9562
    %v9819 = vmax.f32 %v9307, %v9563
    %v9820 = vmax.f32 %v9308, %v9564
    %v9821 = vmax.f32 %v9309, %v9565
    %v9822 = vmax.f32 %v9310, %v9566
    %v9823 = vmax.f32 %v9311, %v9567
    %v9824 = vmax.f32 %v9312, %v9568
    %v9825 = vmax.f32 %v9313, %v9569
    %v9826 = vmax.f32 %v9314, %v9570
    %v9827 = vmax.f32 %v9315, %v9571
    %v9828 = vmax.f32 %v9316, %v9572
    %v9829 = vmax.f32 %v9317, %v9573
    %v9830 = vmax.f32 %v9318, %v9574
    %v9831 = vmax.f32 %v9319, %v9575
    %v9832 = vmax.f32 %v9320, %v9576
    %v9833 = vmax.f32 %v9321, %v9577
    %v9834 = vmax.f32 %v9322, %v9578
    %v9835 = vmax.f32 %v9323, %v9579
    %v9836 = vmax.f32 %v9324, %v9580
    %v9837 = vmax.f32 %v9325, %v9581
    %v9838 = vmax.f32 %v9326, %v9582
    %v9839 = vmax.f32 %v9327, %v9583
    %v9840 = vmax.f32 %v9328, %v9584
    %v9841 = vmax.f32 %v9329, %v9585
    %v9842 = vmax.f32 %v9330, %v9586
    %v9843 = vmax.f32 %v9331, %v9587
    %v9844 = vmax.f32 %v9332, %v9588
    %v9845 = vmax.f32 %v9333, %v9589
    %v9846 = vmax.f32 %v9334, %v9590
    %v9847 = vmax.f32 %v9335, %v9591
    %v9848 = vmax.f32 %v9336, %v9592
    %v9849 = vmax.f32 %v9337, %v9593
    %v9850 = vmax.f32 %v9338, %v9594
    %v9851 = vmax.f32 %v9339, %v9595
    %v9852 = vmax.f32 %v9340, %v9596
    %v9853 = vmax.f32 %v9341, %v9597
    %v9854 = vmax.f32 %v9342, %v9598
    %v9855 = vmax.f32 %v9343, %v9599
    %v9856 = vmax.f32 %v9344, %v9600
    %v9857 = vmax.f32 %v9345, %v9601
    %v9858 = vmax.f32 %v9346, %v9602
    %v9859 = vmax.f32 %v9347, %v9603
    %v9860 = vmax.f32 %v9348, %v9604
    %v9861 = vmax.f32 %v9349, %v9605
    %v9862 = vmax.f32 %v9350, %v9606
    %v9863 = vmax.f32 %v9351, %v9607
    %v9864 = vmax.f32 %v9352, %v9608
    %v9865 = vmax.f32 %v9353, %v9609
    %v9866 = vmax.f32 %v9354, %v9610
    %v9867 = vmax.f32 %v9355, %v9611
    %v9868 = vmax.f32 %v9356, %v9612
    %v9869 = vmax.f32 %v9357, %v9613
    %v9870 = vmax.f32 %v9358, %v9614
    %v9871 = vmax.f32 %v9359, %v9615
    %v9872 = vmax.f32 %v9360, %v9616
    %v9873 = vmax.f32 %v9361, %v9617
    %v9874 = vmax.f32 %v9362, %v9618
    %v9875 = vmax.f32 %v9363, %v9619
    %v9876 = vmax.f32 %v9364, %v9620
    %v9877 = vmax.f32 %v9365, %v9621
    %v9878 = vmax.f32 %v9366, %v9622
    %v9879 = vmax.f32 %v9367, %v9623
    %v9880 = vmax.f32 %v9368, %v9624
    %v9881 = vmax.f32 %v9369, %v9625
    %v9882 = vmax.f32 %v9370, %v9626
    %v9883 = vmax.f32 %v9371, %v9627
    %v9884 = vmax.f32 %v9372, %v9628
    %v9885 = vmax.f32 %v9373, %v9629
    %v9886 = vmax.f32 %v9374, %v9630
    %v9887 = vmax.f32 %v9375, %v9631
    %v9888 = vmax.f32 %v9376, %v9632
    %v9889 = vmax.f32 %v9377, %v9633
    %v9890 = vmax.f32 %v9378, %v9634
    %v9891 = vmax.f32 %v9379, %v9635
    %v9892 = vmax.f32 %v9380, %v9636
    %v9893 = vmax.f32 %v9381, %v9637
    %v9894 = vmax.f32 %v9382, %v9638
    %v9895 = vmax.f32 %v9383, %v9639
    %v9896 = vmax.f32 %v9384, %v9640
    %v9897 = vmax.f32 %v9385, %v9641
    %v9898 = vmax.f32 %v9386, %v9642
    %v9899 = vmax.f32 %v9387, %v9643
    %v9900 = vmax.f32 %v9388, %v9644
    %v9901 = vmax.f32 %v9389, %v9645
    %v9902 = vmax.f32 %v9390, %v9646
    %v9903 = vmax.f32 %v9391, %v9647
    %v9904 = vmax.f32 %v9392, %v9648
    %v9905 = vmax.f32 %v9393, %v9649
    %v9906 = vmax.f32 %v9394, %v9650
    %v9907 = vmax.f32 %v9395, %v9651
    %v9908 = vmax.f32 %v9396, %v9652
    %v9909 = vmax.f32 %v9397, %v9653
    %v9910 = vmax.f32 %v9398, %v9654
    %v9911 = vmax.f32 %v9399, %v9655
    %v9912 = vmax.f32 %v9400, %v9656
    %v9913 = vmax.f32 %v9401, %v9657
    %v9914 = vmax.f32 %v9402, %v9658
    %v9915 = vmax.f32 %v9403, %v9659
    %v9916 = vmax.f32 %v9404, %v9660
    %v9917 = vmax.f32 %v9405, %v9661
    %v9918 = vmax.f32 %v9406, %v9662
    %v9919 = vmax.f32 %v9407, %v9663
    %v9920 = vmax.f32 %v9408, %v9664
    %v9921 = vmax.f32 %v9409, %v9665
    %v9922 = vmax.f32 %v9410, %v9666
    %v9923 = vmax.f32 %v9411, %v9667
    %v9924 = vmax.f32 %v9412, %v9668
    %v9925 = vmax.f32 %v9413, %v9669
    %v9926 = vmax.f32 %v9414, %v9670
    %v9927 = vmax.f32 %v9415, %v9671
    %v9928 = vmax.f32 %v9416, %v9672
    %v9929 = vmax.f32 %v9417, %v9673
    %v9930 = vmax.f32 %v9418, %v9674
    %v9931 = vmax.f32 %v9419, %v9675
    %v9932 = vmax.f32 %v9420, %v9676
    %v9933 = vmax.f32 %v9421, %v9677
    %v9934 = vmax.f32 %v9422, %v9678
    %v9935 = vmax.f32 %v9423, %v9679
    %v9936 = vmax.f32 %v9424, %v9680
    %v9937 = vmax.f32 %v9425, %v9681
    %v9938 = vmax.f32 %v9426, %v9682
    %v9939 = vmax.f32 %v9427, %v9683
    %v9940 = vmax.f32 %v9428, %v9684
    %v9941 = vmax.f32 %v9429, %v9685
    %v9942 = vmax.f32 %v9430, %v9686
    %v9943 = vmax.f32 %v9431, %v9687
    %v9944 = vmax.f32 %v9432, %v9688
    %v9945 = vmax.f32 %v9433, %v9689
    %v9946 = vmax.f32 %v9434, %v9690
    %v9947 = vmax.f32 %v9435, %v9691
    %v9948 = vmax.f32 %v9436, %v9692
    %v9949 = vmax.f32 %v9437, %v9693
    %v9950 = vmax.f32 %v9438, %v9694
    %v9951 = vmax.f32 %v9439, %v9695
    %v9952 = vmax.f32 %v9440, %v9696
    %v9953 = vmax.f32 %v9441, %v9697
    %v9954 = vmax.f32 %v9442, %v9698
    %v9955 = vmax.f32 %v9443, %v9699
    %v9956 = vmax.f32 %v9444, %v9700
    %v9957 = vmax.f32 %v9445, %v9701
    %v9958 = vmax.f32 %v9446, %v9702
    %v9959 = vmax.f32 %v9447, %v9703
    %v9960 = vmax.f32 %v9448, %v9704
    %v9961 = vmax.f32 %v9449, %v9705
    %v9962 = vmax.f32 %v9450, %v9706
    %v9963 = vmax.f32 %v9451, %v9707
    %v9964 = vmax.f32 %v9452, %v9708
    %v9965 = vmax.f32 %v9453, %v9709
    %v9966 = vmax.f32 %v9454, %v9710
    %v9967 = vmax.f32 %v9455, %v9711
    %v9968 = vmax.f32 %v9456, %v9712
    %v9969 = vmax.f32 %v9457, %v9713
    %v9970 = vmax.f32 %v9458, %v9714
    %v9971 = vmax.f32 %v9459, %v9715
    %v9972 = vmax.f32 %v9460, %v9716
    %v9973 = vmax.f32 %v9461, %v9717
    %v9974 = vmax.f32 %v9462, %v9718
    %v9975 = vmax.f32 %v9463, %v9719
    %v9976 = vmax.f32 %v9464, %v9720
    %v9977 = vmax.f32 %v9465, %v9721
    %v9978 = vpack.c.bf16 %v9730, %v9722
    %v9979 = vpack.c.bf16 %v9731, %v9723
    %v9980 = vpack.c.bf16 %v9732, %v9724
    %v9981 = vpack.c.bf16 %v9733, %v9725
    %v9982 = vpack.c.bf16 %v9734, %v9726
    %v9983 = vpack.c.bf16 %v9735, %v9727
    %v9984 = vpack.c.bf16 %v9736, %v9728
    %v9985 = vpack.c.bf16 %v9737, %v9729
    %v9986 = vpack.c.bf16 %v9746, %v9738
    %v9987 = vpack.c.bf16 %v9747, %v9739
    %v9988 = vpack.c.bf16 %v9748, %v9740
    %v9989 = vpack.c.bf16 %v9749, %v9741
    %v9990 = vpack.c.bf16 %v9750, %v9742
    %v9991 = vpack.c.bf16 %v9751, %v9743
    %v9992 = vpack.c.bf16 %v9752, %v9744
    %v9993 = vpack.c.bf16 %v9753, %v9745
    %v9994 = vpack.c.bf16 %v9762, %v9754
    %v9995 = vpack.c.bf16 %v9763, %v9755
    %v9996 = vpack.c.bf16 %v9764, %v9756
    %v9997 = vpack.c.bf16 %v9765, %v9757
    %v9998 = vpack.c.bf16 %v9766, %v9758
    %v9999 = vpack.c.bf16 %v9767, %v9759
    %v10000 = vpack.c.bf16 %v9768, %v9760
    %v10001 = vpack.c.bf16 %v9769, %v9761
    %v10002 = vpack.c.bf16 %v9778, %v9770
    %v10003 = vpack.c.bf16 %v9779, %v9771
    %v10004 = vpack.c.bf16 %v9780, %v9772
    %v10005 = vpack.c.bf16 %v9781, %v9773
    %v10006 = vpack.c.bf16 %v9782, %v9774
    %v10007 = vpack.c.bf16 %v9783, %v9775
    %v10008 = vpack.c.bf16 %v9784, %v9776
    %v10009 = vpack.c.bf16 %v9785, %v9777
    %v10010 = vpack.c.bf16 %v9794, %v9786
    %v10011 = vpack.c.bf16 %v9795, %v9787
    %v10012 = vpack.c.bf16 %v9796, %v9788
    %v10013 = vpack.c.bf16 %v9797, %v9789
    %v10014 = vpack.c.bf16 %v9798, %v9790
    %v10015 = vpack.c.bf16 %v9799, %v9791
    %v10016 = vpack.c.bf16 %v9800, %v9792
    %v10017 = vpack.c.bf16 %v9801, %v9793
    %v10018 = vpack.c.bf16 %v9810, %v9802
    %v10019 = vpack.c.bf16 %v9811, %v9803
    %v10020 = vpack.c.bf16 %v9812, %v9804
    %v10021 = vpack.c.bf16 %v9813, %v9805
    %v10022 = vpack.c.bf16 %v9814, %v9806
    %v10023 = vpack.c.bf16 %v9815, %v9807
    %v10024 = vpack.c.bf16 %v9816, %v9808
    %v10025 = vpack.c.bf16 %v9817, %v9809
    %v10026 = vpack.c.bf16 %v9826, %v9818
    %v10027 = vpack.c.bf16 %v9827, %v9819
    %v10028 = vpack.c.bf16 %v9828, %v9820
    %v10029 = vpack.c.bf16 %v9829, %v9821
    %v10030 = vpack.c.bf16 %v9830, %v9822
    %v10031 = vpack.c.bf16 %v9831, %v9823
    %v10032 = vpack.c.bf16 %v9832, %v9824
    %v10033 = vpack.c.bf16 %v9833, %v9825
    %v10034 = vpack.c.bf16 %v9842, %v9834
    %v10035 = vpack.c.bf16 %v9843, %v9835
    %v10036 = vpack.c.bf16 %v9844, %v9836
    %v10037 = vpack.c.bf16 %v9845, %v9837
    %v10038 = vpack.c.bf16 %v9846, %v9838
    %v10039 = vpack.c.bf16 %v9847, %v9839
    %v10040 = vpack.c.bf16 %v9848, %v9840
    %v10041 = vpack.c.bf16 %v9849, %v9841
    %v10042 = vpack.c.bf16 %v9858, %v9850
    %v10043 = vpack.c.bf16 %v9859, %v9851
    %v10044 = vpack.c.bf16 %v9860, %v9852
    %v10045 = vpack.c.bf16 %v9861, %v9853
    %v10046 = vpack.c.bf16 %v9862, %v9854
    %v10047 = vpack.c.bf16 %v9863, %v9855
    %v10048 = vpack.c.bf16 %v9864, %v9856
    %v10049 = vpack.c.bf16 %v9865, %v9857
    %v10050 = vpack.c.bf16 %v9874, %v9866
    %v10051 = vpack.c.bf16 %v9875, %v9867
    %v10052 = vpack.c.bf16 %v9876, %v9868
    %v10053 = vpack.c.bf16 %v9877, %v9869
    %v10054 = vpack.c.bf16 %v9878, %v9870
    %v10055 = vpack.c.bf16 %v9879, %v9871
    %v10056 = vpack.c.bf16 %v9880, %v9872
    %v10057 = vpack.c.bf16 %v9881, %v9873
    %v10058 = vpack.c.bf16 %v9890, %v9882
    %v10059 = vpack.c.bf16 %v9891, %v9883
    %v10060 = vpack.c.bf16 %v9892, %v9884
    %v10061 = vpack.c.bf16 %v9893, %v9885
    %v10062 = vpack.c.bf16 %v9894, %v9886
    %v10063 = vpack.c.bf16 %v9895, %v9887
    %v10064 = vpack.c.bf16 %v9896, %v9888
    %v10065 = vpack.c.bf16 %v9897, %v9889
    %v10066 = vpack.c.bf16 %v9906, %v9898
    %v10067 = vpack.c.bf16 %v9907, %v9899
    %v10068 = vpack.c.bf16 %v9908, %v9900
    %v10069 = vpack.c.bf16 %v9909, %v9901
    %v10070 = vpack.c.bf16 %v9910, %v9902
    %v10071 = vpack.c.bf16 %v9911, %v9903
    %v10072 = vpack.c.bf16 %v9912, %v9904
    %v10073 = vpack.c.bf16 %v9913, %v9905
    %v10074 = vpack.c.bf16 %v9922, %v9914
    %v10075 = vpack.c.bf16 %v9923, %v9915
    %v10076 = vpack.c.bf16 %v9924, %v9916
    %v10077 = vpack.c.bf16 %v9925, %v9917
    %v10078 = vpack.c.bf16 %v9926, %v9918
    %v10079 = vpack.c.bf16 %v9927, %v9919
    %v10080 = vpack.c.bf16 %v9928, %v9920
    %v10081 = vpack.c.bf16 %v9929, %v9921
    %v10082 = vpack.c.bf16 %v9938, %v9930
    %v10083 = vpack.c.bf16 %v9939, %v9931
    %v10084 = vpack.c.bf16 %v9940, %v9932
    %v10085 = vpack.c.bf16 %v9941, %v9933
    %v10086 = vpack.c.bf16 %v9942, %v9934
    %v10087 = vpack.c.bf16 %v9943, %v9935
    %v10088 = vpack.c.bf16 %v9944, %v9936
    %v10089 = vpack.c.bf16 %v9945, %v9937
    %v10090 = vpack.c.bf16 %v9954, %v9946
    %v10091 = vpack.c.bf16 %v9955, %v9947
    %v10092 = vpack.c.bf16 %v9956, %v9948
    %v10093 = vpack.c.bf16 %v9957, %v9949
    %v10094 = vpack.c.bf16 %v9958, %v9950
    %v10095 = vpack.c.bf16 %v9959, %v9951
    %v10096 = vpack.c.bf16 %v9960, %v9952
    %v10097 = vpack.c.bf16 %v9961, %v9953
    %v10098 = vpack.c.bf16 %v9970, %v9962
    %v10099 = vpack.c.bf16 %v9971, %v9963
    %v10100 = vpack.c.bf16 %v9972, %v9964
    %v10101 = vpack.c.bf16 %v9973, %v9965
    %v10102 = vpack.c.bf16 %v9974, %v9966
    %v10103 = vpack.c.bf16 %v9975, %v9967
    %v10104 = vpack.c.bf16 %v9976, %v9968
    %v10105 = vpack.c.bf16 %v9977, %v9969
    %s10106 = smul.u32 4, 128
    %s10107 = smul.u32 %s10106, 1
    %s10108 = sshll.u32 %s10107, 4
    %10109 = dma.done %s101, %s10108
    %v10110 = vld [vmem:[#allocation3] sm:$0xf]
    %v10111 = vld [vmem:[#allocation3 + $0x4] sm:$0xf]
    %v10112 = vld [vmem:[#allocation3 + $0x8] sm:$0xf]
    %v10113 = vld [vmem:[#allocation3 + $0xc] sm:$0xf]
    %v10114 = vld [vmem:[#allocation3 + $0x10] sm:$0xf]
    %v10115 = vld [vmem:[#allocation3 + $0x14] sm:$0xf]
    %v10116 = vld [vmem:[#allocation3 + $0x18] sm:$0xf]
    %v10117 = vld [vmem:[#allocation3 + $0x1c] sm:$0xf]
    %v10118 = vld [vmem:[#allocation3 + $0x20] sm:$0xf]
    %v10119 = vld [vmem:[#allocation3 + $0x24] sm:$0xf]
    %v10120 = vld [vmem:[#allocation3 + $0x28] sm:$0xf]
    %v10121 = vld [vmem:[#allocation3 + $0x2c] sm:$0xf]
    %v10122 = vld [vmem:[#allocation3 + $0x30] sm:$0xf]
    %v10123 = vld [vmem:[#allocation3 + $0x34] sm:$0xf]
    %v10124 = vld [vmem:[#allocation3 + $0x38] sm:$0xf]
    %v10125 = vld [vmem:[#allocation3 + $0x3c] sm:$0xf]
    %v10126 = vld [vmem:[#allocation3 + $0x40] sm:$0xf]
    %v10127 = vld [vmem:[#allocation3 + $0x44] sm:$0xf]
    %v10128 = vld [vmem:[#allocation3 + $0x48] sm:$0xf]
    %v10129 = vld [vmem:[#allocation3 + $0x4c] sm:$0xf]
    %v10130 = vld [vmem:[#allocation3 + $0x50] sm:$0xf]
    %v10131 = vld [vmem:[#allocation3 + $0x54] sm:$0xf]
    %v10132 = vld [vmem:[#allocation3 + $0x58] sm:$0xf]
    %v10133 = vld [vmem:[#allocation3 + $0x5c] sm:$0xf]
    %v10134 = vld [vmem:[#allocation3 + $0x60] sm:$0xf]
    %v10135 = vld [vmem:[#allocation3 + $0x64] sm:$0xf]
    %v10136 = vld [vmem:[#allocation3 + $0x68] sm:$0xf]
    %v10137 = vld [vmem:[#allocation3 + $0x6c] sm:$0xf]
    %v10138 = vld [vmem:[#allocation3 + $0x70] sm:$0xf]
    %v10139 = vld [vmem:[#allocation3 + $0x74] sm:$0xf]
    %v10140 = vld [vmem:[#allocation3 + $0x78] sm:$0xf]
    %v10141 = vld [vmem:[#allocation3 + $0x7c] sm:$0xf]
    %v10142 = vld [vmem:[#allocation3 + $0x80] sm:$0xf]
    %v10143 = vld [vmem:[#allocation3 + $0x84] sm:$0xf]
    %v10144 = vld [vmem:[#allocation3 + $0x88] sm:$0xf]
    %v10145 = vld [vmem:[#allocation3 + $0x8c] sm:$0xf]
    %v10146 = vld [vmem:[#allocation3 + $0x90] sm:$0xf]
    %v10147 = vld [vmem:[#allocation3 + $0x94] sm:$0xf]
    %v10148 = vld [vmem:[#allocation3 + $0x98] sm:$0xf]
    %v10149 = vld [vmem:[#allocation3 + $0x9c] sm:$0xf]
    %v10150 = vld [vmem:[#allocation3 + $0xa0] sm:$0xf]
    %v10151 = vld [vmem:[#allocation3 + $0xa4] sm:$0xf]
    %v10152 = vld [vmem:[#allocation3 + $0xa8] sm:$0xf]
    %v10153 = vld [vmem:[#allocation3 + $0xac] sm:$0xf]
    %v10154 = vld [vmem:[#allocation3 + $0xb0] sm:$0xf]
    %v10155 = vld [vmem:[#allocation3 + $0xb4] sm:$0xf]
    %v10156 = vld [vmem:[#allocation3 + $0xb8] sm:$0xf]
    %v10157 = vld [vmem:[#allocation3 + $0xbc] sm:$0xf]
    %v10158 = vld [vmem:[#allocation3 + $0xc0] sm:$0xf]
    %v10159 = vld [vmem:[#allocation3 + $0xc4] sm:$0xf]
    %v10160 = vld [vmem:[#allocation3 + $0xc8] sm:$0xf]
    %v10161 = vld [vmem:[#allocation3 + $0xcc] sm:$0xf]
    %v10162 = vld [vmem:[#allocation3 + $0xd0] sm:$0xf]
    %v10163 = vld [vmem:[#allocation3 + $0xd4] sm:$0xf]
    %v10164 = vld [vmem:[#allocation3 + $0xd8] sm:$0xf]
    %v10165 = vld [vmem:[#allocation3 + $0xdc] sm:$0xf]
    %v10166 = vld [vmem:[#allocation3 + $0xe0] sm:$0xf]
    %v10167 = vld [vmem:[#allocation3 + $0xe4] sm:$0xf]
    %v10168 = vld [vmem:[#allocation3 + $0xe8] sm:$0xf]
    %v10169 = vld [vmem:[#allocation3 + $0xec] sm:$0xf]
    %v10170 = vld [vmem:[#allocation3 + $0xf0] sm:$0xf]
    %v10171 = vld [vmem:[#allocation3 + $0xf4] sm:$0xf]
    %v10172 = vld [vmem:[#allocation3 + $0xf8] sm:$0xf]
    %v10173 = vld [vmem:[#allocation3 + $0xfc] sm:$0xf]
    %v10174 = vld [vmem:[#allocation3 + $0x100] sm:$0xf]
    %v10175 = vld [vmem:[#allocation3 + $0x104] sm:$0xf]
    %v10176 = vld [vmem:[#allocation3 + $0x108] sm:$0xf]
    %v10177 = vld [vmem:[#allocation3 + $0x10c] sm:$0xf]
    %v10178 = vld [vmem:[#allocation3 + $0x110] sm:$0xf]
    %v10179 = vld [vmem:[#allocation3 + $0x114] sm:$0xf]
    %v10180 = vld [vmem:[#allocation3 + $0x118] sm:$0xf]
    %v10181 = vld [vmem:[#allocation3 + $0x11c] sm:$0xf]
    %v10182 = vld [vmem:[#allocation3 + $0x120] sm:$0xf]
    %v10183 = vld [vmem:[#allocation3 + $0x124] sm:$0xf]
    %v10184 = vld [vmem:[#allocation3 + $0x128] sm:$0xf]
    %v10185 = vld [vmem:[#allocation3 + $0x12c] sm:$0xf]
    %v10186 = vld [vmem:[#allocation3 + $0x130] sm:$0xf]
    %v10187 = vld [vmem:[#allocation3 + $0x134] sm:$0xf]
    %v10188 = vld [vmem:[#allocation3 + $0x138] sm:$0xf]
    %v10189 = vld [vmem:[#allocation3 + $0x13c] sm:$0xf]
    %v10190 = vld [vmem:[#allocation3 + $0x140] sm:$0xf]
    %v10191 = vld [vmem:[#allocation3 + $0x144] sm:$0xf]
    %v10192 = vld [vmem:[#allocation3 + $0x148] sm:$0xf]
    %v10193 = vld [vmem:[#allocation3 + $0x14c] sm:$0xf]
    %v10194 = vld [vmem:[#allocation3 + $0x150] sm:$0xf]
    %v10195 = vld [vmem:[#allocation3 + $0x154] sm:$0xf]
    %v10196 = vld [vmem:[#allocation3 + $0x158] sm:$0xf]
    %v10197 = vld [vmem:[#allocation3 + $0x15c] sm:$0xf]
    %v10198 = vld [vmem:[#allocation3 + $0x160] sm:$0xf]
    %v10199 = vld [vmem:[#allocation3 + $0x164] sm:$0xf]
    %v10200 = vld [vmem:[#allocation3 + $0x168] sm:$0xf]
    %v10201 = vld [vmem:[#allocation3 + $0x16c] sm:$0xf]
    %v10202 = vld [vmem:[#allocation3 + $0x170] sm:$0xf]
    %v10203 = vld [vmem:[#allocation3 + $0x174] sm:$0xf]
    %v10204 = vld [vmem:[#allocation3 + $0x178] sm:$0xf]
    %v10205 = vld [vmem:[#allocation3 + $0x17c] sm:$0xf]
    %v10206 = vld [vmem:[#allocation3 + $0x180] sm:$0xf]
    %v10207 = vld [vmem:[#allocation3 + $0x184] sm:$0xf]
    %v10208 = vld [vmem:[#allocation3 + $0x188] sm:$0xf]
    %v10209 = vld [vmem:[#allocation3 + $0x18c] sm:$0xf]
    %v10210 = vld [vmem:[#allocation3 + $0x190] sm:$0xf]
    %v10211 = vld [vmem:[#allocation3 + $0x194] sm:$0xf]
    %v10212 = vld [vmem:[#allocation3 + $0x198] sm:$0xf]
    %v10213 = vld [vmem:[#allocation3 + $0x19c] sm:$0xf]
    %v10214 = vld [vmem:[#allocation3 + $0x1a0] sm:$0xf]
    %v10215 = vld [vmem:[#allocation3 + $0x1a4] sm:$0xf]
    %v10216 = vld [vmem:[#allocation3 + $0x1a8] sm:$0xf]
    %v10217 = vld [vmem:[#allocation3 + $0x1ac] sm:$0xf]
    %v10218 = vld [vmem:[#allocation3 + $0x1b0] sm:$0xf]
    %v10219 = vld [vmem:[#allocation3 + $0x1b4] sm:$0xf]
    %v10220 = vld [vmem:[#allocation3 + $0x1b8] sm:$0xf]
    %v10221 = vld [vmem:[#allocation3 + $0x1bc] sm:$0xf]
    %v10222 = vld [vmem:[#allocation3 + $0x1c0] sm:$0xf]
    %v10223 = vld [vmem:[#allocation3 + $0x1c4] sm:$0xf]
    %v10224 = vld [vmem:[#allocation3 + $0x1c8] sm:$0xf]
    %v10225 = vld [vmem:[#allocation3 + $0x1cc] sm:$0xf]
    %v10226 = vld [vmem:[#allocation3 + $0x1d0] sm:$0xf]
    %v10227 = vld [vmem:[#allocation3 + $0x1d4] sm:$0xf]
    %v10228 = vld [vmem:[#allocation3 + $0x1d8] sm:$0xf]
    %v10229 = vld [vmem:[#allocation3 + $0x1dc] sm:$0xf]
    %v10230 = vld [vmem:[#allocation3 + $0x1e0] sm:$0xf]
    %v10231 = vld [vmem:[#allocation3 + $0x1e4] sm:$0xf]
    %v10232 = vld [vmem:[#allocation3 + $0x1e8] sm:$0xf]
    %v10233 = vld [vmem:[#allocation3 + $0x1ec] sm:$0xf]
    %v10234 = vld [vmem:[#allocation3 + $0x1f0] sm:$0xf]
    %v10235 = vld [vmem:[#allocation3 + $0x1f4] sm:$0xf]
    %v10236 = vld [vmem:[#allocation3 + $0x1f8] sm:$0xf]
    %v10237 = vld [vmem:[#allocation3 + $0x1fc] sm:$0xf]
    %v10238 = vld [vmem:[%s13] sm:$0x1]
    %v10240 = vperm.slane %v10238, 0
    %v10370 = vunpack.c.l.b16 %v10110
    %v10371 = vunpack.c.l.b16 %v10111
    %v10372 = vunpack.c.l.b16 %v10112
    %v10373 = vunpack.c.l.b16 %v10113
    %v10374 = vunpack.c.l.b16 %v10114
    %v10375 = vunpack.c.l.b16 %v10115
    %v10376 = vunpack.c.l.b16 %v10116
    %v10377 = vunpack.c.l.b16 %v10117
    %v10378 = vunpack.c.l.b16 %v10118
    %v10379 = vunpack.c.l.b16 %v10119
    %v10380 = vunpack.c.l.b16 %v10120
    %v10381 = vunpack.c.l.b16 %v10121
    %v10382 = vunpack.c.l.b16 %v10122
    %v10383 = vunpack.c.l.b16 %v10123
    %v10384 = vunpack.c.l.b16 %v10124
    %v10385 = vunpack.c.l.b16 %v10125
    %v10386 = vunpack.c.l.b16 %v10126
    %v10387 = vunpack.c.l.b16 %v10127
    %v10388 = vunpack.c.l.b16 %v10128
    %v10389 = vunpack.c.l.b16 %v10129
    %v10390 = vunpack.c.l.b16 %v10130
    %v10391 = vunpack.c.l.b16 %v10131
    %v10392 = vunpack.c.l.b16 %v10132
    %v10393 = vunpack.c.l.b16 %v10133
    %v10394 = vunpack.c.l.b16 %v10134
    %v10395 = vunpack.c.l.b16 %v10135
    %v10396 = vunpack.c.l.b16 %v10136
    %v10397 = vunpack.c.l.b16 %v10137
    %v10398 = vunpack.c.l.b16 %v10138
    %v10399 = vunpack.c.l.b16 %v10139
    %v10400 = vunpack.c.l.b16 %v10140
    %v10401 = vunpack.c.l.b16 %v10141
    %v10402 = vunpack.c.l.b16 %v10142
    %v10403 = vunpack.c.l.b16 %v10143
    %v10404 = vunpack.c.l.b16 %v10144
    %v10405 = vunpack.c.l.b16 %v10145
    %v10406 = vunpack.c.l.b16 %v10146
    %v10407 = vunpack.c.l.b16 %v10147
    %v10408 = vunpack.c.l.b16 %v10148
    %v10409 = vunpack.c.l.b16 %v10149
    %v10410 = vunpack.c.l.b16 %v10150
    %v10411 = vunpack.c.l.b16 %v10151
    %v10412 = vunpack.c.l.b16 %v10152
    %v10413 = vunpack.c.l.b16 %v10153
    %v10414 = vunpack.c.l.b16 %v10154
    %v10415 = vunpack.c.l.b16 %v10155
    %v10416 = vunpack.c.l.b16 %v10156
    %v10417 = vunpack.c.l.b16 %v10157
    %v10418 = vunpack.c.l.b16 %v10158
    %v10419 = vunpack.c.l.b16 %v10159
    %v10420 = vunpack.c.l.b16 %v10160
    %v10421 = vunpack.c.l.b16 %v10161
    %v10422 = vunpack.c.l.b16 %v10162
    %v10423 = vunpack.c.l.b16 %v10163
    %v10424 = vunpack.c.l.b16 %v10164
    %v10425 = vunpack.c.l.b16 %v10165
    %v10426 = vunpack.c.l.b16 %v10166
    %v10427 = vunpack.c.l.b16 %v10167
    %v10428 = vunpack.c.l.b16 %v10168
    %v10429 = vunpack.c.l.b16 %v10169
    %v10430 = vunpack.c.l.b16 %v10170
    %v10431 = vunpack.c.l.b16 %v10171
    %v10432 = vunpack.c.l.b16 %v10172
    %v10433 = vunpack.c.l.b16 %v10173
    %v10434 = vunpack.c.l.b16 %v10174
    %v10435 = vunpack.c.l.b16 %v10175
    %v10436 = vunpack.c.l.b16 %v10176
    %v10437 = vunpack.c.l.b16 %v10177
    %v10438 = vunpack.c.l.b16 %v10178
    %v10439 = vunpack.c.l.b16 %v10179
    %v10440 = vunpack.c.l.b16 %v10180
    %v10441 = vunpack.c.l.b16 %v10181
    %v10442 = vunpack.c.l.b16 %v10182
    %v10443 = vunpack.c.l.b16 %v10183
    %v10444 = vunpack.c.l.b16 %v10184
    %v10445 = vunpack.c.l.b16 %v10185
    %v10446 = vunpack.c.l.b16 %v10186
    %v10447 = vunpack.c.l.b16 %v10187
    %v10448 = vunpack.c.l.b16 %v10188
    %v10449 = vunpack.c.l.b16 %v10189
    %v10450 = vunpack.c.l.b16 %v10190
    %v10451 = vunpack.c.l.b16 %v10191
    %v10452 = vunpack.c.l.b16 %v10192
    %v10453 = vunpack.c.l.b16 %v10193
    %v10454 = vunpack.c.l.b16 %v10194
    %v10455 = vunpack.c.l.b16 %v10195
    %v10456 = vunpack.c.l.b16 %v10196
    %v10457 = vunpack.c.l.b16 %v10197
    %v10458 = vunpack.c.l.b16 %v10198
    %v10459 = vunpack.c.l.b16 %v10199
    %v10460 = vunpack.c.l.b16 %v10200
    %v10461 = vunpack.c.l.b16 %v10201
    %v10462 = vunpack.c.l.b16 %v10202
    %v10463 = vunpack.c.l.b16 %v10203
    %v10464 = vunpack.c.l.b16 %v10204
    %v10465 = vunpack.c.l.b16 %v10205
    %v10466 = vunpack.c.l.b16 %v10206
    %v10467 = vunpack.c.l.b16 %v10207
    %v10468 = vunpack.c.l.b16 %v10208
    %v10469 = vunpack.c.l.b16 %v10209
    %v10470 = vunpack.c.l.b16 %v10210
    %v10471 = vunpack.c.l.b16 %v10211
    %v10472 = vunpack.c.l.b16 %v10212
    %v10473 = vunpack.c.l.b16 %v10213
    %v10474 = vunpack.c.l.b16 %v10214
    %v10475 = vunpack.c.l.b16 %v10215
    %v10476 = vunpack.c.l.b16 %v10216
    %v10477 = vunpack.c.l.b16 %v10217
    %v10478 = vunpack.c.l.b16 %v10218
    %v10479 = vunpack.c.l.b16 %v10219
    %v10480 = vunpack.c.l.b16 %v10220
    %v10481 = vunpack.c.l.b16 %v10221
    %v10482 = vunpack.c.l.b16 %v10222
    %v10483 = vunpack.c.l.b16 %v10223
    %v10484 = vunpack.c.l.b16 %v10224
    %v10485 = vunpack.c.l.b16 %v10225
    %v10486 = vunpack.c.l.b16 %v10226
    %v10487 = vunpack.c.l.b16 %v10227
    %v10488 = vunpack.c.l.b16 %v10228
    %v10489 = vunpack.c.l.b16 %v10229
    %v10490 = vunpack.c.l.b16 %v10230
    %v10491 = vunpack.c.l.b16 %v10231
    %v10492 = vunpack.c.l.b16 %v10232
    %v10493 = vunpack.c.l.b16 %v10233
    %v10494 = vunpack.c.l.b16 %v10234
    %v10495 = vunpack.c.l.b16 %v10235
    %v10496 = vunpack.c.l.b16 %v10236
    %v10497 = vunpack.c.l.b16 %v10237
    %v10498 = vpack.c.b16 %v10371, %v10370
    %v10499 = vpack.c.b16 %v10373, %v10372
    %v10500 = vpack.c.b16 %v10375, %v10374
    %v10501 = vpack.c.b16 %v10377, %v10376
    %v10502 = vpack.c.b16 %v10379, %v10378
    %v10503 = vpack.c.b16 %v10381, %v10380
    %v10504 = vpack.c.b16 %v10383, %v10382
    %v10505 = vpack.c.b16 %v10385, %v10384
    %v10506 = vpack.c.b16 %v10387, %v10386
    %v10507 = vpack.c.b16 %v10389, %v10388
    %v10508 = vpack.c.b16 %v10391, %v10390
    %v10509 = vpack.c.b16 %v10393, %v10392
    %v10510 = vpack.c.b16 %v10395, %v10394
    %v10511 = vpack.c.b16 %v10397, %v10396
    %v10512 = vpack.c.b16 %v10399, %v10398
    %v10513 = vpack.c.b16 %v10401, %v10400
    %v10514 = vpack.c.b16 %v10403, %v10402
    %v10515 = vpack.c.b16 %v10405, %v10404
    %v10516 = vpack.c.b16 %v10407, %v10406
    %v10517 = vpack.c.b16 %v10409, %v10408
    %v10518 = vpack.c.b16 %v10411, %v10410
    %v10519 = vpack.c.b16 %v10413, %v10412
    %v10520 = vpack.c.b16 %v10415, %v10414
    %v10521 = vpack.c.b16 %v10417, %v10416
    %v10522 = vpack.c.b16 %v10419, %v10418
    %v10523 = vpack.c.b16 %v10421, %v10420
    %v10524 = vpack.c.b16 %v10423, %v10422
    %v10525 = vpack.c.b16 %v10425, %v10424
    %v10526 = vpack.c.b16 %v10427, %v10426
    %v10527 = vpack.c.b16 %v10429, %v10428
    %v10528 = vpack.c.b16 %v10431, %v10430
    %v10529 = vpack.c.b16 %v10433, %v10432
    %v10530 = vpack.c.b16 %v10435, %v10434
    %v10531 = vpack.c.b16 %v10437, %v10436
    %v10532 = vpack.c.b16 %v10439, %v10438
    %v10533 = vpack.c.b16 %v10441, %v10440
    %v10534 = vpack.c.b16 %v10443, %v10442
    %v10535 = vpack.c.b16 %v10445, %v10444
    %v10536 = vpack.c.b16 %v10447, %v10446
    %v10537 = vpack.c.b16 %v10449, %v10448
    %v10538 = vpack.c.b16 %v10451, %v10450
    %v10539 = vpack.c.b16 %v10453, %v10452
    %v10540 = vpack.c.b16 %v10455, %v10454
    %v10541 = vpack.c.b16 %v10457, %v10456
    %v10542 = vpack.c.b16 %v10459, %v10458
    %v10543 = vpack.c.b16 %v10461, %v10460
    %v10544 = vpack.c.b16 %v10463, %v10462
    %v10545 = vpack.c.b16 %v10465, %v10464
    %v10546 = vpack.c.b16 %v10467, %v10466
    %v10547 = vpack.c.b16 %v10469, %v10468
    %v10548 = vpack.c.b16 %v10471, %v10470
    %v10549 = vpack.c.b16 %v10473, %v10472
    %v10550 = vpack.c.b16 %v10475, %v10474
    %v10551 = vpack.c.b16 %v10477, %v10476
    %v10552 = vpack.c.b16 %v10479, %v10478
    %v10553 = vpack.c.b16 %v10481, %v10480
    %v10554 = vpack.c.b16 %v10483, %v10482
    %v10555 = vpack.c.b16 %v10485, %v10484
    %v10556 = vpack.c.b16 %v10487, %v10486
    %v10557 = vpack.c.b16 %v10489, %v10488
    %v10558 = vpack.c.b16 %v10491, %v10490
    %v10559 = vpack.c.b16 %v10493, %v10492
    %v10560 = vpack.c.b16 %v10495, %v10494
    %v10561 = vpack.c.b16 %v10497, %v10496
    %10626 = vmatpush.bf16.msra.mxu0 %v10505
    %10627 = vmatpush.bf16.msra.mxu0 %v10504
    %10628 = vmatpush.bf16.msra.mxu0 %v10503
    %10629 = vmatpush.bf16.msra.mxu0 %v10502
    %10630 = vmatpush.bf16.msra.mxu0 %v10501
    %10631 = vmatpush.bf16.msra.mxu0 %v10500
    %10632 = vmatpush.bf16.msra.mxu0 %v10499
    %10633 = vmatpush.bf16.msra.mxu0 %v10498
    %10634 = vmatmul.bf16.gmra.mxu0 %v9978
    %v10635 = vpop.f32.mrf.mxu0
    %v10636 = vadd.f32 %v10240, %v10635
    %v10637 = vpop.f32.mrf.mxu0
    %v10638 = vadd.f32 %v10240, %v10637
    %10639 = vmatmul.bf16.gmra.mxu0 %v9986
    %v10640 = vpop.f32.mrf.mxu0
    %v10641 = vadd.f32 %v10240, %v10640
    %v10642 = vpop.f32.mrf.mxu0
    %v10643 = vadd.f32 %v10240, %v10642
    %10644 = vmatmul.bf16.gmra.mxu0 %v9994
    %v10645 = vpop.f32.mrf.mxu0
    %v10646 = vadd.f32 %v10240, %v10645
    %v10647 = vpop.f32.mrf.mxu0
    %v10648 = vadd.f32 %v10240, %v10647
    %10649 = vmatmul.bf16.gmra.mxu0 %v10002
    %v10650 = vpop.f32.mrf.mxu0
    %v10651 = vadd.f32 %v10240, %v10650
    %v10652 = vpop.f32.mrf.mxu0
    %v10653 = vadd.f32 %v10240, %v10652
    %10654 = vmatmul.bf16.gmra.mxu0 %v10010
    %v10655 = vpop.f32.mrf.mxu0
    %v10656 = vadd.f32 %v10240, %v10655
    %v10657 = vpop.f32.mrf.mxu0
    %v10658 = vadd.f32 %v10240, %v10657
    %10659 = vmatmul.bf16.gmra.mxu0 %v10018
    %v10660 = vpop.f32.mrf.mxu0
    %v10661 = vadd.f32 %v10240, %v10660
    %v10662 = vpop.f32.mrf.mxu0
    %v10663 = vadd.f32 %v10240, %v10662
    %10664 = vmatmul.bf16.gmra.mxu0 %v10026
    %v10665 = vpop.f32.mrf.mxu0
    %v10666 = vadd.f32 %v10240, %v10665
    %v10667 = vpop.f32.mrf.mxu0
    %v10668 = vadd.f32 %v10240, %v10667
    %10669 = vmatmul.bf16.gmra.mxu0 %v10034
    %v10670 = vpop.f32.mrf.mxu0
    %v10671 = vadd.f32 %v10240, %v10670
    %v10672 = vpop.f32.mrf.mxu0
    %v10673 = vadd.f32 %v10240, %v10672
    %10674 = vmatmul.bf16.gmra.mxu0 %v10042
    %v10675 = vpop.f32.mrf.mxu0
    %v10676 = vadd.f32 %v10240, %v10675
    %v10677 = vpop.f32.mrf.mxu0
    %v10678 = vadd.f32 %v10240, %v10677
    %10679 = vmatmul.bf16.gmra.mxu0 %v10050
    %v10680 = vpop.f32.mrf.mxu0
    %v10681 = vadd.f32 %v10240, %v10680
    %v10682 = vpop.f32.mrf.mxu0
    %v10683 = vadd.f32 %v10240, %v10682
    %10684 = vmatmul.bf16.gmra.mxu0 %v10058
    %v10685 = vpop.f32.mrf.mxu0
    %v10686 = vadd.f32 %v10240, %v10685
    %v10687 = vpop.f32.mrf.mxu0
    %v10688 = vadd.f32 %v10240, %v10687
    %10689 = vmatmul.bf16.gmra.mxu0 %v10066
    %v10690 = vpop.f32.mrf.mxu0
    %v10691 = vadd.f32 %v10240, %v10690
    %v10692 = vpop.f32.mrf.mxu0
    %v10693 = vadd.f32 %v10240, %v10692
    %10694 = vmatmul.bf16.gmra.mxu0 %v10074
    %v10695 = vpop.f32.mrf.mxu0
    %v10696 = vadd.f32 %v10240, %v10695
    %v10697 = vpop.f32.mrf.mxu0
    %v10698 = vadd.f32 %v10240, %v10697
    %10699 = vmatmul.bf16.gmra.mxu0 %v10082
    %v10700 = vpop.f32.mrf.mxu0
    %v10701 = vadd.f32 %v10240, %v10700
    %v10702 = vpop.f32.mrf.mxu0
    %v10703 = vadd.f32 %v10240, %v10702
    %10704 = vmatmul.bf16.gmra.mxu0 %v10090
    %v10705 = vpop.f32.mrf.mxu0
    %v10706 = vadd.f32 %v10240, %v10705
    %v10707 = vpop.f32.mrf.mxu0
    %v10708 = vadd.f32 %v10240, %v10707
    %10709 = vmatmul.bf16.gmra.mxu0 %v10098
    %v10710 = vpop.f32.mrf.mxu0
    %v10711 = vadd.f32 %v10240, %v10710
    %v10712 = vpop.f32.mrf.mxu0
    %v10713 = vadd.f32 %v10240, %v10712
    %10714 = vdwg.mxu0
    %10715 = vmatpush.bf16.msra.mxu0 %v10513
    %10716 = vmatpush.bf16.msra.mxu0 %v10512
    %10717 = vmatpush.bf16.msra.mxu0 %v10511
    %10718 = vmatpush.bf16.msra.mxu0 %v10510
    %10719 = vmatpush.bf16.msra.mxu0 %v10509
    %10720 = vmatpush.bf16.msra.mxu0 %v10508
    %10721 = vmatpush.bf16.msra.mxu0 %v10507
    %10722 = vmatpush.bf16.msra.mxu0 %v10506
    %10723 = vmatmul.bf16.gmra.mxu0 %v9979
    %v10724 = vpop.f32.mrf.mxu0
    %v10725 = vadd.f32 %v10636, %v10724
    %v10726 = vpop.f32.mrf.mxu0
    %v10727 = vadd.f32 %v10638, %v10726
    %10728 = vmatmul.bf16.gmra.mxu0 %v9987
    %v10729 = vpop.f32.mrf.mxu0
    %v10730 = vadd.f32 %v10641, %v10729
    %v10731 = vpop.f32.mrf.mxu0
    %v10732 = vadd.f32 %v10643, %v10731
    %10733 = vmatmul.bf16.gmra.mxu0 %v9995
    %v10734 = vpop.f32.mrf.mxu0
    %v10735 = vadd.f32 %v10646, %v10734
    %v10736 = vpop.f32.mrf.mxu0
    %v10737 = vadd.f32 %v10648, %v10736
    %10738 = vmatmul.bf16.gmra.mxu0 %v10003
    %v10739 = vpop.f32.mrf.mxu0
    %v10740 = vadd.f32 %v10651, %v10739
    %v10741 = vpop.f32.mrf.mxu0
    %v10742 = vadd.f32 %v10653, %v10741
    %10743 = vmatmul.bf16.gmra.mxu0 %v10011
    %v10744 = vpop.f32.mrf.mxu0
    %v10745 = vadd.f32 %v10656, %v10744
    %v10746 = vpop.f32.mrf.mxu0
    %v10747 = vadd.f32 %v10658, %v10746
    %10748 = vmatmul.bf16.gmra.mxu0 %v10019
    %v10749 = vpop.f32.mrf.mxu0
    %v10750 = vadd.f32 %v10661, %v10749
    %v10751 = vpop.f32.mrf.mxu0
    %v10752 = vadd.f32 %v10663, %v10751
    %10753 = vmatmul.bf16.gmra.mxu0 %v10027
    %v10754 = vpop.f32.mrf.mxu0
    %v10755 = vadd.f32 %v10666, %v10754
    %v10756 = vpop.f32.mrf.mxu0
    %v10757 = vadd.f32 %v10668, %v10756
    %10758 = vmatmul.bf16.gmra.mxu0 %v10035
    %v10759 = vpop.f32.mrf.mxu0
    %v10760 = vadd.f32 %v10671, %v10759
    %v10761 = vpop.f32.mrf.mxu0
    %v10762 = vadd.f32 %v10673, %v10761
    %10763 = vmatmul.bf16.gmra.mxu0 %v10043
    %v10764 = vpop.f32.mrf.mxu0
    %v10765 = vadd.f32 %v10676, %v10764
    %v10766 = vpop.f32.mrf.mxu0
    %v10767 = vadd.f32 %v10678, %v10766
    %10768 = vmatmul.bf16.gmra.mxu0 %v10051
    %v10769 = vpop.f32.mrf.mxu0
    %v10770 = vadd.f32 %v10681, %v10769
    %v10771 = vpop.f32.mrf.mxu0
    %v10772 = vadd.f32 %v10683, %v10771
    %10773 = vmatmul.bf16.gmra.mxu0 %v10059
    %v10774 = vpop.f32.mrf.mxu0
    %v10775 = vadd.f32 %v10686, %v10774
    %v10776 = vpop.f32.mrf.mxu0
    %v10777 = vadd.f32 %v10688, %v10776
    %10778 = vmatmul.bf16.gmra.mxu0 %v10067
    %v10779 = vpop.f32.mrf.mxu0
    %v10780 = vadd.f32 %v10691, %v10779
    %v10781 = vpop.f32.mrf.mxu0
    %v10782 = vadd.f32 %v10693, %v10781
    %10783 = vmatmul.bf16.gmra.mxu0 %v10075
    %v10784 = vpop.f32.mrf.mxu0
    %v10785 = vadd.f32 %v10696, %v10784
    %v10786 = vpop.f32.mrf.mxu0
    %v10787 = vadd.f32 %v10698, %v10786
    %10788 = vmatmul.bf16.gmra.mxu0 %v10083
    %v10789 = vpop.f32.mrf.mxu0
    %v10790 = vadd.f32 %v10701, %v10789
    %v10791 = vpop.f32.mrf.mxu0
    %v10792 = vadd.f32 %v10703, %v10791
    %10793 = vmatmul.bf16.gmra.mxu0 %v10091
    %v10794 = vpop.f32.mrf.mxu0
    %v10795 = vadd.f32 %v10706, %v10794
    %v10796 = vpop.f32.mrf.mxu0
    %v10797 = vadd.f32 %v10708, %v10796
    %10798 = vmatmul.bf16.gmra.mxu0 %v10099
    %v10799 = vpop.f32.mrf.mxu0
    %v10800 = vadd.f32 %v10711, %v10799
    %v10801 = vpop.f32.mrf.mxu0
    %v10802 = vadd.f32 %v10713, %v10801
    %10803 = vdwg.mxu0
    %10804 = vmatpush.bf16.msra.mxu0 %v10521
    %10805 = vmatpush.bf16.msra.mxu0 %v10520
    %10806 = vmatpush.bf16.msra.mxu0 %v10519
    %10807 = vmatpush.bf16.msra.mxu0 %v10518
    %10808 = vmatpush.bf16.msra.mxu0 %v10517
    %10809 = vmatpush.bf16.msra.mxu0 %v10516
    %10810 = vmatpush.bf16.msra.mxu0 %v10515
    %10811 = vmatpush.bf16.msra.mxu0 %v10514
    %10812 = vmatmul.bf16.gmra.mxu0 %v9980
    %v10813 = vpop.f32.mrf.mxu0
    %v10814 = vadd.f32 %v10725, %v10813
    %v10815 = vpop.f32.mrf.mxu0
    %v10816 = vadd.f32 %v10727, %v10815
    %10817 = vmatmul.bf16.gmra.mxu0 %v9988
    %v10818 = vpop.f32.mrf.mxu0
    %v10819 = vadd.f32 %v10730, %v10818
    %v10820 = vpop.f32.mrf.mxu0
    %v10821 = vadd.f32 %v10732, %v10820
    %10822 = vmatmul.bf16.gmra.mxu0 %v9996
    %v10823 = vpop.f32.mrf.mxu0
    %v10824 = vadd.f32 %v10735, %v10823
    %v10825 = vpop.f32.mrf.mxu0
    %v10826 = vadd.f32 %v10737, %v10825
    %10827 = vmatmul.bf16.gmra.mxu0 %v10004
    %v10828 = vpop.f32.mrf.mxu0
    %v10829 = vadd.f32 %v10740, %v10828
    %v10830 = vpop.f32.mrf.mxu0
    %v10831 = vadd.f32 %v10742, %v10830
    %10832 = vmatmul.bf16.gmra.mxu0 %v10012
    %v10833 = vpop.f32.mrf.mxu0
    %v10834 = vadd.f32 %v10745, %v10833
    %v10835 = vpop.f32.mrf.mxu0
    %v10836 = vadd.f32 %v10747, %v10835
    %10837 = vmatmul.bf16.gmra.mxu0 %v10020
    %v10838 = vpop.f32.mrf.mxu0
    %v10839 = vadd.f32 %v10750, %v10838
    %v10840 = vpop.f32.mrf.mxu0
    %v10841 = vadd.f32 %v10752, %v10840
    %10842 = vmatmul.bf16.gmra.mxu0 %v10028
    %v10843 = vpop.f32.mrf.mxu0
    %v10844 = vadd.f32 %v10755, %v10843
    %v10845 = vpop.f32.mrf.mxu0
    %v10846 = vadd.f32 %v10757, %v10845
    %10847 = vmatmul.bf16.gmra.mxu0 %v10036
    %v10848 = vpop.f32.mrf.mxu0
    %v10849 = vadd.f32 %v10760, %v10848
    %v10850 = vpop.f32.mrf.mxu0
    %v10851 = vadd.f32 %v10762, %v10850
    %10852 = vmatmul.bf16.gmra.mxu0 %v10044
    %v10853 = vpop.f32.mrf.mxu0
    %v10854 = vadd.f32 %v10765, %v10853
    %v10855 = vpop.f32.mrf.mxu0
    %v10856 = vadd.f32 %v10767, %v10855
    %10857 = vmatmul.bf16.gmra.mxu0 %v10052
    %v10858 = vpop.f32.mrf.mxu0
    %v10859 = vadd.f32 %v10770, %v10858
    %v10860 = vpop.f32.mrf.mxu0
    %v10861 = vadd.f32 %v10772, %v10860
    %10862 = vmatmul.bf16.gmra.mxu0 %v10060
    %v10863 = vpop.f32.mrf.mxu0
    %v10864 = vadd.f32 %v10775, %v10863
    %v10865 = vpop.f32.mrf.mxu0
    %v10866 = vadd.f32 %v10777, %v10865
    %10867 = vmatmul.bf16.gmra.mxu0 %v10068
    %v10868 = vpop.f32.mrf.mxu0
    %v10869 = vadd.f32 %v10780, %v10868
    %v10870 = vpop.f32.mrf.mxu0
    %v10871 = vadd.f32 %v10782, %v10870
    %10872 = vmatmul.bf16.gmra.mxu0 %v10076
    %v10873 = vpop.f32.mrf.mxu0
    %v10874 = vadd.f32 %v10785, %v10873
    %v10875 = vpop.f32.mrf.mxu0
    %v10876 = vadd.f32 %v10787, %v10875
    %10877 = vmatmul.bf16.gmra.mxu0 %v10084
    %v10878 = vpop.f32.mrf.mxu0
    %v10879 = vadd.f32 %v10790, %v10878
    %v10880 = vpop.f32.mrf.mxu0
    %v10881 = vadd.f32 %v10792, %v10880
    %10882 = vmatmul.bf16.gmra.mxu0 %v10092
    %v10883 = vpop.f32.mrf.mxu0
    %v10884 = vadd.f32 %v10795, %v10883
    %v10885 = vpop.f32.mrf.mxu0
    %v10886 = vadd.f32 %v10797, %v10885
    %10887 = vmatmul.bf16.gmra.mxu0 %v10100
    %v10888 = vpop.f32.mrf.mxu0
    %v10889 = vadd.f32 %v10800, %v10888
    %v10890 = vpop.f32.mrf.mxu0
    %v10891 = vadd.f32 %v10802, %v10890
    %10892 = vdwg.mxu0
    %10893 = vmatpush.bf16.msra.mxu0 %v10529
    %10894 = vmatpush.bf16.msra.mxu0 %v10528
    %10895 = vmatpush.bf16.msra.mxu0 %v10527
    %10896 = vmatpush.bf16.msra.mxu0 %v10526
    %10897 = vmatpush.bf16.msra.mxu0 %v10525
    %10898 = vmatpush.bf16.msra.mxu0 %v10524
    %10899 = vmatpush.bf16.msra.mxu0 %v10523
    %10900 = vmatpush.bf16.msra.mxu0 %v10522
    %10901 = vmatmul.bf16.gmra.mxu0 %v9981
    %v10902 = vpop.f32.mrf.mxu0
    %v10903 = vadd.f32 %v10814, %v10902
    %v10904 = vpop.f32.mrf.mxu0
    %v10905 = vadd.f32 %v10816, %v10904
    %10906 = vmatmul.bf16.gmra.mxu0 %v9989
    %v10907 = vpop.f32.mrf.mxu0
    %v10908 = vadd.f32 %v10819, %v10907
    %v10909 = vpop.f32.mrf.mxu0
    %v10910 = vadd.f32 %v10821, %v10909
    %10911 = vmatmul.bf16.gmra.mxu0 %v9997
    %v10912 = vpop.f32.mrf.mxu0
    %v10913 = vadd.f32 %v10824, %v10912
    %v10914 = vpop.f32.mrf.mxu0
    %v10915 = vadd.f32 %v10826, %v10914
    %10916 = vmatmul.bf16.gmra.mxu0 %v10005
    %v10917 = vpop.f32.mrf.mxu0
    %v10918 = vadd.f32 %v10829, %v10917
    %v10919 = vpop.f32.mrf.mxu0
    %v10920 = vadd.f32 %v10831, %v10919
    %10921 = vmatmul.bf16.gmra.mxu0 %v10013
    %v10922 = vpop.f32.mrf.mxu0
    %v10923 = vadd.f32 %v10834, %v10922
    %v10924 = vpop.f32.mrf.mxu0
    %v10925 = vadd.f32 %v10836, %v10924
    %10926 = vmatmul.bf16.gmra.mxu0 %v10021
    %v10927 = vpop.f32.mrf.mxu0
    %v10928 = vadd.f32 %v10839, %v10927
    %v10929 = vpop.f32.mrf.mxu0
    %v10930 = vadd.f32 %v10841, %v10929
    %10931 = vmatmul.bf16.gmra.mxu0 %v10029
    %v10932 = vpop.f32.mrf.mxu0
    %v10933 = vadd.f32 %v10844, %v10932
    %v10934 = vpop.f32.mrf.mxu0
    %v10935 = vadd.f32 %v10846, %v10934
    %10936 = vmatmul.bf16.gmra.mxu0 %v10037
    %v10937 = vpop.f32.mrf.mxu0
    %v10938 = vadd.f32 %v10849, %v10937
    %v10939 = vpop.f32.mrf.mxu0
    %v10940 = vadd.f32 %v10851, %v10939
    %10941 = vmatmul.bf16.gmra.mxu0 %v10045
    %v10942 = vpop.f32.mrf.mxu0
    %v10943 = vadd.f32 %v10854, %v10942
    %v10944 = vpop.f32.mrf.mxu0
    %v10945 = vadd.f32 %v10856, %v10944
    %10946 = vmatmul.bf16.gmra.mxu0 %v10053
    %v10947 = vpop.f32.mrf.mxu0
    %v10948 = vadd.f32 %v10859, %v10947
    %v10949 = vpop.f32.mrf.mxu0
    %v10950 = vadd.f32 %v10861, %v10949
    %10951 = vmatmul.bf16.gmra.mxu0 %v10061
    %v10952 = vpop.f32.mrf.mxu0
    %v10953 = vadd.f32 %v10864, %v10952
    %v10954 = vpop.f32.mrf.mxu0
    %v10955 = vadd.f32 %v10866, %v10954
    %10956 = vmatmul.bf16.gmra.mxu0 %v10069
    %v10957 = vpop.f32.mrf.mxu0
    %v10958 = vadd.f32 %v10869, %v10957
    %v10959 = vpop.f32.mrf.mxu0
    %v10960 = vadd.f32 %v10871, %v10959
    %10961 = vmatmul.bf16.gmra.mxu0 %v10077
    %v10962 = vpop.f32.mrf.mxu0
    %v10963 = vadd.f32 %v10874, %v10962
    %v10964 = vpop.f32.mrf.mxu0
    %v10965 = vadd.f32 %v10876, %v10964
    %10966 = vmatmul.bf16.gmra.mxu0 %v10085
    %v10967 = vpop.f32.mrf.mxu0
    %v10968 = vadd.f32 %v10879, %v10967
    %v10969 = vpop.f32.mrf.mxu0
    %v10970 = vadd.f32 %v10881, %v10969
    %10971 = vmatmul.bf16.gmra.mxu0 %v10093
    %v10972 = vpop.f32.mrf.mxu0
    %v10973 = vadd.f32 %v10884, %v10972
    %v10974 = vpop.f32.mrf.mxu0
    %v10975 = vadd.f32 %v10886, %v10974
    %10976 = vmatmul.bf16.gmra.mxu0 %v10101
    %v10977 = vpop.f32.mrf.mxu0
    %v10978 = vadd.f32 %v10889, %v10977
    %v10979 = vpop.f32.mrf.mxu0
    %v10980 = vadd.f32 %v10891, %v10979
    %10981 = vdwg.mxu0
    %10982 = vmatpush.bf16.msra.mxu0 %v10537
    %10983 = vmatpush.bf16.msra.mxu0 %v10536
    %10984 = vmatpush.bf16.msra.mxu0 %v10535
    %10985 = vmatpush.bf16.msra.mxu0 %v10534
    %10986 = vmatpush.bf16.msra.mxu0 %v10533
    %10987 = vmatpush.bf16.msra.mxu0 %v10532
    %10988 = vmatpush.bf16.msra.mxu0 %v10531
    %10989 = vmatpush.bf16.msra.mxu0 %v10530
    %10990 = vmatmul.bf16.gmra.mxu0 %v9982
    %v10991 = vpop.f32.mrf.mxu0
    %v10992 = vadd.f32 %v10903, %v10991
    %v10993 = vpop.f32.mrf.mxu0
    %v10994 = vadd.f32 %v10905, %v10993
    %10995 = vmatmul.bf16.gmra.mxu0 %v9990
    %v10996 = vpop.f32.mrf.mxu0
    %v10997 = vadd.f32 %v10908, %v10996
    %v10998 = vpop.f32.mrf.mxu0
    %v10999 = vadd.f32 %v10910, %v10998
    %11000 = vmatmul.bf16.gmra.mxu0 %v9998
    %v11001 = vpop.f32.mrf.mxu0
    %v11002 = vadd.f32 %v10913, %v11001
    %v11003 = vpop.f32.mrf.mxu0
    %v11004 = vadd.f32 %v10915, %v11003
    %11005 = vmatmul.bf16.gmra.mxu0 %v10006
    %v11006 = vpop.f32.mrf.mxu0
    %v11007 = vadd.f32 %v10918, %v11006
    %v11008 = vpop.f32.mrf.mxu0
    %v11009 = vadd.f32 %v10920, %v11008
    %11010 = vmatmul.bf16.gmra.mxu0 %v10014
    %v11011 = vpop.f32.mrf.mxu0
    %v11012 = vadd.f32 %v10923, %v11011
    %v11013 = vpop.f32.mrf.mxu0
    %v11014 = vadd.f32 %v10925, %v11013
    %11015 = vmatmul.bf16.gmra.mxu0 %v10022
    %v11016 = vpop.f32.mrf.mxu0
    %v11017 = vadd.f32 %v10928, %v11016
    %v11018 = vpop.f32.mrf.mxu0
    %v11019 = vadd.f32 %v10930, %v11018
    %11020 = vmatmul.bf16.gmra.mxu0 %v10030
    %v11021 = vpop.f32.mrf.mxu0
    %v11022 = vadd.f32 %v10933, %v11021
    %v11023 = vpop.f32.mrf.mxu0
    %v11024 = vadd.f32 %v10935, %v11023
    %11025 = vmatmul.bf16.gmra.mxu0 %v10038
    %v11026 = vpop.f32.mrf.mxu0
    %v11027 = vadd.f32 %v10938, %v11026
    %v11028 = vpop.f32.mrf.mxu0
    %v11029 = vadd.f32 %v10940, %v11028
    %11030 = vmatmul.bf16.gmra.mxu0 %v10046
    %v11031 = vpop.f32.mrf.mxu0
    %v11032 = vadd.f32 %v10943, %v11031
    %v11033 = vpop.f32.mrf.mxu0
    %v11034 = vadd.f32 %v10945, %v11033
    %11035 = vmatmul.bf16.gmra.mxu0 %v10054
    %v11036 = vpop.f32.mrf.mxu0
    %v11037 = vadd.f32 %v10948, %v11036
    %v11038 = vpop.f32.mrf.mxu0
    %v11039 = vadd.f32 %v10950, %v11038
    %11040 = vmatmul.bf16.gmra.mxu0 %v10062
    %v11041 = vpop.f32.mrf.mxu0
    %v11042 = vadd.f32 %v10953, %v11041
    %v11043 = vpop.f32.mrf.mxu0
    %v11044 = vadd.f32 %v10955, %v11043
    %11045 = vmatmul.bf16.gmra.mxu0 %v10070
    %v11046 = vpop.f32.mrf.mxu0
    %v11047 = vadd.f32 %v10958, %v11046
    %v11048 = vpop.f32.mrf.mxu0
    %v11049 = vadd.f32 %v10960, %v11048
    %11050 = vmatmul.bf16.gmra.mxu0 %v10078
    %v11051 = vpop.f32.mrf.mxu0
    %v11052 = vadd.f32 %v10963, %v11051
    %v11053 = vpop.f32.mrf.mxu0
    %v11054 = vadd.f32 %v10965, %v11053
    %11055 = vmatmul.bf16.gmra.mxu0 %v10086
    %v11056 = vpop.f32.mrf.mxu0
    %v11057 = vadd.f32 %v10968, %v11056
    %v11058 = vpop.f32.mrf.mxu0
    %v11059 = vadd.f32 %v10970, %v11058
    %11060 = vmatmul.bf16.gmra.mxu0 %v10094
    %v11061 = vpop.f32.mrf.mxu0
    %v11062 = vadd.f32 %v10973, %v11061
    %v11063 = vpop.f32.mrf.mxu0
    %v11064 = vadd.f32 %v10975, %v11063
    %11065 = vmatmul.bf16.gmra.mxu0 %v10102
    %v11066 = vpop.f32.mrf.mxu0
    %v11067 = vadd.f32 %v10978, %v11066
    %v11068 = vpop.f32.mrf.mxu0
    %v11069 = vadd.f32 %v10980, %v11068
    %11070 = vdwg.mxu0
    %11071 = vmatpush.bf16.msra.mxu0 %v10545
    %11072 = vmatpush.bf16.msra.mxu0 %v10544
    %11073 = vmatpush.bf16.msra.mxu0 %v10543
    %11074 = vmatpush.bf16.msra.mxu0 %v10542
    %11075 = vmatpush.bf16.msra.mxu0 %v10541
    %11076 = vmatpush.bf16.msra.mxu0 %v10540
    %11077 = vmatpush.bf16.msra.mxu0 %v10539
    %11078 = vmatpush.bf16.msra.mxu0 %v10538
    %11079 = vmatmul.bf16.gmra.mxu0 %v9983
    %v11080 = vpop.f32.mrf.mxu0
    %v11081 = vadd.f32 %v10992, %v11080
    %v11082 = vpop.f32.mrf.mxu0
    %v11083 = vadd.f32 %v10994, %v11082
    %11084 = vmatmul.bf16.gmra.mxu0 %v9991
    %v11085 = vpop.f32.mrf.mxu0
    %v11086 = vadd.f32 %v10997, %v11085
    %v11087 = vpop.f32.mrf.mxu0
    %v11088 = vadd.f32 %v10999, %v11087
    %11089 = vmatmul.bf16.gmra.mxu0 %v9999
    %v11090 = vpop.f32.mrf.mxu0
    %v11091 = vadd.f32 %v11002, %v11090
    %v11092 = vpop.f32.mrf.mxu0
    %v11093 = vadd.f32 %v11004, %v11092
    %11094 = vmatmul.bf16.gmra.mxu0 %v10007
    %v11095 = vpop.f32.mrf.mxu0
    %v11096 = vadd.f32 %v11007, %v11095
    %v11097 = vpop.f32.mrf.mxu0
    %v11098 = vadd.f32 %v11009, %v11097
    %11099 = vmatmul.bf16.gmra.mxu0 %v10015
    %v11100 = vpop.f32.mrf.mxu0
    %v11101 = vadd.f32 %v11012, %v11100
    %v11102 = vpop.f32.mrf.mxu0
    %v11103 = vadd.f32 %v11014, %v11102
    %11104 = vmatmul.bf16.gmra.mxu0 %v10023
    %v11105 = vpop.f32.mrf.mxu0
    %v11106 = vadd.f32 %v11017, %v11105
    %v11107 = vpop.f32.mrf.mxu0
    %v11108 = vadd.f32 %v11019, %v11107
    %11109 = vmatmul.bf16.gmra.mxu0 %v10031
    %v11110 = vpop.f32.mrf.mxu0
    %v11111 = vadd.f32 %v11022, %v11110
    %v11112 = vpop.f32.mrf.mxu0
    %v11113 = vadd.f32 %v11024, %v11112
    %11114 = vmatmul.bf16.gmra.mxu0 %v10039
    %v11115 = vpop.f32.mrf.mxu0
    %v11116 = vadd.f32 %v11027, %v11115
    %v11117 = vpop.f32.mrf.mxu0
    %v11118 = vadd.f32 %v11029, %v11117
    %11119 = vmatmul.bf16.gmra.mxu0 %v10047
    %v11120 = vpop.f32.mrf.mxu0
    %v11121 = vadd.f32 %v11032, %v11120
    %v11122 = vpop.f32.mrf.mxu0
    %v11123 = vadd.f32 %v11034, %v11122
    %11124 = vmatmul.bf16.gmra.mxu0 %v10055
    %v11125 = vpop.f32.mrf.mxu0
    %v11126 = vadd.f32 %v11037, %v11125
    %v11127 = vpop.f32.mrf.mxu0
    %v11128 = vadd.f32 %v11039, %v11127
    %11129 = vmatmul.bf16.gmra.mxu0 %v10063
    %v11130 = vpop.f32.mrf.mxu0
    %v11131 = vadd.f32 %v11042, %v11130
    %v11132 = vpop.f32.mrf.mxu0
    %v11133 = vadd.f32 %v11044, %v11132
    %11134 = vmatmul.bf16.gmra.mxu0 %v10071
    %v11135 = vpop.f32.mrf.mxu0
    %v11136 = vadd.f32 %v11047, %v11135
    %v11137 = vpop.f32.mrf.mxu0
    %v11138 = vadd.f32 %v11049, %v11137
    %11139 = vmatmul.bf16.gmra.mxu0 %v10079
    %v11140 = vpop.f32.mrf.mxu0
    %v11141 = vadd.f32 %v11052, %v11140
    %v11142 = vpop.f32.mrf.mxu0
    %v11143 = vadd.f32 %v11054, %v11142
    %11144 = vmatmul.bf16.gmra.mxu0 %v10087
    %v11145 = vpop.f32.mrf.mxu0
    %v11146 = vadd.f32 %v11057, %v11145
    %v11147 = vpop.f32.mrf.mxu0
    %v11148 = vadd.f32 %v11059, %v11147
    %11149 = vmatmul.bf16.gmra.mxu0 %v10095
    %v11150 = vpop.f32.mrf.mxu0
    %v11151 = vadd.f32 %v11062, %v11150
    %v11152 = vpop.f32.mrf.mxu0
    %v11153 = vadd.f32 %v11064, %v11152
    %11154 = vmatmul.bf16.gmra.mxu0 %v10103
    %v11155 = vpop.f32.mrf.mxu0
    %v11156 = vadd.f32 %v11067, %v11155
    %v11157 = vpop.f32.mrf.mxu0
    %v11158 = vadd.f32 %v11069, %v11157
    %11159 = vdwg.mxu0
    %11160 = vmatpush.bf16.msra.mxu0 %v10553
    %11161 = vmatpush.bf16.msra.mxu0 %v10552
    %11162 = vmatpush.bf16.msra.mxu0 %v10551
    %11163 = vmatpush.bf16.msra.mxu0 %v10550
    %11164 = vmatpush.bf16.msra.mxu0 %v10549
    %11165 = vmatpush.bf16.msra.mxu0 %v10548
    %11166 = vmatpush.bf16.msra.mxu0 %v10547
    %11167 = vmatpush.bf16.msra.mxu0 %v10546
    %11168 = vmatmul.bf16.gmra.mxu0 %v9984
    %v11169 = vpop.f32.mrf.mxu0
    %v11170 = vadd.f32 %v11081, %v11169
    %v11171 = vpop.f32.mrf.mxu0
    %v11172 = vadd.f32 %v11083, %v11171
    %11173 = vmatmul.bf16.gmra.mxu0 %v9992
    %v11174 = vpop.f32.mrf.mxu0
    %v11175 = vadd.f32 %v11086, %v11174
    %v11176 = vpop.f32.mrf.mxu0
    %v11177 = vadd.f32 %v11088, %v11176
    %11178 = vmatmul.bf16.gmra.mxu0 %v10000
    %v11179 = vpop.f32.mrf.mxu0
    %v11180 = vadd.f32 %v11091, %v11179
    %v11181 = vpop.f32.mrf.mxu0
    %v11182 = vadd.f32 %v11093, %v11181
    %11183 = vmatmul.bf16.gmra.mxu0 %v10008
    %v11184 = vpop.f32.mrf.mxu0
    %v11185 = vadd.f32 %v11096, %v11184
    %v11186 = vpop.f32.mrf.mxu0
    %v11187 = vadd.f32 %v11098, %v11186
    %11188 = vmatmul.bf16.gmra.mxu0 %v10016
    %v11189 = vpop.f32.mrf.mxu0
    %v11190 = vadd.f32 %v11101, %v11189
    %v11191 = vpop.f32.mrf.mxu0
    %v11192 = vadd.f32 %v11103, %v11191
    %11193 = vmatmul.bf16.gmra.mxu0 %v10024
    %v11194 = vpop.f32.mrf.mxu0
    %v11195 = vadd.f32 %v11106, %v11194
    %v11196 = vpop.f32.mrf.mxu0
    %v11197 = vadd.f32 %v11108, %v11196
    %11198 = vmatmul.bf16.gmra.mxu0 %v10032
    %v11199 = vpop.f32.mrf.mxu0
    %v11200 = vadd.f32 %v11111, %v11199
    %v11201 = vpop.f32.mrf.mxu0
    %v11202 = vadd.f32 %v11113, %v11201
    %11203 = vmatmul.bf16.gmra.mxu0 %v10040
    %v11204 = vpop.f32.mrf.mxu0
    %v11205 = vadd.f32 %v11116, %v11204
    %v11206 = vpop.f32.mrf.mxu0
    %v11207 = vadd.f32 %v11118, %v11206
    %11208 = vmatmul.bf16.gmra.mxu0 %v10048
    %v11209 = vpop.f32.mrf.mxu0
    %v11210 = vadd.f32 %v11121, %v11209
    %v11211 = vpop.f32.mrf.mxu0
    %v11212 = vadd.f32 %v11123, %v11211
    %11213 = vmatmul.bf16.gmra.mxu0 %v10056
    %v11214 = vpop.f32.mrf.mxu0
    %v11215 = vadd.f32 %v11126, %v11214
    %v11216 = vpop.f32.mrf.mxu0
    %v11217 = vadd.f32 %v11128, %v11216
    %11218 = vmatmul.bf16.gmra.mxu0 %v10064
    %v11219 = vpop.f32.mrf.mxu0
    %v11220 = vadd.f32 %v11131, %v11219
    %v11221 = vpop.f32.mrf.mxu0
    %v11222 = vadd.f32 %v11133, %v11221
    %11223 = vmatmul.bf16.gmra.mxu0 %v10072
    %v11224 = vpop.f32.mrf.mxu0
    %v11225 = vadd.f32 %v11136, %v11224
    %v11226 = vpop.f32.mrf.mxu0
    %v11227 = vadd.f32 %v11138, %v11226
    %11228 = vmatmul.bf16.gmra.mxu0 %v10080
    %v11229 = vpop.f32.mrf.mxu0
    %v11230 = vadd.f32 %v11141, %v11229
    %v11231 = vpop.f32.mrf.mxu0
    %v11232 = vadd.f32 %v11143, %v11231
    %11233 = vmatmul.bf16.gmra.mxu0 %v10088
    %v11234 = vpop.f32.mrf.mxu0
    %v11235 = vadd.f32 %v11146, %v11234
    %v11236 = vpop.f32.mrf.mxu0
    %v11237 = vadd.f32 %v11148, %v11236
    %11238 = vmatmul.bf16.gmra.mxu0 %v10096
    %v11239 = vpop.f32.mrf.mxu0
    %v11240 = vadd.f32 %v11151, %v11239
    %v11241 = vpop.f32.mrf.mxu0
    %v11242 = vadd.f32 %v11153, %v11241
    %11243 = vmatmul.bf16.gmra.mxu0 %v10104
    %v11244 = vpop.f32.mrf.mxu0
    %v11245 = vadd.f32 %v11156, %v11244
    %v11246 = vpop.f32.mrf.mxu0
    %v11247 = vadd.f32 %v11158, %v11246
    %11248 = vdwg.mxu0
    %11249 = vmatpush.bf16.msra.mxu0 %v10561
    %11250 = vmatpush.bf16.msra.mxu0 %v10560
    %11251 = vmatpush.bf16.msra.mxu0 %v10559
    %11252 = vmatpush.bf16.msra.mxu0 %v10558
    %11253 = vmatpush.bf16.msra.mxu0 %v10557
    %11254 = vmatpush.bf16.msra.mxu0 %v10556
    %11255 = vmatpush.bf16.msra.mxu0 %v10555
    %11256 = vmatpush.bf16.msra.mxu0 %v10554
    %11257 = vmatmul.bf16.gmra.mxu0 %v9985
    %v11258 = vpop.f32.mrf.mxu0
    %v11259 = vadd.f32 %v11170, %v11258
    %v11260 = vpop.f32.mrf.mxu0
    %v11261 = vadd.f32 %v11172, %v11260
    %11262 = vmatmul.bf16.gmra.mxu0 %v9993
    %v11263 = vpop.f32.mrf.mxu0
    %v11264 = vadd.f32 %v11175, %v11263
    %v11265 = vpop.f32.mrf.mxu0
    %v11266 = vadd.f32 %v11177, %v11265
    %11267 = vmatmul.bf16.gmra.mxu0 %v10001
    %v11268 = vpop.f32.mrf.mxu0
    %v11269 = vadd.f32 %v11180, %v11268
    %v11270 = vpop.f32.mrf.mxu0
    %v11271 = vadd.f32 %v11182, %v11270
    %11272 = vmatmul.bf16.gmra.mxu0 %v10009
    %v11273 = vpop.f32.mrf.mxu0
    %v11274 = vadd.f32 %v11185, %v11273
    %v11275 = vpop.f32.mrf.mxu0
    %v11276 = vadd.f32 %v11187, %v11275
    %11277 = vmatmul.bf16.gmra.mxu0 %v10017
    %v11278 = vpop.f32.mrf.mxu0
    %v11279 = vadd.f32 %v11190, %v11278
    %v11280 = vpop.f32.mrf.mxu0
    %v11281 = vadd.f32 %v11192, %v11280
    %11282 = vmatmul.bf16.gmra.mxu0 %v10025
    %v11283 = vpop.f32.mrf.mxu0
    %v11284 = vadd.f32 %v11195, %v11283
    %v11285 = vpop.f32.mrf.mxu0
    %v11286 = vadd.f32 %v11197, %v11285
    %11287 = vmatmul.bf16.gmra.mxu0 %v10033
    %v11288 = vpop.f32.mrf.mxu0
    %v11289 = vadd.f32 %v11200, %v11288
    %v11290 = vpop.f32.mrf.mxu0
    %v11291 = vadd.f32 %v11202, %v11290
    %11292 = vmatmul.bf16.gmra.mxu0 %v10041
    %v11293 = vpop.f32.mrf.mxu0
    %v11294 = vadd.f32 %v11205, %v11293
    %v11295 = vpop.f32.mrf.mxu0
    %v11296 = vadd.f32 %v11207, %v11295
    %11297 = vmatmul.bf16.gmra.mxu0 %v10049
    %v11298 = vpop.f32.mrf.mxu0
    %v11299 = vadd.f32 %v11210, %v11298
    %v11300 = vpop.f32.mrf.mxu0
    %v11301 = vadd.f32 %v11212, %v11300
    %11302 = vmatmul.bf16.gmra.mxu0 %v10057
    %v11303 = vpop.f32.mrf.mxu0
    %v11304 = vadd.f32 %v11215, %v11303
    %v11305 = vpop.f32.mrf.mxu0
    %v11306 = vadd.f32 %v11217, %v11305
    %11307 = vmatmul.bf16.gmra.mxu0 %v10065
    %v11308 = vpop.f32.mrf.mxu0
    %v11309 = vadd.f32 %v11220, %v11308
    %v11310 = vpop.f32.mrf.mxu0
    %v11311 = vadd.f32 %v11222, %v11310
    %11312 = vmatmul.bf16.gmra.mxu0 %v10073
    %v11313 = vpop.f32.mrf.mxu0
    %v11314 = vadd.f32 %v11225, %v11313
    %v11315 = vpop.f32.mrf.mxu0
    %v11316 = vadd.f32 %v11227, %v11315
    %11317 = vmatmul.bf16.gmra.mxu0 %v10081
    %v11318 = vpop.f32.mrf.mxu0
    %v11319 = vadd.f32 %v11230, %v11318
    %v11320 = vpop.f32.mrf.mxu0
    %v11321 = vadd.f32 %v11232, %v11320
    %11322 = vmatmul.bf16.gmra.mxu0 %v10089
    %v11323 = vpop.f32.mrf.mxu0
    %v11324 = vadd.f32 %v11235, %v11323
    %v11325 = vpop.f32.mrf.mxu0
    %v11326 = vadd.f32 %v11237, %v11325
    %11327 = vmatmul.bf16.gmra.mxu0 %v10097
    %v11328 = vpop.f32.mrf.mxu0
    %v11329 = vadd.f32 %v11240, %v11328
    %v11330 = vpop.f32.mrf.mxu0
    %v11331 = vadd.f32 %v11242, %v11330
    %11332 = vmatmul.bf16.gmra.mxu0 %v10105
    %v11333 = vpop.f32.mrf.mxu0
    %v11334 = vadd.f32 %v11245, %v11333
    %v11335 = vpop.f32.mrf.mxu0
    %v11336 = vadd.f32 %v11247, %v11335
    %11337 = vdwg.mxu0
    %v11338 = vtanh.pop %v11259
    %v11339 = vtanh.pop %v11261
    %v11340 = vtanh.pop %v11264
    %v11341 = vtanh.pop %v11266
    %v11342 = vtanh.pop %v11269
    %v11343 = vtanh.pop %v11271
    %v11344 = vtanh.pop %v11274
    %v11345 = vtanh.pop %v11276
    %v11346 = vtanh.pop %v11279
    %v11347 = vtanh.pop %v11281
    %v11348 = vtanh.pop %v11284
    %v11349 = vtanh.pop %v11286
    %v11350 = vtanh.pop %v11289
    %v11351 = vtanh.pop %v11291
    %v11352 = vtanh.pop %v11294
    %v11353 = vtanh.pop %v11296
    %v11354 = vtanh.pop %v11299
    %v11355 = vtanh.pop %v11301
    %v11356 = vtanh.pop %v11304
    %v11357 = vtanh.pop %v11306
    %v11358 = vtanh.pop %v11309
    %v11359 = vtanh.pop %v11311
    %v11360 = vtanh.pop %v11314
    %v11361 = vtanh.pop %v11316
    %v11362 = vtanh.pop %v11319
    %v11363 = vtanh.pop %v11321
    %v11364 = vtanh.pop %v11324
    %v11365 = vtanh.pop %v11326
    %v11366 = vtanh.pop %v11329
    %v11367 = vtanh.pop %v11331
    %v11368 = vtanh.pop %v11334
    %v11369 = vtanh.pop %v11336
    %v11370 = vpack.c.bf16 %v11338, %v11338
    %v11371 = vpack.c.bf16 %v11339, %v11339
    %v11372 = vpack.c.bf16 %v11340, %v11340
    %v11373 = vpack.c.bf16 %v11341, %v11341
    %v11374 = vpack.c.bf16 %v11342, %v11342
    %v11375 = vpack.c.bf16 %v11343, %v11343
    %v11376 = vpack.c.bf16 %v11344, %v11344
    %v11377 = vpack.c.bf16 %v11345, %v11345
    %v11378 = vpack.c.bf16 %v11346, %v11346
    %v11379 = vpack.c.bf16 %v11347, %v11347
    %v11380 = vpack.c.bf16 %v11348, %v11348
    %v11381 = vpack.c.bf16 %v11349, %v11349
    %v11382 = vpack.c.bf16 %v11350, %v11350
    %v11383 = vpack.c.bf16 %v11351, %v11351
    %v11384 = vpack.c.bf16 %v11352, %v11352
    %v11385 = vpack.c.bf16 %v11353, %v11353
    %v11386 = vpack.c.bf16 %v11354, %v11354
    %v11387 = vpack.c.bf16 %v11355, %v11355
    %v11388 = vpack.c.bf16 %v11356, %v11356
    %v11389 = vpack.c.bf16 %v11357, %v11357
    %v11390 = vpack.c.bf16 %v11358, %v11358
    %v11391 = vpack.c.bf16 %v11359, %v11359
    %v11392 = vpack.c.bf16 %v11360, %v11360
    %v11393 = vpack.c.bf16 %v11361, %v11361
    %v11394 = vpack.c.bf16 %v11362, %v11362
    %v11395 = vpack.c.bf16 %v11363, %v11363
    %v11396 = vpack.c.bf16 %v11364, %v11364
    %v11397 = vpack.c.bf16 %v11365, %v11365
    %v11398 = vpack.c.bf16 %v11366, %v11366
    %v11399 = vpack.c.bf16 %v11367, %v11367
    %v11400 = vpack.c.bf16 %v11368, %v11368
    %v11401 = vpack.c.bf16 %v11369, %v11369
    %11402 = vst [vmem:[#allocation11] sm:$0xf] %v11370
    %11403 = vst [vmem:[#allocation11 + $0x4] sm:$0xf] %v11371
    %11404 = vst [vmem:[#allocation11 + $0x8] sm:$0xf] %v11372
    %11405 = vst [vmem:[#allocation11 + $0xc] sm:$0xf] %v11373
    %11406 = vst [vmem:[#allocation11 + $0x10] sm:$0xf] %v11374
    %11407 = vst [vmem:[#allocation11 + $0x14] sm:$0xf] %v11375
    %11408 = vst [vmem:[#allocation11 + $0x18] sm:$0xf] %v11376
    %11409 = vst [vmem:[#allocation11 + $0x1c] sm:$0xf] %v11377
    %11410 = vst [vmem:[#allocation11 + $0x20] sm:$0xf] %v11378
    %11411 = vst [vmem:[#allocation11 + $0x24] sm:$0xf] %v11379
    %11412 = vst [vmem:[#allocation11 + $0x28] sm:$0xf] %v11380
    %11413 = vst [vmem:[#allocation11 + $0x2c] sm:$0xf] %v11381
    %11414 = vst [vmem:[#allocation11 + $0x30] sm:$0xf] %v11382
    %11415 = vst [vmem:[#allocation11 + $0x34] sm:$0xf] %v11383
    %11416 = vst [vmem:[#allocation11 + $0x38] sm:$0xf] %v11384
    %11417 = vst [vmem:[#allocation11 + $0x3c] sm:$0xf] %v11385
    %11418 = vst [vmem:[#allocation11 + $0x40] sm:$0xf] %v11386
    %11419 = vst [vmem:[#allocation11 + $0x44] sm:$0xf] %v11387
    %11420 = vst [vmem:[#allocation11 + $0x48] sm:$0xf] %v11388
    %11421 = vst [vmem:[#allocation11 + $0x4c] sm:$0xf] %v11389
    %11422 = vst [vmem:[#allocation11 + $0x50] sm:$0xf] %v11390
    %11423 = vst [vmem:[#allocation11 + $0x54] sm:$0xf] %v11391
    %11424 = vst [vmem:[#allocation11 + $0x58] sm:$0xf] %v11392
    %11425 = vst [vmem:[#allocation11 + $0x5c] sm:$0xf] %v11393
    %11426 = vst [vmem:[#allocation11 + $0x60] sm:$0xf] %v11394
    %11427 = vst [vmem:[#allocation11 + $0x64] sm:$0xf] %v11395
    %11428 = vst [vmem:[#allocation11 + $0x68] sm:$0xf] %v11396
    %11429 = vst [vmem:[#allocation11 + $0x6c] sm:$0xf] %v11397
    %11430 = vst [vmem:[#allocation11 + $0x70] sm:$0xf] %v11398
    %11431 = vst [vmem:[#allocation11 + $0x74] sm:$0xf] %v11399
    %11432 = vst [vmem:[#allocation11 + $0x78] sm:$0xf] %v11400
    %11433 = vst [vmem:[#allocation11 + $0x7c] sm:$0xf] %v11401
    // Predicated region
    $region70: #{tpu_custom_call.1} parent=1 // pred_check
      _
    $region71: #{tpu_custom_call.1} parent=1 // pred_check_branch
      %11435 = sbr.rel (0) target = $region73
    $region72: #{tpu_custom_call.1} parent=1 // pred_region
      %11437 = vsyncadd [#allocation7], 0
      %s11438 = sshll.u32 [#allocation11], 4
      %s11439 = int_to_ptr.vmem [resolvable:$true] %s11438
      %s11440 = sshll.u32 %s14, 4
      %s11441 = int_to_ptr.hbm [resolvable:$true] %s11440
      %11446 = dma.vmem_to_hbm [thread:$0]  %s11439, 2048, %s11441, [#allocation7], 64, 64, 4
    $region73: #{tpu_custom_call.1} parent=1 // pred_fallthru
      _
    // Predicated region
    $region74: #{tpu_custom_call.1} parent=1 // pred_check
      _
    $region75: #{tpu_custom_call.1} parent=1 // pred_check_branch
      %11448 = sbr.rel (0) target = $region77
    $region76: #{tpu_custom_call.1} parent=1 // pred_region
      %11450 = dma.done [#allocation7], 2048
    $region77: #{tpu_custom_call.1} parent=1 // pred_fallthru
      _
    %11451 = vsyncpa [#allocation6], 1
    %11452 = vsyncpa [#allocation9], 1
    %11453 = vsyncpa [#allocation7], 1
  %11454 = vsyncmov [#allocation4]
  %s11455 = vpop.sfrf %11454
  %p11456 = scmp.eq.s32.totalorder %s11455, 0
  %p11457 = pneg %p11456
  %11459 = shalt.err (%p11457)
  %s11460 = scalar_lea.sflag [#allocation4], 1
  %11461 = vsyncmov %s11460
  %s11462 = vpop.sfrf %11461
  %p11463 = scmp.eq.s32.totalorder %s11462, 0
  %p11464 = pneg %p11463
  %11466 = shalt.err (%p11464)

</llo_original>
